<compile_context>
chip_gen: v7x
topology: tpu7x:2x2x1
jax: 0.10.0
libtpu: 0.0.40
codegen_flags: <defaults>
</compile_context>

<pallas_src>
import jax
import jax.numpy as jnp
from jax.experimental import pallas as pl
from jax.experimental.pallas import tpu as pltpu


def se_gate_conv1x1_kernel(gate_ref, x_ref, w_ref, o_ref):
    """out[ct, M] = W[ct, Cin] @ (sigmoid(g)[Cin, 1] * x[Cin, M])."""
    # sigmoid on the per-channel gate (EUP), lane-broadcast multiply (VPU).
    g = jax.nn.sigmoid(gate_ref[...].astype(jnp.float32))          # [Cin, 1]
    xg = x_ref[...].astype(jnp.float32) * g                        # [Cin, M]
    # 1x1 conv == channel matmul on the MXU.  Cast xg to the weight dtype so a
    # bf16 weight takes the native bf16 x bf16 MXU path (f32 weights also work
    # unchanged); accumulation stays f32 via preferred_element_type.
    acc = jnp.dot(w_ref[...], xg.astype(w_ref.dtype),
                  preferred_element_type=jnp.float32)              # [ct, M]
    o_ref[...] = acc.astype(o_ref.dtype)


def _tensorcores_per_chip():
    """2 on v7x (2 TCs/chip), else 1 (v5e/v6e have a single TensorCore)."""
    try:
        kind = jax.devices()[0].device_kind.lower()
    except Exception:  # pragma: no cover - defensive
        return 1
    return 2 if ("v7" in kind or "tpu7" in kind) else 1


def se_gate_conv1x1(x_nchw, gate_nc11, w_oihw):
    """sigmoid(gate) * x, then 1x1 conv (no bias). NCHW in / NCHW out."""
    N, Cin, H, W = x_nchw.shape
    Cout = w_oihw.shape[0]
    assert N == 1, "kernel assumes N == 1 (matches the reference module)"
    assert w_oihw.shape == (Cout, Cin, 1, 1)
    assert gate_nc11.shape == (N, Cin, 1, 1)
    M = H * W

    # Pure reshapes of contiguous NCHW data -- no HBM transpose traffic.
    x2d = x_nchw.reshape(Cin, M)        # [Cin, M]
    gate = gate_nc11.reshape(Cin, 1)    # [Cin, 1]
    w2d = w_oihw.reshape(Cout, Cin)     # [Cout, Cin]

    # One Cout tile per TensorCore.
    n_cores = _tensorcores_per_chip()
    if Cout % n_cores != 0:
        n_cores = 1
    cout_tile = Cout // n_cores
    grid = (n_cores,)

    # Advisory cost hint for XLA's scheduler (op is launch/overhead bound).
    bytes_accessed = (w2d.size * w2d.dtype.itemsize
                      + x2d.size * x2d.dtype.itemsize
                      + gate.size * gate.dtype.itemsize
                      + Cout * M * x_nchw.dtype.itemsize)
    cost = pl.CostEstimate(flops=2 * Cout * Cin * M,
                           transcendentals=Cin,
                           bytes_accessed=bytes_accessed)

    # VMEM per buffer (lane padding to 128 included): x ~1.2 MB, gate ~1.2 MB,
    # weight tile (bf16) ~0.9-1.8 MB, out ~0.1-0.2 MB.  Double-buffered total
    # is well under the scoped limit on every generation (incl. v7x's 64 MiB).
    def build(dim_sems):
        return pl.pallas_call(
            se_gate_conv1x1_kernel,
            out_shape=jax.ShapeDtypeStruct((Cout, M), x_nchw.dtype),
            grid_spec=pltpu.PrefetchScalarGridSpec(
                num_scalar_prefetch=0,
                grid=grid,
                in_specs=[
                    pl.BlockSpec((Cin, 1), lambda j: (0, 0)),          # gate (resident)
                    pl.BlockSpec((Cin, M), lambda j: (0, 0)),          # activations (resident)
                    pl.BlockSpec((cout_tile, Cin), lambda j: (j, 0)),  # weight tile
                ],
                out_specs=pl.BlockSpec((cout_tile, M), lambda j: (j, 0)),
            ),
            compiler_params=pltpu.CompilerParams(dimension_semantics=dim_sems),
            cost_estimate=cost,
        )

    if n_cores > 1:
        # v7x: shard the Cout axis across the two TensorCores.
        try:
            out2d = build((pltpu.CORE_PARALLEL,))(gate, x2d, w2d)
        except Exception:
            out2d = build(("parallel",))(gate, x2d, w2d)
    else:
        # Single TensorCore: one grid step, semantics irrelevant.
        out2d = build(("arbitrary",))(gate, x2d, w2d)

    # Free reshape back to NCHW.
    return out2d.reshape(N, Cout, H, W)


if __name__ == "__main__":
    key = jax.random.PRNGKey(0)
    k1, k2, k3 = jax.random.split(key, 3)

    N, Cin, Cout, H, W = 1, 2304, 384, 7, 7

    # Inputs matching the module's forward signature (x693, x689).
    x689 = jax.random.normal(k1, (N, Cin, H, W), dtype=jnp.float32)
    x693 = jax.random.normal(k2, (N, Cin, 1, 1), dtype=jnp.float32)

    # Conv2d(2304, 384, 1, bias=False) weight (PyTorch-style uniform init).
    bound = 1.0 / (Cin ** 0.5)
    w_f32 = jax.random.uniform(k3, (Cout, Cin, 1, 1), dtype=jnp.float32,
                               minval=-bound, maxval=bound)
    # Constant parameter stored in bf16 (halves the dominant HBM transfer and
    # enables the native bf16 MXU path).  Confirm the accuracy budget allows
    # this before shipping; pass w_f32 directly to keep full f32 semantics.
    w = w_f32.astype(jnp.bfloat16)

    out = se_gate_conv1x1(x689, x693, w)
    out = jax.block_until_ready(out)

    # Pure-JAX reference with matching dtypes: bf16 weight, bf16 gated
    # activations (the kernel feeds both MXU operands as bf16), f32 accumulate.
    xg_ref = (jax.nn.sigmoid(x693) * x689).astype(jnp.bfloat16).astype(jnp.float32)
    ref = jnp.einsum("nchw,oc->nohw",
                     xg_ref,
                     w.astype(jnp.float32).reshape(Cout, Cin))

    assert out.shape == (N, Cout, H, W), out.shape
    assert out.dtype == jnp.float32
    assert jnp.allclose(out, ref, atol=5e-3, rtol=5e-3), float(
        jnp.max(jnp.abs(out - ref)))

    print("KERNEL_OK")
</pallas_src>

<mosaic_0001>
module attributes {stable_mosaic.version = 11 : i64} {
  func.func @se_gate_conv1x1_kernel(%arg0: i32, %arg1: memref<2304x1xf32, #tpu.memory_space<vmem>>, %arg2: memref<2304x49xf32, #tpu.memory_space<vmem>>, %arg3: memref<384x2304xbf16, #tpu.memory_space<vmem>>, %arg4: memref<384x49xf32, #tpu.memory_space<vmem>>) attributes {dimension_semantics = [#tpu.dimension_semantics<arbitrary>], iteration_bounds = array<i64: 1>, scalar_prefetch = 0 : i64, scratch_operands = 0 : i64, tpu.core_type = #tpu.core_type<tc>, window_params = [{pipeline_mode = #tpu.pipeline_mode<synchronous>, transform_indices = @transform_0, window_bounds = array<i64: 2304, 1>}, {pipeline_mode = #tpu.pipeline_mode<synchronous>, transform_indices = @transform_1, window_bounds = array<i64: 2304, 49>}, {transform_indices = @transform_2, window_bounds = array<i64: 384, 2304>}, {transform_indices = @transform_3, window_bounds = array<i64: 384, 49>}]} {
    %c0 = arith.constant 0 : index
    %c0_0 = arith.constant 0 : index
    %0 = vector.load %arg1[%c0, %c0_0] : memref<2304x1xf32, #tpu.memory_space<vmem>>, vector<2304x1xf32>
    %1 = arith.negf %0 : vector<2304x1xf32>
    %2 = math.exp %1 : vector<2304x1xf32>
    %cst = arith.constant 1.000000e+00 : f32
    %3 = vector.broadcast %cst : f32 to vector<2304x1xf32>
    %4 = arith.addf %3, %2 : vector<2304x1xf32>
    %5 = arith.divf %3, %4 : vector<2304x1xf32>
    %c0_1 = arith.constant 0 : index
    %c0_2 = arith.constant 0 : index
    %6 = vector.load %arg2[%c0_1, %c0_2] : memref<2304x49xf32, #tpu.memory_space<vmem>>, vector<2304x49xf32>
    %7 = vector.broadcast %5 : vector<2304x1xf32> to vector<2304x49xf32>
    %8 = arith.mulf %6, %7 : vector<2304x49xf32>
    %c0_3 = arith.constant 0 : index
    %c0_4 = arith.constant 0 : index
    %9 = vector.load %arg3[%c0_3, %c0_4] : memref<384x2304xbf16, #tpu.memory_space<vmem>>, vector<384x2304xbf16>
    %10 = arith.truncf %8 : vector<2304x49xf32> to vector<2304x49xbf16>
    %cst_5 = arith.constant dense<0.000000e+00> : vector<384x49xf32>
    %11 = tpu.matmul %9, %10, %cst_5 {dimension_numbers = #tpu.dot_dimension_numbers<[1], [0], [0], [1], [0, 0, 1, 1], [], []>} : vector<384x2304xbf16>, vector<2304x49xbf16>, vector<384x49xf32> -> vector<384x49xf32>
    %c0_6 = arith.constant 0 : index
    %c0_7 = arith.constant 0 : index
    %12 = vector.load %arg4[%c0_6, %c0_7] : memref<384x49xf32, #tpu.memory_space<vmem>>, vector<384x49xf32>
    tpu.vector_store %arg4[%c0_6, %c0_7], %11 {strides = array<i32>} : memref<384x49xf32, #tpu.memory_space<vmem>>, vector<384x49xf32>,
    return
  }
  func.func @transform_0(%arg0: i32) -> (i32, i32) {
    %c0_i32 = arith.constant 0 : i32
    %c0_i32_0 = arith.constant 0 : i32
    %c0_i32_1 = arith.constant 0 : i32
    return %c0_i32, %c0_i32_0 : i32, i32
  }
  func.func @transform_1(%arg0: i32) -> (i32, i32) {
    %c0_i32 = arith.constant 0 : i32
    %c0_i32_0 = arith.constant 0 : i32
    %c0_i32_1 = arith.constant 0 : i32
    return %c0_i32, %c0_i32_0 : i32, i32
  }
  func.func @transform_2(%arg0: i32) -> (i32, i32) {
    %c0_i32 = arith.constant 0 : i32
    %c0_i32_0 = arith.constant 0 : i32
    return %arg0, %c0_i32 : i32, i32
  }
  func.func @transform_3(%arg0: i32) -> (i32, i32) {
    %c0_i32 = arith.constant 0 : i32
    %c0_i32_0 = arith.constant 0 : i32
    return %arg0, %c0_i32 : i32, i32
  }
}

</mosaic_0001>

<llo_original>
// kernel: tpu_custom_call.1
$region0: #{tpu_custom_call.1}
  #allocation0 [shape = 'u32[]', space=smem, size = 0x4, offset = 0x4, fixed_abs, tag = 'smem constant byte address 0x4 - core index']
  #allocation1 [shape = 'u32[144,128]{1,0:T(1,128)}', space=vmem, size = 0x12000, scoped, tag = 'internal scratch']
  %s0 = inlined_call_operand.vmem [shape: f32[2304,1], index: 0, kind: input, shape index: {}]
  %s1 = inlined_call_operand.vmem [shape: f32[2304,49], index: 1, kind: input, shape index: {}]
  %s2 = inlined_call_operand.vmem [shape: bf16[384,2304], index: 2, kind: input, shape index: {}]
  %s3 = inlined_call_operand.vmem [shape: f32[384,49], index: 3, kind: output, shape index: {}]
  %s4 = sld [smem:[#allocation0]]
  $region22: #{tpu_custom_call.1} parent=0
    _
  %s6 = ssub.s32 1, %s4
  %s7 = scalar_select 0, %s6, %s4
  // Predicated region
  $region2: #{tpu_custom_call.1} parent=0 // pred_check
    _
  $region3: #{tpu_custom_call.1} parent=0 // pred_check_branch
    %9 = sbr.rel (0) target = $region5
  $region4: #{tpu_custom_call.1} parent=0 // pred_region
    _
  $region5: #{tpu_custom_call.1} parent=0 // pred_fallthru
    _
  // Predicated region
  $region6: #{tpu_custom_call.1} parent=0 // pred_check
    _
  $region7: #{tpu_custom_call.1} parent=0 // pred_check_branch
    %11 = sbr.rel (0) target = $region9
  $region8: #{tpu_custom_call.1} parent=0 // pred_region
    _
  $region9: #{tpu_custom_call.1} parent=0 // pred_fallthru
    _
  // Predicated region
  $region10: #{tpu_custom_call.1} parent=0 // pred_check
    _
  $region11: #{tpu_custom_call.1} parent=0 // pred_check_branch
    %13 = sbr.rel (0) target = $region13
  $region12: #{tpu_custom_call.1} parent=0 // pred_region
    _
  $region13: #{tpu_custom_call.1} parent=0 // pred_fallthru
    _
  %v15 = vld [vmem:[%s0] sm:$0xff]
  %v16 = vld [vmem:[%s0 + $0x8] sm:$0xff]
  %v17 = vld [vmem:[%s0 + $0x10] sm:$0xff]
  %v18 = vld [vmem:[%s0 + $0x18] sm:$0xff]
  %v19 = vld [vmem:[%s0 + $0x20] sm:$0xff]
  %v20 = vld [vmem:[%s0 + $0x28] sm:$0xff]
  %v21 = vld [vmem:[%s0 + $0x30] sm:$0xff]
  %v22 = vld [vmem:[%s0 + $0x38] sm:$0xff]
  %v23 = vld [vmem:[%s0 + $0x40] sm:$0xff]
  %v24 = vld [vmem:[%s0 + $0x48] sm:$0xff]
  %v25 = vld [vmem:[%s0 + $0x50] sm:$0xff]
  %v26 = vld [vmem:[%s0 + $0x58] sm:$0xff]
  %v27 = vld [vmem:[%s0 + $0x60] sm:$0xff]
  %v28 = vld [vmem:[%s0 + $0x68] sm:$0xff]
  %v29 = vld [vmem:[%s0 + $0x70] sm:$0xff]
  %v30 = vld [vmem:[%s0 + $0x78] sm:$0xff]
  %v31 = vld [vmem:[%s0 + $0x80] sm:$0xff]
  %v32 = vld [vmem:[%s0 + $0x88] sm:$0xff]
  %v33 = vld [vmem:[%s0 + $0x90] sm:$0xff]
  %v34 = vld [vmem:[%s0 + $0x98] sm:$0xff]
  %v35 = vld [vmem:[%s0 + $0xa0] sm:$0xff]
  %v36 = vld [vmem:[%s0 + $0xa8] sm:$0xff]
  %v37 = vld [vmem:[%s0 + $0xb0] sm:$0xff]
  %v38 = vld [vmem:[%s0 + $0xb8] sm:$0xff]
  %v39 = vld [vmem:[%s0 + $0xc0] sm:$0xff]
  %v40 = vld [vmem:[%s0 + $0xc8] sm:$0xff]
  %v41 = vld [vmem:[%s0 + $0xd0] sm:$0xff]
  %v42 = vld [vmem:[%s0 + $0xd8] sm:$0xff]
  %v43 = vld [vmem:[%s0 + $0xe0] sm:$0xff]
  %v44 = vld [vmem:[%s0 + $0xe8] sm:$0xff]
  %v45 = vld [vmem:[%s0 + $0xf0] sm:$0xff]
  %v46 = vld [vmem:[%s0 + $0xf8] sm:$0xff]
  %v47 = vld [vmem:[%s0 + $0x100] sm:$0xff]
  %v48 = vld [vmem:[%s0 + $0x108] sm:$0xff]
  %v49 = vld [vmem:[%s0 + $0x110] sm:$0xff]
  %v50 = vld [vmem:[%s0 + $0x118] sm:$0xff]
  %v51 = vld [vmem:[%s0 + $0x120] sm:$0xff]
  %v52 = vld [vmem:[%s0 + $0x128] sm:$0xff]
  %v53 = vld [vmem:[%s0 + $0x130] sm:$0xff]
  %v54 = vld [vmem:[%s0 + $0x138] sm:$0xff]
  %v55 = vld [vmem:[%s0 + $0x140] sm:$0xff]
  %v56 = vld [vmem:[%s0 + $0x148] sm:$0xff]
  %v57 = vld [vmem:[%s0 + $0x150] sm:$0xff]
  %v58 = vld [vmem:[%s0 + $0x158] sm:$0xff]
  %v59 = vld [vmem:[%s0 + $0x160] sm:$0xff]
  %v60 = vld [vmem:[%s0 + $0x168] sm:$0xff]
  %v61 = vld [vmem:[%s0 + $0x170] sm:$0xff]
  %v62 = vld [vmem:[%s0 + $0x178] sm:$0xff]
  %v63 = vld [vmem:[%s0 + $0x180] sm:$0xff]
  %v64 = vld [vmem:[%s0 + $0x188] sm:$0xff]
  %v65 = vld [vmem:[%s0 + $0x190] sm:$0xff]
  %v66 = vld [vmem:[%s0 + $0x198] sm:$0xff]
  %v67 = vld [vmem:[%s0 + $0x1a0] sm:$0xff]
  %v68 = vld [vmem:[%s0 + $0x1a8] sm:$0xff]
  %v69 = vld [vmem:[%s0 + $0x1b0] sm:$0xff]
  %v70 = vld [vmem:[%s0 + $0x1b8] sm:$0xff]
  %v71 = vld [vmem:[%s0 + $0x1c0] sm:$0xff]
  %v72 = vld [vmem:[%s0 + $0x1c8] sm:$0xff]
  %v73 = vld [vmem:[%s0 + $0x1d0] sm:$0xff]
  %v74 = vld [vmem:[%s0 + $0x1d8] sm:$0xff]
  %v75 = vld [vmem:[%s0 + $0x1e0] sm:$0xff]
  %v76 = vld [vmem:[%s0 + $0x1e8] sm:$0xff]
  %v77 = vld [vmem:[%s0 + $0x1f0] sm:$0xff]
  %v78 = vld [vmem:[%s0 + $0x1f8] sm:$0xff]
  %v79 = vld [vmem:[%s0 + $0x200] sm:$0xff]
  %v80 = vld [vmem:[%s0 + $0x208] sm:$0xff]
  %v81 = vld [vmem:[%s0 + $0x210] sm:$0xff]
  %v82 = vld [vmem:[%s0 + $0x218] sm:$0xff]
  %v83 = vld [vmem:[%s0 + $0x220] sm:$0xff]
  %v84 = vld [vmem:[%s0 + $0x228] sm:$0xff]
  %v85 = vld [vmem:[%s0 + $0x230] sm:$0xff]
  %v86 = vld [vmem:[%s0 + $0x238] sm:$0xff]
  %v87 = vld [vmem:[%s0 + $0x240] sm:$0xff]
  %v88 = vld [vmem:[%s0 + $0x248] sm:$0xff]
  %v89 = vld [vmem:[%s0 + $0x250] sm:$0xff]
  %v90 = vld [vmem:[%s0 + $0x258] sm:$0xff]
  %v91 = vld [vmem:[%s0 + $0x260] sm:$0xff]
  %v92 = vld [vmem:[%s0 + $0x268] sm:$0xff]
  %v93 = vld [vmem:[%s0 + $0x270] sm:$0xff]
  %v94 = vld [vmem:[%s0 + $0x278] sm:$0xff]
  %v95 = vld [vmem:[%s0 + $0x280] sm:$0xff]
  %v96 = vld [vmem:[%s0 + $0x288] sm:$0xff]
  %v97 = vld [vmem:[%s0 + $0x290] sm:$0xff]
  %v98 = vld [vmem:[%s0 + $0x298] sm:$0xff]
  %v99 = vld [vmem:[%s0 + $0x2a0] sm:$0xff]
  %v100 = vld [vmem:[%s0 + $0x2a8] sm:$0xff]
  %v101 = vld [vmem:[%s0 + $0x2b0] sm:$0xff]
  %v102 = vld [vmem:[%s0 + $0x2b8] sm:$0xff]
  %v103 = vld [vmem:[%s0 + $0x2c0] sm:$0xff]
  %v104 = vld [vmem:[%s0 + $0x2c8] sm:$0xff]
  %v105 = vld [vmem:[%s0 + $0x2d0] sm:$0xff]
  %v106 = vld [vmem:[%s0 + $0x2d8] sm:$0xff]
  %v107 = vld [vmem:[%s0 + $0x2e0] sm:$0xff]
  %v108 = vld [vmem:[%s0 + $0x2e8] sm:$0xff]
  %v109 = vld [vmem:[%s0 + $0x2f0] sm:$0xff]
  %v110 = vld [vmem:[%s0 + $0x2f8] sm:$0xff]
  %v111 = vld [vmem:[%s0 + $0x300] sm:$0xff]
  %v112 = vld [vmem:[%s0 + $0x308] sm:$0xff]
  %v113 = vld [vmem:[%s0 + $0x310] sm:$0xff]
  %v114 = vld [vmem:[%s0 + $0x318] sm:$0xff]
  %v115 = vld [vmem:[%s0 + $0x320] sm:$0xff]
  %v116 = vld [vmem:[%s0 + $0x328] sm:$0xff]
  %v117 = vld [vmem:[%s0 + $0x330] sm:$0xff]
  %v118 = vld [vmem:[%s0 + $0x338] sm:$0xff]
  %v119 = vld [vmem:[%s0 + $0x340] sm:$0xff]
  %v120 = vld [vmem:[%s0 + $0x348] sm:$0xff]
  %v121 = vld [vmem:[%s0 + $0x350] sm:$0xff]
  %v122 = vld [vmem:[%s0 + $0x358] sm:$0xff]
  %v123 = vld [vmem:[%s0 + $0x360] sm:$0xff]
  %v124 = vld [vmem:[%s0 + $0x368] sm:$0xff]
  %v125 = vld [vmem:[%s0 + $0x370] sm:$0xff]
  %v126 = vld [vmem:[%s0 + $0x378] sm:$0xff]
  %v127 = vld [vmem:[%s0 + $0x380] sm:$0xff]
  %v128 = vld [vmem:[%s0 + $0x388] sm:$0xff]
  %v129 = vld [vmem:[%s0 + $0x390] sm:$0xff]
  %v130 = vld [vmem:[%s0 + $0x398] sm:$0xff]
  %v131 = vld [vmem:[%s0 + $0x3a0] sm:$0xff]
  %v132 = vld [vmem:[%s0 + $0x3a8] sm:$0xff]
  %v133 = vld [vmem:[%s0 + $0x3b0] sm:$0xff]
  %v134 = vld [vmem:[%s0 + $0x3b8] sm:$0xff]
  %v135 = vld [vmem:[%s0 + $0x3c0] sm:$0xff]
  %v136 = vld [vmem:[%s0 + $0x3c8] sm:$0xff]
  %v137 = vld [vmem:[%s0 + $0x3d0] sm:$0xff]
  %v138 = vld [vmem:[%s0 + $0x3d8] sm:$0xff]
  %v139 = vld [vmem:[%s0 + $0x3e0] sm:$0xff]
  %v140 = vld [vmem:[%s0 + $0x3e8] sm:$0xff]
  %v141 = vld [vmem:[%s0 + $0x3f0] sm:$0xff]
  %v142 = vld [vmem:[%s0 + $0x3f8] sm:$0xff]
  %v143 = vld [vmem:[%s0 + $0x400] sm:$0xff]
  %v144 = vld [vmem:[%s0 + $0x408] sm:$0xff]
  %v145 = vld [vmem:[%s0 + $0x410] sm:$0xff]
  %v146 = vld [vmem:[%s0 + $0x418] sm:$0xff]
  %v147 = vld [vmem:[%s0 + $0x420] sm:$0xff]
  %v148 = vld [vmem:[%s0 + $0x428] sm:$0xff]
  %v149 = vld [vmem:[%s0 + $0x430] sm:$0xff]
  %v150 = vld [vmem:[%s0 + $0x438] sm:$0xff]
  %v151 = vld [vmem:[%s0 + $0x440] sm:$0xff]
  %v152 = vld [vmem:[%s0 + $0x448] sm:$0xff]
  %v153 = vld [vmem:[%s0 + $0x450] sm:$0xff]
  %v154 = vld [vmem:[%s0 + $0x458] sm:$0xff]
  %v155 = vld [vmem:[%s0 + $0x460] sm:$0xff]
  %v156 = vld [vmem:[%s0 + $0x468] sm:$0xff]
  %v157 = vld [vmem:[%s0 + $0x470] sm:$0xff]
  %v158 = vld [vmem:[%s0 + $0x478] sm:$0xff]
  %v159 = vld [vmem:[%s0 + $0x480] sm:$0xff]
  %v160 = vld [vmem:[%s0 + $0x488] sm:$0xff]
  %v161 = vld [vmem:[%s0 + $0x490] sm:$0xff]
  %v162 = vld [vmem:[%s0 + $0x498] sm:$0xff]
  %v163 = vld [vmem:[%s0 + $0x4a0] sm:$0xff]
  %v164 = vld [vmem:[%s0 + $0x4a8] sm:$0xff]
  %v165 = vld [vmem:[%s0 + $0x4b0] sm:$0xff]
  %v166 = vld [vmem:[%s0 + $0x4b8] sm:$0xff]
  %v167 = vld [vmem:[%s0 + $0x4c0] sm:$0xff]
  %v168 = vld [vmem:[%s0 + $0x4c8] sm:$0xff]
  %v169 = vld [vmem:[%s0 + $0x4d0] sm:$0xff]
  %v170 = vld [vmem:[%s0 + $0x4d8] sm:$0xff]
  %v171 = vld [vmem:[%s0 + $0x4e0] sm:$0xff]
  %v172 = vld [vmem:[%s0 + $0x4e8] sm:$0xff]
  %v173 = vld [vmem:[%s0 + $0x4f0] sm:$0xff]
  %v174 = vld [vmem:[%s0 + $0x4f8] sm:$0xff]
  %v175 = vld [vmem:[%s0 + $0x500] sm:$0xff]
  %v176 = vld [vmem:[%s0 + $0x508] sm:$0xff]
  %v177 = vld [vmem:[%s0 + $0x510] sm:$0xff]
  %v178 = vld [vmem:[%s0 + $0x518] sm:$0xff]
  %v179 = vld [vmem:[%s0 + $0x520] sm:$0xff]
  %v180 = vld [vmem:[%s0 + $0x528] sm:$0xff]
  %v181 = vld [vmem:[%s0 + $0x530] sm:$0xff]
  %v182 = vld [vmem:[%s0 + $0x538] sm:$0xff]
  %v183 = vld [vmem:[%s0 + $0x540] sm:$0xff]
  %v184 = vld [vmem:[%s0 + $0x548] sm:$0xff]
  %v185 = vld [vmem:[%s0 + $0x550] sm:$0xff]
  %v186 = vld [vmem:[%s0 + $0x558] sm:$0xff]
  %v187 = vld [vmem:[%s0 + $0x560] sm:$0xff]
  %v188 = vld [vmem:[%s0 + $0x568] sm:$0xff]
  %v189 = vld [vmem:[%s0 + $0x570] sm:$0xff]
  %v190 = vld [vmem:[%s0 + $0x578] sm:$0xff]
  %v191 = vld [vmem:[%s0 + $0x580] sm:$0xff]
  %v192 = vld [vmem:[%s0 + $0x588] sm:$0xff]
  %v193 = vld [vmem:[%s0 + $0x590] sm:$0xff]
  %v194 = vld [vmem:[%s0 + $0x598] sm:$0xff]
  %v195 = vld [vmem:[%s0 + $0x5a0] sm:$0xff]
  %v196 = vld [vmem:[%s0 + $0x5a8] sm:$0xff]
  %v197 = vld [vmem:[%s0 + $0x5b0] sm:$0xff]
  %v198 = vld [vmem:[%s0 + $0x5b8] sm:$0xff]
  %v199 = vld [vmem:[%s0 + $0x5c0] sm:$0xff]
  %v200 = vld [vmem:[%s0 + $0x5c8] sm:$0xff]
  %v201 = vld [vmem:[%s0 + $0x5d0] sm:$0xff]
  %v202 = vld [vmem:[%s0 + $0x5d8] sm:$0xff]
  %v203 = vld [vmem:[%s0 + $0x5e0] sm:$0xff]
  %v204 = vld [vmem:[%s0 + $0x5e8] sm:$0xff]
  %v205 = vld [vmem:[%s0 + $0x5f0] sm:$0xff]
  %v206 = vld [vmem:[%s0 + $0x5f8] sm:$0xff]
  %v207 = vld [vmem:[%s0 + $0x600] sm:$0xff]
  %v208 = vld [vmem:[%s0 + $0x608] sm:$0xff]
  %v209 = vld [vmem:[%s0 + $0x610] sm:$0xff]
  %v210 = vld [vmem:[%s0 + $0x618] sm:$0xff]
  %v211 = vld [vmem:[%s0 + $0x620] sm:$0xff]
  %v212 = vld [vmem:[%s0 + $0x628] sm:$0xff]
  %v213 = vld [vmem:[%s0 + $0x630] sm:$0xff]
  %v214 = vld [vmem:[%s0 + $0x638] sm:$0xff]
  %v215 = vld [vmem:[%s0 + $0x640] sm:$0xff]
  %v216 = vld [vmem:[%s0 + $0x648] sm:$0xff]
  %v217 = vld [vmem:[%s0 + $0x650] sm:$0xff]
  %v218 = vld [vmem:[%s0 + $0x658] sm:$0xff]
  %v219 = vld [vmem:[%s0 + $0x660] sm:$0xff]
  %v220 = vld [vmem:[%s0 + $0x668] sm:$0xff]
  %v221 = vld [vmem:[%s0 + $0x670] sm:$0xff]
  %v222 = vld [vmem:[%s0 + $0x678] sm:$0xff]
  %v223 = vld [vmem:[%s0 + $0x680] sm:$0xff]
  %v224 = vld [vmem:[%s0 + $0x688] sm:$0xff]
  %v225 = vld [vmem:[%s0 + $0x690] sm:$0xff]
  %v226 = vld [vmem:[%s0 + $0x698] sm:$0xff]
  %v227 = vld [vmem:[%s0 + $0x6a0] sm:$0xff]
  %v228 = vld [vmem:[%s0 + $0x6a8] sm:$0xff]
  %v229 = vld [vmem:[%s0 + $0x6b0] sm:$0xff]
  %v230 = vld [vmem:[%s0 + $0x6b8] sm:$0xff]
  %v231 = vld [vmem:[%s0 + $0x6c0] sm:$0xff]
  %v232 = vld [vmem:[%s0 + $0x6c8] sm:$0xff]
  %v233 = vld [vmem:[%s0 + $0x6d0] sm:$0xff]
  %v234 = vld [vmem:[%s0 + $0x6d8] sm:$0xff]
  %v235 = vld [vmem:[%s0 + $0x6e0] sm:$0xff]
  %v236 = vld [vmem:[%s0 + $0x6e8] sm:$0xff]
  %v237 = vld [vmem:[%s0 + $0x6f0] sm:$0xff]
  %v238 = vld [vmem:[%s0 + $0x6f8] sm:$0xff]
  %v239 = vld [vmem:[%s0 + $0x700] sm:$0xff]
  %v240 = vld [vmem:[%s0 + $0x708] sm:$0xff]
  %v241 = vld [vmem:[%s0 + $0x710] sm:$0xff]
  %v242 = vld [vmem:[%s0 + $0x718] sm:$0xff]
  %v243 = vld [vmem:[%s0 + $0x720] sm:$0xff]
  %v244 = vld [vmem:[%s0 + $0x728] sm:$0xff]
  %v245 = vld [vmem:[%s0 + $0x730] sm:$0xff]
  %v246 = vld [vmem:[%s0 + $0x738] sm:$0xff]
  %v247 = vld [vmem:[%s0 + $0x740] sm:$0xff]
  %v248 = vld [vmem:[%s0 + $0x748] sm:$0xff]
  %v249 = vld [vmem:[%s0 + $0x750] sm:$0xff]
  %v250 = vld [vmem:[%s0 + $0x758] sm:$0xff]
  %v251 = vld [vmem:[%s0 + $0x760] sm:$0xff]
  %v252 = vld [vmem:[%s0 + $0x768] sm:$0xff]
  %v253 = vld [vmem:[%s0 + $0x770] sm:$0xff]
  %v254 = vld [vmem:[%s0 + $0x778] sm:$0xff]
  %v255 = vld [vmem:[%s0 + $0x780] sm:$0xff]
  %v256 = vld [vmem:[%s0 + $0x788] sm:$0xff]
  %v257 = vld [vmem:[%s0 + $0x790] sm:$0xff]
  %v258 = vld [vmem:[%s0 + $0x798] sm:$0xff]
  %v259 = vld [vmem:[%s0 + $0x7a0] sm:$0xff]
  %v260 = vld [vmem:[%s0 + $0x7a8] sm:$0xff]
  %v261 = vld [vmem:[%s0 + $0x7b0] sm:$0xff]
  %v262 = vld [vmem:[%s0 + $0x7b8] sm:$0xff]
  %v263 = vld [vmem:[%s0 + $0x7c0] sm:$0xff]
  %v264 = vld [vmem:[%s0 + $0x7c8] sm:$0xff]
  %v265 = vld [vmem:[%s0 + $0x7d0] sm:$0xff]
  %v266 = vld [vmem:[%s0 + $0x7d8] sm:$0xff]
  %v267 = vld [vmem:[%s0 + $0x7e0] sm:$0xff]
  %v268 = vld [vmem:[%s0 + $0x7e8] sm:$0xff]
  %v269 = vld [vmem:[%s0 + $0x7f0] sm:$0xff]
  %v270 = vld [vmem:[%s0 + $0x7f8] sm:$0xff]
  %v271 = vld [vmem:[%s0 + $0x800] sm:$0xff]
  %v272 = vld [vmem:[%s0 + $0x808] sm:$0xff]
  %v273 = vld [vmem:[%s0 + $0x810] sm:$0xff]
  %v274 = vld [vmem:[%s0 + $0x818] sm:$0xff]
  %v275 = vld [vmem:[%s0 + $0x820] sm:$0xff]
  %v276 = vld [vmem:[%s0 + $0x828] sm:$0xff]
  %v277 = vld [vmem:[%s0 + $0x830] sm:$0xff]
  %v278 = vld [vmem:[%s0 + $0x838] sm:$0xff]
  %v279 = vld [vmem:[%s0 + $0x840] sm:$0xff]
  %v280 = vld [vmem:[%s0 + $0x848] sm:$0xff]
  %v281 = vld [vmem:[%s0 + $0x850] sm:$0xff]
  %v282 = vld [vmem:[%s0 + $0x858] sm:$0xff]
  %v283 = vld [vmem:[%s0 + $0x860] sm:$0xff]
  %v284 = vld [vmem:[%s0 + $0x868] sm:$0xff]
  %v285 = vld [vmem:[%s0 + $0x870] sm:$0xff]
  %v286 = vld [vmem:[%s0 + $0x878] sm:$0xff]
  %v287 = vld [vmem:[%s0 + $0x880] sm:$0xff]
  %v288 = vld [vmem:[%s0 + $0x888] sm:$0xff]
  %v289 = vld [vmem:[%s0 + $0x890] sm:$0xff]
  %v290 = vld [vmem:[%s0 + $0x898] sm:$0xff]
  %v291 = vld [vmem:[%s0 + $0x8a0] sm:$0xff]
  %v292 = vld [vmem:[%s0 + $0x8a8] sm:$0xff]
  %v293 = vld [vmem:[%s0 + $0x8b0] sm:$0xff]
  %v294 = vld [vmem:[%s0 + $0x8b8] sm:$0xff]
  %v295 = vld [vmem:[%s0 + $0x8c0] sm:$0xff]
  %v296 = vld [vmem:[%s0 + $0x8c8] sm:$0xff]
  %v297 = vld [vmem:[%s0 + $0x8d0] sm:$0xff]
  %v298 = vld [vmem:[%s0 + $0x8d8] sm:$0xff]
  %v299 = vld [vmem:[%s0 + $0x8e0] sm:$0xff]
  %v300 = vld [vmem:[%s0 + $0x8e8] sm:$0xff]
  %v301 = vld [vmem:[%s0 + $0x8f0] sm:$0xff]
  %v302 = vld [vmem:[%s0 + $0x8f8] sm:$0xff]
  %v303 = vxor.u32 %v15, 2147483648
  %v304 = vxor.u32 %v16, 2147483648
  %v305 = vxor.u32 %v17, 2147483648
  %v306 = vxor.u32 %v18, 2147483648
  %v307 = vxor.u32 %v19, 2147483648
  %v308 = vxor.u32 %v20, 2147483648
  %v309 = vxor.u32 %v21, 2147483648
  %v310 = vxor.u32 %v22, 2147483648
  %v311 = vxor.u32 %v23, 2147483648
  %v312 = vxor.u32 %v24, 2147483648
  %v313 = vxor.u32 %v25, 2147483648
  %v314 = vxor.u32 %v26, 2147483648
  %v315 = vxor.u32 %v27, 2147483648
  %v316 = vxor.u32 %v28, 2147483648
  %v317 = vxor.u32 %v29, 2147483648
  %v318 = vxor.u32 %v30, 2147483648
  %v319 = vxor.u32 %v31, 2147483648
  %v320 = vxor.u32 %v32, 2147483648
  %v321 = vxor.u32 %v33, 2147483648
  %v322 = vxor.u32 %v34, 2147483648
  %v323 = vxor.u32 %v35, 2147483648
  %v324 = vxor.u32 %v36, 2147483648
  %v325 = vxor.u32 %v37, 2147483648
  %v326 = vxor.u32 %v38, 2147483648
  %v327 = vxor.u32 %v39, 2147483648
  %v328 = vxor.u32 %v40, 2147483648
  %v329 = vxor.u32 %v41, 2147483648
  %v330 = vxor.u32 %v42, 2147483648
  %v331 = vxor.u32 %v43, 2147483648
  %v332 = vxor.u32 %v44, 2147483648
  %v333 = vxor.u32 %v45, 2147483648
  %v334 = vxor.u32 %v46, 2147483648
  %v335 = vxor.u32 %v47, 2147483648
  %v336 = vxor.u32 %v48, 2147483648
  %v337 = vxor.u32 %v49, 2147483648
  %v338 = vxor.u32 %v50, 2147483648
  %v339 = vxor.u32 %v51, 2147483648
  %v340 = vxor.u32 %v52, 2147483648
  %v341 = vxor.u32 %v53, 2147483648
  %v342 = vxor.u32 %v54, 2147483648
  %v343 = vxor.u32 %v55, 2147483648
  %v344 = vxor.u32 %v56, 2147483648
  %v345 = vxor.u32 %v57, 2147483648
  %v346 = vxor.u32 %v58, 2147483648
  %v347 = vxor.u32 %v59, 2147483648
  %v348 = vxor.u32 %v60, 2147483648
  %v349 = vxor.u32 %v61, 2147483648
  %v350 = vxor.u32 %v62, 2147483648
  %v351 = vxor.u32 %v63, 2147483648
  %v352 = vxor.u32 %v64, 2147483648
  %v353 = vxor.u32 %v65, 2147483648
  %v354 = vxor.u32 %v66, 2147483648
  %v355 = vxor.u32 %v67, 2147483648
  %v356 = vxor.u32 %v68, 2147483648
  %v357 = vxor.u32 %v69, 2147483648
  %v358 = vxor.u32 %v70, 2147483648
  %v359 = vxor.u32 %v71, 2147483648
  %v360 = vxor.u32 %v72, 2147483648
  %v361 = vxor.u32 %v73, 2147483648
  %v362 = vxor.u32 %v74, 2147483648
  %v363 = vxor.u32 %v75, 2147483648
  %v364 = vxor.u32 %v76, 2147483648
  %v365 = vxor.u32 %v77, 2147483648
  %v366 = vxor.u32 %v78, 2147483648
  %v367 = vxor.u32 %v79, 2147483648
  %v368 = vxor.u32 %v80, 2147483648
  %v369 = vxor.u32 %v81, 2147483648
  %v370 = vxor.u32 %v82, 2147483648
  %v371 = vxor.u32 %v83, 2147483648
  %v372 = vxor.u32 %v84, 2147483648
  %v373 = vxor.u32 %v85, 2147483648
  %v374 = vxor.u32 %v86, 2147483648
  %v375 = vxor.u32 %v87, 2147483648
  %v376 = vxor.u32 %v88, 2147483648
  %v377 = vxor.u32 %v89, 2147483648
  %v378 = vxor.u32 %v90, 2147483648
  %v379 = vxor.u32 %v91, 2147483648
  %v380 = vxor.u32 %v92, 2147483648
  %v381 = vxor.u32 %v93, 2147483648
  %v382 = vxor.u32 %v94, 2147483648
  %v383 = vxor.u32 %v95, 2147483648
  %v384 = vxor.u32 %v96, 2147483648
  %v385 = vxor.u32 %v97, 2147483648
  %v386 = vxor.u32 %v98, 2147483648
  %v387 = vxor.u32 %v99, 2147483648
  %v388 = vxor.u32 %v100, 2147483648
  %v389 = vxor.u32 %v101, 2147483648
  %v390 = vxor.u32 %v102, 2147483648
  %v391 = vxor.u32 %v103, 2147483648
  %v392 = vxor.u32 %v104, 2147483648
  %v393 = vxor.u32 %v105, 2147483648
  %v394 = vxor.u32 %v106, 2147483648
  %v395 = vxor.u32 %v107, 2147483648
  %v396 = vxor.u32 %v108, 2147483648
  %v397 = vxor.u32 %v109, 2147483648
  %v398 = vxor.u32 %v110, 2147483648
  %v399 = vxor.u32 %v111, 2147483648
  %v400 = vxor.u32 %v112, 2147483648
  %v401 = vxor.u32 %v113, 2147483648
  %v402 = vxor.u32 %v114, 2147483648
  %v403 = vxor.u32 %v115, 2147483648
  %v404 = vxor.u32 %v116, 2147483648
  %v405 = vxor.u32 %v117, 2147483648
  %v406 = vxor.u32 %v118, 2147483648
  %v407 = vxor.u32 %v119, 2147483648
  %v408 = vxor.u32 %v120, 2147483648
  %v409 = vxor.u32 %v121, 2147483648
  %v410 = vxor.u32 %v122, 2147483648
  %v411 = vxor.u32 %v123, 2147483648
  %v412 = vxor.u32 %v124, 2147483648
  %v413 = vxor.u32 %v125, 2147483648
  %v414 = vxor.u32 %v126, 2147483648
  %v415 = vxor.u32 %v127, 2147483648
  %v416 = vxor.u32 %v128, 2147483648
  %v417 = vxor.u32 %v129, 2147483648
  %v418 = vxor.u32 %v130, 2147483648
  %v419 = vxor.u32 %v131, 2147483648
  %v420 = vxor.u32 %v132, 2147483648
  %v421 = vxor.u32 %v133, 2147483648
  %v422 = vxor.u32 %v134, 2147483648
  %v423 = vxor.u32 %v135, 2147483648
  %v424 = vxor.u32 %v136, 2147483648
  %v425 = vxor.u32 %v137, 2147483648
  %v426 = vxor.u32 %v138, 2147483648
  %v427 = vxor.u32 %v139, 2147483648
  %v428 = vxor.u32 %v140, 2147483648
  %v429 = vxor.u32 %v141, 2147483648
  %v430 = vxor.u32 %v142, 2147483648
  %v431 = vxor.u32 %v143, 2147483648
  %v432 = vxor.u32 %v144, 2147483648
  %v433 = vxor.u32 %v145, 2147483648
  %v434 = vxor.u32 %v146, 2147483648
  %v435 = vxor.u32 %v147, 2147483648
  %v436 = vxor.u32 %v148, 2147483648
  %v437 = vxor.u32 %v149, 2147483648
  %v438 = vxor.u32 %v150, 2147483648
  %v439 = vxor.u32 %v151, 2147483648
  %v440 = vxor.u32 %v152, 2147483648
  %v441 = vxor.u32 %v153, 2147483648
  %v442 = vxor.u32 %v154, 2147483648
  %v443 = vxor.u32 %v155, 2147483648
  %v444 = vxor.u32 %v156, 2147483648
  %v445 = vxor.u32 %v157, 2147483648
  %v446 = vxor.u32 %v158, 2147483648
  %v447 = vxor.u32 %v159, 2147483648
  %v448 = vxor.u32 %v160, 2147483648
  %v449 = vxor.u32 %v161, 2147483648
  %v450 = vxor.u32 %v162, 2147483648
  %v451 = vxor.u32 %v163, 2147483648
  %v452 = vxor.u32 %v164, 2147483648
  %v453 = vxor.u32 %v165, 2147483648
  %v454 = vxor.u32 %v166, 2147483648
  %v455 = vxor.u32 %v167, 2147483648
  %v456 = vxor.u32 %v168, 2147483648
  %v457 = vxor.u32 %v169, 2147483648
  %v458 = vxor.u32 %v170, 2147483648
  %v459 = vxor.u32 %v171, 2147483648
  %v460 = vxor.u32 %v172, 2147483648
  %v461 = vxor.u32 %v173, 2147483648
  %v462 = vxor.u32 %v174, 2147483648
  %v463 = vxor.u32 %v175, 2147483648
  %v464 = vxor.u32 %v176, 2147483648
  %v465 = vxor.u32 %v177, 2147483648
  %v466 = vxor.u32 %v178, 2147483648
  %v467 = vxor.u32 %v179, 2147483648
  %v468 = vxor.u32 %v180, 2147483648
  %v469 = vxor.u32 %v181, 2147483648
  %v470 = vxor.u32 %v182, 2147483648
  %v471 = vxor.u32 %v183, 2147483648
  %v472 = vxor.u32 %v184, 2147483648
  %v473 = vxor.u32 %v185, 2147483648
  %v474 = vxor.u32 %v186, 2147483648
  %v475 = vxor.u32 %v187, 2147483648
  %v476 = vxor.u32 %v188, 2147483648
  %v477 = vxor.u32 %v189, 2147483648
  %v478 = vxor.u32 %v190, 2147483648
  %v479 = vxor.u32 %v191, 2147483648
  %v480 = vxor.u32 %v192, 2147483648
  %v481 = vxor.u32 %v193, 2147483648
  %v482 = vxor.u32 %v194, 2147483648
  %v483 = vxor.u32 %v195, 2147483648
  %v484 = vxor.u32 %v196, 2147483648
  %v485 = vxor.u32 %v197, 2147483648
  %v486 = vxor.u32 %v198, 2147483648
  %v487 = vxor.u32 %v199, 2147483648
  %v488 = vxor.u32 %v200, 2147483648
  %v489 = vxor.u32 %v201, 2147483648
  %v490 = vxor.u32 %v202, 2147483648
  %v491 = vxor.u32 %v203, 2147483648
  %v492 = vxor.u32 %v204, 2147483648
  %v493 = vxor.u32 %v205, 2147483648
  %v494 = vxor.u32 %v206, 2147483648
  %v495 = vxor.u32 %v207, 2147483648
  %v496 = vxor.u32 %v208, 2147483648
  %v497 = vxor.u32 %v209, 2147483648
  %v498 = vxor.u32 %v210, 2147483648
  %v499 = vxor.u32 %v211, 2147483648
  %v500 = vxor.u32 %v212, 2147483648
  %v501 = vxor.u32 %v213, 2147483648
  %v502 = vxor.u32 %v214, 2147483648
  %v503 = vxor.u32 %v215, 2147483648
  %v504 = vxor.u32 %v216, 2147483648
  %v505 = vxor.u32 %v217, 2147483648
  %v506 = vxor.u32 %v218, 2147483648
  %v507 = vxor.u32 %v219, 2147483648
  %v508 = vxor.u32 %v220, 2147483648
  %v509 = vxor.u32 %v221, 2147483648
  %v510 = vxor.u32 %v222, 2147483648
  %v511 = vxor.u32 %v223, 2147483648
  %v512 = vxor.u32 %v224, 2147483648
  %v513 = vxor.u32 %v225, 2147483648
  %v514 = vxor.u32 %v226, 2147483648
  %v515 = vxor.u32 %v227, 2147483648
  %v516 = vxor.u32 %v228, 2147483648
  %v517 = vxor.u32 %v229, 2147483648
  %v518 = vxor.u32 %v230, 2147483648
  %v519 = vxor.u32 %v231, 2147483648
  %v520 = vxor.u32 %v232, 2147483648
  %v521 = vxor.u32 %v233, 2147483648
  %v522 = vxor.u32 %v234, 2147483648
  %v523 = vxor.u32 %v235, 2147483648
  %v524 = vxor.u32 %v236, 2147483648
  %v525 = vxor.u32 %v237, 2147483648
  %v526 = vxor.u32 %v238, 2147483648
  %v527 = vxor.u32 %v239, 2147483648
  %v528 = vxor.u32 %v240, 2147483648
  %v529 = vxor.u32 %v241, 2147483648
  %v530 = vxor.u32 %v242, 2147483648
  %v531 = vxor.u32 %v243, 2147483648
  %v532 = vxor.u32 %v244, 2147483648
  %v533 = vxor.u32 %v245, 2147483648
  %v534 = vxor.u32 %v246, 2147483648
  %v535 = vxor.u32 %v247, 2147483648
  %v536 = vxor.u32 %v248, 2147483648
  %v537 = vxor.u32 %v249, 2147483648
  %v538 = vxor.u32 %v250, 2147483648
  %v539 = vxor.u32 %v251, 2147483648
  %v540 = vxor.u32 %v252, 2147483648
  %v541 = vxor.u32 %v253, 2147483648
  %v542 = vxor.u32 %v254, 2147483648
  %v543 = vxor.u32 %v255, 2147483648
  %v544 = vxor.u32 %v256, 2147483648
  %v545 = vxor.u32 %v257, 2147483648
  %v546 = vxor.u32 %v258, 2147483648
  %v547 = vxor.u32 %v259, 2147483648
  %v548 = vxor.u32 %v260, 2147483648
  %v549 = vxor.u32 %v261, 2147483648
  %v550 = vxor.u32 %v262, 2147483648
  %v551 = vxor.u32 %v263, 2147483648
  %v552 = vxor.u32 %v264, 2147483648
  %v553 = vxor.u32 %v265, 2147483648
  %v554 = vxor.u32 %v266, 2147483648
  %v555 = vxor.u32 %v267, 2147483648
  %v556 = vxor.u32 %v268, 2147483648
  %v557 = vxor.u32 %v269, 2147483648
  %v558 = vxor.u32 %v270, 2147483648
  %v559 = vxor.u32 %v271, 2147483648
  %v560 = vxor.u32 %v272, 2147483648
  %v561 = vxor.u32 %v273, 2147483648
  %v562 = vxor.u32 %v274, 2147483648
  %v563 = vxor.u32 %v275, 2147483648
  %v564 = vxor.u32 %v276, 2147483648
  %v565 = vxor.u32 %v277, 2147483648
  %v566 = vxor.u32 %v278, 2147483648
  %v567 = vxor.u32 %v279, 2147483648
  %v568 = vxor.u32 %v280, 2147483648
  %v569 = vxor.u32 %v281, 2147483648
  %v570 = vxor.u32 %v282, 2147483648
  %v571 = vxor.u32 %v283, 2147483648
  %v572 = vxor.u32 %v284, 2147483648
  %v573 = vxor.u32 %v285, 2147483648
  %v574 = vxor.u32 %v286, 2147483648
  %v575 = vxor.u32 %v287, 2147483648
  %v576 = vxor.u32 %v288, 2147483648
  %v577 = vxor.u32 %v289, 2147483648
  %v578 = vxor.u32 %v290, 2147483648
  %v579 = vxor.u32 %v291, 2147483648
  %v580 = vxor.u32 %v292, 2147483648
  %v581 = vxor.u32 %v293, 2147483648
  %v582 = vxor.u32 %v294, 2147483648
  %v583 = vxor.u32 %v295, 2147483648
  %v584 = vxor.u32 %v296, 2147483648
  %v585 = vxor.u32 %v297, 2147483648
  %v586 = vxor.u32 %v298, 2147483648
  %v587 = vxor.u32 %v299, 2147483648
  %v588 = vxor.u32 %v300, 2147483648
  %v589 = vxor.u32 %v301, 2147483648
  %v590 = vxor.u32 %v302, 2147483648
  %v591 = vmul.f32 %v303, 1.442695
  %v592 = vpow.pop %v591
  %v593 = vmul.f32 %v304, 1.442695
  %v594 = vpow.pop %v593
  %v595 = vmul.f32 %v305, 1.442695
  %v596 = vpow.pop %v595
  %v597 = vmul.f32 %v306, 1.442695
  %v598 = vpow.pop %v597
  %v599 = vmul.f32 %v307, 1.442695
  %v600 = vpow.pop %v599
  %v601 = vmul.f32 %v308, 1.442695
  %v602 = vpow.pop %v601
  %v603 = vmul.f32 %v309, 1.442695
  %v604 = vpow.pop %v603
  %v605 = vmul.f32 %v310, 1.442695
  %v606 = vpow.pop %v605
  %v607 = vmul.f32 %v311, 1.442695
  %v608 = vpow.pop %v607
  %v609 = vmul.f32 %v312, 1.442695
  %v610 = vpow.pop %v609
  %v611 = vmul.f32 %v313, 1.442695
  %v612 = vpow.pop %v611
  %v613 = vmul.f32 %v314, 1.442695
  %v614 = vpow.pop %v613
  %v615 = vmul.f32 %v315, 1.442695
  %v616 = vpow.pop %v615
  %v617 = vmul.f32 %v316, 1.442695
  %v618 = vpow.pop %v617
  %v619 = vmul.f32 %v317, 1.442695
  %v620 = vpow.pop %v619
  %v621 = vmul.f32 %v318, 1.442695
  %v622 = vpow.pop %v621
  %v623 = vmul.f32 %v319, 1.442695
  %v624 = vpow.pop %v623
  %v625 = vmul.f32 %v320, 1.442695
  %v626 = vpow.pop %v625
  %v627 = vmul.f32 %v321, 1.442695
  %v628 = vpow.pop %v627
  %v629 = vmul.f32 %v322, 1.442695
  %v630 = vpow.pop %v629
  %v631 = vmul.f32 %v323, 1.442695
  %v632 = vpow.pop %v631
  %v633 = vmul.f32 %v324, 1.442695
  %v634 = vpow.pop %v633
  %v635 = vmul.f32 %v325, 1.442695
  %v636 = vpow.pop %v635
  %v637 = vmul.f32 %v326, 1.442695
  %v638 = vpow.pop %v637
  %v639 = vmul.f32 %v327, 1.442695
  %v640 = vpow.pop %v639
  %v641 = vmul.f32 %v328, 1.442695
  %v642 = vpow.pop %v641
  %v643 = vmul.f32 %v329, 1.442695
  %v644 = vpow.pop %v643
  %v645 = vmul.f32 %v330, 1.442695
  %v646 = vpow.pop %v645
  %v647 = vmul.f32 %v331, 1.442695
  %v648 = vpow.pop %v647
  %v649 = vmul.f32 %v332, 1.442695
  %v650 = vpow.pop %v649
  %v651 = vmul.f32 %v333, 1.442695
  %v652 = vpow.pop %v651
  %v653 = vmul.f32 %v334, 1.442695
  %v654 = vpow.pop %v653
  %v655 = vmul.f32 %v335, 1.442695
  %v656 = vpow.pop %v655
  %v657 = vmul.f32 %v336, 1.442695
  %v658 = vpow.pop %v657
  %v659 = vmul.f32 %v337, 1.442695
  %v660 = vpow.pop %v659
  %v661 = vmul.f32 %v338, 1.442695
  %v662 = vpow.pop %v661
  %v663 = vmul.f32 %v339, 1.442695
  %v664 = vpow.pop %v663
  %v665 = vmul.f32 %v340, 1.442695
  %v666 = vpow.pop %v665
  %v667 = vmul.f32 %v341, 1.442695
  %v668 = vpow.pop %v667
  %v669 = vmul.f32 %v342, 1.442695
  %v670 = vpow.pop %v669
  %v671 = vmul.f32 %v343, 1.442695
  %v672 = vpow.pop %v671
  %v673 = vmul.f32 %v344, 1.442695
  %v674 = vpow.pop %v673
  %v675 = vmul.f32 %v345, 1.442695
  %v676 = vpow.pop %v675
  %v677 = vmul.f32 %v346, 1.442695
  %v678 = vpow.pop %v677
  %v679 = vmul.f32 %v347, 1.442695
  %v680 = vpow.pop %v679
  %v681 = vmul.f32 %v348, 1.442695
  %v682 = vpow.pop %v681
  %v683 = vmul.f32 %v349, 1.442695
  %v684 = vpow.pop %v683
  %v685 = vmul.f32 %v350, 1.442695
  %v686 = vpow.pop %v685
  %v687 = vmul.f32 %v351, 1.442695
  %v688 = vpow.pop %v687
  %v689 = vmul.f32 %v352, 1.442695
  %v690 = vpow.pop %v689
  %v691 = vmul.f32 %v353, 1.442695
  %v692 = vpow.pop %v691
  %v693 = vmul.f32 %v354, 1.442695
  %v694 = vpow.pop %v693
  %v695 = vmul.f32 %v355, 1.442695
  %v696 = vpow.pop %v695
  %v697 = vmul.f32 %v356, 1.442695
  %v698 = vpow.pop %v697
  %v699 = vmul.f32 %v357, 1.442695
  %v700 = vpow.pop %v699
  %v701 = vmul.f32 %v358, 1.442695
  %v702 = vpow.pop %v701
  %v703 = vmul.f32 %v359, 1.442695
  %v704 = vpow.pop %v703
  %v705 = vmul.f32 %v360, 1.442695
  %v706 = vpow.pop %v705
  %v707 = vmul.f32 %v361, 1.442695
  %v708 = vpow.pop %v707
  %v709 = vmul.f32 %v362, 1.442695
  %v710 = vpow.pop %v709
  %v711 = vmul.f32 %v363, 1.442695
  %v712 = vpow.pop %v711
  %v713 = vmul.f32 %v364, 1.442695
  %v714 = vpow.pop %v713
  %v715 = vmul.f32 %v365, 1.442695
  %v716 = vpow.pop %v715
  %v717 = vmul.f32 %v366, 1.442695
  %v718 = vpow.pop %v717
  %v719 = vmul.f32 %v367, 1.442695
  %v720 = vpow.pop %v719
  %v721 = vmul.f32 %v368, 1.442695
  %v722 = vpow.pop %v721
  %v723 = vmul.f32 %v369, 1.442695
  %v724 = vpow.pop %v723
  %v725 = vmul.f32 %v370, 1.442695
  %v726 = vpow.pop %v725
  %v727 = vmul.f32 %v371, 1.442695
  %v728 = vpow.pop %v727
  %v729 = vmul.f32 %v372, 1.442695
  %v730 = vpow.pop %v729
  %v731 = vmul.f32 %v373, 1.442695
  %v732 = vpow.pop %v731
  %v733 = vmul.f32 %v374, 1.442695
  %v734 = vpow.pop %v733
  %v735 = vmul.f32 %v375, 1.442695
  %v736 = vpow.pop %v735
  %v737 = vmul.f32 %v376, 1.442695
  %v738 = vpow.pop %v737
  %v739 = vmul.f32 %v377, 1.442695
  %v740 = vpow.pop %v739
  %v741 = vmul.f32 %v378, 1.442695
  %v742 = vpow.pop %v741
  %v743 = vmul.f32 %v379, 1.442695
  %v744 = vpow.pop %v743
  %v745 = vmul.f32 %v380, 1.442695
  %v746 = vpow.pop %v745
  %v747 = vmul.f32 %v381, 1.442695
  %v748 = vpow.pop %v747
  %v749 = vmul.f32 %v382, 1.442695
  %v750 = vpow.pop %v749
  %v751 = vmul.f32 %v383, 1.442695
  %v752 = vpow.pop %v751
  %v753 = vmul.f32 %v384, 1.442695
  %v754 = vpow.pop %v753
  %v755 = vmul.f32 %v385, 1.442695
  %v756 = vpow.pop %v755
  %v757 = vmul.f32 %v386, 1.442695
  %v758 = vpow.pop %v757
  %v759 = vmul.f32 %v387, 1.442695
  %v760 = vpow.pop %v759
  %v761 = vmul.f32 %v388, 1.442695
  %v762 = vpow.pop %v761
  %v763 = vmul.f32 %v389, 1.442695
  %v764 = vpow.pop %v763
  %v765 = vmul.f32 %v390, 1.442695
  %v766 = vpow.pop %v765
  %v767 = vmul.f32 %v391, 1.442695
  %v768 = vpow.pop %v767
  %v769 = vmul.f32 %v392, 1.442695
  %v770 = vpow.pop %v769
  %v771 = vmul.f32 %v393, 1.442695
  %v772 = vpow.pop %v771
  %v773 = vmul.f32 %v394, 1.442695
  %v774 = vpow.pop %v773
  %v775 = vmul.f32 %v395, 1.442695
  %v776 = vpow.pop %v775
  %v777 = vmul.f32 %v396, 1.442695
  %v778 = vpow.pop %v777
  %v779 = vmul.f32 %v397, 1.442695
  %v780 = vpow.pop %v779
  %v781 = vmul.f32 %v398, 1.442695
  %v782 = vpow.pop %v781
  %v783 = vmul.f32 %v399, 1.442695
  %v784 = vpow.pop %v783
  %v785 = vmul.f32 %v400, 1.442695
  %v786 = vpow.pop %v785
  %v787 = vmul.f32 %v401, 1.442695
  %v788 = vpow.pop %v787
  %v789 = vmul.f32 %v402, 1.442695
  %v790 = vpow.pop %v789
  %v791 = vmul.f32 %v403, 1.442695
  %v792 = vpow.pop %v791
  %v793 = vmul.f32 %v404, 1.442695
  %v794 = vpow.pop %v793
  %v795 = vmul.f32 %v405, 1.442695
  %v796 = vpow.pop %v795
  %v797 = vmul.f32 %v406, 1.442695
  %v798 = vpow.pop %v797
  %v799 = vmul.f32 %v407, 1.442695
  %v800 = vpow.pop %v799
  %v801 = vmul.f32 %v408, 1.442695
  %v802 = vpow.pop %v801
  %v803 = vmul.f32 %v409, 1.442695
  %v804 = vpow.pop %v803
  %v805 = vmul.f32 %v410, 1.442695
  %v806 = vpow.pop %v805
  %v807 = vmul.f32 %v411, 1.442695
  %v808 = vpow.pop %v807
  %v809 = vmul.f32 %v412, 1.442695
  %v810 = vpow.pop %v809
  %v811 = vmul.f32 %v413, 1.442695
  %v812 = vpow.pop %v811
  %v813 = vmul.f32 %v414, 1.442695
  %v814 = vpow.pop %v813
  %v815 = vmul.f32 %v415, 1.442695
  %v816 = vpow.pop %v815
  %v817 = vmul.f32 %v416, 1.442695
  %v818 = vpow.pop %v817
  %v819 = vmul.f32 %v417, 1.442695
  %v820 = vpow.pop %v819
  %v821 = vmul.f32 %v418, 1.442695
  %v822 = vpow.pop %v821
  %v823 = vmul.f32 %v419, 1.442695
  %v824 = vpow.pop %v823
  %v825 = vmul.f32 %v420, 1.442695
  %v826 = vpow.pop %v825
  %v827 = vmul.f32 %v421, 1.442695
  %v828 = vpow.pop %v827
  %v829 = vmul.f32 %v422, 1.442695
  %v830 = vpow.pop %v829
  %v831 = vmul.f32 %v423, 1.442695
  %v832 = vpow.pop %v831
  %v833 = vmul.f32 %v424, 1.442695
  %v834 = vpow.pop %v833
  %v835 = vmul.f32 %v425, 1.442695
  %v836 = vpow.pop %v835
  %v837 = vmul.f32 %v426, 1.442695
  %v838 = vpow.pop %v837
  %v839 = vmul.f32 %v427, 1.442695
  %v840 = vpow.pop %v839
  %v841 = vmul.f32 %v428, 1.442695
  %v842 = vpow.pop %v841
  %v843 = vmul.f32 %v429, 1.442695
  %v844 = vpow.pop %v843
  %v845 = vmul.f32 %v430, 1.442695
  %v846 = vpow.pop %v845
  %v847 = vmul.f32 %v431, 1.442695
  %v848 = vpow.pop %v847
  %v849 = vmul.f32 %v432, 1.442695
  %v850 = vpow.pop %v849
  %v851 = vmul.f32 %v433, 1.442695
  %v852 = vpow.pop %v851
  %v853 = vmul.f32 %v434, 1.442695
  %v854 = vpow.pop %v853
  %v855 = vmul.f32 %v435, 1.442695
  %v856 = vpow.pop %v855
  %v857 = vmul.f32 %v436, 1.442695
  %v858 = vpow.pop %v857
  %v859 = vmul.f32 %v437, 1.442695
  %v860 = vpow.pop %v859
  %v861 = vmul.f32 %v438, 1.442695
  %v862 = vpow.pop %v861
  %v863 = vmul.f32 %v439, 1.442695
  %v864 = vpow.pop %v863
  %v865 = vmul.f32 %v440, 1.442695
  %v866 = vpow.pop %v865
  %v867 = vmul.f32 %v441, 1.442695
  %v868 = vpow.pop %v867
  %v869 = vmul.f32 %v442, 1.442695
  %v870 = vpow.pop %v869
  %v871 = vmul.f32 %v443, 1.442695
  %v872 = vpow.pop %v871
  %v873 = vmul.f32 %v444, 1.442695
  %v874 = vpow.pop %v873
  %v875 = vmul.f32 %v445, 1.442695
  %v876 = vpow.pop %v875
  %v877 = vmul.f32 %v446, 1.442695
  %v878 = vpow.pop %v877
  %v879 = vmul.f32 %v447, 1.442695
  %v880 = vpow.pop %v879
  %v881 = vmul.f32 %v448, 1.442695
  %v882 = vpow.pop %v881
  %v883 = vmul.f32 %v449, 1.442695
  %v884 = vpow.pop %v883
  %v885 = vmul.f32 %v450, 1.442695
  %v886 = vpow.pop %v885
  %v887 = vmul.f32 %v451, 1.442695
  %v888 = vpow.pop %v887
  %v889 = vmul.f32 %v452, 1.442695
  %v890 = vpow.pop %v889
  %v891 = vmul.f32 %v453, 1.442695
  %v892 = vpow.pop %v891
  %v893 = vmul.f32 %v454, 1.442695
  %v894 = vpow.pop %v893
  %v895 = vmul.f32 %v455, 1.442695
  %v896 = vpow.pop %v895
  %v897 = vmul.f32 %v456, 1.442695
  %v898 = vpow.pop %v897
  %v899 = vmul.f32 %v457, 1.442695
  %v900 = vpow.pop %v899
  %v901 = vmul.f32 %v458, 1.442695
  %v902 = vpow.pop %v901
  %v903 = vmul.f32 %v459, 1.442695
  %v904 = vpow.pop %v903
  %v905 = vmul.f32 %v460, 1.442695
  %v906 = vpow.pop %v905
  %v907 = vmul.f32 %v461, 1.442695
  %v908 = vpow.pop %v907
  %v909 = vmul.f32 %v462, 1.442695
  %v910 = vpow.pop %v909
  %v911 = vmul.f32 %v463, 1.442695
  %v912 = vpow.pop %v911
  %v913 = vmul.f32 %v464, 1.442695
  %v914 = vpow.pop %v913
  %v915 = vmul.f32 %v465, 1.442695
  %v916 = vpow.pop %v915
  %v917 = vmul.f32 %v466, 1.442695
  %v918 = vpow.pop %v917
  %v919 = vmul.f32 %v467, 1.442695
  %v920 = vpow.pop %v919
  %v921 = vmul.f32 %v468, 1.442695
  %v922 = vpow.pop %v921
  %v923 = vmul.f32 %v469, 1.442695
  %v924 = vpow.pop %v923
  %v925 = vmul.f32 %v470, 1.442695
  %v926 = vpow.pop %v925
  %v927 = vmul.f32 %v471, 1.442695
  %v928 = vpow.pop %v927
  %v929 = vmul.f32 %v472, 1.442695
  %v930 = vpow.pop %v929
  %v931 = vmul.f32 %v473, 1.442695
  %v932 = vpow.pop %v931
  %v933 = vmul.f32 %v474, 1.442695
  %v934 = vpow.pop %v933
  %v935 = vmul.f32 %v475, 1.442695
  %v936 = vpow.pop %v935
  %v937 = vmul.f32 %v476, 1.442695
  %v938 = vpow.pop %v937
  %v939 = vmul.f32 %v477, 1.442695
  %v940 = vpow.pop %v939
  %v941 = vmul.f32 %v478, 1.442695
  %v942 = vpow.pop %v941
  %v943 = vmul.f32 %v479, 1.442695
  %v944 = vpow.pop %v943
  %v945 = vmul.f32 %v480, 1.442695
  %v946 = vpow.pop %v945
  %v947 = vmul.f32 %v481, 1.442695
  %v948 = vpow.pop %v947
  %v949 = vmul.f32 %v482, 1.442695
  %v950 = vpow.pop %v949
  %v951 = vmul.f32 %v483, 1.442695
  %v952 = vpow.pop %v951
  %v953 = vmul.f32 %v484, 1.442695
  %v954 = vpow.pop %v953
  %v955 = vmul.f32 %v485, 1.442695
  %v956 = vpow.pop %v955
  %v957 = vmul.f32 %v486, 1.442695
  %v958 = vpow.pop %v957
  %v959 = vmul.f32 %v487, 1.442695
  %v960 = vpow.pop %v959
  %v961 = vmul.f32 %v488, 1.442695
  %v962 = vpow.pop %v961
  %v963 = vmul.f32 %v489, 1.442695
  %v964 = vpow.pop %v963
  %v965 = vmul.f32 %v490, 1.442695
  %v966 = vpow.pop %v965
  %v967 = vmul.f32 %v491, 1.442695
  %v968 = vpow.pop %v967
  %v969 = vmul.f32 %v492, 1.442695
  %v970 = vpow.pop %v969
  %v971 = vmul.f32 %v493, 1.442695
  %v972 = vpow.pop %v971
  %v973 = vmul.f32 %v494, 1.442695
  %v974 = vpow.pop %v973
  %v975 = vmul.f32 %v495, 1.442695
  %v976 = vpow.pop %v975
  %v977 = vmul.f32 %v496, 1.442695
  %v978 = vpow.pop %v977
  %v979 = vmul.f32 %v497, 1.442695
  %v980 = vpow.pop %v979
  %v981 = vmul.f32 %v498, 1.442695
  %v982 = vpow.pop %v981
  %v983 = vmul.f32 %v499, 1.442695
  %v984 = vpow.pop %v983
  %v985 = vmul.f32 %v500, 1.442695
  %v986 = vpow.pop %v985
  %v987 = vmul.f32 %v501, 1.442695
  %v988 = vpow.pop %v987
  %v989 = vmul.f32 %v502, 1.442695
  %v990 = vpow.pop %v989
  %v991 = vmul.f32 %v503, 1.442695
  %v992 = vpow.pop %v991
  %v993 = vmul.f32 %v504, 1.442695
  %v994 = vpow.pop %v993
  %v995 = vmul.f32 %v505, 1.442695
  %v996 = vpow.pop %v995
  %v997 = vmul.f32 %v506, 1.442695
  %v998 = vpow.pop %v997
  %v999 = vmul.f32 %v507, 1.442695
  %v1000 = vpow.pop %v999
  %v1001 = vmul.f32 %v508, 1.442695
  %v1002 = vpow.pop %v1001
  %v1003 = vmul.f32 %v509, 1.442695
  %v1004 = vpow.pop %v1003
  %v1005 = vmul.f32 %v510, 1.442695
  %v1006 = vpow.pop %v1005
  %v1007 = vmul.f32 %v511, 1.442695
  %v1008 = vpow.pop %v1007
  %v1009 = vmul.f32 %v512, 1.442695
  %v1010 = vpow.pop %v1009
  %v1011 = vmul.f32 %v513, 1.442695
  %v1012 = vpow.pop %v1011
  %v1013 = vmul.f32 %v514, 1.442695
  %v1014 = vpow.pop %v1013
  %v1015 = vmul.f32 %v515, 1.442695
  %v1016 = vpow.pop %v1015
  %v1017 = vmul.f32 %v516, 1.442695
  %v1018 = vpow.pop %v1017
  %v1019 = vmul.f32 %v517, 1.442695
  %v1020 = vpow.pop %v1019
  %v1021 = vmul.f32 %v518, 1.442695
  %v1022 = vpow.pop %v1021
  %v1023 = vmul.f32 %v519, 1.442695
  %v1024 = vpow.pop %v1023
  %v1025 = vmul.f32 %v520, 1.442695
  %v1026 = vpow.pop %v1025
  %v1027 = vmul.f32 %v521, 1.442695
  %v1028 = vpow.pop %v1027
  %v1029 = vmul.f32 %v522, 1.442695
  %v1030 = vpow.pop %v1029
  %v1031 = vmul.f32 %v523, 1.442695
  %v1032 = vpow.pop %v1031
  %v1033 = vmul.f32 %v524, 1.442695
  %v1034 = vpow.pop %v1033
  %v1035 = vmul.f32 %v525, 1.442695
  %v1036 = vpow.pop %v1035
  %v1037 = vmul.f32 %v526, 1.442695
  %v1038 = vpow.pop %v1037
  %v1039 = vmul.f32 %v527, 1.442695
  %v1040 = vpow.pop %v1039
  %v1041 = vmul.f32 %v528, 1.442695
  %v1042 = vpow.pop %v1041
  %v1043 = vmul.f32 %v529, 1.442695
  %v1044 = vpow.pop %v1043
  %v1045 = vmul.f32 %v530, 1.442695
  %v1046 = vpow.pop %v1045
  %v1047 = vmul.f32 %v531, 1.442695
  %v1048 = vpow.pop %v1047
  %v1049 = vmul.f32 %v532, 1.442695
  %v1050 = vpow.pop %v1049
  %v1051 = vmul.f32 %v533, 1.442695
  %v1052 = vpow.pop %v1051
  %v1053 = vmul.f32 %v534, 1.442695
  %v1054 = vpow.pop %v1053
  %v1055 = vmul.f32 %v535, 1.442695
  %v1056 = vpow.pop %v1055
  %v1057 = vmul.f32 %v536, 1.442695
  %v1058 = vpow.pop %v1057
  %v1059 = vmul.f32 %v537, 1.442695
  %v1060 = vpow.pop %v1059
  %v1061 = vmul.f32 %v538, 1.442695
  %v1062 = vpow.pop %v1061
  %v1063 = vmul.f32 %v539, 1.442695
  %v1064 = vpow.pop %v1063
  %v1065 = vmul.f32 %v540, 1.442695
  %v1066 = vpow.pop %v1065
  %v1067 = vmul.f32 %v541, 1.442695
  %v1068 = vpow.pop %v1067
  %v1069 = vmul.f32 %v542, 1.442695
  %v1070 = vpow.pop %v1069
  %v1071 = vmul.f32 %v543, 1.442695
  %v1072 = vpow.pop %v1071
  %v1073 = vmul.f32 %v544, 1.442695
  %v1074 = vpow.pop %v1073
  %v1075 = vmul.f32 %v545, 1.442695
  %v1076 = vpow.pop %v1075
  %v1077 = vmul.f32 %v546, 1.442695
  %v1078 = vpow.pop %v1077
  %v1079 = vmul.f32 %v547, 1.442695
  %v1080 = vpow.pop %v1079
  %v1081 = vmul.f32 %v548, 1.442695
  %v1082 = vpow.pop %v1081
  %v1083 = vmul.f32 %v549, 1.442695
  %v1084 = vpow.pop %v1083
  %v1085 = vmul.f32 %v550, 1.442695
  %v1086 = vpow.pop %v1085
  %v1087 = vmul.f32 %v551, 1.442695
  %v1088 = vpow.pop %v1087
  %v1089 = vmul.f32 %v552, 1.442695
  %v1090 = vpow.pop %v1089
  %v1091 = vmul.f32 %v553, 1.442695
  %v1092 = vpow.pop %v1091
  %v1093 = vmul.f32 %v554, 1.442695
  %v1094 = vpow.pop %v1093
  %v1095 = vmul.f32 %v555, 1.442695
  %v1096 = vpow.pop %v1095
  %v1097 = vmul.f32 %v556, 1.442695
  %v1098 = vpow.pop %v1097
  %v1099 = vmul.f32 %v557, 1.442695
  %v1100 = vpow.pop %v1099
  %v1101 = vmul.f32 %v558, 1.442695
  %v1102 = vpow.pop %v1101
  %v1103 = vmul.f32 %v559, 1.442695
  %v1104 = vpow.pop %v1103
  %v1105 = vmul.f32 %v560, 1.442695
  %v1106 = vpow.pop %v1105
  %v1107 = vmul.f32 %v561, 1.442695
  %v1108 = vpow.pop %v1107
  %v1109 = vmul.f32 %v562, 1.442695
  %v1110 = vpow.pop %v1109
  %v1111 = vmul.f32 %v563, 1.442695
  %v1112 = vpow.pop %v1111
  %v1113 = vmul.f32 %v564, 1.442695
  %v1114 = vpow.pop %v1113
  %v1115 = vmul.f32 %v565, 1.442695
  %v1116 = vpow.pop %v1115
  %v1117 = vmul.f32 %v566, 1.442695
  %v1118 = vpow.pop %v1117
  %v1119 = vmul.f32 %v567, 1.442695
  %v1120 = vpow.pop %v1119
  %v1121 = vmul.f32 %v568, 1.442695
  %v1122 = vpow.pop %v1121
  %v1123 = vmul.f32 %v569, 1.442695
  %v1124 = vpow.pop %v1123
  %v1125 = vmul.f32 %v570, 1.442695
  %v1126 = vpow.pop %v1125
  %v1127 = vmul.f32 %v571, 1.442695
  %v1128 = vpow.pop %v1127
  %v1129 = vmul.f32 %v572, 1.442695
  %v1130 = vpow.pop %v1129
  %v1131 = vmul.f32 %v573, 1.442695
  %v1132 = vpow.pop %v1131
  %v1133 = vmul.f32 %v574, 1.442695
  %v1134 = vpow.pop %v1133
  %v1135 = vmul.f32 %v575, 1.442695
  %v1136 = vpow.pop %v1135
  %v1137 = vmul.f32 %v576, 1.442695
  %v1138 = vpow.pop %v1137
  %v1139 = vmul.f32 %v577, 1.442695
  %v1140 = vpow.pop %v1139
  %v1141 = vmul.f32 %v578, 1.442695
  %v1142 = vpow.pop %v1141
  %v1143 = vmul.f32 %v579, 1.442695
  %v1144 = vpow.pop %v1143
  %v1145 = vmul.f32 %v580, 1.442695
  %v1146 = vpow.pop %v1145
  %v1147 = vmul.f32 %v581, 1.442695
  %v1148 = vpow.pop %v1147
  %v1149 = vmul.f32 %v582, 1.442695
  %v1150 = vpow.pop %v1149
  %v1151 = vmul.f32 %v583, 1.442695
  %v1152 = vpow.pop %v1151
  %v1153 = vmul.f32 %v584, 1.442695
  %v1154 = vpow.pop %v1153
  %v1155 = vmul.f32 %v585, 1.442695
  %v1156 = vpow.pop %v1155
  %v1157 = vmul.f32 %v586, 1.442695
  %v1158 = vpow.pop %v1157
  %v1159 = vmul.f32 %v587, 1.442695
  %v1160 = vpow.pop %v1159
  %v1161 = vmul.f32 %v588, 1.442695
  %v1162 = vpow.pop %v1161
  %v1163 = vmul.f32 %v589, 1.442695
  %v1164 = vpow.pop %v1163
  %v1165 = vmul.f32 %v590, 1.442695
  %v1166 = vpow.pop %v1165
  %v1167 = vadd.f32 %v592, 1.0
  %v1168 = vadd.f32 %v594, 1.0
  %v1169 = vadd.f32 %v596, 1.0
  %v1170 = vadd.f32 %v598, 1.0
  %v1171 = vadd.f32 %v600, 1.0
  %v1172 = vadd.f32 %v602, 1.0
  %v1173 = vadd.f32 %v604, 1.0
  %v1174 = vadd.f32 %v606, 1.0
  %v1175 = vadd.f32 %v608, 1.0
  %v1176 = vadd.f32 %v610, 1.0
  %v1177 = vadd.f32 %v612, 1.0
  %v1178 = vadd.f32 %v614, 1.0
  %v1179 = vadd.f32 %v616, 1.0
  %v1180 = vadd.f32 %v618, 1.0
  %v1181 = vadd.f32 %v620, 1.0
  %v1182 = vadd.f32 %v622, 1.0
  %v1183 = vadd.f32 %v624, 1.0
  %v1184 = vadd.f32 %v626, 1.0
  %v1185 = vadd.f32 %v628, 1.0
  %v1186 = vadd.f32 %v630, 1.0
  %v1187 = vadd.f32 %v632, 1.0
  %v1188 = vadd.f32 %v634, 1.0
  %v1189 = vadd.f32 %v636, 1.0
  %v1190 = vadd.f32 %v638, 1.0
  %v1191 = vadd.f32 %v640, 1.0
  %v1192 = vadd.f32 %v642, 1.0
  %v1193 = vadd.f32 %v644, 1.0
  %v1194 = vadd.f32 %v646, 1.0
  %v1195 = vadd.f32 %v648, 1.0
  %v1196 = vadd.f32 %v650, 1.0
  %v1197 = vadd.f32 %v652, 1.0
  %v1198 = vadd.f32 %v654, 1.0
  %v1199 = vadd.f32 %v656, 1.0
  %v1200 = vadd.f32 %v658, 1.0
  %v1201 = vadd.f32 %v660, 1.0
  %v1202 = vadd.f32 %v662, 1.0
  %v1203 = vadd.f32 %v664, 1.0
  %v1204 = vadd.f32 %v666, 1.0
  %v1205 = vadd.f32 %v668, 1.0
  %v1206 = vadd.f32 %v670, 1.0
  %v1207 = vadd.f32 %v672, 1.0
  %v1208 = vadd.f32 %v674, 1.0
  %v1209 = vadd.f32 %v676, 1.0
  %v1210 = vadd.f32 %v678, 1.0
  %v1211 = vadd.f32 %v680, 1.0
  %v1212 = vadd.f32 %v682, 1.0
  %v1213 = vadd.f32 %v684, 1.0
  %v1214 = vadd.f32 %v686, 1.0
  %v1215 = vadd.f32 %v688, 1.0
  %v1216 = vadd.f32 %v690, 1.0
  %v1217 = vadd.f32 %v692, 1.0
  %v1218 = vadd.f32 %v694, 1.0
  %v1219 = vadd.f32 %v696, 1.0
  %v1220 = vadd.f32 %v698, 1.0
  %v1221 = vadd.f32 %v700, 1.0
  %v1222 = vadd.f32 %v702, 1.0
  %v1223 = vadd.f32 %v704, 1.0
  %v1224 = vadd.f32 %v706, 1.0
  %v1225 = vadd.f32 %v708, 1.0
  %v1226 = vadd.f32 %v710, 1.0
  %v1227 = vadd.f32 %v712, 1.0
  %v1228 = vadd.f32 %v714, 1.0
  %v1229 = vadd.f32 %v716, 1.0
  %v1230 = vadd.f32 %v718, 1.0
  %v1231 = vadd.f32 %v720, 1.0
  %v1232 = vadd.f32 %v722, 1.0
  %v1233 = vadd.f32 %v724, 1.0
  %v1234 = vadd.f32 %v726, 1.0
  %v1235 = vadd.f32 %v728, 1.0
  %v1236 = vadd.f32 %v730, 1.0
  %v1237 = vadd.f32 %v732, 1.0
  %v1238 = vadd.f32 %v734, 1.0
  %v1239 = vadd.f32 %v736, 1.0
  %v1240 = vadd.f32 %v738, 1.0
  %v1241 = vadd.f32 %v740, 1.0
  %v1242 = vadd.f32 %v742, 1.0
  %v1243 = vadd.f32 %v744, 1.0
  %v1244 = vadd.f32 %v746, 1.0
  %v1245 = vadd.f32 %v748, 1.0
  %v1246 = vadd.f32 %v750, 1.0
  %v1247 = vadd.f32 %v752, 1.0
  %v1248 = vadd.f32 %v754, 1.0
  %v1249 = vadd.f32 %v756, 1.0
  %v1250 = vadd.f32 %v758, 1.0
  %v1251 = vadd.f32 %v760, 1.0
  %v1252 = vadd.f32 %v762, 1.0
  %v1253 = vadd.f32 %v764, 1.0
  %v1254 = vadd.f32 %v766, 1.0
  %v1255 = vadd.f32 %v768, 1.0
  %v1256 = vadd.f32 %v770, 1.0
  %v1257 = vadd.f32 %v772, 1.0
  %v1258 = vadd.f32 %v774, 1.0
  %v1259 = vadd.f32 %v776, 1.0
  %v1260 = vadd.f32 %v778, 1.0
  %v1261 = vadd.f32 %v780, 1.0
  %v1262 = vadd.f32 %v782, 1.0
  %v1263 = vadd.f32 %v784, 1.0
  %v1264 = vadd.f32 %v786, 1.0
  %v1265 = vadd.f32 %v788, 1.0
  %v1266 = vadd.f32 %v790, 1.0
  %v1267 = vadd.f32 %v792, 1.0
  %v1268 = vadd.f32 %v794, 1.0
  %v1269 = vadd.f32 %v796, 1.0
  %v1270 = vadd.f32 %v798, 1.0
  %v1271 = vadd.f32 %v800, 1.0
  %v1272 = vadd.f32 %v802, 1.0
  %v1273 = vadd.f32 %v804, 1.0
  %v1274 = vadd.f32 %v806, 1.0
  %v1275 = vadd.f32 %v808, 1.0
  %v1276 = vadd.f32 %v810, 1.0
  %v1277 = vadd.f32 %v812, 1.0
  %v1278 = vadd.f32 %v814, 1.0
  %v1279 = vadd.f32 %v816, 1.0
  %v1280 = vadd.f32 %v818, 1.0
  %v1281 = vadd.f32 %v820, 1.0
  %v1282 = vadd.f32 %v822, 1.0
  %v1283 = vadd.f32 %v824, 1.0
  %v1284 = vadd.f32 %v826, 1.0
  %v1285 = vadd.f32 %v828, 1.0
  %v1286 = vadd.f32 %v830, 1.0
  %v1287 = vadd.f32 %v832, 1.0
  %v1288 = vadd.f32 %v834, 1.0
  %v1289 = vadd.f32 %v836, 1.0
  %v1290 = vadd.f32 %v838, 1.0
  %v1291 = vadd.f32 %v840, 1.0
  %v1292 = vadd.f32 %v842, 1.0
  %v1293 = vadd.f32 %v844, 1.0
  %v1294 = vadd.f32 %v846, 1.0
  %v1295 = vadd.f32 %v848, 1.0
  %v1296 = vadd.f32 %v850, 1.0
  %v1297 = vadd.f32 %v852, 1.0
  %v1298 = vadd.f32 %v854, 1.0
  %v1299 = vadd.f32 %v856, 1.0
  %v1300 = vadd.f32 %v858, 1.0
  %v1301 = vadd.f32 %v860, 1.0
  %v1302 = vadd.f32 %v862, 1.0
  %v1303 = vadd.f32 %v864, 1.0
  %v1304 = vadd.f32 %v866, 1.0
  %v1305 = vadd.f32 %v868, 1.0
  %v1306 = vadd.f32 %v870, 1.0
  %v1307 = vadd.f32 %v872, 1.0
  %v1308 = vadd.f32 %v874, 1.0
  %v1309 = vadd.f32 %v876, 1.0
  %v1310 = vadd.f32 %v878, 1.0
  %v1311 = vadd.f32 %v880, 1.0
  %v1312 = vadd.f32 %v882, 1.0
  %v1313 = vadd.f32 %v884, 1.0
  %v1314 = vadd.f32 %v886, 1.0
  %v1315 = vadd.f32 %v888, 1.0
  %v1316 = vadd.f32 %v890, 1.0
  %v1317 = vadd.f32 %v892, 1.0
  %v1318 = vadd.f32 %v894, 1.0
  %v1319 = vadd.f32 %v896, 1.0
  %v1320 = vadd.f32 %v898, 1.0
  %v1321 = vadd.f32 %v900, 1.0
  %v1322 = vadd.f32 %v902, 1.0
  %v1323 = vadd.f32 %v904, 1.0
  %v1324 = vadd.f32 %v906, 1.0
  %v1325 = vadd.f32 %v908, 1.0
  %v1326 = vadd.f32 %v910, 1.0
  %v1327 = vadd.f32 %v912, 1.0
  %v1328 = vadd.f32 %v914, 1.0
  %v1329 = vadd.f32 %v916, 1.0
  %v1330 = vadd.f32 %v918, 1.0
  %v1331 = vadd.f32 %v920, 1.0
  %v1332 = vadd.f32 %v922, 1.0
  %v1333 = vadd.f32 %v924, 1.0
  %v1334 = vadd.f32 %v926, 1.0
  %v1335 = vadd.f32 %v928, 1.0
  %v1336 = vadd.f32 %v930, 1.0
  %v1337 = vadd.f32 %v932, 1.0
  %v1338 = vadd.f32 %v934, 1.0
  %v1339 = vadd.f32 %v936, 1.0
  %v1340 = vadd.f32 %v938, 1.0
  %v1341 = vadd.f32 %v940, 1.0
  %v1342 = vadd.f32 %v942, 1.0
  %v1343 = vadd.f32 %v944, 1.0
  %v1344 = vadd.f32 %v946, 1.0
  %v1345 = vadd.f32 %v948, 1.0
  %v1346 = vadd.f32 %v950, 1.0
  %v1347 = vadd.f32 %v952, 1.0
  %v1348 = vadd.f32 %v954, 1.0
  %v1349 = vadd.f32 %v956, 1.0
  %v1350 = vadd.f32 %v958, 1.0
  %v1351 = vadd.f32 %v960, 1.0
  %v1352 = vadd.f32 %v962, 1.0
  %v1353 = vadd.f32 %v964, 1.0
  %v1354 = vadd.f32 %v966, 1.0
  %v1355 = vadd.f32 %v968, 1.0
  %v1356 = vadd.f32 %v970, 1.0
  %v1357 = vadd.f32 %v972, 1.0
  %v1358 = vadd.f32 %v974, 1.0
  %v1359 = vadd.f32 %v976, 1.0
  %v1360 = vadd.f32 %v978, 1.0
  %v1361 = vadd.f32 %v980, 1.0
  %v1362 = vadd.f32 %v982, 1.0
  %v1363 = vadd.f32 %v984, 1.0
  %v1364 = vadd.f32 %v986, 1.0
  %v1365 = vadd.f32 %v988, 1.0
  %v1366 = vadd.f32 %v990, 1.0
  %v1367 = vadd.f32 %v992, 1.0
  %v1368 = vadd.f32 %v994, 1.0
  %v1369 = vadd.f32 %v996, 1.0
  %v1370 = vadd.f32 %v998, 1.0
  %v1371 = vadd.f32 %v1000, 1.0
  %v1372 = vadd.f32 %v1002, 1.0
  %v1373 = vadd.f32 %v1004, 1.0
  %v1374 = vadd.f32 %v1006, 1.0
  %v1375 = vadd.f32 %v1008, 1.0
  %v1376 = vadd.f32 %v1010, 1.0
  %v1377 = vadd.f32 %v1012, 1.0
  %v1378 = vadd.f32 %v1014, 1.0
  %v1379 = vadd.f32 %v1016, 1.0
  %v1380 = vadd.f32 %v1018, 1.0
  %v1381 = vadd.f32 %v1020, 1.0
  %v1382 = vadd.f32 %v1022, 1.0
  %v1383 = vadd.f32 %v1024, 1.0
  %v1384 = vadd.f32 %v1026, 1.0
  %v1385 = vadd.f32 %v1028, 1.0
  %v1386 = vadd.f32 %v1030, 1.0
  %v1387 = vadd.f32 %v1032, 1.0
  %v1388 = vadd.f32 %v1034, 1.0
  %v1389 = vadd.f32 %v1036, 1.0
  %v1390 = vadd.f32 %v1038, 1.0
  %v1391 = vadd.f32 %v1040, 1.0
  %v1392 = vadd.f32 %v1042, 1.0
  %v1393 = vadd.f32 %v1044, 1.0
  %v1394 = vadd.f32 %v1046, 1.0
  %v1395 = vadd.f32 %v1048, 1.0
  %v1396 = vadd.f32 %v1050, 1.0
  %v1397 = vadd.f32 %v1052, 1.0
  %v1398 = vadd.f32 %v1054, 1.0
  %v1399 = vadd.f32 %v1056, 1.0
  %v1400 = vadd.f32 %v1058, 1.0
  %v1401 = vadd.f32 %v1060, 1.0
  %v1402 = vadd.f32 %v1062, 1.0
  %v1403 = vadd.f32 %v1064, 1.0
  %v1404 = vadd.f32 %v1066, 1.0
  %v1405 = vadd.f32 %v1068, 1.0
  %v1406 = vadd.f32 %v1070, 1.0
  %v1407 = vadd.f32 %v1072, 1.0
  %v1408 = vadd.f32 %v1074, 1.0
  %v1409 = vadd.f32 %v1076, 1.0
  %v1410 = vadd.f32 %v1078, 1.0
  %v1411 = vadd.f32 %v1080, 1.0
  %v1412 = vadd.f32 %v1082, 1.0
  %v1413 = vadd.f32 %v1084, 1.0
  %v1414 = vadd.f32 %v1086, 1.0
  %v1415 = vadd.f32 %v1088, 1.0
  %v1416 = vadd.f32 %v1090, 1.0
  %v1417 = vadd.f32 %v1092, 1.0
  %v1418 = vadd.f32 %v1094, 1.0
  %v1419 = vadd.f32 %v1096, 1.0
  %v1420 = vadd.f32 %v1098, 1.0
  %v1421 = vadd.f32 %v1100, 1.0
  %v1422 = vadd.f32 %v1102, 1.0
  %v1423 = vadd.f32 %v1104, 1.0
  %v1424 = vadd.f32 %v1106, 1.0
  %v1425 = vadd.f32 %v1108, 1.0
  %v1426 = vadd.f32 %v1110, 1.0
  %v1427 = vadd.f32 %v1112, 1.0
  %v1428 = vadd.f32 %v1114, 1.0
  %v1429 = vadd.f32 %v1116, 1.0
  %v1430 = vadd.f32 %v1118, 1.0
  %v1431 = vadd.f32 %v1120, 1.0
  %v1432 = vadd.f32 %v1122, 1.0
  %v1433 = vadd.f32 %v1124, 1.0
  %v1434 = vadd.f32 %v1126, 1.0
  %v1435 = vadd.f32 %v1128, 1.0
  %v1436 = vadd.f32 %v1130, 1.0
  %v1437 = vadd.f32 %v1132, 1.0
  %v1438 = vadd.f32 %v1134, 1.0
  %v1439 = vadd.f32 %v1136, 1.0
  %v1440 = vadd.f32 %v1138, 1.0
  %v1441 = vadd.f32 %v1140, 1.0
  %v1442 = vadd.f32 %v1142, 1.0
  %v1443 = vadd.f32 %v1144, 1.0
  %v1444 = vadd.f32 %v1146, 1.0
  %v1445 = vadd.f32 %v1148, 1.0
  %v1446 = vadd.f32 %v1150, 1.0
  %v1447 = vadd.f32 %v1152, 1.0
  %v1448 = vadd.f32 %v1154, 1.0
  %v1449 = vadd.f32 %v1156, 1.0
  %v1450 = vadd.f32 %v1158, 1.0
  %v1451 = vadd.f32 %v1160, 1.0
  %v1452 = vadd.f32 %v1162, 1.0
  %v1453 = vadd.f32 %v1164, 1.0
  %v1454 = vadd.f32 %v1166, 1.0
  %v1455 = vrcp.pop %v1167
  %v1456 = vmul.f32 1.0, %v1455
  %v1457 = vrcp.pop %v1168
  %v1458 = vmul.f32 1.0, %v1457
  %v1459 = vrcp.pop %v1169
  %v1460 = vmul.f32 1.0, %v1459
  %v1461 = vrcp.pop %v1170
  %v1462 = vmul.f32 1.0, %v1461
  %v1463 = vrcp.pop %v1171
  %v1464 = vmul.f32 1.0, %v1463
  %v1465 = vrcp.pop %v1172
  %v1466 = vmul.f32 1.0, %v1465
  %v1467 = vrcp.pop %v1173
  %v1468 = vmul.f32 1.0, %v1467
  %v1469 = vrcp.pop %v1174
  %v1470 = vmul.f32 1.0, %v1469
  %v1471 = vrcp.pop %v1175
  %v1472 = vmul.f32 1.0, %v1471
  %v1473 = vrcp.pop %v1176
  %v1474 = vmul.f32 1.0, %v1473
  %v1475 = vrcp.pop %v1177
  %v1476 = vmul.f32 1.0, %v1475
  %v1477 = vrcp.pop %v1178
  %v1478 = vmul.f32 1.0, %v1477
  %v1479 = vrcp.pop %v1179
  %v1480 = vmul.f32 1.0, %v1479
  %v1481 = vrcp.pop %v1180
  %v1482 = vmul.f32 1.0, %v1481
  %v1483 = vrcp.pop %v1181
  %v1484 = vmul.f32 1.0, %v1483
  %v1485 = vrcp.pop %v1182
  %v1486 = vmul.f32 1.0, %v1485
  %v1487 = vrcp.pop %v1183
  %v1488 = vmul.f32 1.0, %v1487
  %v1489 = vrcp.pop %v1184
  %v1490 = vmul.f32 1.0, %v1489
  %v1491 = vrcp.pop %v1185
  %v1492 = vmul.f32 1.0, %v1491
  %v1493 = vrcp.pop %v1186
  %v1494 = vmul.f32 1.0, %v1493
  %v1495 = vrcp.pop %v1187
  %v1496 = vmul.f32 1.0, %v1495
  %v1497 = vrcp.pop %v1188
  %v1498 = vmul.f32 1.0, %v1497
  %v1499 = vrcp.pop %v1189
  %v1500 = vmul.f32 1.0, %v1499
  %v1501 = vrcp.pop %v1190
  %v1502 = vmul.f32 1.0, %v1501
  %v1503 = vrcp.pop %v1191
  %v1504 = vmul.f32 1.0, %v1503
  %v1505 = vrcp.pop %v1192
  %v1506 = vmul.f32 1.0, %v1505
  %v1507 = vrcp.pop %v1193
  %v1508 = vmul.f32 1.0, %v1507
  %v1509 = vrcp.pop %v1194
  %v1510 = vmul.f32 1.0, %v1509
  %v1511 = vrcp.pop %v1195
  %v1512 = vmul.f32 1.0, %v1511
  %v1513 = vrcp.pop %v1196
  %v1514 = vmul.f32 1.0, %v1513
  %v1515 = vrcp.pop %v1197
  %v1516 = vmul.f32 1.0, %v1515
  %v1517 = vrcp.pop %v1198
  %v1518 = vmul.f32 1.0, %v1517
  %v1519 = vrcp.pop %v1199
  %v1520 = vmul.f32 1.0, %v1519
  %v1521 = vrcp.pop %v1200
  %v1522 = vmul.f32 1.0, %v1521
  %v1523 = vrcp.pop %v1201
  %v1524 = vmul.f32 1.0, %v1523
  %v1525 = vrcp.pop %v1202
  %v1526 = vmul.f32 1.0, %v1525
  %v1527 = vrcp.pop %v1203
  %v1528 = vmul.f32 1.0, %v1527
  %v1529 = vrcp.pop %v1204
  %v1530 = vmul.f32 1.0, %v1529
  %v1531 = vrcp.pop %v1205
  %v1532 = vmul.f32 1.0, %v1531
  %v1533 = vrcp.pop %v1206
  %v1534 = vmul.f32 1.0, %v1533
  %v1535 = vrcp.pop %v1207
  %v1536 = vmul.f32 1.0, %v1535
  %v1537 = vrcp.pop %v1208
  %v1538 = vmul.f32 1.0, %v1537
  %v1539 = vrcp.pop %v1209
  %v1540 = vmul.f32 1.0, %v1539
  %v1541 = vrcp.pop %v1210
  %v1542 = vmul.f32 1.0, %v1541
  %v1543 = vrcp.pop %v1211
  %v1544 = vmul.f32 1.0, %v1543
  %v1545 = vrcp.pop %v1212
  %v1546 = vmul.f32 1.0, %v1545
  %v1547 = vrcp.pop %v1213
  %v1548 = vmul.f32 1.0, %v1547
  %v1549 = vrcp.pop %v1214
  %v1550 = vmul.f32 1.0, %v1549
  %v1551 = vrcp.pop %v1215
  %v1552 = vmul.f32 1.0, %v1551
  %v1553 = vrcp.pop %v1216
  %v1554 = vmul.f32 1.0, %v1553
  %v1555 = vrcp.pop %v1217
  %v1556 = vmul.f32 1.0, %v1555
  %v1557 = vrcp.pop %v1218
  %v1558 = vmul.f32 1.0, %v1557
  %v1559 = vrcp.pop %v1219
  %v1560 = vmul.f32 1.0, %v1559
  %v1561 = vrcp.pop %v1220
  %v1562 = vmul.f32 1.0, %v1561
  %v1563 = vrcp.pop %v1221
  %v1564 = vmul.f32 1.0, %v1563
  %v1565 = vrcp.pop %v1222
  %v1566 = vmul.f32 1.0, %v1565
  %v1567 = vrcp.pop %v1223
  %v1568 = vmul.f32 1.0, %v1567
  %v1569 = vrcp.pop %v1224
  %v1570 = vmul.f32 1.0, %v1569
  %v1571 = vrcp.pop %v1225
  %v1572 = vmul.f32 1.0, %v1571
  %v1573 = vrcp.pop %v1226
  %v1574 = vmul.f32 1.0, %v1573
  %v1575 = vrcp.pop %v1227
  %v1576 = vmul.f32 1.0, %v1575
  %v1577 = vrcp.pop %v1228
  %v1578 = vmul.f32 1.0, %v1577
  %v1579 = vrcp.pop %v1229
  %v1580 = vmul.f32 1.0, %v1579
  %v1581 = vrcp.pop %v1230
  %v1582 = vmul.f32 1.0, %v1581
  %v1583 = vrcp.pop %v1231
  %v1584 = vmul.f32 1.0, %v1583
  %v1585 = vrcp.pop %v1232
  %v1586 = vmul.f32 1.0, %v1585
  %v1587 = vrcp.pop %v1233
  %v1588 = vmul.f32 1.0, %v1587
  %v1589 = vrcp.pop %v1234
  %v1590 = vmul.f32 1.0, %v1589
  %v1591 = vrcp.pop %v1235
  %v1592 = vmul.f32 1.0, %v1591
  %v1593 = vrcp.pop %v1236
  %v1594 = vmul.f32 1.0, %v1593
  %v1595 = vrcp.pop %v1237
  %v1596 = vmul.f32 1.0, %v1595
  %v1597 = vrcp.pop %v1238
  %v1598 = vmul.f32 1.0, %v1597
  %v1599 = vrcp.pop %v1239
  %v1600 = vmul.f32 1.0, %v1599
  %v1601 = vrcp.pop %v1240
  %v1602 = vmul.f32 1.0, %v1601
  %v1603 = vrcp.pop %v1241
  %v1604 = vmul.f32 1.0, %v1603
  %v1605 = vrcp.pop %v1242
  %v1606 = vmul.f32 1.0, %v1605
  %v1607 = vrcp.pop %v1243
  %v1608 = vmul.f32 1.0, %v1607
  %v1609 = vrcp.pop %v1244
  %v1610 = vmul.f32 1.0, %v1609
  %v1611 = vrcp.pop %v1245
  %v1612 = vmul.f32 1.0, %v1611
  %v1613 = vrcp.pop %v1246
  %v1614 = vmul.f32 1.0, %v1613
  %v1615 = vrcp.pop %v1247
  %v1616 = vmul.f32 1.0, %v1615
  %v1617 = vrcp.pop %v1248
  %v1618 = vmul.f32 1.0, %v1617
  %v1619 = vrcp.pop %v1249
  %v1620 = vmul.f32 1.0, %v1619
  %v1621 = vrcp.pop %v1250
  %v1622 = vmul.f32 1.0, %v1621
  %v1623 = vrcp.pop %v1251
  %v1624 = vmul.f32 1.0, %v1623
  %v1625 = vrcp.pop %v1252
  %v1626 = vmul.f32 1.0, %v1625
  %v1627 = vrcp.pop %v1253
  %v1628 = vmul.f32 1.0, %v1627
  %v1629 = vrcp.pop %v1254
  %v1630 = vmul.f32 1.0, %v1629
  %v1631 = vrcp.pop %v1255
  %v1632 = vmul.f32 1.0, %v1631
  %v1633 = vrcp.pop %v1256
  %v1634 = vmul.f32 1.0, %v1633
  %v1635 = vrcp.pop %v1257
  %v1636 = vmul.f32 1.0, %v1635
  %v1637 = vrcp.pop %v1258
  %v1638 = vmul.f32 1.0, %v1637
  %v1639 = vrcp.pop %v1259
  %v1640 = vmul.f32 1.0, %v1639
  %v1641 = vrcp.pop %v1260
  %v1642 = vmul.f32 1.0, %v1641
  %v1643 = vrcp.pop %v1261
  %v1644 = vmul.f32 1.0, %v1643
  %v1645 = vrcp.pop %v1262
  %v1646 = vmul.f32 1.0, %v1645
  %v1647 = vrcp.pop %v1263
  %v1648 = vmul.f32 1.0, %v1647
  %v1649 = vrcp.pop %v1264
  %v1650 = vmul.f32 1.0, %v1649
  %v1651 = vrcp.pop %v1265
  %v1652 = vmul.f32 1.0, %v1651
  %v1653 = vrcp.pop %v1266
  %v1654 = vmul.f32 1.0, %v1653
  %v1655 = vrcp.pop %v1267
  %v1656 = vmul.f32 1.0, %v1655
  %v1657 = vrcp.pop %v1268
  %v1658 = vmul.f32 1.0, %v1657
  %v1659 = vrcp.pop %v1269
  %v1660 = vmul.f32 1.0, %v1659
  %v1661 = vrcp.pop %v1270
  %v1662 = vmul.f32 1.0, %v1661
  %v1663 = vrcp.pop %v1271
  %v1664 = vmul.f32 1.0, %v1663
  %v1665 = vrcp.pop %v1272
  %v1666 = vmul.f32 1.0, %v1665
  %v1667 = vrcp.pop %v1273
  %v1668 = vmul.f32 1.0, %v1667
  %v1669 = vrcp.pop %v1274
  %v1670 = vmul.f32 1.0, %v1669
  %v1671 = vrcp.pop %v1275
  %v1672 = vmul.f32 1.0, %v1671
  %v1673 = vrcp.pop %v1276
  %v1674 = vmul.f32 1.0, %v1673
  %v1675 = vrcp.pop %v1277
  %v1676 = vmul.f32 1.0, %v1675
  %v1677 = vrcp.pop %v1278
  %v1678 = vmul.f32 1.0, %v1677
  %v1679 = vrcp.pop %v1279
  %v1680 = vmul.f32 1.0, %v1679
  %v1681 = vrcp.pop %v1280
  %v1682 = vmul.f32 1.0, %v1681
  %v1683 = vrcp.pop %v1281
  %v1684 = vmul.f32 1.0, %v1683
  %v1685 = vrcp.pop %v1282
  %v1686 = vmul.f32 1.0, %v1685
  %v1687 = vrcp.pop %v1283
  %v1688 = vmul.f32 1.0, %v1687
  %v1689 = vrcp.pop %v1284
  %v1690 = vmul.f32 1.0, %v1689
  %v1691 = vrcp.pop %v1285
  %v1692 = vmul.f32 1.0, %v1691
  %v1693 = vrcp.pop %v1286
  %v1694 = vmul.f32 1.0, %v1693
  %v1695 = vrcp.pop %v1287
  %v1696 = vmul.f32 1.0, %v1695
  %v1697 = vrcp.pop %v1288
  %v1698 = vmul.f32 1.0, %v1697
  %v1699 = vrcp.pop %v1289
  %v1700 = vmul.f32 1.0, %v1699
  %v1701 = vrcp.pop %v1290
  %v1702 = vmul.f32 1.0, %v1701
  %v1703 = vrcp.pop %v1291
  %v1704 = vmul.f32 1.0, %v1703
  %v1705 = vrcp.pop %v1292
  %v1706 = vmul.f32 1.0, %v1705
  %v1707 = vrcp.pop %v1293
  %v1708 = vmul.f32 1.0, %v1707
  %v1709 = vrcp.pop %v1294
  %v1710 = vmul.f32 1.0, %v1709
  %v1711 = vrcp.pop %v1295
  %v1712 = vmul.f32 1.0, %v1711
  %v1713 = vrcp.pop %v1296
  %v1714 = vmul.f32 1.0, %v1713
  %v1715 = vrcp.pop %v1297
  %v1716 = vmul.f32 1.0, %v1715
  %v1717 = vrcp.pop %v1298
  %v1718 = vmul.f32 1.0, %v1717
  %v1719 = vrcp.pop %v1299
  %v1720 = vmul.f32 1.0, %v1719
  %v1721 = vrcp.pop %v1300
  %v1722 = vmul.f32 1.0, %v1721
  %v1723 = vrcp.pop %v1301
  %v1724 = vmul.f32 1.0, %v1723
  %v1725 = vrcp.pop %v1302
  %v1726 = vmul.f32 1.0, %v1725
  %v1727 = vrcp.pop %v1303
  %v1728 = vmul.f32 1.0, %v1727
  %v1729 = vrcp.pop %v1304
  %v1730 = vmul.f32 1.0, %v1729
  %v1731 = vrcp.pop %v1305
  %v1732 = vmul.f32 1.0, %v1731
  %v1733 = vrcp.pop %v1306
  %v1734 = vmul.f32 1.0, %v1733
  %v1735 = vrcp.pop %v1307
  %v1736 = vmul.f32 1.0, %v1735
  %v1737 = vrcp.pop %v1308
  %v1738 = vmul.f32 1.0, %v1737
  %v1739 = vrcp.pop %v1309
  %v1740 = vmul.f32 1.0, %v1739
  %v1741 = vrcp.pop %v1310
  %v1742 = vmul.f32 1.0, %v1741
  %v1743 = vrcp.pop %v1311
  %v1744 = vmul.f32 1.0, %v1743
  %v1745 = vrcp.pop %v1312
  %v1746 = vmul.f32 1.0, %v1745
  %v1747 = vrcp.pop %v1313
  %v1748 = vmul.f32 1.0, %v1747
  %v1749 = vrcp.pop %v1314
  %v1750 = vmul.f32 1.0, %v1749
  %v1751 = vrcp.pop %v1315
  %v1752 = vmul.f32 1.0, %v1751
  %v1753 = vrcp.pop %v1316
  %v1754 = vmul.f32 1.0, %v1753
  %v1755 = vrcp.pop %v1317
  %v1756 = vmul.f32 1.0, %v1755
  %v1757 = vrcp.pop %v1318
  %v1758 = vmul.f32 1.0, %v1757
  %v1759 = vrcp.pop %v1319
  %v1760 = vmul.f32 1.0, %v1759
  %v1761 = vrcp.pop %v1320
  %v1762 = vmul.f32 1.0, %v1761
  %v1763 = vrcp.pop %v1321
  %v1764 = vmul.f32 1.0, %v1763
  %v1765 = vrcp.pop %v1322
  %v1766 = vmul.f32 1.0, %v1765
  %v1767 = vrcp.pop %v1323
  %v1768 = vmul.f32 1.0, %v1767
  %v1769 = vrcp.pop %v1324
  %v1770 = vmul.f32 1.0, %v1769
  %v1771 = vrcp.pop %v1325
  %v1772 = vmul.f32 1.0, %v1771
  %v1773 = vrcp.pop %v1326
  %v1774 = vmul.f32 1.0, %v1773
  %v1775 = vrcp.pop %v1327
  %v1776 = vmul.f32 1.0, %v1775
  %v1777 = vrcp.pop %v1328
  %v1778 = vmul.f32 1.0, %v1777
  %v1779 = vrcp.pop %v1329
  %v1780 = vmul.f32 1.0, %v1779
  %v1781 = vrcp.pop %v1330
  %v1782 = vmul.f32 1.0, %v1781
  %v1783 = vrcp.pop %v1331
  %v1784 = vmul.f32 1.0, %v1783
  %v1785 = vrcp.pop %v1332
  %v1786 = vmul.f32 1.0, %v1785
  %v1787 = vrcp.pop %v1333
  %v1788 = vmul.f32 1.0, %v1787
  %v1789 = vrcp.pop %v1334
  %v1790 = vmul.f32 1.0, %v1789
  %v1791 = vrcp.pop %v1335
  %v1792 = vmul.f32 1.0, %v1791
  %v1793 = vrcp.pop %v1336
  %v1794 = vmul.f32 1.0, %v1793
  %v1795 = vrcp.pop %v1337
  %v1796 = vmul.f32 1.0, %v1795
  %v1797 = vrcp.pop %v1338
  %v1798 = vmul.f32 1.0, %v1797
  %v1799 = vrcp.pop %v1339
  %v1800 = vmul.f32 1.0, %v1799
  %v1801 = vrcp.pop %v1340
  %v1802 = vmul.f32 1.0, %v1801
  %v1803 = vrcp.pop %v1341
  %v1804 = vmul.f32 1.0, %v1803
  %v1805 = vrcp.pop %v1342
  %v1806 = vmul.f32 1.0, %v1805
  %v1807 = vrcp.pop %v1343
  %v1808 = vmul.f32 1.0, %v1807
  %v1809 = vrcp.pop %v1344
  %v1810 = vmul.f32 1.0, %v1809
  %v1811 = vrcp.pop %v1345
  %v1812 = vmul.f32 1.0, %v1811
  %v1813 = vrcp.pop %v1346
  %v1814 = vmul.f32 1.0, %v1813
  %v1815 = vrcp.pop %v1347
  %v1816 = vmul.f32 1.0, %v1815
  %v1817 = vrcp.pop %v1348
  %v1818 = vmul.f32 1.0, %v1817
  %v1819 = vrcp.pop %v1349
  %v1820 = vmul.f32 1.0, %v1819
  %v1821 = vrcp.pop %v1350
  %v1822 = vmul.f32 1.0, %v1821
  %v1823 = vrcp.pop %v1351
  %v1824 = vmul.f32 1.0, %v1823
  %v1825 = vrcp.pop %v1352
  %v1826 = vmul.f32 1.0, %v1825
  %v1827 = vrcp.pop %v1353
  %v1828 = vmul.f32 1.0, %v1827
  %v1829 = vrcp.pop %v1354
  %v1830 = vmul.f32 1.0, %v1829
  %v1831 = vrcp.pop %v1355
  %v1832 = vmul.f32 1.0, %v1831
  %v1833 = vrcp.pop %v1356
  %v1834 = vmul.f32 1.0, %v1833
  %v1835 = vrcp.pop %v1357
  %v1836 = vmul.f32 1.0, %v1835
  %v1837 = vrcp.pop %v1358
  %v1838 = vmul.f32 1.0, %v1837
  %v1839 = vrcp.pop %v1359
  %v1840 = vmul.f32 1.0, %v1839
  %v1841 = vrcp.pop %v1360
  %v1842 = vmul.f32 1.0, %v1841
  %v1843 = vrcp.pop %v1361
  %v1844 = vmul.f32 1.0, %v1843
  %v1845 = vrcp.pop %v1362
  %v1846 = vmul.f32 1.0, %v1845
  %v1847 = vrcp.pop %v1363
  %v1848 = vmul.f32 1.0, %v1847
  %v1849 = vrcp.pop %v1364
  %v1850 = vmul.f32 1.0, %v1849
  %v1851 = vrcp.pop %v1365
  %v1852 = vmul.f32 1.0, %v1851
  %v1853 = vrcp.pop %v1366
  %v1854 = vmul.f32 1.0, %v1853
  %v1855 = vrcp.pop %v1367
  %v1856 = vmul.f32 1.0, %v1855
  %v1857 = vrcp.pop %v1368
  %v1858 = vmul.f32 1.0, %v1857
  %v1859 = vrcp.pop %v1369
  %v1860 = vmul.f32 1.0, %v1859
  %v1861 = vrcp.pop %v1370
  %v1862 = vmul.f32 1.0, %v1861
  %v1863 = vrcp.pop %v1371
  %v1864 = vmul.f32 1.0, %v1863
  %v1865 = vrcp.pop %v1372
  %v1866 = vmul.f32 1.0, %v1865
  %v1867 = vrcp.pop %v1373
  %v1868 = vmul.f32 1.0, %v1867
  %v1869 = vrcp.pop %v1374
  %v1870 = vmul.f32 1.0, %v1869
  %v1871 = vrcp.pop %v1375
  %v1872 = vmul.f32 1.0, %v1871
  %v1873 = vrcp.pop %v1376
  %v1874 = vmul.f32 1.0, %v1873
  %v1875 = vrcp.pop %v1377
  %v1876 = vmul.f32 1.0, %v1875
  %v1877 = vrcp.pop %v1378
  %v1878 = vmul.f32 1.0, %v1877
  %v1879 = vrcp.pop %v1379
  %v1880 = vmul.f32 1.0, %v1879
  %v1881 = vrcp.pop %v1380
  %v1882 = vmul.f32 1.0, %v1881
  %v1883 = vrcp.pop %v1381
  %v1884 = vmul.f32 1.0, %v1883
  %v1885 = vrcp.pop %v1382
  %v1886 = vmul.f32 1.0, %v1885
  %v1887 = vrcp.pop %v1383
  %v1888 = vmul.f32 1.0, %v1887
  %v1889 = vrcp.pop %v1384
  %v1890 = vmul.f32 1.0, %v1889
  %v1891 = vrcp.pop %v1385
  %v1892 = vmul.f32 1.0, %v1891
  %v1893 = vrcp.pop %v1386
  %v1894 = vmul.f32 1.0, %v1893
  %v1895 = vrcp.pop %v1387
  %v1896 = vmul.f32 1.0, %v1895
  %v1897 = vrcp.pop %v1388
  %v1898 = vmul.f32 1.0, %v1897
  %v1899 = vrcp.pop %v1389
  %v1900 = vmul.f32 1.0, %v1899
  %v1901 = vrcp.pop %v1390
  %v1902 = vmul.f32 1.0, %v1901
  %v1903 = vrcp.pop %v1391
  %v1904 = vmul.f32 1.0, %v1903
  %v1905 = vrcp.pop %v1392
  %v1906 = vmul.f32 1.0, %v1905
  %v1907 = vrcp.pop %v1393
  %v1908 = vmul.f32 1.0, %v1907
  %v1909 = vrcp.pop %v1394
  %v1910 = vmul.f32 1.0, %v1909
  %v1911 = vrcp.pop %v1395
  %v1912 = vmul.f32 1.0, %v1911
  %v1913 = vrcp.pop %v1396
  %v1914 = vmul.f32 1.0, %v1913
  %v1915 = vrcp.pop %v1397
  %v1916 = vmul.f32 1.0, %v1915
  %v1917 = vrcp.pop %v1398
  %v1918 = vmul.f32 1.0, %v1917
  %v1919 = vrcp.pop %v1399
  %v1920 = vmul.f32 1.0, %v1919
  %v1921 = vrcp.pop %v1400
  %v1922 = vmul.f32 1.0, %v1921
  %v1923 = vrcp.pop %v1401
  %v1924 = vmul.f32 1.0, %v1923
  %v1925 = vrcp.pop %v1402
  %v1926 = vmul.f32 1.0, %v1925
  %v1927 = vrcp.pop %v1403
  %v1928 = vmul.f32 1.0, %v1927
  %v1929 = vrcp.pop %v1404
  %v1930 = vmul.f32 1.0, %v1929
  %v1931 = vrcp.pop %v1405
  %v1932 = vmul.f32 1.0, %v1931
  %v1933 = vrcp.pop %v1406
  %v1934 = vmul.f32 1.0, %v1933
  %v1935 = vrcp.pop %v1407
  %v1936 = vmul.f32 1.0, %v1935
  %v1937 = vrcp.pop %v1408
  %v1938 = vmul.f32 1.0, %v1937
  %v1939 = vrcp.pop %v1409
  %v1940 = vmul.f32 1.0, %v1939
  %v1941 = vrcp.pop %v1410
  %v1942 = vmul.f32 1.0, %v1941
  %v1943 = vrcp.pop %v1411
  %v1944 = vmul.f32 1.0, %v1943
  %v1945 = vrcp.pop %v1412
  %v1946 = vmul.f32 1.0, %v1945
  %v1947 = vrcp.pop %v1413
  %v1948 = vmul.f32 1.0, %v1947
  %v1949 = vrcp.pop %v1414
  %v1950 = vmul.f32 1.0, %v1949
  %v1951 = vrcp.pop %v1415
  %v1952 = vmul.f32 1.0, %v1951
  %v1953 = vrcp.pop %v1416
  %v1954 = vmul.f32 1.0, %v1953
  %v1955 = vrcp.pop %v1417
  %v1956 = vmul.f32 1.0, %v1955
  %v1957 = vrcp.pop %v1418
  %v1958 = vmul.f32 1.0, %v1957
  %v1959 = vrcp.pop %v1419
  %v1960 = vmul.f32 1.0, %v1959
  %v1961 = vrcp.pop %v1420
  %v1962 = vmul.f32 1.0, %v1961
  %v1963 = vrcp.pop %v1421
  %v1964 = vmul.f32 1.0, %v1963
  %v1965 = vrcp.pop %v1422
  %v1966 = vmul.f32 1.0, %v1965
  %v1967 = vrcp.pop %v1423
  %v1968 = vmul.f32 1.0, %v1967
  %v1969 = vrcp.pop %v1424
  %v1970 = vmul.f32 1.0, %v1969
  %v1971 = vrcp.pop %v1425
  %v1972 = vmul.f32 1.0, %v1971
  %v1973 = vrcp.pop %v1426
  %v1974 = vmul.f32 1.0, %v1973
  %v1975 = vrcp.pop %v1427
  %v1976 = vmul.f32 1.0, %v1975
  %v1977 = vrcp.pop %v1428
  %v1978 = vmul.f32 1.0, %v1977
  %v1979 = vrcp.pop %v1429
  %v1980 = vmul.f32 1.0, %v1979
  %v1981 = vrcp.pop %v1430
  %v1982 = vmul.f32 1.0, %v1981
  %v1983 = vrcp.pop %v1431
  %v1984 = vmul.f32 1.0, %v1983
  %v1985 = vrcp.pop %v1432
  %v1986 = vmul.f32 1.0, %v1985
  %v1987 = vrcp.pop %v1433
  %v1988 = vmul.f32 1.0, %v1987
  %v1989 = vrcp.pop %v1434
  %v1990 = vmul.f32 1.0, %v1989
  %v1991 = vrcp.pop %v1435
  %v1992 = vmul.f32 1.0, %v1991
  %v1993 = vrcp.pop %v1436
  %v1994 = vmul.f32 1.0, %v1993
  %v1995 = vrcp.pop %v1437
  %v1996 = vmul.f32 1.0, %v1995
  %v1997 = vrcp.pop %v1438
  %v1998 = vmul.f32 1.0, %v1997
  %v1999 = vrcp.pop %v1439
  %v2000 = vmul.f32 1.0, %v1999
  %v2001 = vrcp.pop %v1440
  %v2002 = vmul.f32 1.0, %v2001
  %v2003 = vrcp.pop %v1441
  %v2004 = vmul.f32 1.0, %v2003
  %v2005 = vrcp.pop %v1442
  %v2006 = vmul.f32 1.0, %v2005
  %v2007 = vrcp.pop %v1443
  %v2008 = vmul.f32 1.0, %v2007
  %v2009 = vrcp.pop %v1444
  %v2010 = vmul.f32 1.0, %v2009
  %v2011 = vrcp.pop %v1445
  %v2012 = vmul.f32 1.0, %v2011
  %v2013 = vrcp.pop %v1446
  %v2014 = vmul.f32 1.0, %v2013
  %v2015 = vrcp.pop %v1447
  %v2016 = vmul.f32 1.0, %v2015
  %v2017 = vrcp.pop %v1448
  %v2018 = vmul.f32 1.0, %v2017
  %v2019 = vrcp.pop %v1449
  %v2020 = vmul.f32 1.0, %v2019
  %v2021 = vrcp.pop %v1450
  %v2022 = vmul.f32 1.0, %v2021
  %v2023 = vrcp.pop %v1451
  %v2024 = vmul.f32 1.0, %v2023
  %v2025 = vrcp.pop %v1452
  %v2026 = vmul.f32 1.0, %v2025
  %v2027 = vrcp.pop %v1453
  %v2028 = vmul.f32 1.0, %v2027
  %v2029 = vrcp.pop %v1454
  %v2030 = vmul.f32 1.0, %v2029
  %v2031 = vld [vmem:[%s1] sm:$0xff]
  %v2032 = vld [vmem:[%s1 + $0x8] sm:$0xff]
  %v2033 = vld [vmem:[%s1 + $0x10] sm:$0xff]
  %v2034 = vld [vmem:[%s1 + $0x18] sm:$0xff]
  %v2035 = vld [vmem:[%s1 + $0x20] sm:$0xff]
  %v2036 = vld [vmem:[%s1 + $0x28] sm:$0xff]
  %v2037 = vld [vmem:[%s1 + $0x30] sm:$0xff]
  %v2038 = vld [vmem:[%s1 + $0x38] sm:$0xff]
  %v2039 = vld [vmem:[%s1 + $0x40] sm:$0xff]
  %v2040 = vld [vmem:[%s1 + $0x48] sm:$0xff]
  %v2041 = vld [vmem:[%s1 + $0x50] sm:$0xff]
  %v2042 = vld [vmem:[%s1 + $0x58] sm:$0xff]
  %v2043 = vld [vmem:[%s1 + $0x60] sm:$0xff]
  %v2044 = vld [vmem:[%s1 + $0x68] sm:$0xff]
  %v2045 = vld [vmem:[%s1 + $0x70] sm:$0xff]
  %v2046 = vld [vmem:[%s1 + $0x78] sm:$0xff]
  %v2047 = vld [vmem:[%s1 + $0x80] sm:$0xff]
  %v2048 = vld [vmem:[%s1 + $0x88] sm:$0xff]
  %v2049 = vld [vmem:[%s1 + $0x90] sm:$0xff]
  %v2050 = vld [vmem:[%s1 + $0x98] sm:$0xff]
  %v2051 = vld [vmem:[%s1 + $0xa0] sm:$0xff]
  %v2052 = vld [vmem:[%s1 + $0xa8] sm:$0xff]
  %v2053 = vld [vmem:[%s1 + $0xb0] sm:$0xff]
  %v2054 = vld [vmem:[%s1 + $0xb8] sm:$0xff]
  %v2055 = vld [vmem:[%s1 + $0xc0] sm:$0xff]
  %v2056 = vld [vmem:[%s1 + $0xc8] sm:$0xff]
  %v2057 = vld [vmem:[%s1 + $0xd0] sm:$0xff]
  %v2058 = vld [vmem:[%s1 + $0xd8] sm:$0xff]
  %v2059 = vld [vmem:[%s1 + $0xe0] sm:$0xff]
  %v2060 = vld [vmem:[%s1 + $0xe8] sm:$0xff]
  %v2061 = vld [vmem:[%s1 + $0xf0] sm:$0xff]
  %v2062 = vld [vmem:[%s1 + $0xf8] sm:$0xff]
  %v2063 = vld [vmem:[%s1 + $0x100] sm:$0xff]
  %v2064 = vld [vmem:[%s1 + $0x108] sm:$0xff]
  %v2065 = vld [vmem:[%s1 + $0x110] sm:$0xff]
  %v2066 = vld [vmem:[%s1 + $0x118] sm:$0xff]
  %v2067 = vld [vmem:[%s1 + $0x120] sm:$0xff]
  %v2068 = vld [vmem:[%s1 + $0x128] sm:$0xff]
  %v2069 = vld [vmem:[%s1 + $0x130] sm:$0xff]
  %v2070 = vld [vmem:[%s1 + $0x138] sm:$0xff]
  %v2071 = vld [vmem:[%s1 + $0x140] sm:$0xff]
  %v2072 = vld [vmem:[%s1 + $0x148] sm:$0xff]
  %v2073 = vld [vmem:[%s1 + $0x150] sm:$0xff]
  %v2074 = vld [vmem:[%s1 + $0x158] sm:$0xff]
  %v2075 = vld [vmem:[%s1 + $0x160] sm:$0xff]
  %v2076 = vld [vmem:[%s1 + $0x168] sm:$0xff]
  %v2077 = vld [vmem:[%s1 + $0x170] sm:$0xff]
  %v2078 = vld [vmem:[%s1 + $0x178] sm:$0xff]
  %v2079 = vld [vmem:[%s1 + $0x180] sm:$0xff]
  %v2080 = vld [vmem:[%s1 + $0x188] sm:$0xff]
  %v2081 = vld [vmem:[%s1 + $0x190] sm:$0xff]
  %v2082 = vld [vmem:[%s1 + $0x198] sm:$0xff]
  %v2083 = vld [vmem:[%s1 + $0x1a0] sm:$0xff]
  %v2084 = vld [vmem:[%s1 + $0x1a8] sm:$0xff]
  %v2085 = vld [vmem:[%s1 + $0x1b0] sm:$0xff]
  %v2086 = vld [vmem:[%s1 + $0x1b8] sm:$0xff]
  %v2087 = vld [vmem:[%s1 + $0x1c0] sm:$0xff]
  %v2088 = vld [vmem:[%s1 + $0x1c8] sm:$0xff]
  %v2089 = vld [vmem:[%s1 + $0x1d0] sm:$0xff]
  %v2090 = vld [vmem:[%s1 + $0x1d8] sm:$0xff]
  %v2091 = vld [vmem:[%s1 + $0x1e0] sm:$0xff]
  %v2092 = vld [vmem:[%s1 + $0x1e8] sm:$0xff]
  %v2093 = vld [vmem:[%s1 + $0x1f0] sm:$0xff]
  %v2094 = vld [vmem:[%s1 + $0x1f8] sm:$0xff]
  %v2095 = vld [vmem:[%s1 + $0x200] sm:$0xff]
  %v2096 = vld [vmem:[%s1 + $0x208] sm:$0xff]
  %v2097 = vld [vmem:[%s1 + $0x210] sm:$0xff]
  %v2098 = vld [vmem:[%s1 + $0x218] sm:$0xff]
  %v2099 = vld [vmem:[%s1 + $0x220] sm:$0xff]
  %v2100 = vld [vmem:[%s1 + $0x228] sm:$0xff]
  %v2101 = vld [vmem:[%s1 + $0x230] sm:$0xff]
  %v2102 = vld [vmem:[%s1 + $0x238] sm:$0xff]
  %v2103 = vld [vmem:[%s1 + $0x240] sm:$0xff]
  %v2104 = vld [vmem:[%s1 + $0x248] sm:$0xff]
  %v2105 = vld [vmem:[%s1 + $0x250] sm:$0xff]
  %v2106 = vld [vmem:[%s1 + $0x258] sm:$0xff]
  %v2107 = vld [vmem:[%s1 + $0x260] sm:$0xff]
  %v2108 = vld [vmem:[%s1 + $0x268] sm:$0xff]
  %v2109 = vld [vmem:[%s1 + $0x270] sm:$0xff]
  %v2110 = vld [vmem:[%s1 + $0x278] sm:$0xff]
  %v2111 = vld [vmem:[%s1 + $0x280] sm:$0xff]
  %v2112 = vld [vmem:[%s1 + $0x288] sm:$0xff]
  %v2113 = vld [vmem:[%s1 + $0x290] sm:$0xff]
  %v2114 = vld [vmem:[%s1 + $0x298] sm:$0xff]
  %v2115 = vld [vmem:[%s1 + $0x2a0] sm:$0xff]
  %v2116 = vld [vmem:[%s1 + $0x2a8] sm:$0xff]
  %v2117 = vld [vmem:[%s1 + $0x2b0] sm:$0xff]
  %v2118 = vld [vmem:[%s1 + $0x2b8] sm:$0xff]
  %v2119 = vld [vmem:[%s1 + $0x2c0] sm:$0xff]
  %v2120 = vld [vmem:[%s1 + $0x2c8] sm:$0xff]
  %v2121 = vld [vmem:[%s1 + $0x2d0] sm:$0xff]
  %v2122 = vld [vmem:[%s1 + $0x2d8] sm:$0xff]
  %v2123 = vld [vmem:[%s1 + $0x2e0] sm:$0xff]
  %v2124 = vld [vmem:[%s1 + $0x2e8] sm:$0xff]
  %v2125 = vld [vmem:[%s1 + $0x2f0] sm:$0xff]
  %v2126 = vld [vmem:[%s1 + $0x2f8] sm:$0xff]
  %v2127 = vld [vmem:[%s1 + $0x300] sm:$0xff]
  %v2128 = vld [vmem:[%s1 + $0x308] sm:$0xff]
  %v2129 = vld [vmem:[%s1 + $0x310] sm:$0xff]
  %v2130 = vld [vmem:[%s1 + $0x318] sm:$0xff]
  %v2131 = vld [vmem:[%s1 + $0x320] sm:$0xff]
  %v2132 = vld [vmem:[%s1 + $0x328] sm:$0xff]
  %v2133 = vld [vmem:[%s1 + $0x330] sm:$0xff]
  %v2134 = vld [vmem:[%s1 + $0x338] sm:$0xff]
  %v2135 = vld [vmem:[%s1 + $0x340] sm:$0xff]
  %v2136 = vld [vmem:[%s1 + $0x348] sm:$0xff]
  %v2137 = vld [vmem:[%s1 + $0x350] sm:$0xff]
  %v2138 = vld [vmem:[%s1 + $0x358] sm:$0xff]
  %v2139 = vld [vmem:[%s1 + $0x360] sm:$0xff]
  %v2140 = vld [vmem:[%s1 + $0x368] sm:$0xff]
  %v2141 = vld [vmem:[%s1 + $0x370] sm:$0xff]
  %v2142 = vld [vmem:[%s1 + $0x378] sm:$0xff]
  %v2143 = vld [vmem:[%s1 + $0x380] sm:$0xff]
  %v2144 = vld [vmem:[%s1 + $0x388] sm:$0xff]
  %v2145 = vld [vmem:[%s1 + $0x390] sm:$0xff]
  %v2146 = vld [vmem:[%s1 + $0x398] sm:$0xff]
  %v2147 = vld [vmem:[%s1 + $0x3a0] sm:$0xff]
  %v2148 = vld [vmem:[%s1 + $0x3a8] sm:$0xff]
  %v2149 = vld [vmem:[%s1 + $0x3b0] sm:$0xff]
  %v2150 = vld [vmem:[%s1 + $0x3b8] sm:$0xff]
  %v2151 = vld [vmem:[%s1 + $0x3c0] sm:$0xff]
  %v2152 = vld [vmem:[%s1 + $0x3c8] sm:$0xff]
  %v2153 = vld [vmem:[%s1 + $0x3d0] sm:$0xff]
  %v2154 = vld [vmem:[%s1 + $0x3d8] sm:$0xff]
  %v2155 = vld [vmem:[%s1 + $0x3e0] sm:$0xff]
  %v2156 = vld [vmem:[%s1 + $0x3e8] sm:$0xff]
  %v2157 = vld [vmem:[%s1 + $0x3f0] sm:$0xff]
  %v2158 = vld [vmem:[%s1 + $0x3f8] sm:$0xff]
  %v2159 = vld [vmem:[%s1 + $0x400] sm:$0xff]
  %v2160 = vld [vmem:[%s1 + $0x408] sm:$0xff]
  %v2161 = vld [vmem:[%s1 + $0x410] sm:$0xff]
  %v2162 = vld [vmem:[%s1 + $0x418] sm:$0xff]
  %v2163 = vld [vmem:[%s1 + $0x420] sm:$0xff]
  %v2164 = vld [vmem:[%s1 + $0x428] sm:$0xff]
  %v2165 = vld [vmem:[%s1 + $0x430] sm:$0xff]
  %v2166 = vld [vmem:[%s1 + $0x438] sm:$0xff]
  %v2167 = vld [vmem:[%s1 + $0x440] sm:$0xff]
  %v2168 = vld [vmem:[%s1 + $0x448] sm:$0xff]
  %v2169 = vld [vmem:[%s1 + $0x450] sm:$0xff]
  %v2170 = vld [vmem:[%s1 + $0x458] sm:$0xff]
  %v2171 = vld [vmem:[%s1 + $0x460] sm:$0xff]
  %v2172 = vld [vmem:[%s1 + $0x468] sm:$0xff]
  %v2173 = vld [vmem:[%s1 + $0x470] sm:$0xff]
  %v2174 = vld [vmem:[%s1 + $0x478] sm:$0xff]
  %v2175 = vld [vmem:[%s1 + $0x480] sm:$0xff]
  %v2176 = vld [vmem:[%s1 + $0x488] sm:$0xff]
  %v2177 = vld [vmem:[%s1 + $0x490] sm:$0xff]
  %v2178 = vld [vmem:[%s1 + $0x498] sm:$0xff]
  %v2179 = vld [vmem:[%s1 + $0x4a0] sm:$0xff]
  %v2180 = vld [vmem:[%s1 + $0x4a8] sm:$0xff]
  %v2181 = vld [vmem:[%s1 + $0x4b0] sm:$0xff]
  %v2182 = vld [vmem:[%s1 + $0x4b8] sm:$0xff]
  %v2183 = vld [vmem:[%s1 + $0x4c0] sm:$0xff]
  %v2184 = vld [vmem:[%s1 + $0x4c8] sm:$0xff]
  %v2185 = vld [vmem:[%s1 + $0x4d0] sm:$0xff]
  %v2186 = vld [vmem:[%s1 + $0x4d8] sm:$0xff]
  %v2187 = vld [vmem:[%s1 + $0x4e0] sm:$0xff]
  %v2188 = vld [vmem:[%s1 + $0x4e8] sm:$0xff]
  %v2189 = vld [vmem:[%s1 + $0x4f0] sm:$0xff]
  %v2190 = vld [vmem:[%s1 + $0x4f8] sm:$0xff]
  %v2191 = vld [vmem:[%s1 + $0x500] sm:$0xff]
  %v2192 = vld [vmem:[%s1 + $0x508] sm:$0xff]
  %v2193 = vld [vmem:[%s1 + $0x510] sm:$0xff]
  %v2194 = vld [vmem:[%s1 + $0x518] sm:$0xff]
  %v2195 = vld [vmem:[%s1 + $0x520] sm:$0xff]
  %v2196 = vld [vmem:[%s1 + $0x528] sm:$0xff]
  %v2197 = vld [vmem:[%s1 + $0x530] sm:$0xff]
  %v2198 = vld [vmem:[%s1 + $0x538] sm:$0xff]
  %v2199 = vld [vmem:[%s1 + $0x540] sm:$0xff]
  %v2200 = vld [vmem:[%s1 + $0x548] sm:$0xff]
  %v2201 = vld [vmem:[%s1 + $0x550] sm:$0xff]
  %v2202 = vld [vmem:[%s1 + $0x558] sm:$0xff]
  %v2203 = vld [vmem:[%s1 + $0x560] sm:$0xff]
  %v2204 = vld [vmem:[%s1 + $0x568] sm:$0xff]
  %v2205 = vld [vmem:[%s1 + $0x570] sm:$0xff]
  %v2206 = vld [vmem:[%s1 + $0x578] sm:$0xff]
  %v2207 = vld [vmem:[%s1 + $0x580] sm:$0xff]
  %v2208 = vld [vmem:[%s1 + $0x588] sm:$0xff]
  %v2209 = vld [vmem:[%s1 + $0x590] sm:$0xff]
  %v2210 = vld [vmem:[%s1 + $0x598] sm:$0xff]
  %v2211 = vld [vmem:[%s1 + $0x5a0] sm:$0xff]
  %v2212 = vld [vmem:[%s1 + $0x5a8] sm:$0xff]
  %v2213 = vld [vmem:[%s1 + $0x5b0] sm:$0xff]
  %v2214 = vld [vmem:[%s1 + $0x5b8] sm:$0xff]
  %v2215 = vld [vmem:[%s1 + $0x5c0] sm:$0xff]
  %v2216 = vld [vmem:[%s1 + $0x5c8] sm:$0xff]
  %v2217 = vld [vmem:[%s1 + $0x5d0] sm:$0xff]
  %v2218 = vld [vmem:[%s1 + $0x5d8] sm:$0xff]
  %v2219 = vld [vmem:[%s1 + $0x5e0] sm:$0xff]
  %v2220 = vld [vmem:[%s1 + $0x5e8] sm:$0xff]
  %v2221 = vld [vmem:[%s1 + $0x5f0] sm:$0xff]
  %v2222 = vld [vmem:[%s1 + $0x5f8] sm:$0xff]
  %v2223 = vld [vmem:[%s1 + $0x600] sm:$0xff]
  %v2224 = vld [vmem:[%s1 + $0x608] sm:$0xff]
  %v2225 = vld [vmem:[%s1 + $0x610] sm:$0xff]
  %v2226 = vld [vmem:[%s1 + $0x618] sm:$0xff]
  %v2227 = vld [vmem:[%s1 + $0x620] sm:$0xff]
  %v2228 = vld [vmem:[%s1 + $0x628] sm:$0xff]
  %v2229 = vld [vmem:[%s1 + $0x630] sm:$0xff]
  %v2230 = vld [vmem:[%s1 + $0x638] sm:$0xff]
  %v2231 = vld [vmem:[%s1 + $0x640] sm:$0xff]
  %v2232 = vld [vmem:[%s1 + $0x648] sm:$0xff]
  %v2233 = vld [vmem:[%s1 + $0x650] sm:$0xff]
  %v2234 = vld [vmem:[%s1 + $0x658] sm:$0xff]
  %v2235 = vld [vmem:[%s1 + $0x660] sm:$0xff]
  %v2236 = vld [vmem:[%s1 + $0x668] sm:$0xff]
  %v2237 = vld [vmem:[%s1 + $0x670] sm:$0xff]
  %v2238 = vld [vmem:[%s1 + $0x678] sm:$0xff]
  %v2239 = vld [vmem:[%s1 + $0x680] sm:$0xff]
  %v2240 = vld [vmem:[%s1 + $0x688] sm:$0xff]
  %v2241 = vld [vmem:[%s1 + $0x690] sm:$0xff]
  %v2242 = vld [vmem:[%s1 + $0x698] sm:$0xff]
  %v2243 = vld [vmem:[%s1 + $0x6a0] sm:$0xff]
  %v2244 = vld [vmem:[%s1 + $0x6a8] sm:$0xff]
  %v2245 = vld [vmem:[%s1 + $0x6b0] sm:$0xff]
  %v2246 = vld [vmem:[%s1 + $0x6b8] sm:$0xff]
  %v2247 = vld [vmem:[%s1 + $0x6c0] sm:$0xff]
  %v2248 = vld [vmem:[%s1 + $0x6c8] sm:$0xff]
  %v2249 = vld [vmem:[%s1 + $0x6d0] sm:$0xff]
  %v2250 = vld [vmem:[%s1 + $0x6d8] sm:$0xff]
  %v2251 = vld [vmem:[%s1 + $0x6e0] sm:$0xff]
  %v2252 = vld [vmem:[%s1 + $0x6e8] sm:$0xff]
  %v2253 = vld [vmem:[%s1 + $0x6f0] sm:$0xff]
  %v2254 = vld [vmem:[%s1 + $0x6f8] sm:$0xff]
  %v2255 = vld [vmem:[%s1 + $0x700] sm:$0xff]
  %v2256 = vld [vmem:[%s1 + $0x708] sm:$0xff]
  %v2257 = vld [vmem:[%s1 + $0x710] sm:$0xff]
  %v2258 = vld [vmem:[%s1 + $0x718] sm:$0xff]
  %v2259 = vld [vmem:[%s1 + $0x720] sm:$0xff]
  %v2260 = vld [vmem:[%s1 + $0x728] sm:$0xff]
  %v2261 = vld [vmem:[%s1 + $0x730] sm:$0xff]
  %v2262 = vld [vmem:[%s1 + $0x738] sm:$0xff]
  %v2263 = vld [vmem:[%s1 + $0x740] sm:$0xff]
  %v2264 = vld [vmem:[%s1 + $0x748] sm:$0xff]
  %v2265 = vld [vmem:[%s1 + $0x750] sm:$0xff]
  %v2266 = vld [vmem:[%s1 + $0x758] sm:$0xff]
  %v2267 = vld [vmem:[%s1 + $0x760] sm:$0xff]
  %v2268 = vld [vmem:[%s1 + $0x768] sm:$0xff]
  %v2269 = vld [vmem:[%s1 + $0x770] sm:$0xff]
  %v2270 = vld [vmem:[%s1 + $0x778] sm:$0xff]
  %v2271 = vld [vmem:[%s1 + $0x780] sm:$0xff]
  %v2272 = vld [vmem:[%s1 + $0x788] sm:$0xff]
  %v2273 = vld [vmem:[%s1 + $0x790] sm:$0xff]
  %v2274 = vld [vmem:[%s1 + $0x798] sm:$0xff]
  %v2275 = vld [vmem:[%s1 + $0x7a0] sm:$0xff]
  %v2276 = vld [vmem:[%s1 + $0x7a8] sm:$0xff]
  %v2277 = vld [vmem:[%s1 + $0x7b0] sm:$0xff]
  %v2278 = vld [vmem:[%s1 + $0x7b8] sm:$0xff]
  %v2279 = vld [vmem:[%s1 + $0x7c0] sm:$0xff]
  %v2280 = vld [vmem:[%s1 + $0x7c8] sm:$0xff]
  %v2281 = vld [vmem:[%s1 + $0x7d0] sm:$0xff]
  %v2282 = vld [vmem:[%s1 + $0x7d8] sm:$0xff]
  %v2283 = vld [vmem:[%s1 + $0x7e0] sm:$0xff]
  %v2284 = vld [vmem:[%s1 + $0x7e8] sm:$0xff]
  %v2285 = vld [vmem:[%s1 + $0x7f0] sm:$0xff]
  %v2286 = vld [vmem:[%s1 + $0x7f8] sm:$0xff]
  %v2287 = vld [vmem:[%s1 + $0x800] sm:$0xff]
  %v2288 = vld [vmem:[%s1 + $0x808] sm:$0xff]
  %v2289 = vld [vmem:[%s1 + $0x810] sm:$0xff]
  %v2290 = vld [vmem:[%s1 + $0x818] sm:$0xff]
  %v2291 = vld [vmem:[%s1 + $0x820] sm:$0xff]
  %v2292 = vld [vmem:[%s1 + $0x828] sm:$0xff]
  %v2293 = vld [vmem:[%s1 + $0x830] sm:$0xff]
  %v2294 = vld [vmem:[%s1 + $0x838] sm:$0xff]
  %v2295 = vld [vmem:[%s1 + $0x840] sm:$0xff]
  %v2296 = vld [vmem:[%s1 + $0x848] sm:$0xff]
  %v2297 = vld [vmem:[%s1 + $0x850] sm:$0xff]
  %v2298 = vld [vmem:[%s1 + $0x858] sm:$0xff]
  %v2299 = vld [vmem:[%s1 + $0x860] sm:$0xff]
  %v2300 = vld [vmem:[%s1 + $0x868] sm:$0xff]
  %v2301 = vld [vmem:[%s1 + $0x870] sm:$0xff]
  %v2302 = vld [vmem:[%s1 + $0x878] sm:$0xff]
  %v2303 = vld [vmem:[%s1 + $0x880] sm:$0xff]
  %v2304 = vld [vmem:[%s1 + $0x888] sm:$0xff]
  %v2305 = vld [vmem:[%s1 + $0x890] sm:$0xff]
  %v2306 = vld [vmem:[%s1 + $0x898] sm:$0xff]
  %v2307 = vld [vmem:[%s1 + $0x8a0] sm:$0xff]
  %v2308 = vld [vmem:[%s1 + $0x8a8] sm:$0xff]
  %v2309 = vld [vmem:[%s1 + $0x8b0] sm:$0xff]
  %v2310 = vld [vmem:[%s1 + $0x8b8] sm:$0xff]
  %v2311 = vld [vmem:[%s1 + $0x8c0] sm:$0xff]
  %v2312 = vld [vmem:[%s1 + $0x8c8] sm:$0xff]
  %v2313 = vld [vmem:[%s1 + $0x8d0] sm:$0xff]
  %v2314 = vld [vmem:[%s1 + $0x8d8] sm:$0xff]
  %v2315 = vld [vmem:[%s1 + $0x8e0] sm:$0xff]
  %v2316 = vld [vmem:[%s1 + $0x8e8] sm:$0xff]
  %v2317 = vld [vmem:[%s1 + $0x8f0] sm:$0xff]
  %v2318 = vld [vmem:[%s1 + $0x8f8] sm:$0xff]
  %2320 = vset.pattern.permute.xlu0 0
  %2321 = vperm.xlu0 %2320, %v1456
  %v2322 = vpop.permute.xlu0 %2321
  %2325 = vset.pattern.permute.xlu0 0
  %2326 = vperm.xlu0 %2325, %v1458
  %v2327 = vpop.permute.xlu0 %2326
  %2330 = vset.pattern.permute.xlu0 0
  %2331 = vperm.xlu0 %2330, %v1460
  %v2332 = vpop.permute.xlu0 %2331
  %2335 = vset.pattern.permute.xlu0 0
  %2336 = vperm.xlu0 %2335, %v1462
  %v2337 = vpop.permute.xlu0 %2336
  %2340 = vset.pattern.permute.xlu0 0
  %2341 = vperm.xlu0 %2340, %v1464
  %v2342 = vpop.permute.xlu0 %2341
  %2345 = vset.pattern.permute.xlu0 0
  %2346 = vperm.xlu0 %2345, %v1466
  %v2347 = vpop.permute.xlu0 %2346
  %2350 = vset.pattern.permute.xlu0 0
  %2351 = vperm.xlu0 %2350, %v1468
  %v2352 = vpop.permute.xlu0 %2351
  %2355 = vset.pattern.permute.xlu0 0
  %2356 = vperm.xlu0 %2355, %v1470
  %v2357 = vpop.permute.xlu0 %2356
  %2360 = vset.pattern.permute.xlu0 0
  %2361 = vperm.xlu0 %2360, %v1472
  %v2362 = vpop.permute.xlu0 %2361
  %2365 = vset.pattern.permute.xlu0 0
  %2366 = vperm.xlu0 %2365, %v1474
  %v2367 = vpop.permute.xlu0 %2366
  %2370 = vset.pattern.permute.xlu0 0
  %2371 = vperm.xlu0 %2370, %v1476
  %v2372 = vpop.permute.xlu0 %2371
  %2375 = vset.pattern.permute.xlu0 0
  %2376 = vperm.xlu0 %2375, %v1478
  %v2377 = vpop.permute.xlu0 %2376
  %2380 = vset.pattern.permute.xlu0 0
  %2381 = vperm.xlu0 %2380, %v1480
  %v2382 = vpop.permute.xlu0 %2381
  %2385 = vset.pattern.permute.xlu0 0
  %2386 = vperm.xlu0 %2385, %v1482
  %v2387 = vpop.permute.xlu0 %2386
  %2390 = vset.pattern.permute.xlu0 0
  %2391 = vperm.xlu0 %2390, %v1484
  %v2392 = vpop.permute.xlu0 %2391
  %2395 = vset.pattern.permute.xlu0 0
  %2396 = vperm.xlu0 %2395, %v1486
  %v2397 = vpop.permute.xlu0 %2396
  %2400 = vset.pattern.permute.xlu0 0
  %2401 = vperm.xlu0 %2400, %v1488
  %v2402 = vpop.permute.xlu0 %2401
  %2405 = vset.pattern.permute.xlu0 0
  %2406 = vperm.xlu0 %2405, %v1490
  %v2407 = vpop.permute.xlu0 %2406
  %2410 = vset.pattern.permute.xlu0 0
  %2411 = vperm.xlu0 %2410, %v1492
  %v2412 = vpop.permute.xlu0 %2411
  %2415 = vset.pattern.permute.xlu0 0
  %2416 = vperm.xlu0 %2415, %v1494
  %v2417 = vpop.permute.xlu0 %2416
  %2420 = vset.pattern.permute.xlu0 0
  %2421 = vperm.xlu0 %2420, %v1496
  %v2422 = vpop.permute.xlu0 %2421
  %2425 = vset.pattern.permute.xlu0 0
  %2426 = vperm.xlu0 %2425, %v1498
  %v2427 = vpop.permute.xlu0 %2426
  %2430 = vset.pattern.permute.xlu0 0
  %2431 = vperm.xlu0 %2430, %v1500
  %v2432 = vpop.permute.xlu0 %2431
  %2435 = vset.pattern.permute.xlu0 0
  %2436 = vperm.xlu0 %2435, %v1502
  %v2437 = vpop.permute.xlu0 %2436
  %2440 = vset.pattern.permute.xlu0 0
  %2441 = vperm.xlu0 %2440, %v1504
  %v2442 = vpop.permute.xlu0 %2441
  %2445 = vset.pattern.permute.xlu0 0
  %2446 = vperm.xlu0 %2445, %v1506
  %v2447 = vpop.permute.xlu0 %2446
  %2450 = vset.pattern.permute.xlu0 0
  %2451 = vperm.xlu0 %2450, %v1508
  %v2452 = vpop.permute.xlu0 %2451
  %2455 = vset.pattern.permute.xlu0 0
  %2456 = vperm.xlu0 %2455, %v1510
  %v2457 = vpop.permute.xlu0 %2456
  %2460 = vset.pattern.permute.xlu0 0
  %2461 = vperm.xlu0 %2460, %v1512
  %v2462 = vpop.permute.xlu0 %2461
  %2465 = vset.pattern.permute.xlu0 0
  %2466 = vperm.xlu0 %2465, %v1514
  %v2467 = vpop.permute.xlu0 %2466
  %2470 = vset.pattern.permute.xlu0 0
  %2471 = vperm.xlu0 %2470, %v1516
  %v2472 = vpop.permute.xlu0 %2471
  %2475 = vset.pattern.permute.xlu0 0
  %2476 = vperm.xlu0 %2475, %v1518
  %v2477 = vpop.permute.xlu0 %2476
  %2480 = vset.pattern.permute.xlu0 0
  %2481 = vperm.xlu0 %2480, %v1520
  %v2482 = vpop.permute.xlu0 %2481
  %2485 = vset.pattern.permute.xlu0 0
  %2486 = vperm.xlu0 %2485, %v1522
  %v2487 = vpop.permute.xlu0 %2486
  %2490 = vset.pattern.permute.xlu0 0
  %2491 = vperm.xlu0 %2490, %v1524
  %v2492 = vpop.permute.xlu0 %2491
  %2495 = vset.pattern.permute.xlu0 0
  %2496 = vperm.xlu0 %2495, %v1526
  %v2497 = vpop.permute.xlu0 %2496
  %2500 = vset.pattern.permute.xlu0 0
  %2501 = vperm.xlu0 %2500, %v1528
  %v2502 = vpop.permute.xlu0 %2501
  %2505 = vset.pattern.permute.xlu0 0
  %2506 = vperm.xlu0 %2505, %v1530
  %v2507 = vpop.permute.xlu0 %2506
  %2510 = vset.pattern.permute.xlu0 0
  %2511 = vperm.xlu0 %2510, %v1532
  %v2512 = vpop.permute.xlu0 %2511
  %2515 = vset.pattern.permute.xlu0 0
  %2516 = vperm.xlu0 %2515, %v1534
  %v2517 = vpop.permute.xlu0 %2516
  %2520 = vset.pattern.permute.xlu0 0
  %2521 = vperm.xlu0 %2520, %v1536
  %v2522 = vpop.permute.xlu0 %2521
  %2525 = vset.pattern.permute.xlu0 0
  %2526 = vperm.xlu0 %2525, %v1538
  %v2527 = vpop.permute.xlu0 %2526
  %2530 = vset.pattern.permute.xlu0 0
  %2531 = vperm.xlu0 %2530, %v1540
  %v2532 = vpop.permute.xlu0 %2531
  %2535 = vset.pattern.permute.xlu0 0
  %2536 = vperm.xlu0 %2535, %v1542
  %v2537 = vpop.permute.xlu0 %2536
  %2540 = vset.pattern.permute.xlu0 0
  %2541 = vperm.xlu0 %2540, %v1544
  %v2542 = vpop.permute.xlu0 %2541
  %2545 = vset.pattern.permute.xlu0 0
  %2546 = vperm.xlu0 %2545, %v1546
  %v2547 = vpop.permute.xlu0 %2546
  %2550 = vset.pattern.permute.xlu0 0
  %2551 = vperm.xlu0 %2550, %v1548
  %v2552 = vpop.permute.xlu0 %2551
  %2555 = vset.pattern.permute.xlu0 0
  %2556 = vperm.xlu0 %2555, %v1550
  %v2557 = vpop.permute.xlu0 %2556
  %2560 = vset.pattern.permute.xlu0 0
  %2561 = vperm.xlu0 %2560, %v1552
  %v2562 = vpop.permute.xlu0 %2561
  %2565 = vset.pattern.permute.xlu0 0
  %2566 = vperm.xlu0 %2565, %v1554
  %v2567 = vpop.permute.xlu0 %2566
  %2570 = vset.pattern.permute.xlu0 0
  %2571 = vperm.xlu0 %2570, %v1556
  %v2572 = vpop.permute.xlu0 %2571
  %2575 = vset.pattern.permute.xlu0 0
  %2576 = vperm.xlu0 %2575, %v1558
  %v2577 = vpop.permute.xlu0 %2576
  %2580 = vset.pattern.permute.xlu0 0
  %2581 = vperm.xlu0 %2580, %v1560
  %v2582 = vpop.permute.xlu0 %2581
  %2585 = vset.pattern.permute.xlu0 0
  %2586 = vperm.xlu0 %2585, %v1562
  %v2587 = vpop.permute.xlu0 %2586
  %2590 = vset.pattern.permute.xlu0 0
  %2591 = vperm.xlu0 %2590, %v1564
  %v2592 = vpop.permute.xlu0 %2591
  %2595 = vset.pattern.permute.xlu0 0
  %2596 = vperm.xlu0 %2595, %v1566
  %v2597 = vpop.permute.xlu0 %2596
  %2600 = vset.pattern.permute.xlu0 0
  %2601 = vperm.xlu0 %2600, %v1568
  %v2602 = vpop.permute.xlu0 %2601
  %2605 = vset.pattern.permute.xlu0 0
  %2606 = vperm.xlu0 %2605, %v1570
  %v2607 = vpop.permute.xlu0 %2606
  %2610 = vset.pattern.permute.xlu0 0
  %2611 = vperm.xlu0 %2610, %v1572
  %v2612 = vpop.permute.xlu0 %2611
  %2615 = vset.pattern.permute.xlu0 0
  %2616 = vperm.xlu0 %2615, %v1574
  %v2617 = vpop.permute.xlu0 %2616
  %2620 = vset.pattern.permute.xlu0 0
  %2621 = vperm.xlu0 %2620, %v1576
  %v2622 = vpop.permute.xlu0 %2621
  %2625 = vset.pattern.permute.xlu0 0
  %2626 = vperm.xlu0 %2625, %v1578
  %v2627 = vpop.permute.xlu0 %2626
  %2630 = vset.pattern.permute.xlu0 0
  %2631 = vperm.xlu0 %2630, %v1580
  %v2632 = vpop.permute.xlu0 %2631
  %2635 = vset.pattern.permute.xlu0 0
  %2636 = vperm.xlu0 %2635, %v1582
  %v2637 = vpop.permute.xlu0 %2636
  %2640 = vset.pattern.permute.xlu0 0
  %2641 = vperm.xlu0 %2640, %v1584
  %v2642 = vpop.permute.xlu0 %2641
  %2645 = vset.pattern.permute.xlu0 0
  %2646 = vperm.xlu0 %2645, %v1586
  %v2647 = vpop.permute.xlu0 %2646
  %2650 = vset.pattern.permute.xlu0 0
  %2651 = vperm.xlu0 %2650, %v1588
  %v2652 = vpop.permute.xlu0 %2651
  %2655 = vset.pattern.permute.xlu0 0
  %2656 = vperm.xlu0 %2655, %v1590
  %v2657 = vpop.permute.xlu0 %2656
  %2660 = vset.pattern.permute.xlu0 0
  %2661 = vperm.xlu0 %2660, %v1592
  %v2662 = vpop.permute.xlu0 %2661
  %2665 = vset.pattern.permute.xlu0 0
  %2666 = vperm.xlu0 %2665, %v1594
  %v2667 = vpop.permute.xlu0 %2666
  %2670 = vset.pattern.permute.xlu0 0
  %2671 = vperm.xlu0 %2670, %v1596
  %v2672 = vpop.permute.xlu0 %2671
  %2675 = vset.pattern.permute.xlu0 0
  %2676 = vperm.xlu0 %2675, %v1598
  %v2677 = vpop.permute.xlu0 %2676
  %2680 = vset.pattern.permute.xlu0 0
  %2681 = vperm.xlu0 %2680, %v1600
  %v2682 = vpop.permute.xlu0 %2681
  %2685 = vset.pattern.permute.xlu0 0
  %2686 = vperm.xlu0 %2685, %v1602
  %v2687 = vpop.permute.xlu0 %2686
  %2690 = vset.pattern.permute.xlu0 0
  %2691 = vperm.xlu0 %2690, %v1604
  %v2692 = vpop.permute.xlu0 %2691
  %2695 = vset.pattern.permute.xlu0 0
  %2696 = vperm.xlu0 %2695, %v1606
  %v2697 = vpop.permute.xlu0 %2696
  %2700 = vset.pattern.permute.xlu0 0
  %2701 = vperm.xlu0 %2700, %v1608
  %v2702 = vpop.permute.xlu0 %2701
  %2705 = vset.pattern.permute.xlu0 0
  %2706 = vperm.xlu0 %2705, %v1610
  %v2707 = vpop.permute.xlu0 %2706
  %2710 = vset.pattern.permute.xlu0 0
  %2711 = vperm.xlu0 %2710, %v1612
  %v2712 = vpop.permute.xlu0 %2711
  %2715 = vset.pattern.permute.xlu0 0
  %2716 = vperm.xlu0 %2715, %v1614
  %v2717 = vpop.permute.xlu0 %2716
  %2720 = vset.pattern.permute.xlu0 0
  %2721 = vperm.xlu0 %2720, %v1616
  %v2722 = vpop.permute.xlu0 %2721
  %2725 = vset.pattern.permute.xlu0 0
  %2726 = vperm.xlu0 %2725, %v1618
  %v2727 = vpop.permute.xlu0 %2726
  %2730 = vset.pattern.permute.xlu0 0
  %2731 = vperm.xlu0 %2730, %v1620
  %v2732 = vpop.permute.xlu0 %2731
  %2735 = vset.pattern.permute.xlu0 0
  %2736 = vperm.xlu0 %2735, %v1622
  %v2737 = vpop.permute.xlu0 %2736
  %2740 = vset.pattern.permute.xlu0 0
  %2741 = vperm.xlu0 %2740, %v1624
  %v2742 = vpop.permute.xlu0 %2741
  %2745 = vset.pattern.permute.xlu0 0
  %2746 = vperm.xlu0 %2745, %v1626
  %v2747 = vpop.permute.xlu0 %2746
  %2750 = vset.pattern.permute.xlu0 0
  %2751 = vperm.xlu0 %2750, %v1628
  %v2752 = vpop.permute.xlu0 %2751
  %2755 = vset.pattern.permute.xlu0 0
  %2756 = vperm.xlu0 %2755, %v1630
  %v2757 = vpop.permute.xlu0 %2756
  %2760 = vset.pattern.permute.xlu0 0
  %2761 = vperm.xlu0 %2760, %v1632
  %v2762 = vpop.permute.xlu0 %2761
  %2765 = vset.pattern.permute.xlu0 0
  %2766 = vperm.xlu0 %2765, %v1634
  %v2767 = vpop.permute.xlu0 %2766
  %2770 = vset.pattern.permute.xlu0 0
  %2771 = vperm.xlu0 %2770, %v1636
  %v2772 = vpop.permute.xlu0 %2771
  %2775 = vset.pattern.permute.xlu0 0
  %2776 = vperm.xlu0 %2775, %v1638
  %v2777 = vpop.permute.xlu0 %2776
  %2780 = vset.pattern.permute.xlu0 0
  %2781 = vperm.xlu0 %2780, %v1640
  %v2782 = vpop.permute.xlu0 %2781
  %2785 = vset.pattern.permute.xlu0 0
  %2786 = vperm.xlu0 %2785, %v1642
  %v2787 = vpop.permute.xlu0 %2786
  %2790 = vset.pattern.permute.xlu0 0
  %2791 = vperm.xlu0 %2790, %v1644
  %v2792 = vpop.permute.xlu0 %2791
  %2795 = vset.pattern.permute.xlu0 0
  %2796 = vperm.xlu0 %2795, %v1646
  %v2797 = vpop.permute.xlu0 %2796
  %2800 = vset.pattern.permute.xlu0 0
  %2801 = vperm.xlu0 %2800, %v1648
  %v2802 = vpop.permute.xlu0 %2801
  %2805 = vset.pattern.permute.xlu0 0
  %2806 = vperm.xlu0 %2805, %v1650
  %v2807 = vpop.permute.xlu0 %2806
  %2810 = vset.pattern.permute.xlu0 0
  %2811 = vperm.xlu0 %2810, %v1652
  %v2812 = vpop.permute.xlu0 %2811
  %2815 = vset.pattern.permute.xlu0 0
  %2816 = vperm.xlu0 %2815, %v1654
  %v2817 = vpop.permute.xlu0 %2816
  %2820 = vset.pattern.permute.xlu0 0
  %2821 = vperm.xlu0 %2820, %v1656
  %v2822 = vpop.permute.xlu0 %2821
  %2825 = vset.pattern.permute.xlu0 0
  %2826 = vperm.xlu0 %2825, %v1658
  %v2827 = vpop.permute.xlu0 %2826
  %2830 = vset.pattern.permute.xlu0 0
  %2831 = vperm.xlu0 %2830, %v1660
  %v2832 = vpop.permute.xlu0 %2831
  %2835 = vset.pattern.permute.xlu0 0
  %2836 = vperm.xlu0 %2835, %v1662
  %v2837 = vpop.permute.xlu0 %2836
  %2840 = vset.pattern.permute.xlu0 0
  %2841 = vperm.xlu0 %2840, %v1664
  %v2842 = vpop.permute.xlu0 %2841
  %2845 = vset.pattern.permute.xlu0 0
  %2846 = vperm.xlu0 %2845, %v1666
  %v2847 = vpop.permute.xlu0 %2846
  %2850 = vset.pattern.permute.xlu0 0
  %2851 = vperm.xlu0 %2850, %v1668
  %v2852 = vpop.permute.xlu0 %2851
  %2855 = vset.pattern.permute.xlu0 0
  %2856 = vperm.xlu0 %2855, %v1670
  %v2857 = vpop.permute.xlu0 %2856
  %2860 = vset.pattern.permute.xlu0 0
  %2861 = vperm.xlu0 %2860, %v1672
  %v2862 = vpop.permute.xlu0 %2861
  %2865 = vset.pattern.permute.xlu0 0
  %2866 = vperm.xlu0 %2865, %v1674
  %v2867 = vpop.permute.xlu0 %2866
  %2870 = vset.pattern.permute.xlu0 0
  %2871 = vperm.xlu0 %2870, %v1676
  %v2872 = vpop.permute.xlu0 %2871
  %2875 = vset.pattern.permute.xlu0 0
  %2876 = vperm.xlu0 %2875, %v1678
  %v2877 = vpop.permute.xlu0 %2876
  %2880 = vset.pattern.permute.xlu0 0
  %2881 = vperm.xlu0 %2880, %v1680
  %v2882 = vpop.permute.xlu0 %2881
  %2885 = vset.pattern.permute.xlu0 0
  %2886 = vperm.xlu0 %2885, %v1682
  %v2887 = vpop.permute.xlu0 %2886
  %2890 = vset.pattern.permute.xlu0 0
  %2891 = vperm.xlu0 %2890, %v1684
  %v2892 = vpop.permute.xlu0 %2891
  %2895 = vset.pattern.permute.xlu0 0
  %2896 = vperm.xlu0 %2895, %v1686
  %v2897 = vpop.permute.xlu0 %2896
  %2900 = vset.pattern.permute.xlu0 0
  %2901 = vperm.xlu0 %2900, %v1688
  %v2902 = vpop.permute.xlu0 %2901
  %2905 = vset.pattern.permute.xlu0 0
  %2906 = vperm.xlu0 %2905, %v1690
  %v2907 = vpop.permute.xlu0 %2906
  %2910 = vset.pattern.permute.xlu0 0
  %2911 = vperm.xlu0 %2910, %v1692
  %v2912 = vpop.permute.xlu0 %2911
  %2915 = vset.pattern.permute.xlu0 0
  %2916 = vperm.xlu0 %2915, %v1694
  %v2917 = vpop.permute.xlu0 %2916
  %2920 = vset.pattern.permute.xlu0 0
  %2921 = vperm.xlu0 %2920, %v1696
  %v2922 = vpop.permute.xlu0 %2921
  %2925 = vset.pattern.permute.xlu0 0
  %2926 = vperm.xlu0 %2925, %v1698
  %v2927 = vpop.permute.xlu0 %2926
  %2930 = vset.pattern.permute.xlu0 0
  %2931 = vperm.xlu0 %2930, %v1700
  %v2932 = vpop.permute.xlu0 %2931
  %2935 = vset.pattern.permute.xlu0 0
  %2936 = vperm.xlu0 %2935, %v1702
  %v2937 = vpop.permute.xlu0 %2936
  %2940 = vset.pattern.permute.xlu0 0
  %2941 = vperm.xlu0 %2940, %v1704
  %v2942 = vpop.permute.xlu0 %2941
  %2945 = vset.pattern.permute.xlu0 0
  %2946 = vperm.xlu0 %2945, %v1706
  %v2947 = vpop.permute.xlu0 %2946
  %2950 = vset.pattern.permute.xlu0 0
  %2951 = vperm.xlu0 %2950, %v1708
  %v2952 = vpop.permute.xlu0 %2951
  %2955 = vset.pattern.permute.xlu0 0
  %2956 = vperm.xlu0 %2955, %v1710
  %v2957 = vpop.permute.xlu0 %2956
  %2960 = vset.pattern.permute.xlu0 0
  %2961 = vperm.xlu0 %2960, %v1712
  %v2962 = vpop.permute.xlu0 %2961
  %2965 = vset.pattern.permute.xlu0 0
  %2966 = vperm.xlu0 %2965, %v1714
  %v2967 = vpop.permute.xlu0 %2966
  %2970 = vset.pattern.permute.xlu0 0
  %2971 = vperm.xlu0 %2970, %v1716
  %v2972 = vpop.permute.xlu0 %2971
  %2975 = vset.pattern.permute.xlu0 0
  %2976 = vperm.xlu0 %2975, %v1718
  %v2977 = vpop.permute.xlu0 %2976
  %2980 = vset.pattern.permute.xlu0 0
  %2981 = vperm.xlu0 %2980, %v1720
  %v2982 = vpop.permute.xlu0 %2981
  %2985 = vset.pattern.permute.xlu0 0
  %2986 = vperm.xlu0 %2985, %v1722
  %v2987 = vpop.permute.xlu0 %2986
  %2990 = vset.pattern.permute.xlu0 0
  %2991 = vperm.xlu0 %2990, %v1724
  %v2992 = vpop.permute.xlu0 %2991
  %2995 = vset.pattern.permute.xlu0 0
  %2996 = vperm.xlu0 %2995, %v1726
  %v2997 = vpop.permute.xlu0 %2996
  %3000 = vset.pattern.permute.xlu0 0
  %3001 = vperm.xlu0 %3000, %v1728
  %v3002 = vpop.permute.xlu0 %3001
  %3005 = vset.pattern.permute.xlu0 0
  %3006 = vperm.xlu0 %3005, %v1730
  %v3007 = vpop.permute.xlu0 %3006
  %3010 = vset.pattern.permute.xlu0 0
  %3011 = vperm.xlu0 %3010, %v1732
  %v3012 = vpop.permute.xlu0 %3011
  %3015 = vset.pattern.permute.xlu0 0
  %3016 = vperm.xlu0 %3015, %v1734
  %v3017 = vpop.permute.xlu0 %3016
  %3020 = vset.pattern.permute.xlu0 0
  %3021 = vperm.xlu0 %3020, %v1736
  %v3022 = vpop.permute.xlu0 %3021
  %3025 = vset.pattern.permute.xlu0 0
  %3026 = vperm.xlu0 %3025, %v1738
  %v3027 = vpop.permute.xlu0 %3026
  %3030 = vset.pattern.permute.xlu0 0
  %3031 = vperm.xlu0 %3030, %v1740
  %v3032 = vpop.permute.xlu0 %3031
  %3035 = vset.pattern.permute.xlu0 0
  %3036 = vperm.xlu0 %3035, %v1742
  %v3037 = vpop.permute.xlu0 %3036
  %3040 = vset.pattern.permute.xlu0 0
  %3041 = vperm.xlu0 %3040, %v1744
  %v3042 = vpop.permute.xlu0 %3041
  %3045 = vset.pattern.permute.xlu0 0
  %3046 = vperm.xlu0 %3045, %v1746
  %v3047 = vpop.permute.xlu0 %3046
  %3050 = vset.pattern.permute.xlu0 0
  %3051 = vperm.xlu0 %3050, %v1748
  %v3052 = vpop.permute.xlu0 %3051
  %3055 = vset.pattern.permute.xlu0 0
  %3056 = vperm.xlu0 %3055, %v1750
  %v3057 = vpop.permute.xlu0 %3056
  %3060 = vset.pattern.permute.xlu0 0
  %3061 = vperm.xlu0 %3060, %v1752
  %v3062 = vpop.permute.xlu0 %3061
  %3065 = vset.pattern.permute.xlu0 0
  %3066 = vperm.xlu0 %3065, %v1754
  %v3067 = vpop.permute.xlu0 %3066
  %3070 = vset.pattern.permute.xlu0 0
  %3071 = vperm.xlu0 %3070, %v1756
  %v3072 = vpop.permute.xlu0 %3071
  %3075 = vset.pattern.permute.xlu0 0
  %3076 = vperm.xlu0 %3075, %v1758
  %v3077 = vpop.permute.xlu0 %3076
  %3080 = vset.pattern.permute.xlu0 0
  %3081 = vperm.xlu0 %3080, %v1760
  %v3082 = vpop.permute.xlu0 %3081
  %3085 = vset.pattern.permute.xlu0 0
  %3086 = vperm.xlu0 %3085, %v1762
  %v3087 = vpop.permute.xlu0 %3086
  %3090 = vset.pattern.permute.xlu0 0
  %3091 = vperm.xlu0 %3090, %v1764
  %v3092 = vpop.permute.xlu0 %3091
  %3095 = vset.pattern.permute.xlu0 0
  %3096 = vperm.xlu0 %3095, %v1766
  %v3097 = vpop.permute.xlu0 %3096
  %3100 = vset.pattern.permute.xlu0 0
  %3101 = vperm.xlu0 %3100, %v1768
  %v3102 = vpop.permute.xlu0 %3101
  %3105 = vset.pattern.permute.xlu0 0
  %3106 = vperm.xlu0 %3105, %v1770
  %v3107 = vpop.permute.xlu0 %3106
  %3110 = vset.pattern.permute.xlu0 0
  %3111 = vperm.xlu0 %3110, %v1772
  %v3112 = vpop.permute.xlu0 %3111
  %3115 = vset.pattern.permute.xlu0 0
  %3116 = vperm.xlu0 %3115, %v1774
  %v3117 = vpop.permute.xlu0 %3116
  %3120 = vset.pattern.permute.xlu0 0
  %3121 = vperm.xlu0 %3120, %v1776
  %v3122 = vpop.permute.xlu0 %3121
  %3125 = vset.pattern.permute.xlu0 0
  %3126 = vperm.xlu0 %3125, %v1778
  %v3127 = vpop.permute.xlu0 %3126
  %3130 = vset.pattern.permute.xlu0 0
  %3131 = vperm.xlu0 %3130, %v1780
  %v3132 = vpop.permute.xlu0 %3131
  %3135 = vset.pattern.permute.xlu0 0
  %3136 = vperm.xlu0 %3135, %v1782
  %v3137 = vpop.permute.xlu0 %3136
  %3140 = vset.pattern.permute.xlu0 0
  %3141 = vperm.xlu0 %3140, %v1784
  %v3142 = vpop.permute.xlu0 %3141
  %3145 = vset.pattern.permute.xlu0 0
  %3146 = vperm.xlu0 %3145, %v1786
  %v3147 = vpop.permute.xlu0 %3146
  %3150 = vset.pattern.permute.xlu0 0
  %3151 = vperm.xlu0 %3150, %v1788
  %v3152 = vpop.permute.xlu0 %3151
  %3155 = vset.pattern.permute.xlu0 0
  %3156 = vperm.xlu0 %3155, %v1790
  %v3157 = vpop.permute.xlu0 %3156
  %3160 = vset.pattern.permute.xlu0 0
  %3161 = vperm.xlu0 %3160, %v1792
  %v3162 = vpop.permute.xlu0 %3161
  %3165 = vset.pattern.permute.xlu0 0
  %3166 = vperm.xlu0 %3165, %v1794
  %v3167 = vpop.permute.xlu0 %3166
  %3170 = vset.pattern.permute.xlu0 0
  %3171 = vperm.xlu0 %3170, %v1796
  %v3172 = vpop.permute.xlu0 %3171
  %3175 = vset.pattern.permute.xlu0 0
  %3176 = vperm.xlu0 %3175, %v1798
  %v3177 = vpop.permute.xlu0 %3176
  %3180 = vset.pattern.permute.xlu0 0
  %3181 = vperm.xlu0 %3180, %v1800
  %v3182 = vpop.permute.xlu0 %3181
  %3185 = vset.pattern.permute.xlu0 0
  %3186 = vperm.xlu0 %3185, %v1802
  %v3187 = vpop.permute.xlu0 %3186
  %3190 = vset.pattern.permute.xlu0 0
  %3191 = vperm.xlu0 %3190, %v1804
  %v3192 = vpop.permute.xlu0 %3191
  %3195 = vset.pattern.permute.xlu0 0
  %3196 = vperm.xlu0 %3195, %v1806
  %v3197 = vpop.permute.xlu0 %3196
  %3200 = vset.pattern.permute.xlu0 0
  %3201 = vperm.xlu0 %3200, %v1808
  %v3202 = vpop.permute.xlu0 %3201
  %3205 = vset.pattern.permute.xlu0 0
  %3206 = vperm.xlu0 %3205, %v1810
  %v3207 = vpop.permute.xlu0 %3206
  %3210 = vset.pattern.permute.xlu0 0
  %3211 = vperm.xlu0 %3210, %v1812
  %v3212 = vpop.permute.xlu0 %3211
  %3215 = vset.pattern.permute.xlu0 0
  %3216 = vperm.xlu0 %3215, %v1814
  %v3217 = vpop.permute.xlu0 %3216
  %3220 = vset.pattern.permute.xlu0 0
  %3221 = vperm.xlu0 %3220, %v1816
  %v3222 = vpop.permute.xlu0 %3221
  %3225 = vset.pattern.permute.xlu0 0
  %3226 = vperm.xlu0 %3225, %v1818
  %v3227 = vpop.permute.xlu0 %3226
  %3230 = vset.pattern.permute.xlu0 0
  %3231 = vperm.xlu0 %3230, %v1820
  %v3232 = vpop.permute.xlu0 %3231
  %3235 = vset.pattern.permute.xlu0 0
  %3236 = vperm.xlu0 %3235, %v1822
  %v3237 = vpop.permute.xlu0 %3236
  %3240 = vset.pattern.permute.xlu0 0
  %3241 = vperm.xlu0 %3240, %v1824
  %v3242 = vpop.permute.xlu0 %3241
  %3245 = vset.pattern.permute.xlu0 0
  %3246 = vperm.xlu0 %3245, %v1826
  %v3247 = vpop.permute.xlu0 %3246
  %3250 = vset.pattern.permute.xlu0 0
  %3251 = vperm.xlu0 %3250, %v1828
  %v3252 = vpop.permute.xlu0 %3251
  %3255 = vset.pattern.permute.xlu0 0
  %3256 = vperm.xlu0 %3255, %v1830
  %v3257 = vpop.permute.xlu0 %3256
  %3260 = vset.pattern.permute.xlu0 0
  %3261 = vperm.xlu0 %3260, %v1832
  %v3262 = vpop.permute.xlu0 %3261
  %3265 = vset.pattern.permute.xlu0 0
  %3266 = vperm.xlu0 %3265, %v1834
  %v3267 = vpop.permute.xlu0 %3266
  %3270 = vset.pattern.permute.xlu0 0
  %3271 = vperm.xlu0 %3270, %v1836
  %v3272 = vpop.permute.xlu0 %3271
  %3275 = vset.pattern.permute.xlu0 0
  %3276 = vperm.xlu0 %3275, %v1838
  %v3277 = vpop.permute.xlu0 %3276
  %3280 = vset.pattern.permute.xlu0 0
  %3281 = vperm.xlu0 %3280, %v1840
  %v3282 = vpop.permute.xlu0 %3281
  %3285 = vset.pattern.permute.xlu0 0
  %3286 = vperm.xlu0 %3285, %v1842
  %v3287 = vpop.permute.xlu0 %3286
  %3290 = vset.pattern.permute.xlu0 0
  %3291 = vperm.xlu0 %3290, %v1844
  %v3292 = vpop.permute.xlu0 %3291
  %3295 = vset.pattern.permute.xlu0 0
  %3296 = vperm.xlu0 %3295, %v1846
  %v3297 = vpop.permute.xlu0 %3296
  %3300 = vset.pattern.permute.xlu0 0
  %3301 = vperm.xlu0 %3300, %v1848
  %v3302 = vpop.permute.xlu0 %3301
  %3305 = vset.pattern.permute.xlu0 0
  %3306 = vperm.xlu0 %3305, %v1850
  %v3307 = vpop.permute.xlu0 %3306
  %3310 = vset.pattern.permute.xlu0 0
  %3311 = vperm.xlu0 %3310, %v1852
  %v3312 = vpop.permute.xlu0 %3311
  %3315 = vset.pattern.permute.xlu0 0
  %3316 = vperm.xlu0 %3315, %v1854
  %v3317 = vpop.permute.xlu0 %3316
  %3320 = vset.pattern.permute.xlu0 0
  %3321 = vperm.xlu0 %3320, %v1856
  %v3322 = vpop.permute.xlu0 %3321
  %3325 = vset.pattern.permute.xlu0 0
  %3326 = vperm.xlu0 %3325, %v1858
  %v3327 = vpop.permute.xlu0 %3326
  %3330 = vset.pattern.permute.xlu0 0
  %3331 = vperm.xlu0 %3330, %v1860
  %v3332 = vpop.permute.xlu0 %3331
  %3335 = vset.pattern.permute.xlu0 0
  %3336 = vperm.xlu0 %3335, %v1862
  %v3337 = vpop.permute.xlu0 %3336
  %3340 = vset.pattern.permute.xlu0 0
  %3341 = vperm.xlu0 %3340, %v1864
  %v3342 = vpop.permute.xlu0 %3341
  %3345 = vset.pattern.permute.xlu0 0
  %3346 = vperm.xlu0 %3345, %v1866
  %v3347 = vpop.permute.xlu0 %3346
  %3350 = vset.pattern.permute.xlu0 0
  %3351 = vperm.xlu0 %3350, %v1868
  %v3352 = vpop.permute.xlu0 %3351
  %3355 = vset.pattern.permute.xlu0 0
  %3356 = vperm.xlu0 %3355, %v1870
  %v3357 = vpop.permute.xlu0 %3356
  %3360 = vset.pattern.permute.xlu0 0
  %3361 = vperm.xlu0 %3360, %v1872
  %v3362 = vpop.permute.xlu0 %3361
  %3365 = vset.pattern.permute.xlu0 0
  %3366 = vperm.xlu0 %3365, %v1874
  %v3367 = vpop.permute.xlu0 %3366
  %3370 = vset.pattern.permute.xlu0 0
  %3371 = vperm.xlu0 %3370, %v1876
  %v3372 = vpop.permute.xlu0 %3371
  %3375 = vset.pattern.permute.xlu0 0
  %3376 = vperm.xlu0 %3375, %v1878
  %v3377 = vpop.permute.xlu0 %3376
  %3380 = vset.pattern.permute.xlu0 0
  %3381 = vperm.xlu0 %3380, %v1880
  %v3382 = vpop.permute.xlu0 %3381
  %3385 = vset.pattern.permute.xlu0 0
  %3386 = vperm.xlu0 %3385, %v1882
  %v3387 = vpop.permute.xlu0 %3386
  %3390 = vset.pattern.permute.xlu0 0
  %3391 = vperm.xlu0 %3390, %v1884
  %v3392 = vpop.permute.xlu0 %3391
  %3395 = vset.pattern.permute.xlu0 0
  %3396 = vperm.xlu0 %3395, %v1886
  %v3397 = vpop.permute.xlu0 %3396
  %3400 = vset.pattern.permute.xlu0 0
  %3401 = vperm.xlu0 %3400, %v1888
  %v3402 = vpop.permute.xlu0 %3401
  %3405 = vset.pattern.permute.xlu0 0
  %3406 = vperm.xlu0 %3405, %v1890
  %v3407 = vpop.permute.xlu0 %3406
  %3410 = vset.pattern.permute.xlu0 0
  %3411 = vperm.xlu0 %3410, %v1892
  %v3412 = vpop.permute.xlu0 %3411
  %3415 = vset.pattern.permute.xlu0 0
  %3416 = vperm.xlu0 %3415, %v1894
  %v3417 = vpop.permute.xlu0 %3416
  %3420 = vset.pattern.permute.xlu0 0
  %3421 = vperm.xlu0 %3420, %v1896
  %v3422 = vpop.permute.xlu0 %3421
  %3425 = vset.pattern.permute.xlu0 0
  %3426 = vperm.xlu0 %3425, %v1898
  %v3427 = vpop.permute.xlu0 %3426
  %3430 = vset.pattern.permute.xlu0 0
  %3431 = vperm.xlu0 %3430, %v1900
  %v3432 = vpop.permute.xlu0 %3431
  %3435 = vset.pattern.permute.xlu0 0
  %3436 = vperm.xlu0 %3435, %v1902
  %v3437 = vpop.permute.xlu0 %3436
  %3440 = vset.pattern.permute.xlu0 0
  %3441 = vperm.xlu0 %3440, %v1904
  %v3442 = vpop.permute.xlu0 %3441
  %3445 = vset.pattern.permute.xlu0 0
  %3446 = vperm.xlu0 %3445, %v1906
  %v3447 = vpop.permute.xlu0 %3446
  %3450 = vset.pattern.permute.xlu0 0
  %3451 = vperm.xlu0 %3450, %v1908
  %v3452 = vpop.permute.xlu0 %3451
  %3455 = vset.pattern.permute.xlu0 0
  %3456 = vperm.xlu0 %3455, %v1910
  %v3457 = vpop.permute.xlu0 %3456
  %3460 = vset.pattern.permute.xlu0 0
  %3461 = vperm.xlu0 %3460, %v1912
  %v3462 = vpop.permute.xlu0 %3461
  %3465 = vset.pattern.permute.xlu0 0
  %3466 = vperm.xlu0 %3465, %v1914
  %v3467 = vpop.permute.xlu0 %3466
  %3470 = vset.pattern.permute.xlu0 0
  %3471 = vperm.xlu0 %3470, %v1916
  %v3472 = vpop.permute.xlu0 %3471
  %3475 = vset.pattern.permute.xlu0 0
  %3476 = vperm.xlu0 %3475, %v1918
  %v3477 = vpop.permute.xlu0 %3476
  %3480 = vset.pattern.permute.xlu0 0
  %3481 = vperm.xlu0 %3480, %v1920
  %v3482 = vpop.permute.xlu0 %3481
  %3485 = vset.pattern.permute.xlu0 0
  %3486 = vperm.xlu0 %3485, %v1922
  %v3487 = vpop.permute.xlu0 %3486
  %3490 = vset.pattern.permute.xlu0 0
  %3491 = vperm.xlu0 %3490, %v1924
  %v3492 = vpop.permute.xlu0 %3491
  %3495 = vset.pattern.permute.xlu0 0
  %3496 = vperm.xlu0 %3495, %v1926
  %v3497 = vpop.permute.xlu0 %3496
  %3500 = vset.pattern.permute.xlu0 0
  %3501 = vperm.xlu0 %3500, %v1928
  %v3502 = vpop.permute.xlu0 %3501
  %3505 = vset.pattern.permute.xlu0 0
  %3506 = vperm.xlu0 %3505, %v1930
  %v3507 = vpop.permute.xlu0 %3506
  %3510 = vset.pattern.permute.xlu0 0
  %3511 = vperm.xlu0 %3510, %v1932
  %v3512 = vpop.permute.xlu0 %3511
  %3515 = vset.pattern.permute.xlu0 0
  %3516 = vperm.xlu0 %3515, %v1934
  %v3517 = vpop.permute.xlu0 %3516
  %3520 = vset.pattern.permute.xlu0 0
  %3521 = vperm.xlu0 %3520, %v1936
  %v3522 = vpop.permute.xlu0 %3521
  %3525 = vset.pattern.permute.xlu0 0
  %3526 = vperm.xlu0 %3525, %v1938
  %v3527 = vpop.permute.xlu0 %3526
  %3530 = vset.pattern.permute.xlu0 0
  %3531 = vperm.xlu0 %3530, %v1940
  %v3532 = vpop.permute.xlu0 %3531
  %3535 = vset.pattern.permute.xlu0 0
  %3536 = vperm.xlu0 %3535, %v1942
  %v3537 = vpop.permute.xlu0 %3536
  %3540 = vset.pattern.permute.xlu0 0
  %3541 = vperm.xlu0 %3540, %v1944
  %v3542 = vpop.permute.xlu0 %3541
  %3545 = vset.pattern.permute.xlu0 0
  %3546 = vperm.xlu0 %3545, %v1946
  %v3547 = vpop.permute.xlu0 %3546
  %3550 = vset.pattern.permute.xlu0 0
  %3551 = vperm.xlu0 %3550, %v1948
  %v3552 = vpop.permute.xlu0 %3551
  %3555 = vset.pattern.permute.xlu0 0
  %3556 = vperm.xlu0 %3555, %v1950
  %v3557 = vpop.permute.xlu0 %3556
  %3560 = vset.pattern.permute.xlu0 0
  %3561 = vperm.xlu0 %3560, %v1952
  %v3562 = vpop.permute.xlu0 %3561
  %3565 = vset.pattern.permute.xlu0 0
  %3566 = vperm.xlu0 %3565, %v1954
  %v3567 = vpop.permute.xlu0 %3566
  %3570 = vset.pattern.permute.xlu0 0
  %3571 = vperm.xlu0 %3570, %v1956
  %v3572 = vpop.permute.xlu0 %3571
  %3575 = vset.pattern.permute.xlu0 0
  %3576 = vperm.xlu0 %3575, %v1958
  %v3577 = vpop.permute.xlu0 %3576
  %3580 = vset.pattern.permute.xlu0 0
  %3581 = vperm.xlu0 %3580, %v1960
  %v3582 = vpop.permute.xlu0 %3581
  %3585 = vset.pattern.permute.xlu0 0
  %3586 = vperm.xlu0 %3585, %v1962
  %v3587 = vpop.permute.xlu0 %3586
  %3590 = vset.pattern.permute.xlu0 0
  %3591 = vperm.xlu0 %3590, %v1964
  %v3592 = vpop.permute.xlu0 %3591
  %3595 = vset.pattern.permute.xlu0 0
  %3596 = vperm.xlu0 %3595, %v1966
  %v3597 = vpop.permute.xlu0 %3596
  %3600 = vset.pattern.permute.xlu0 0
  %3601 = vperm.xlu0 %3600, %v1968
  %v3602 = vpop.permute.xlu0 %3601
  %3605 = vset.pattern.permute.xlu0 0
  %3606 = vperm.xlu0 %3605, %v1970
  %v3607 = vpop.permute.xlu0 %3606
  %3610 = vset.pattern.permute.xlu0 0
  %3611 = vperm.xlu0 %3610, %v1972
  %v3612 = vpop.permute.xlu0 %3611
  %3615 = vset.pattern.permute.xlu0 0
  %3616 = vperm.xlu0 %3615, %v1974
  %v3617 = vpop.permute.xlu0 %3616
  %3620 = vset.pattern.permute.xlu0 0
  %3621 = vperm.xlu0 %3620, %v1976
  %v3622 = vpop.permute.xlu0 %3621
  %3625 = vset.pattern.permute.xlu0 0
  %3626 = vperm.xlu0 %3625, %v1978
  %v3627 = vpop.permute.xlu0 %3626
  %3630 = vset.pattern.permute.xlu0 0
  %3631 = vperm.xlu0 %3630, %v1980
  %v3632 = vpop.permute.xlu0 %3631
  %3635 = vset.pattern.permute.xlu0 0
  %3636 = vperm.xlu0 %3635, %v1982
  %v3637 = vpop.permute.xlu0 %3636
  %3640 = vset.pattern.permute.xlu0 0
  %3641 = vperm.xlu0 %3640, %v1984
  %v3642 = vpop.permute.xlu0 %3641
  %3645 = vset.pattern.permute.xlu0 0
  %3646 = vperm.xlu0 %3645, %v1986
  %v3647 = vpop.permute.xlu0 %3646
  %3650 = vset.pattern.permute.xlu0 0
  %3651 = vperm.xlu0 %3650, %v1988
  %v3652 = vpop.permute.xlu0 %3651
  %3655 = vset.pattern.permute.xlu0 0
  %3656 = vperm.xlu0 %3655, %v1990
  %v3657 = vpop.permute.xlu0 %3656
  %3660 = vset.pattern.permute.xlu0 0
  %3661 = vperm.xlu0 %3660, %v1992
  %v3662 = vpop.permute.xlu0 %3661
  %3665 = vset.pattern.permute.xlu0 0
  %3666 = vperm.xlu0 %3665, %v1994
  %v3667 = vpop.permute.xlu0 %3666
  %3670 = vset.pattern.permute.xlu0 0
  %3671 = vperm.xlu0 %3670, %v1996
  %v3672 = vpop.permute.xlu0 %3671
  %3675 = vset.pattern.permute.xlu0 0
  %3676 = vperm.xlu0 %3675, %v1998
  %v3677 = vpop.permute.xlu0 %3676
  %3680 = vset.pattern.permute.xlu0 0
  %3681 = vperm.xlu0 %3680, %v2000
  %v3682 = vpop.permute.xlu0 %3681
  %3685 = vset.pattern.permute.xlu0 0
  %3686 = vperm.xlu0 %3685, %v2002
  %v3687 = vpop.permute.xlu0 %3686
  %3690 = vset.pattern.permute.xlu0 0
  %3691 = vperm.xlu0 %3690, %v2004
  %v3692 = vpop.permute.xlu0 %3691
  %3695 = vset.pattern.permute.xlu0 0
  %3696 = vperm.xlu0 %3695, %v2006
  %v3697 = vpop.permute.xlu0 %3696
  %3700 = vset.pattern.permute.xlu0 0
  %3701 = vperm.xlu0 %3700, %v2008
  %v3702 = vpop.permute.xlu0 %3701
  %3705 = vset.pattern.permute.xlu0 0
  %3706 = vperm.xlu0 %3705, %v2010
  %v3707 = vpop.permute.xlu0 %3706
  %3710 = vset.pattern.permute.xlu0 0
  %3711 = vperm.xlu0 %3710, %v2012
  %v3712 = vpop.permute.xlu0 %3711
  %3715 = vset.pattern.permute.xlu0 0
  %3716 = vperm.xlu0 %3715, %v2014
  %v3717 = vpop.permute.xlu0 %3716
  %3720 = vset.pattern.permute.xlu0 0
  %3721 = vperm.xlu0 %3720, %v2016
  %v3722 = vpop.permute.xlu0 %3721
  %3725 = vset.pattern.permute.xlu0 0
  %3726 = vperm.xlu0 %3725, %v2018
  %v3727 = vpop.permute.xlu0 %3726
  %3730 = vset.pattern.permute.xlu0 0
  %3731 = vperm.xlu0 %3730, %v2020
  %v3732 = vpop.permute.xlu0 %3731
  %3735 = vset.pattern.permute.xlu0 0
  %3736 = vperm.xlu0 %3735, %v2022
  %v3737 = vpop.permute.xlu0 %3736
  %3740 = vset.pattern.permute.xlu0 0
  %3741 = vperm.xlu0 %3740, %v2024
  %v3742 = vpop.permute.xlu0 %3741
  %3745 = vset.pattern.permute.xlu0 0
  %3746 = vperm.xlu0 %3745, %v2026
  %v3747 = vpop.permute.xlu0 %3746
  %3750 = vset.pattern.permute.xlu0 0
  %3751 = vperm.xlu0 %3750, %v2028
  %v3752 = vpop.permute.xlu0 %3751
  %3755 = vset.pattern.permute.xlu0 0
  %3756 = vperm.xlu0 %3755, %v2030
  %v3757 = vpop.permute.xlu0 %3756
  %v3759 = vmul.f32 %v2031, %v2322
  %v3760 = vmul.f32 %v2032, %v2327
  %v3761 = vmul.f32 %v2033, %v2332
  %v3762 = vmul.f32 %v2034, %v2337
  %v3763 = vmul.f32 %v2035, %v2342
  %v3764 = vmul.f32 %v2036, %v2347
  %v3765 = vmul.f32 %v2037, %v2352
  %v3766 = vmul.f32 %v2038, %v2357
  %v3767 = vmul.f32 %v2039, %v2362
  %v3768 = vmul.f32 %v2040, %v2367
  %v3769 = vmul.f32 %v2041, %v2372
  %v3770 = vmul.f32 %v2042, %v2377
  %v3771 = vmul.f32 %v2043, %v2382
  %v3772 = vmul.f32 %v2044, %v2387
  %v3773 = vmul.f32 %v2045, %v2392
  %v3774 = vmul.f32 %v2046, %v2397
  %v3775 = vmul.f32 %v2047, %v2402
  %v3776 = vmul.f32 %v2048, %v2407
  %v3777 = vmul.f32 %v2049, %v2412
  %v3778 = vmul.f32 %v2050, %v2417
  %v3779 = vmul.f32 %v2051, %v2422
  %v3780 = vmul.f32 %v2052, %v2427
  %v3781 = vmul.f32 %v2053, %v2432
  %v3782 = vmul.f32 %v2054, %v2437
  %v3783 = vmul.f32 %v2055, %v2442
  %v3784 = vmul.f32 %v2056, %v2447
  %v3785 = vmul.f32 %v2057, %v2452
  %v3786 = vmul.f32 %v2058, %v2457
  %v3787 = vmul.f32 %v2059, %v2462
  %v3788 = vmul.f32 %v2060, %v2467
  %v3789 = vmul.f32 %v2061, %v2472
  %v3790 = vmul.f32 %v2062, %v2477
  %v3791 = vmul.f32 %v2063, %v2482
  %v3792 = vmul.f32 %v2064, %v2487
  %v3793 = vmul.f32 %v2065, %v2492
  %v3794 = vmul.f32 %v2066, %v2497
  %v3795 = vmul.f32 %v2067, %v2502
  %v3796 = vmul.f32 %v2068, %v2507
  %v3797 = vmul.f32 %v2069, %v2512
  %v3798 = vmul.f32 %v2070, %v2517
  %v3799 = vmul.f32 %v2071, %v2522
  %v3800 = vmul.f32 %v2072, %v2527
  %v3801 = vmul.f32 %v2073, %v2532
  %v3802 = vmul.f32 %v2074, %v2537
  %v3803 = vmul.f32 %v2075, %v2542
  %v3804 = vmul.f32 %v2076, %v2547
  %v3805 = vmul.f32 %v2077, %v2552
  %v3806 = vmul.f32 %v2078, %v2557
  %v3807 = vmul.f32 %v2079, %v2562
  %v3808 = vmul.f32 %v2080, %v2567
  %v3809 = vmul.f32 %v2081, %v2572
  %v3810 = vmul.f32 %v2082, %v2577
  %v3811 = vmul.f32 %v2083, %v2582
  %v3812 = vmul.f32 %v2084, %v2587
  %v3813 = vmul.f32 %v2085, %v2592
  %v3814 = vmul.f32 %v2086, %v2597
  %v3815 = vmul.f32 %v2087, %v2602
  %v3816 = vmul.f32 %v2088, %v2607
  %v3817 = vmul.f32 %v2089, %v2612
  %v3818 = vmul.f32 %v2090, %v2617
  %v3819 = vmul.f32 %v2091, %v2622
  %v3820 = vmul.f32 %v2092, %v2627
  %v3821 = vmul.f32 %v2093, %v2632
  %v3822 = vmul.f32 %v2094, %v2637
  %v3823 = vmul.f32 %v2095, %v2642
  %v3824 = vmul.f32 %v2096, %v2647
  %v3825 = vmul.f32 %v2097, %v2652
  %v3826 = vmul.f32 %v2098, %v2657
  %v3827 = vmul.f32 %v2099, %v2662
  %v3828 = vmul.f32 %v2100, %v2667
  %v3829 = vmul.f32 %v2101, %v2672
  %v3830 = vmul.f32 %v2102, %v2677
  %v3831 = vmul.f32 %v2103, %v2682
  %v3832 = vmul.f32 %v2104, %v2687
  %v3833 = vmul.f32 %v2105, %v2692
  %v3834 = vmul.f32 %v2106, %v2697
  %v3835 = vmul.f32 %v2107, %v2702
  %v3836 = vmul.f32 %v2108, %v2707
  %v3837 = vmul.f32 %v2109, %v2712
  %v3838 = vmul.f32 %v2110, %v2717
  %v3839 = vmul.f32 %v2111, %v2722
  %v3840 = vmul.f32 %v2112, %v2727
  %v3841 = vmul.f32 %v2113, %v2732
  %v3842 = vmul.f32 %v2114, %v2737
  %v3843 = vmul.f32 %v2115, %v2742
  %v3844 = vmul.f32 %v2116, %v2747
  %v3845 = vmul.f32 %v2117, %v2752
  %v3846 = vmul.f32 %v2118, %v2757
  %v3847 = vmul.f32 %v2119, %v2762
  %v3848 = vmul.f32 %v2120, %v2767
  %v3849 = vmul.f32 %v2121, %v2772
  %v3850 = vmul.f32 %v2122, %v2777
  %v3851 = vmul.f32 %v2123, %v2782
  %v3852 = vmul.f32 %v2124, %v2787
  %v3853 = vmul.f32 %v2125, %v2792
  %v3854 = vmul.f32 %v2126, %v2797
  %v3855 = vmul.f32 %v2127, %v2802
  %v3856 = vmul.f32 %v2128, %v2807
  %v3857 = vmul.f32 %v2129, %v2812
  %v3858 = vmul.f32 %v2130, %v2817
  %v3859 = vmul.f32 %v2131, %v2822
  %v3860 = vmul.f32 %v2132, %v2827
  %v3861 = vmul.f32 %v2133, %v2832
  %v3862 = vmul.f32 %v2134, %v2837
  %v3863 = vmul.f32 %v2135, %v2842
  %v3864 = vmul.f32 %v2136, %v2847
  %v3865 = vmul.f32 %v2137, %v2852
  %v3866 = vmul.f32 %v2138, %v2857
  %v3867 = vmul.f32 %v2139, %v2862
  %v3868 = vmul.f32 %v2140, %v2867
  %v3869 = vmul.f32 %v2141, %v2872
  %v3870 = vmul.f32 %v2142, %v2877
  %v3871 = vmul.f32 %v2143, %v2882
  %v3872 = vmul.f32 %v2144, %v2887
  %v3873 = vmul.f32 %v2145, %v2892
  %v3874 = vmul.f32 %v2146, %v2897
  %v3875 = vmul.f32 %v2147, %v2902
  %v3876 = vmul.f32 %v2148, %v2907
  %v3877 = vmul.f32 %v2149, %v2912
  %v3878 = vmul.f32 %v2150, %v2917
  %v3879 = vmul.f32 %v2151, %v2922
  %v3880 = vmul.f32 %v2152, %v2927
  %v3881 = vmul.f32 %v2153, %v2932
  %v3882 = vmul.f32 %v2154, %v2937
  %v3883 = vmul.f32 %v2155, %v2942
  %v3884 = vmul.f32 %v2156, %v2947
  %v3885 = vmul.f32 %v2157, %v2952
  %v3886 = vmul.f32 %v2158, %v2957
  %v3887 = vmul.f32 %v2159, %v2962
  %v3888 = vmul.f32 %v2160, %v2967
  %v3889 = vmul.f32 %v2161, %v2972
  %v3890 = vmul.f32 %v2162, %v2977
  %v3891 = vmul.f32 %v2163, %v2982
  %v3892 = vmul.f32 %v2164, %v2987
  %v3893 = vmul.f32 %v2165, %v2992
  %v3894 = vmul.f32 %v2166, %v2997
  %v3895 = vmul.f32 %v2167, %v3002
  %v3896 = vmul.f32 %v2168, %v3007
  %v3897 = vmul.f32 %v2169, %v3012
  %v3898 = vmul.f32 %v2170, %v3017
  %v3899 = vmul.f32 %v2171, %v3022
  %v3900 = vmul.f32 %v2172, %v3027
  %v3901 = vmul.f32 %v2173, %v3032
  %v3902 = vmul.f32 %v2174, %v3037
  %v3903 = vmul.f32 %v2175, %v3042
  %v3904 = vmul.f32 %v2176, %v3047
  %v3905 = vmul.f32 %v2177, %v3052
  %v3906 = vmul.f32 %v2178, %v3057
  %v3907 = vmul.f32 %v2179, %v3062
  %v3908 = vmul.f32 %v2180, %v3067
  %v3909 = vmul.f32 %v2181, %v3072
  %v3910 = vmul.f32 %v2182, %v3077
  %v3911 = vmul.f32 %v2183, %v3082
  %v3912 = vmul.f32 %v2184, %v3087
  %v3913 = vmul.f32 %v2185, %v3092
  %v3914 = vmul.f32 %v2186, %v3097
  %v3915 = vmul.f32 %v2187, %v3102
  %v3916 = vmul.f32 %v2188, %v3107
  %v3917 = vmul.f32 %v2189, %v3112
  %v3918 = vmul.f32 %v2190, %v3117
  %v3919 = vmul.f32 %v2191, %v3122
  %v3920 = vmul.f32 %v2192, %v3127
  %v3921 = vmul.f32 %v2193, %v3132
  %v3922 = vmul.f32 %v2194, %v3137
  %v3923 = vmul.f32 %v2195, %v3142
  %v3924 = vmul.f32 %v2196, %v3147
  %v3925 = vmul.f32 %v2197, %v3152
  %v3926 = vmul.f32 %v2198, %v3157
  %v3927 = vmul.f32 %v2199, %v3162
  %v3928 = vmul.f32 %v2200, %v3167
  %v3929 = vmul.f32 %v2201, %v3172
  %v3930 = vmul.f32 %v2202, %v3177
  %v3931 = vmul.f32 %v2203, %v3182
  %v3932 = vmul.f32 %v2204, %v3187
  %v3933 = vmul.f32 %v2205, %v3192
  %v3934 = vmul.f32 %v2206, %v3197
  %v3935 = vmul.f32 %v2207, %v3202
  %v3936 = vmul.f32 %v2208, %v3207
  %v3937 = vmul.f32 %v2209, %v3212
  %v3938 = vmul.f32 %v2210, %v3217
  %v3939 = vmul.f32 %v2211, %v3222
  %v3940 = vmul.f32 %v2212, %v3227
  %v3941 = vmul.f32 %v2213, %v3232
  %v3942 = vmul.f32 %v2214, %v3237
  %v3943 = vmul.f32 %v2215, %v3242
  %v3944 = vmul.f32 %v2216, %v3247
  %v3945 = vmul.f32 %v2217, %v3252
  %v3946 = vmul.f32 %v2218, %v3257
  %v3947 = vmul.f32 %v2219, %v3262
  %v3948 = vmul.f32 %v2220, %v3267
  %v3949 = vmul.f32 %v2221, %v3272
  %v3950 = vmul.f32 %v2222, %v3277
  %v3951 = vmul.f32 %v2223, %v3282
  %v3952 = vmul.f32 %v2224, %v3287
  %v3953 = vmul.f32 %v2225, %v3292
  %v3954 = vmul.f32 %v2226, %v3297
  %v3955 = vmul.f32 %v2227, %v3302
  %v3956 = vmul.f32 %v2228, %v3307
  %v3957 = vmul.f32 %v2229, %v3312
  %v3958 = vmul.f32 %v2230, %v3317
  %v3959 = vmul.f32 %v2231, %v3322
  %v3960 = vmul.f32 %v2232, %v3327
  %v3961 = vmul.f32 %v2233, %v3332
  %v3962 = vmul.f32 %v2234, %v3337
  %v3963 = vmul.f32 %v2235, %v3342
  %v3964 = vmul.f32 %v2236, %v3347
  %v3965 = vmul.f32 %v2237, %v3352
  %v3966 = vmul.f32 %v2238, %v3357
  %v3967 = vmul.f32 %v2239, %v3362
  %v3968 = vmul.f32 %v2240, %v3367
  %v3969 = vmul.f32 %v2241, %v3372
  %v3970 = vmul.f32 %v2242, %v3377
  %v3971 = vmul.f32 %v2243, %v3382
  %v3972 = vmul.f32 %v2244, %v3387
  %v3973 = vmul.f32 %v2245, %v3392
  %v3974 = vmul.f32 %v2246, %v3397
  %v3975 = vmul.f32 %v2247, %v3402
  %v3976 = vmul.f32 %v2248, %v3407
  %v3977 = vmul.f32 %v2249, %v3412
  %v3978 = vmul.f32 %v2250, %v3417
  %v3979 = vmul.f32 %v2251, %v3422
  %v3980 = vmul.f32 %v2252, %v3427
  %v3981 = vmul.f32 %v2253, %v3432
  %v3982 = vmul.f32 %v2254, %v3437
  %v3983 = vmul.f32 %v2255, %v3442
  %v3984 = vmul.f32 %v2256, %v3447
  %v3985 = vmul.f32 %v2257, %v3452
  %v3986 = vmul.f32 %v2258, %v3457
  %v3987 = vmul.f32 %v2259, %v3462
  %v3988 = vmul.f32 %v2260, %v3467
  %v3989 = vmul.f32 %v2261, %v3472
  %v3990 = vmul.f32 %v2262, %v3477
  %v3991 = vmul.f32 %v2263, %v3482
  %v3992 = vmul.f32 %v2264, %v3487
  %v3993 = vmul.f32 %v2265, %v3492
  %v3994 = vmul.f32 %v2266, %v3497
  %v3995 = vmul.f32 %v2267, %v3502
  %v3996 = vmul.f32 %v2268, %v3507
  %v3997 = vmul.f32 %v2269, %v3512
  %v3998 = vmul.f32 %v2270, %v3517
  %v3999 = vmul.f32 %v2271, %v3522
  %v4000 = vmul.f32 %v2272, %v3527
  %v4001 = vmul.f32 %v2273, %v3532
  %v4002 = vmul.f32 %v2274, %v3537
  %v4003 = vmul.f32 %v2275, %v3542
  %v4004 = vmul.f32 %v2276, %v3547
  %v4005 = vmul.f32 %v2277, %v3552
  %v4006 = vmul.f32 %v2278, %v3557
  %v4007 = vmul.f32 %v2279, %v3562
  %v4008 = vmul.f32 %v2280, %v3567
  %v4009 = vmul.f32 %v2281, %v3572
  %v4010 = vmul.f32 %v2282, %v3577
  %v4011 = vmul.f32 %v2283, %v3582
  %v4012 = vmul.f32 %v2284, %v3587
  %v4013 = vmul.f32 %v2285, %v3592
  %v4014 = vmul.f32 %v2286, %v3597
  %v4015 = vmul.f32 %v2287, %v3602
  %v4016 = vmul.f32 %v2288, %v3607
  %v4017 = vmul.f32 %v2289, %v3612
  %v4018 = vmul.f32 %v2290, %v3617
  %v4019 = vmul.f32 %v2291, %v3622
  %v4020 = vmul.f32 %v2292, %v3627
  %v4021 = vmul.f32 %v2293, %v3632
  %v4022 = vmul.f32 %v2294, %v3637
  %v4023 = vmul.f32 %v2295, %v3642
  %v4024 = vmul.f32 %v2296, %v3647
  %v4025 = vmul.f32 %v2297, %v3652
  %v4026 = vmul.f32 %v2298, %v3657
  %v4027 = vmul.f32 %v2299, %v3662
  %v4028 = vmul.f32 %v2300, %v3667
  %v4029 = vmul.f32 %v2301, %v3672
  %v4030 = vmul.f32 %v2302, %v3677
  %v4031 = vmul.f32 %v2303, %v3682
  %v4032 = vmul.f32 %v2304, %v3687
  %v4033 = vmul.f32 %v2305, %v3692
  %v4034 = vmul.f32 %v2306, %v3697
  %v4035 = vmul.f32 %v2307, %v3702
  %v4036 = vmul.f32 %v2308, %v3707
  %v4037 = vmul.f32 %v2309, %v3712
  %v4038 = vmul.f32 %v2310, %v3717
  %v4039 = vmul.f32 %v2311, %v3722
  %v4040 = vmul.f32 %v2312, %v3727
  %v4041 = vmul.f32 %v2313, %v3732
  %v4042 = vmul.f32 %v2314, %v3737
  %v4043 = vmul.f32 %v2315, %v3742
  %v4044 = vmul.f32 %v2316, %v3747
  %v4045 = vmul.f32 %v2317, %v3752
  %v4046 = vmul.f32 %v2318, %v3757
  %v4047 = vld [vmem:[%s2] sm:$0xff]
  %v4048 = vld [vmem:[%s2 + $0x8] sm:$0xff]
  %v4049 = vld [vmem:[%s2 + $0x10] sm:$0xff]
  %v4050 = vld [vmem:[%s2 + $0x18] sm:$0xff]
  %v4051 = vld [vmem:[%s2 + $0x20] sm:$0xff]
  %v4052 = vld [vmem:[%s2 + $0x28] sm:$0xff]
  %v4053 = vld [vmem:[%s2 + $0x30] sm:$0xff]
  %v4054 = vld [vmem:[%s2 + $0x38] sm:$0xff]
  %v4055 = vld [vmem:[%s2 + $0x40] sm:$0xff]
  %v4056 = vld [vmem:[%s2 + $0x48] sm:$0xff]
  %v4057 = vld [vmem:[%s2 + $0x50] sm:$0xff]
  %v4058 = vld [vmem:[%s2 + $0x58] sm:$0xff]
  %v4059 = vld [vmem:[%s2 + $0x60] sm:$0xff]
  %v4060 = vld [vmem:[%s2 + $0x68] sm:$0xff]
  %v4061 = vld [vmem:[%s2 + $0x70] sm:$0xff]
  %v4062 = vld [vmem:[%s2 + $0x78] sm:$0xff]
  %v4063 = vld [vmem:[%s2 + $0x80] sm:$0xff]
  %v4064 = vld [vmem:[%s2 + $0x88] sm:$0xff]
  %v4065 = vld [vmem:[%s2 + $0x90] sm:$0xff]
  %v4066 = vld [vmem:[%s2 + $0x98] sm:$0xff]
  %v4067 = vld [vmem:[%s2 + $0xa0] sm:$0xff]
  %v4068 = vld [vmem:[%s2 + $0xa8] sm:$0xff]
  %v4069 = vld [vmem:[%s2 + $0xb0] sm:$0xff]
  %v4070 = vld [vmem:[%s2 + $0xb8] sm:$0xff]
  %v4071 = vld [vmem:[%s2 + $0xc0] sm:$0xff]
  %v4072 = vld [vmem:[%s2 + $0xc8] sm:$0xff]
  %v4073 = vld [vmem:[%s2 + $0xd0] sm:$0xff]
  %v4074 = vld [vmem:[%s2 + $0xd8] sm:$0xff]
  %v4075 = vld [vmem:[%s2 + $0xe0] sm:$0xff]
  %v4076 = vld [vmem:[%s2 + $0xe8] sm:$0xff]
  %v4077 = vld [vmem:[%s2 + $0xf0] sm:$0xff]
  %v4078 = vld [vmem:[%s2 + $0xf8] sm:$0xff]
  %v4079 = vld [vmem:[%s2 + $0x100] sm:$0xff]
  %v4080 = vld [vmem:[%s2 + $0x108] sm:$0xff]
  %v4081 = vld [vmem:[%s2 + $0x110] sm:$0xff]
  %v4082 = vld [vmem:[%s2 + $0x118] sm:$0xff]
  %v4083 = vld [vmem:[%s2 + $0x120] sm:$0xff]
  %v4084 = vld [vmem:[%s2 + $0x128] sm:$0xff]
  %v4085 = vld [vmem:[%s2 + $0x130] sm:$0xff]
  %v4086 = vld [vmem:[%s2 + $0x138] sm:$0xff]
  %v4087 = vld [vmem:[%s2 + $0x140] sm:$0xff]
  %v4088 = vld [vmem:[%s2 + $0x148] sm:$0xff]
  %v4089 = vld [vmem:[%s2 + $0x150] sm:$0xff]
  %v4090 = vld [vmem:[%s2 + $0x158] sm:$0xff]
  %v4091 = vld [vmem:[%s2 + $0x160] sm:$0xff]
  %v4092 = vld [vmem:[%s2 + $0x168] sm:$0xff]
  %v4093 = vld [vmem:[%s2 + $0x170] sm:$0xff]
  %v4094 = vld [vmem:[%s2 + $0x178] sm:$0xff]
  %v4095 = vld [vmem:[%s2 + $0x180] sm:$0xff]
  %v4096 = vld [vmem:[%s2 + $0x188] sm:$0xff]
  %v4097 = vld [vmem:[%s2 + $0x190] sm:$0xff]
  %v4098 = vld [vmem:[%s2 + $0x198] sm:$0xff]
  %v4099 = vld [vmem:[%s2 + $0x1a0] sm:$0xff]
  %v4100 = vld [vmem:[%s2 + $0x1a8] sm:$0xff]
  %v4101 = vld [vmem:[%s2 + $0x1b0] sm:$0xff]
  %v4102 = vld [vmem:[%s2 + $0x1b8] sm:$0xff]
  %v4103 = vld [vmem:[%s2 + $0x1c0] sm:$0xff]
  %v4104 = vld [vmem:[%s2 + $0x1c8] sm:$0xff]
  %v4105 = vld [vmem:[%s2 + $0x1d0] sm:$0xff]
  %v4106 = vld [vmem:[%s2 + $0x1d8] sm:$0xff]
  %v4107 = vld [vmem:[%s2 + $0x1e0] sm:$0xff]
  %v4108 = vld [vmem:[%s2 + $0x1e8] sm:$0xff]
  %v4109 = vld [vmem:[%s2 + $0x1f0] sm:$0xff]
  %v4110 = vld [vmem:[%s2 + $0x1f8] sm:$0xff]
  %v4111 = vld [vmem:[%s2 + $0x200] sm:$0xff]
  %v4112 = vld [vmem:[%s2 + $0x208] sm:$0xff]
  %v4113 = vld [vmem:[%s2 + $0x210] sm:$0xff]
  %v4114 = vld [vmem:[%s2 + $0x218] sm:$0xff]
  %v4115 = vld [vmem:[%s2 + $0x220] sm:$0xff]
  %v4116 = vld [vmem:[%s2 + $0x228] sm:$0xff]
  %v4117 = vld [vmem:[%s2 + $0x230] sm:$0xff]
  %v4118 = vld [vmem:[%s2 + $0x238] sm:$0xff]
  %v4119 = vld [vmem:[%s2 + $0x240] sm:$0xff]
  %v4120 = vld [vmem:[%s2 + $0x248] sm:$0xff]
  %v4121 = vld [vmem:[%s2 + $0x250] sm:$0xff]
  %v4122 = vld [vmem:[%s2 + $0x258] sm:$0xff]
  %v4123 = vld [vmem:[%s2 + $0x260] sm:$0xff]
  %v4124 = vld [vmem:[%s2 + $0x268] sm:$0xff]
  %v4125 = vld [vmem:[%s2 + $0x270] sm:$0xff]
  %v4126 = vld [vmem:[%s2 + $0x278] sm:$0xff]
  %v4127 = vld [vmem:[%s2 + $0x280] sm:$0xff]
  %v4128 = vld [vmem:[%s2 + $0x288] sm:$0xff]
  %v4129 = vld [vmem:[%s2 + $0x290] sm:$0xff]
  %v4130 = vld [vmem:[%s2 + $0x298] sm:$0xff]
  %v4131 = vld [vmem:[%s2 + $0x2a0] sm:$0xff]
  %v4132 = vld [vmem:[%s2 + $0x2a8] sm:$0xff]
  %v4133 = vld [vmem:[%s2 + $0x2b0] sm:$0xff]
  %v4134 = vld [vmem:[%s2 + $0x2b8] sm:$0xff]
  %v4135 = vld [vmem:[%s2 + $0x2c0] sm:$0xff]
  %v4136 = vld [vmem:[%s2 + $0x2c8] sm:$0xff]
  %v4137 = vld [vmem:[%s2 + $0x2d0] sm:$0xff]
  %v4138 = vld [vmem:[%s2 + $0x2d8] sm:$0xff]
  %v4139 = vld [vmem:[%s2 + $0x2e0] sm:$0xff]
  %v4140 = vld [vmem:[%s2 + $0x2e8] sm:$0xff]
  %v4141 = vld [vmem:[%s2 + $0x2f0] sm:$0xff]
  %v4142 = vld [vmem:[%s2 + $0x2f8] sm:$0xff]
  %v4143 = vld [vmem:[%s2 + $0x300] sm:$0xff]
  %v4144 = vld [vmem:[%s2 + $0x308] sm:$0xff]
  %v4145 = vld [vmem:[%s2 + $0x310] sm:$0xff]
  %v4146 = vld [vmem:[%s2 + $0x318] sm:$0xff]
  %v4147 = vld [vmem:[%s2 + $0x320] sm:$0xff]
  %v4148 = vld [vmem:[%s2 + $0x328] sm:$0xff]
  %v4149 = vld [vmem:[%s2 + $0x330] sm:$0xff]
  %v4150 = vld [vmem:[%s2 + $0x338] sm:$0xff]
  %v4151 = vld [vmem:[%s2 + $0x340] sm:$0xff]
  %v4152 = vld [vmem:[%s2 + $0x348] sm:$0xff]
  %v4153 = vld [vmem:[%s2 + $0x350] sm:$0xff]
  %v4154 = vld [vmem:[%s2 + $0x358] sm:$0xff]
  %v4155 = vld [vmem:[%s2 + $0x360] sm:$0xff]
  %v4156 = vld [vmem:[%s2 + $0x368] sm:$0xff]
  %v4157 = vld [vmem:[%s2 + $0x370] sm:$0xff]
  %v4158 = vld [vmem:[%s2 + $0x378] sm:$0xff]
  %v4159 = vld [vmem:[%s2 + $0x380] sm:$0xff]
  %v4160 = vld [vmem:[%s2 + $0x388] sm:$0xff]
  %v4161 = vld [vmem:[%s2 + $0x390] sm:$0xff]
  %v4162 = vld [vmem:[%s2 + $0x398] sm:$0xff]
  %v4163 = vld [vmem:[%s2 + $0x3a0] sm:$0xff]
  %v4164 = vld [vmem:[%s2 + $0x3a8] sm:$0xff]
  %v4165 = vld [vmem:[%s2 + $0x3b0] sm:$0xff]
  %v4166 = vld [vmem:[%s2 + $0x3b8] sm:$0xff]
  %v4167 = vld [vmem:[%s2 + $0x3c0] sm:$0xff]
  %v4168 = vld [vmem:[%s2 + $0x3c8] sm:$0xff]
  %v4169 = vld [vmem:[%s2 + $0x3d0] sm:$0xff]
  %v4170 = vld [vmem:[%s2 + $0x3d8] sm:$0xff]
  %v4171 = vld [vmem:[%s2 + $0x3e0] sm:$0xff]
  %v4172 = vld [vmem:[%s2 + $0x3e8] sm:$0xff]
  %v4173 = vld [vmem:[%s2 + $0x3f0] sm:$0xff]
  %v4174 = vld [vmem:[%s2 + $0x3f8] sm:$0xff]
  %v4175 = vld [vmem:[%s2 + $0x400] sm:$0xff]
  %v4176 = vld [vmem:[%s2 + $0x408] sm:$0xff]
  %v4177 = vld [vmem:[%s2 + $0x410] sm:$0xff]
  %v4178 = vld [vmem:[%s2 + $0x418] sm:$0xff]
  %v4179 = vld [vmem:[%s2 + $0x420] sm:$0xff]
  %v4180 = vld [vmem:[%s2 + $0x428] sm:$0xff]
  %v4181 = vld [vmem:[%s2 + $0x430] sm:$0xff]
  %v4182 = vld [vmem:[%s2 + $0x438] sm:$0xff]
  %v4183 = vld [vmem:[%s2 + $0x440] sm:$0xff]
  %v4184 = vld [vmem:[%s2 + $0x448] sm:$0xff]
  %v4185 = vld [vmem:[%s2 + $0x450] sm:$0xff]
  %v4186 = vld [vmem:[%s2 + $0x458] sm:$0xff]
  %v4187 = vld [vmem:[%s2 + $0x460] sm:$0xff]
  %v4188 = vld [vmem:[%s2 + $0x468] sm:$0xff]
  %v4189 = vld [vmem:[%s2 + $0x470] sm:$0xff]
  %v4190 = vld [vmem:[%s2 + $0x478] sm:$0xff]
  %v4191 = vld [vmem:[%s2 + $0x480] sm:$0xff]
  %v4192 = vld [vmem:[%s2 + $0x488] sm:$0xff]
  %v4193 = vld [vmem:[%s2 + $0x490] sm:$0xff]
  %v4194 = vld [vmem:[%s2 + $0x498] sm:$0xff]
  %v4195 = vld [vmem:[%s2 + $0x4a0] sm:$0xff]
  %v4196 = vld [vmem:[%s2 + $0x4a8] sm:$0xff]
  %v4197 = vld [vmem:[%s2 + $0x4b0] sm:$0xff]
  %v4198 = vld [vmem:[%s2 + $0x4b8] sm:$0xff]
  %v4199 = vld [vmem:[%s2 + $0x4c0] sm:$0xff]
  %v4200 = vld [vmem:[%s2 + $0x4c8] sm:$0xff]
  %v4201 = vld [vmem:[%s2 + $0x4d0] sm:$0xff]
  %v4202 = vld [vmem:[%s2 + $0x4d8] sm:$0xff]
  %v4203 = vld [vmem:[%s2 + $0x4e0] sm:$0xff]
  %v4204 = vld [vmem:[%s2 + $0x4e8] sm:$0xff]
  %v4205 = vld [vmem:[%s2 + $0x4f0] sm:$0xff]
  %v4206 = vld [vmem:[%s2 + $0x4f8] sm:$0xff]
  %v4207 = vld [vmem:[%s2 + $0x500] sm:$0xff]
  %v4208 = vld [vmem:[%s2 + $0x508] sm:$0xff]
  %v4209 = vld [vmem:[%s2 + $0x510] sm:$0xff]
  %v4210 = vld [vmem:[%s2 + $0x518] sm:$0xff]
  %v4211 = vld [vmem:[%s2 + $0x520] sm:$0xff]
  %v4212 = vld [vmem:[%s2 + $0x528] sm:$0xff]
  %v4213 = vld [vmem:[%s2 + $0x530] sm:$0xff]
  %v4214 = vld [vmem:[%s2 + $0x538] sm:$0xff]
  %v4215 = vld [vmem:[%s2 + $0x540] sm:$0xff]
  %v4216 = vld [vmem:[%s2 + $0x548] sm:$0xff]
  %v4217 = vld [vmem:[%s2 + $0x550] sm:$0xff]
  %v4218 = vld [vmem:[%s2 + $0x558] sm:$0xff]
  %v4219 = vld [vmem:[%s2 + $0x560] sm:$0xff]
  %v4220 = vld [vmem:[%s2 + $0x568] sm:$0xff]
  %v4221 = vld [vmem:[%s2 + $0x570] sm:$0xff]
  %v4222 = vld [vmem:[%s2 + $0x578] sm:$0xff]
  %v4223 = vld [vmem:[%s2 + $0x580] sm:$0xff]
  %v4224 = vld [vmem:[%s2 + $0x588] sm:$0xff]
  %v4225 = vld [vmem:[%s2 + $0x590] sm:$0xff]
  %v4226 = vld [vmem:[%s2 + $0x598] sm:$0xff]
  %v4227 = vld [vmem:[%s2 + $0x5a0] sm:$0xff]
  %v4228 = vld [vmem:[%s2 + $0x5a8] sm:$0xff]
  %v4229 = vld [vmem:[%s2 + $0x5b0] sm:$0xff]
  %v4230 = vld [vmem:[%s2 + $0x5b8] sm:$0xff]
  %v4231 = vld [vmem:[%s2 + $0x5c0] sm:$0xff]
  %v4232 = vld [vmem:[%s2 + $0x5c8] sm:$0xff]
  %v4233 = vld [vmem:[%s2 + $0x5d0] sm:$0xff]
  %v4234 = vld [vmem:[%s2 + $0x5d8] sm:$0xff]
  %v4235 = vld [vmem:[%s2 + $0x5e0] sm:$0xff]
  %v4236 = vld [vmem:[%s2 + $0x5e8] sm:$0xff]
  %v4237 = vld [vmem:[%s2 + $0x5f0] sm:$0xff]
  %v4238 = vld [vmem:[%s2 + $0x5f8] sm:$0xff]
  %v4239 = vld [vmem:[%s2 + $0x600] sm:$0xff]
  %v4240 = vld [vmem:[%s2 + $0x608] sm:$0xff]
  %v4241 = vld [vmem:[%s2 + $0x610] sm:$0xff]
  %v4242 = vld [vmem:[%s2 + $0x618] sm:$0xff]
  %v4243 = vld [vmem:[%s2 + $0x620] sm:$0xff]
  %v4244 = vld [vmem:[%s2 + $0x628] sm:$0xff]
  %v4245 = vld [vmem:[%s2 + $0x630] sm:$0xff]
  %v4246 = vld [vmem:[%s2 + $0x638] sm:$0xff]
  %v4247 = vld [vmem:[%s2 + $0x640] sm:$0xff]
  %v4248 = vld [vmem:[%s2 + $0x648] sm:$0xff]
  %v4249 = vld [vmem:[%s2 + $0x650] sm:$0xff]
  %v4250 = vld [vmem:[%s2 + $0x658] sm:$0xff]
  %v4251 = vld [vmem:[%s2 + $0x660] sm:$0xff]
  %v4252 = vld [vmem:[%s2 + $0x668] sm:$0xff]
  %v4253 = vld [vmem:[%s2 + $0x670] sm:$0xff]
  %v4254 = vld [vmem:[%s2 + $0x678] sm:$0xff]
  %v4255 = vld [vmem:[%s2 + $0x680] sm:$0xff]
  %v4256 = vld [vmem:[%s2 + $0x688] sm:$0xff]
  %v4257 = vld [vmem:[%s2 + $0x690] sm:$0xff]
  %v4258 = vld [vmem:[%s2 + $0x698] sm:$0xff]
  %v4259 = vld [vmem:[%s2 + $0x6a0] sm:$0xff]
  %v4260 = vld [vmem:[%s2 + $0x6a8] sm:$0xff]
  %v4261 = vld [vmem:[%s2 + $0x6b0] sm:$0xff]
  %v4262 = vld [vmem:[%s2 + $0x6b8] sm:$0xff]
  %v4263 = vld [vmem:[%s2 + $0x6c0] sm:$0xff]
  %v4264 = vld [vmem:[%s2 + $0x6c8] sm:$0xff]
  %v4265 = vld [vmem:[%s2 + $0x6d0] sm:$0xff]
  %v4266 = vld [vmem:[%s2 + $0x6d8] sm:$0xff]
  %v4267 = vld [vmem:[%s2 + $0x6e0] sm:$0xff]
  %v4268 = vld [vmem:[%s2 + $0x6e8] sm:$0xff]
  %v4269 = vld [vmem:[%s2 + $0x6f0] sm:$0xff]
  %v4270 = vld [vmem:[%s2 + $0x6f8] sm:$0xff]
  %v4271 = vld [vmem:[%s2 + $0x700] sm:$0xff]
  %v4272 = vld [vmem:[%s2 + $0x708] sm:$0xff]
  %v4273 = vld [vmem:[%s2 + $0x710] sm:$0xff]
  %v4274 = vld [vmem:[%s2 + $0x718] sm:$0xff]
  %v4275 = vld [vmem:[%s2 + $0x720] sm:$0xff]
  %v4276 = vld [vmem:[%s2 + $0x728] sm:$0xff]
  %v4277 = vld [vmem:[%s2 + $0x730] sm:$0xff]
  %v4278 = vld [vmem:[%s2 + $0x738] sm:$0xff]
  %v4279 = vld [vmem:[%s2 + $0x740] sm:$0xff]
  %v4280 = vld [vmem:[%s2 + $0x748] sm:$0xff]
  %v4281 = vld [vmem:[%s2 + $0x750] sm:$0xff]
  %v4282 = vld [vmem:[%s2 + $0x758] sm:$0xff]
  %v4283 = vld [vmem:[%s2 + $0x760] sm:$0xff]
  %v4284 = vld [vmem:[%s2 + $0x768] sm:$0xff]
  %v4285 = vld [vmem:[%s2 + $0x770] sm:$0xff]
  %v4286 = vld [vmem:[%s2 + $0x778] sm:$0xff]
  %v4287 = vld [vmem:[%s2 + $0x780] sm:$0xff]
  %v4288 = vld [vmem:[%s2 + $0x788] sm:$0xff]
  %v4289 = vld [vmem:[%s2 + $0x790] sm:$0xff]
  %v4290 = vld [vmem:[%s2 + $0x798] sm:$0xff]
  %v4291 = vld [vmem:[%s2 + $0x7a0] sm:$0xff]
  %v4292 = vld [vmem:[%s2 + $0x7a8] sm:$0xff]
  %v4293 = vld [vmem:[%s2 + $0x7b0] sm:$0xff]
  %v4294 = vld [vmem:[%s2 + $0x7b8] sm:$0xff]
  %v4295 = vld [vmem:[%s2 + $0x7c0] sm:$0xff]
  %v4296 = vld [vmem:[%s2 + $0x7c8] sm:$0xff]
  %v4297 = vld [vmem:[%s2 + $0x7d0] sm:$0xff]
  %v4298 = vld [vmem:[%s2 + $0x7d8] sm:$0xff]
  %v4299 = vld [vmem:[%s2 + $0x7e0] sm:$0xff]
  %v4300 = vld [vmem:[%s2 + $0x7e8] sm:$0xff]
  %v4301 = vld [vmem:[%s2 + $0x7f0] sm:$0xff]
  %v4302 = vld [vmem:[%s2 + $0x7f8] sm:$0xff]
  %v4303 = vld [vmem:[%s2 + $0x800] sm:$0xff]
  %v4304 = vld [vmem:[%s2 + $0x808] sm:$0xff]
  %v4305 = vld [vmem:[%s2 + $0x810] sm:$0xff]
  %v4306 = vld [vmem:[%s2 + $0x818] sm:$0xff]
  %v4307 = vld [vmem:[%s2 + $0x820] sm:$0xff]
  %v4308 = vld [vmem:[%s2 + $0x828] sm:$0xff]
  %v4309 = vld [vmem:[%s2 + $0x830] sm:$0xff]
  %v4310 = vld [vmem:[%s2 + $0x838] sm:$0xff]
  %v4311 = vld [vmem:[%s2 + $0x840] sm:$0xff]
  %v4312 = vld [vmem:[%s2 + $0x848] sm:$0xff]
  %v4313 = vld [vmem:[%s2 + $0x850] sm:$0xff]
  %v4314 = vld [vmem:[%s2 + $0x858] sm:$0xff]
  %v4315 = vld [vmem:[%s2 + $0x860] sm:$0xff]
  %v4316 = vld [vmem:[%s2 + $0x868] sm:$0xff]
  %v4317 = vld [vmem:[%s2 + $0x870] sm:$0xff]
  %v4318 = vld [vmem:[%s2 + $0x878] sm:$0xff]
  %v4319 = vld [vmem:[%s2 + $0x880] sm:$0xff]
  %v4320 = vld [vmem:[%s2 + $0x888] sm:$0xff]
  %v4321 = vld [vmem:[%s2 + $0x890] sm:$0xff]
  %v4322 = vld [vmem:[%s2 + $0x898] sm:$0xff]
  %v4323 = vld [vmem:[%s2 + $0x8a0] sm:$0xff]
  %v4324 = vld [vmem:[%s2 + $0x8a8] sm:$0xff]
  %v4325 = vld [vmem:[%s2 + $0x8b0] sm:$0xff]
  %v4326 = vld [vmem:[%s2 + $0x8b8] sm:$0xff]
  %v4327 = vld [vmem:[%s2 + $0x8c0] sm:$0xff]
  %v4328 = vld [vmem:[%s2 + $0x8c8] sm:$0xff]
  %v4329 = vld [vmem:[%s2 + $0x8d0] sm:$0xff]
  %v4330 = vld [vmem:[%s2 + $0x8d8] sm:$0xff]
  %v4331 = vld [vmem:[%s2 + $0x8e0] sm:$0xff]
  %v4332 = vld [vmem:[%s2 + $0x8e8] sm:$0xff]
  %v4333 = vld [vmem:[%s2 + $0x8f0] sm:$0xff]
  %v4334 = vld [vmem:[%s2 + $0x8f8] sm:$0xff]
  %v4335 = vld [vmem:[%s2 + $0x900] sm:$0xff]
  %v4336 = vld [vmem:[%s2 + $0x908] sm:$0xff]
  %v4337 = vld [vmem:[%s2 + $0x910] sm:$0xff]
  %v4338 = vld [vmem:[%s2 + $0x918] sm:$0xff]
  %v4339 = vld [vmem:[%s2 + $0x920] sm:$0xff]
  %v4340 = vld [vmem:[%s2 + $0x928] sm:$0xff]
  %v4341 = vld [vmem:[%s2 + $0x930] sm:$0xff]
  %v4342 = vld [vmem:[%s2 + $0x938] sm:$0xff]
  %v4343 = vld [vmem:[%s2 + $0x940] sm:$0xff]
  %v4344 = vld [vmem:[%s2 + $0x948] sm:$0xff]
  %v4345 = vld [vmem:[%s2 + $0x950] sm:$0xff]
  %v4346 = vld [vmem:[%s2 + $0x958] sm:$0xff]
  %v4347 = vld [vmem:[%s2 + $0x960] sm:$0xff]
  %v4348 = vld [vmem:[%s2 + $0x968] sm:$0xff]
  %v4349 = vld [vmem:[%s2 + $0x970] sm:$0xff]
  %v4350 = vld [vmem:[%s2 + $0x978] sm:$0xff]
  %v4351 = vld [vmem:[%s2 + $0x980] sm:$0xff]
  %v4352 = vld [vmem:[%s2 + $0x988] sm:$0xff]
  %v4353 = vld [vmem:[%s2 + $0x990] sm:$0xff]
  %v4354 = vld [vmem:[%s2 + $0x998] sm:$0xff]
  %v4355 = vld [vmem:[%s2 + $0x9a0] sm:$0xff]
  %v4356 = vld [vmem:[%s2 + $0x9a8] sm:$0xff]
  %v4357 = vld [vmem:[%s2 + $0x9b0] sm:$0xff]
  %v4358 = vld [vmem:[%s2 + $0x9b8] sm:$0xff]
  %v4359 = vld [vmem:[%s2 + $0x9c0] sm:$0xff]
  %v4360 = vld [vmem:[%s2 + $0x9c8] sm:$0xff]
  %v4361 = vld [vmem:[%s2 + $0x9d0] sm:$0xff]
  %v4362 = vld [vmem:[%s2 + $0x9d8] sm:$0xff]
  %v4363 = vld [vmem:[%s2 + $0x9e0] sm:$0xff]
  %v4364 = vld [vmem:[%s2 + $0x9e8] sm:$0xff]
  %v4365 = vld [vmem:[%s2 + $0x9f0] sm:$0xff]
  %v4366 = vld [vmem:[%s2 + $0x9f8] sm:$0xff]
  %v4367 = vld [vmem:[%s2 + $0xa00] sm:$0xff]
  %v4368 = vld [vmem:[%s2 + $0xa08] sm:$0xff]
  %v4369 = vld [vmem:[%s2 + $0xa10] sm:$0xff]
  %v4370 = vld [vmem:[%s2 + $0xa18] sm:$0xff]
  %v4371 = vld [vmem:[%s2 + $0xa20] sm:$0xff]
  %v4372 = vld [vmem:[%s2 + $0xa28] sm:$0xff]
  %v4373 = vld [vmem:[%s2 + $0xa30] sm:$0xff]
  %v4374 = vld [vmem:[%s2 + $0xa38] sm:$0xff]
  %v4375 = vld [vmem:[%s2 + $0xa40] sm:$0xff]
  %v4376 = vld [vmem:[%s2 + $0xa48] sm:$0xff]
  %v4377 = vld [vmem:[%s2 + $0xa50] sm:$0xff]
  %v4378 = vld [vmem:[%s2 + $0xa58] sm:$0xff]
  %v4379 = vld [vmem:[%s2 + $0xa60] sm:$0xff]
  %v4380 = vld [vmem:[%s2 + $0xa68] sm:$0xff]
  %v4381 = vld [vmem:[%s2 + $0xa70] sm:$0xff]
  %v4382 = vld [vmem:[%s2 + $0xa78] sm:$0xff]
  %v4383 = vld [vmem:[%s2 + $0xa80] sm:$0xff]
  %v4384 = vld [vmem:[%s2 + $0xa88] sm:$0xff]
  %v4385 = vld [vmem:[%s2 + $0xa90] sm:$0xff]
  %v4386 = vld [vmem:[%s2 + $0xa98] sm:$0xff]
  %v4387 = vld [vmem:[%s2 + $0xaa0] sm:$0xff]
  %v4388 = vld [vmem:[%s2 + $0xaa8] sm:$0xff]
  %v4389 = vld [vmem:[%s2 + $0xab0] sm:$0xff]
  %v4390 = vld [vmem:[%s2 + $0xab8] sm:$0xff]
  %v4391 = vld [vmem:[%s2 + $0xac0] sm:$0xff]
  %v4392 = vld [vmem:[%s2 + $0xac8] sm:$0xff]
  %v4393 = vld [vmem:[%s2 + $0xad0] sm:$0xff]
  %v4394 = vld [vmem:[%s2 + $0xad8] sm:$0xff]
  %v4395 = vld [vmem:[%s2 + $0xae0] sm:$0xff]
  %v4396 = vld [vmem:[%s2 + $0xae8] sm:$0xff]
  %v4397 = vld [vmem:[%s2 + $0xaf0] sm:$0xff]
  %v4398 = vld [vmem:[%s2 + $0xaf8] sm:$0xff]
  %v4399 = vld [vmem:[%s2 + $0xb00] sm:$0xff]
  %v4400 = vld [vmem:[%s2 + $0xb08] sm:$0xff]
  %v4401 = vld [vmem:[%s2 + $0xb10] sm:$0xff]
  %v4402 = vld [vmem:[%s2 + $0xb18] sm:$0xff]
  %v4403 = vld [vmem:[%s2 + $0xb20] sm:$0xff]
  %v4404 = vld [vmem:[%s2 + $0xb28] sm:$0xff]
  %v4405 = vld [vmem:[%s2 + $0xb30] sm:$0xff]
  %v4406 = vld [vmem:[%s2 + $0xb38] sm:$0xff]
  %v4407 = vld [vmem:[%s2 + $0xb40] sm:$0xff]
  %v4408 = vld [vmem:[%s2 + $0xb48] sm:$0xff]
  %v4409 = vld [vmem:[%s2 + $0xb50] sm:$0xff]
  %v4410 = vld [vmem:[%s2 + $0xb58] sm:$0xff]
  %v4411 = vld [vmem:[%s2 + $0xb60] sm:$0xff]
  %v4412 = vld [vmem:[%s2 + $0xb68] sm:$0xff]
  %v4413 = vld [vmem:[%s2 + $0xb70] sm:$0xff]
  %v4414 = vld [vmem:[%s2 + $0xb78] sm:$0xff]
  %v4415 = vld [vmem:[%s2 + $0xb80] sm:$0xff]
  %v4416 = vld [vmem:[%s2 + $0xb88] sm:$0xff]
  %v4417 = vld [vmem:[%s2 + $0xb90] sm:$0xff]
  %v4418 = vld [vmem:[%s2 + $0xb98] sm:$0xff]
  %v4419 = vld [vmem:[%s2 + $0xba0] sm:$0xff]
  %v4420 = vld [vmem:[%s2 + $0xba8] sm:$0xff]
  %v4421 = vld [vmem:[%s2 + $0xbb0] sm:$0xff]
  %v4422 = vld [vmem:[%s2 + $0xbb8] sm:$0xff]
  %v4423 = vld [vmem:[%s2 + $0xbc0] sm:$0xff]
  %v4424 = vld [vmem:[%s2 + $0xbc8] sm:$0xff]
  %v4425 = vld [vmem:[%s2 + $0xbd0] sm:$0xff]
  %v4426 = vld [vmem:[%s2 + $0xbd8] sm:$0xff]
  %v4427 = vld [vmem:[%s2 + $0xbe0] sm:$0xff]
  %v4428 = vld [vmem:[%s2 + $0xbe8] sm:$0xff]
  %v4429 = vld [vmem:[%s2 + $0xbf0] sm:$0xff]
  %v4430 = vld [vmem:[%s2 + $0xbf8] sm:$0xff]
  %v4431 = vld [vmem:[%s2 + $0xc00] sm:$0xff]
  %v4432 = vld [vmem:[%s2 + $0xc08] sm:$0xff]
  %v4433 = vld [vmem:[%s2 + $0xc10] sm:$0xff]
  %v4434 = vld [vmem:[%s2 + $0xc18] sm:$0xff]
  %v4435 = vld [vmem:[%s2 + $0xc20] sm:$0xff]
  %v4436 = vld [vmem:[%s2 + $0xc28] sm:$0xff]
  %v4437 = vld [vmem:[%s2 + $0xc30] sm:$0xff]
  %v4438 = vld [vmem:[%s2 + $0xc38] sm:$0xff]
  %v4439 = vld [vmem:[%s2 + $0xc40] sm:$0xff]
  %v4440 = vld [vmem:[%s2 + $0xc48] sm:$0xff]
  %v4441 = vld [vmem:[%s2 + $0xc50] sm:$0xff]
  %v4442 = vld [vmem:[%s2 + $0xc58] sm:$0xff]
  %v4443 = vld [vmem:[%s2 + $0xc60] sm:$0xff]
  %v4444 = vld [vmem:[%s2 + $0xc68] sm:$0xff]
  %v4445 = vld [vmem:[%s2 + $0xc70] sm:$0xff]
  %v4446 = vld [vmem:[%s2 + $0xc78] sm:$0xff]
  %v4447 = vld [vmem:[%s2 + $0xc80] sm:$0xff]
  %v4448 = vld [vmem:[%s2 + $0xc88] sm:$0xff]
  %v4449 = vld [vmem:[%s2 + $0xc90] sm:$0xff]
  %v4450 = vld [vmem:[%s2 + $0xc98] sm:$0xff]
  %v4451 = vld [vmem:[%s2 + $0xca0] sm:$0xff]
  %v4452 = vld [vmem:[%s2 + $0xca8] sm:$0xff]
  %v4453 = vld [vmem:[%s2 + $0xcb0] sm:$0xff]
  %v4454 = vld [vmem:[%s2 + $0xcb8] sm:$0xff]
  %v4455 = vld [vmem:[%s2 + $0xcc0] sm:$0xff]
  %v4456 = vld [vmem:[%s2 + $0xcc8] sm:$0xff]
  %v4457 = vld [vmem:[%s2 + $0xcd0] sm:$0xff]
  %v4458 = vld [vmem:[%s2 + $0xcd8] sm:$0xff]
  %v4459 = vld [vmem:[%s2 + $0xce0] sm:$0xff]
  %v4460 = vld [vmem:[%s2 + $0xce8] sm:$0xff]
  %v4461 = vld [vmem:[%s2 + $0xcf0] sm:$0xff]
  %v4462 = vld [vmem:[%s2 + $0xcf8] sm:$0xff]
  %v4463 = vld [vmem:[%s2 + $0xd00] sm:$0xff]
  %v4464 = vld [vmem:[%s2 + $0xd08] sm:$0xff]
  %v4465 = vld [vmem:[%s2 + $0xd10] sm:$0xff]
  %v4466 = vld [vmem:[%s2 + $0xd18] sm:$0xff]
  %v4467 = vld [vmem:[%s2 + $0xd20] sm:$0xff]
  %v4468 = vld [vmem:[%s2 + $0xd28] sm:$0xff]
  %v4469 = vld [vmem:[%s2 + $0xd30] sm:$0xff]
  %v4470 = vld [vmem:[%s2 + $0xd38] sm:$0xff]
  %v4471 = vld [vmem:[%s2 + $0xd40] sm:$0xff]
  %v4472 = vld [vmem:[%s2 + $0xd48] sm:$0xff]
  %v4473 = vld [vmem:[%s2 + $0xd50] sm:$0xff]
  %v4474 = vld [vmem:[%s2 + $0xd58] sm:$0xff]
  %v4475 = vld [vmem:[%s2 + $0xd60] sm:$0xff]
  %v4476 = vld [vmem:[%s2 + $0xd68] sm:$0xff]
  %v4477 = vld [vmem:[%s2 + $0xd70] sm:$0xff]
  %v4478 = vld [vmem:[%s2 + $0xd78] sm:$0xff]
  %v4479 = vpack.c.bf16 %v3760, %v3759
  %v4480 = vpack.c.bf16 %v3762, %v3761
  %v4481 = vpack.c.bf16 %v3764, %v3763
  %v4482 = vpack.c.bf16 %v3766, %v3765
  %v4483 = vpack.c.bf16 %v3768, %v3767
  %v4484 = vpack.c.bf16 %v3770, %v3769
  %v4485 = vpack.c.bf16 %v3772, %v3771
  %v4486 = vpack.c.bf16 %v3774, %v3773
  %v4487 = vpack.c.bf16 %v3776, %v3775
  %v4488 = vpack.c.bf16 %v3778, %v3777
  %v4489 = vpack.c.bf16 %v3780, %v3779
  %v4490 = vpack.c.bf16 %v3782, %v3781
  %v4491 = vpack.c.bf16 %v3784, %v3783
  %v4492 = vpack.c.bf16 %v3786, %v3785
  %v4493 = vpack.c.bf16 %v3788, %v3787
  %v4494 = vpack.c.bf16 %v3790, %v3789
  %v4495 = vpack.c.bf16 %v3792, %v3791
  %v4496 = vpack.c.bf16 %v3794, %v3793
  %v4497 = vpack.c.bf16 %v3796, %v3795
  %v4498 = vpack.c.bf16 %v3798, %v3797
  %v4499 = vpack.c.bf16 %v3800, %v3799
  %v4500 = vpack.c.bf16 %v3802, %v3801
  %v4501 = vpack.c.bf16 %v3804, %v3803
  %v4502 = vpack.c.bf16 %v3806, %v3805
  %v4503 = vpack.c.bf16 %v3808, %v3807
  %v4504 = vpack.c.bf16 %v3810, %v3809
  %v4505 = vpack.c.bf16 %v3812, %v3811
  %v4506 = vpack.c.bf16 %v3814, %v3813
  %v4507 = vpack.c.bf16 %v3816, %v3815
  %v4508 = vpack.c.bf16 %v3818, %v3817
  %v4509 = vpack.c.bf16 %v3820, %v3819
  %v4510 = vpack.c.bf16 %v3822, %v3821
  %v4511 = vpack.c.bf16 %v3824, %v3823
  %v4512 = vpack.c.bf16 %v3826, %v3825
  %v4513 = vpack.c.bf16 %v3828, %v3827
  %v4514 = vpack.c.bf16 %v3830, %v3829
  %v4515 = vpack.c.bf16 %v3832, %v3831
  %v4516 = vpack.c.bf16 %v3834, %v3833
  %v4517 = vpack.c.bf16 %v3836, %v3835
  %v4518 = vpack.c.bf16 %v3838, %v3837
  %v4519 = vpack.c.bf16 %v3840, %v3839
  %v4520 = vpack.c.bf16 %v3842, %v3841
  %v4521 = vpack.c.bf16 %v3844, %v3843
  %v4522 = vpack.c.bf16 %v3846, %v3845
  %v4523 = vpack.c.bf16 %v3848, %v3847
  %v4524 = vpack.c.bf16 %v3850, %v3849
  %v4525 = vpack.c.bf16 %v3852, %v3851
  %v4526 = vpack.c.bf16 %v3854, %v3853
  %v4527 = vpack.c.bf16 %v3856, %v3855
  %v4528 = vpack.c.bf16 %v3858, %v3857
  %v4529 = vpack.c.bf16 %v3860, %v3859
  %v4530 = vpack.c.bf16 %v3862, %v3861
  %v4531 = vpack.c.bf16 %v3864, %v3863
  %v4532 = vpack.c.bf16 %v3866, %v3865
  %v4533 = vpack.c.bf16 %v3868, %v3867
  %v4534 = vpack.c.bf16 %v3870, %v3869
  %v4535 = vpack.c.bf16 %v3872, %v3871
  %v4536 = vpack.c.bf16 %v3874, %v3873
  %v4537 = vpack.c.bf16 %v3876, %v3875
  %v4538 = vpack.c.bf16 %v3878, %v3877
  %v4539 = vpack.c.bf16 %v3880, %v3879
  %v4540 = vpack.c.bf16 %v3882, %v3881
  %v4541 = vpack.c.bf16 %v3884, %v3883
  %v4542 = vpack.c.bf16 %v3886, %v3885
  %v4543 = vpack.c.bf16 %v3888, %v3887
  %v4544 = vpack.c.bf16 %v3890, %v3889
  %v4545 = vpack.c.bf16 %v3892, %v3891
  %v4546 = vpack.c.bf16 %v3894, %v3893
  %v4547 = vpack.c.bf16 %v3896, %v3895
  %v4548 = vpack.c.bf16 %v3898, %v3897
  %v4549 = vpack.c.bf16 %v3900, %v3899
  %v4550 = vpack.c.bf16 %v3902, %v3901
  %v4551 = vpack.c.bf16 %v3904, %v3903
  %v4552 = vpack.c.bf16 %v3906, %v3905
  %v4553 = vpack.c.bf16 %v3908, %v3907
  %v4554 = vpack.c.bf16 %v3910, %v3909
  %v4555 = vpack.c.bf16 %v3912, %v3911
  %v4556 = vpack.c.bf16 %v3914, %v3913
  %v4557 = vpack.c.bf16 %v3916, %v3915
  %v4558 = vpack.c.bf16 %v3918, %v3917
  %v4559 = vpack.c.bf16 %v3920, %v3919
  %v4560 = vpack.c.bf16 %v3922, %v3921
  %v4561 = vpack.c.bf16 %v3924, %v3923
  %v4562 = vpack.c.bf16 %v3926, %v3925
  %v4563 = vpack.c.bf16 %v3928, %v3927
  %v4564 = vpack.c.bf16 %v3930, %v3929
  %v4565 = vpack.c.bf16 %v3932, %v3931
  %v4566 = vpack.c.bf16 %v3934, %v3933
  %v4567 = vpack.c.bf16 %v3936, %v3935
  %v4568 = vpack.c.bf16 %v3938, %v3937
  %v4569 = vpack.c.bf16 %v3940, %v3939
  %v4570 = vpack.c.bf16 %v3942, %v3941
  %v4571 = vpack.c.bf16 %v3944, %v3943
  %v4572 = vpack.c.bf16 %v3946, %v3945
  %v4573 = vpack.c.bf16 %v3948, %v3947
  %v4574 = vpack.c.bf16 %v3950, %v3949
  %v4575 = vpack.c.bf16 %v3952, %v3951
  %v4576 = vpack.c.bf16 %v3954, %v3953
  %v4577 = vpack.c.bf16 %v3956, %v3955
  %v4578 = vpack.c.bf16 %v3958, %v3957
  %v4579 = vpack.c.bf16 %v3960, %v3959
  %v4580 = vpack.c.bf16 %v3962, %v3961
  %v4581 = vpack.c.bf16 %v3964, %v3963
  %v4582 = vpack.c.bf16 %v3966, %v3965
  %v4583 = vpack.c.bf16 %v3968, %v3967
  %v4584 = vpack.c.bf16 %v3970, %v3969
  %v4585 = vpack.c.bf16 %v3972, %v3971
  %v4586 = vpack.c.bf16 %v3974, %v3973
  %v4587 = vpack.c.bf16 %v3976, %v3975
  %v4588 = vpack.c.bf16 %v3978, %v3977
  %v4589 = vpack.c.bf16 %v3980, %v3979
  %v4590 = vpack.c.bf16 %v3982, %v3981
  %v4591 = vpack.c.bf16 %v3984, %v3983
  %v4592 = vpack.c.bf16 %v3986, %v3985
  %v4593 = vpack.c.bf16 %v3988, %v3987
  %v4594 = vpack.c.bf16 %v3990, %v3989
  %v4595 = vpack.c.bf16 %v3992, %v3991
  %v4596 = vpack.c.bf16 %v3994, %v3993
  %v4597 = vpack.c.bf16 %v3996, %v3995
  %v4598 = vpack.c.bf16 %v3998, %v3997
  %v4599 = vpack.c.bf16 %v4000, %v3999
  %v4600 = vpack.c.bf16 %v4002, %v4001
  %v4601 = vpack.c.bf16 %v4004, %v4003
  %v4602 = vpack.c.bf16 %v4006, %v4005
  %v4603 = vpack.c.bf16 %v4008, %v4007
  %v4604 = vpack.c.bf16 %v4010, %v4009
  %v4605 = vpack.c.bf16 %v4012, %v4011
  %v4606 = vpack.c.bf16 %v4014, %v4013
  %v4607 = vpack.c.bf16 %v4016, %v4015
  %v4608 = vpack.c.bf16 %v4018, %v4017
  %v4609 = vpack.c.bf16 %v4020, %v4019
  %v4610 = vpack.c.bf16 %v4022, %v4021
  %v4611 = vpack.c.bf16 %v4024, %v4023
  %v4612 = vpack.c.bf16 %v4026, %v4025
  %v4613 = vpack.c.bf16 %v4028, %v4027
  %v4614 = vpack.c.bf16 %v4030, %v4029
  %v4615 = vpack.c.bf16 %v4032, %v4031
  %v4616 = vpack.c.bf16 %v4034, %v4033
  %v4617 = vpack.c.bf16 %v4036, %v4035
  %v4618 = vpack.c.bf16 %v4038, %v4037
  %v4619 = vpack.c.bf16 %v4040, %v4039
  %v4620 = vpack.c.bf16 %v4042, %v4041
  %v4621 = vpack.c.bf16 %v4044, %v4043
  %v4622 = vpack.c.bf16 %v4046, %v4045
  %v5055 = vunpack.c.l.b16 %v4047
  %v5056 = vunpack.c.h.b16 %v4047
  %v5057 = vunpack.c.l.b16 %v4048
  %v5058 = vunpack.c.h.b16 %v4048
  %v5059 = vunpack.c.l.b16 %v4049
  %v5060 = vunpack.c.h.b16 %v4049
  %v5061 = vunpack.c.l.b16 %v4050
  %v5062 = vunpack.c.h.b16 %v4050
  %v5063 = vunpack.c.l.b16 %v4051
  %v5064 = vunpack.c.h.b16 %v4051
  %v5065 = vunpack.c.l.b16 %v4052
  %v5066 = vunpack.c.h.b16 %v4052
  %v5067 = vunpack.c.l.b16 %v4053
  %v5068 = vunpack.c.h.b16 %v4053
  %v5069 = vunpack.c.l.b16 %v4054
  %v5070 = vunpack.c.h.b16 %v4054
  %v5071 = vunpack.c.l.b16 %v4055
  %v5072 = vunpack.c.h.b16 %v4055
  %v5073 = vunpack.c.l.b16 %v4056
  %v5074 = vunpack.c.h.b16 %v4056
  %v5075 = vunpack.c.l.b16 %v4057
  %v5076 = vunpack.c.h.b16 %v4057
  %v5077 = vunpack.c.l.b16 %v4058
  %v5078 = vunpack.c.h.b16 %v4058
  %v5079 = vunpack.c.l.b16 %v4059
  %v5080 = vunpack.c.h.b16 %v4059
  %v5081 = vunpack.c.l.b16 %v4060
  %v5082 = vunpack.c.h.b16 %v4060
  %v5083 = vunpack.c.l.b16 %v4061
  %v5084 = vunpack.c.h.b16 %v4061
  %v5085 = vunpack.c.l.b16 %v4062
  %v5086 = vunpack.c.h.b16 %v4062
  %v5087 = vunpack.c.l.b16 %v4063
  %v5088 = vunpack.c.h.b16 %v4063
  %v5089 = vunpack.c.l.b16 %v4064
  %v5090 = vunpack.c.h.b16 %v4064
  %v5091 = vunpack.c.l.b16 %v4065
  %v5092 = vunpack.c.h.b16 %v4065
  %v5093 = vunpack.c.l.b16 %v4066
  %v5094 = vunpack.c.h.b16 %v4066
  %v5095 = vunpack.c.l.b16 %v4067
  %v5096 = vunpack.c.h.b16 %v4067
  %v5097 = vunpack.c.l.b16 %v4068
  %v5098 = vunpack.c.h.b16 %v4068
  %v5099 = vunpack.c.l.b16 %v4069
  %v5100 = vunpack.c.h.b16 %v4069
  %v5101 = vunpack.c.l.b16 %v4070
  %v5102 = vunpack.c.h.b16 %v4070
  %v5103 = vunpack.c.l.b16 %v4071
  %v5104 = vunpack.c.h.b16 %v4071
  %v5105 = vunpack.c.l.b16 %v4072
  %v5106 = vunpack.c.h.b16 %v4072
  %v5107 = vunpack.c.l.b16 %v4073
  %v5108 = vunpack.c.h.b16 %v4073
  %v5109 = vunpack.c.l.b16 %v4074
  %v5110 = vunpack.c.h.b16 %v4074
  %v5111 = vunpack.c.l.b16 %v4075
  %v5112 = vunpack.c.h.b16 %v4075
  %v5113 = vunpack.c.l.b16 %v4076
  %v5114 = vunpack.c.h.b16 %v4076
  %v5115 = vunpack.c.l.b16 %v4077
  %v5116 = vunpack.c.h.b16 %v4077
  %v5117 = vunpack.c.l.b16 %v4078
  %v5118 = vunpack.c.h.b16 %v4078
  %v5119 = vunpack.c.l.b16 %v4079
  %v5120 = vunpack.c.h.b16 %v4079
  %v5121 = vunpack.c.l.b16 %v4080
  %v5122 = vunpack.c.h.b16 %v4080
  %v5123 = vunpack.c.l.b16 %v4081
  %v5124 = vunpack.c.h.b16 %v4081
  %v5125 = vunpack.c.l.b16 %v4082
  %v5126 = vunpack.c.h.b16 %v4082
  %v5127 = vunpack.c.l.b16 %v4083
  %v5128 = vunpack.c.h.b16 %v4083
  %v5129 = vunpack.c.l.b16 %v4084
  %v5130 = vunpack.c.h.b16 %v4084
  %v5131 = vunpack.c.l.b16 %v4085
  %v5132 = vunpack.c.h.b16 %v4085
  %v5133 = vunpack.c.l.b16 %v4086
  %v5134 = vunpack.c.h.b16 %v4086
  %v5135 = vunpack.c.l.b16 %v4087
  %v5136 = vunpack.c.h.b16 %v4087
  %v5137 = vunpack.c.l.b16 %v4088
  %v5138 = vunpack.c.h.b16 %v4088
  %v5139 = vunpack.c.l.b16 %v4089
  %v5140 = vunpack.c.h.b16 %v4089
  %v5141 = vunpack.c.l.b16 %v4090
  %v5142 = vunpack.c.h.b16 %v4090
  %v5143 = vunpack.c.l.b16 %v4091
  %v5144 = vunpack.c.h.b16 %v4091
  %v5145 = vunpack.c.l.b16 %v4092
  %v5146 = vunpack.c.h.b16 %v4092
  %v5147 = vunpack.c.l.b16 %v4093
  %v5148 = vunpack.c.h.b16 %v4093
  %v5149 = vunpack.c.l.b16 %v4094
  %v5150 = vunpack.c.h.b16 %v4094
  %v5151 = vunpack.c.l.b16 %v4095
  %v5152 = vunpack.c.h.b16 %v4095
  %v5153 = vunpack.c.l.b16 %v4096
  %v5154 = vunpack.c.h.b16 %v4096
  %v5155 = vunpack.c.l.b16 %v4097
  %v5156 = vunpack.c.h.b16 %v4097
  %v5157 = vunpack.c.l.b16 %v4098
  %v5158 = vunpack.c.h.b16 %v4098
  %v5159 = vunpack.c.l.b16 %v4099
  %v5160 = vunpack.c.h.b16 %v4099
  %v5161 = vunpack.c.l.b16 %v4100
  %v5162 = vunpack.c.h.b16 %v4100
  %v5163 = vunpack.c.l.b16 %v4101
  %v5164 = vunpack.c.h.b16 %v4101
  %v5165 = vunpack.c.l.b16 %v4102
  %v5166 = vunpack.c.h.b16 %v4102
  %v5167 = vunpack.c.l.b16 %v4103
  %v5168 = vunpack.c.h.b16 %v4103
  %v5169 = vunpack.c.l.b16 %v4104
  %v5170 = vunpack.c.h.b16 %v4104
  %v5171 = vunpack.c.l.b16 %v4105
  %v5172 = vunpack.c.h.b16 %v4105
  %v5173 = vunpack.c.l.b16 %v4106
  %v5174 = vunpack.c.h.b16 %v4106
  %v5175 = vunpack.c.l.b16 %v4107
  %v5176 = vunpack.c.h.b16 %v4107
  %v5177 = vunpack.c.l.b16 %v4108
  %v5178 = vunpack.c.h.b16 %v4108
  %v5179 = vunpack.c.l.b16 %v4109
  %v5180 = vunpack.c.h.b16 %v4109
  %v5181 = vunpack.c.l.b16 %v4110
  %v5182 = vunpack.c.h.b16 %v4110
  %v5183 = vunpack.c.l.b16 %v4111
  %v5184 = vunpack.c.h.b16 %v4111
  %v5185 = vunpack.c.l.b16 %v4112
  %v5186 = vunpack.c.h.b16 %v4112
  %v5187 = vunpack.c.l.b16 %v4113
  %v5188 = vunpack.c.h.b16 %v4113
  %v5189 = vunpack.c.l.b16 %v4114
  %v5190 = vunpack.c.h.b16 %v4114
  %v5191 = vunpack.c.l.b16 %v4115
  %v5192 = vunpack.c.h.b16 %v4115
  %v5193 = vunpack.c.l.b16 %v4116
  %v5194 = vunpack.c.h.b16 %v4116
  %v5195 = vunpack.c.l.b16 %v4117
  %v5196 = vunpack.c.h.b16 %v4117
  %v5197 = vunpack.c.l.b16 %v4118
  %v5198 = vunpack.c.h.b16 %v4118
  %v5199 = vunpack.c.l.b16 %v4119
  %v5200 = vunpack.c.h.b16 %v4119
  %v5201 = vunpack.c.l.b16 %v4120
  %v5202 = vunpack.c.h.b16 %v4120
  %v5203 = vunpack.c.l.b16 %v4121
  %v5204 = vunpack.c.h.b16 %v4121
  %v5205 = vunpack.c.l.b16 %v4122
  %v5206 = vunpack.c.h.b16 %v4122
  %v5207 = vunpack.c.l.b16 %v4123
  %v5208 = vunpack.c.h.b16 %v4123
  %v5209 = vunpack.c.l.b16 %v4124
  %v5210 = vunpack.c.h.b16 %v4124
  %v5211 = vunpack.c.l.b16 %v4125
  %v5212 = vunpack.c.h.b16 %v4125
  %v5213 = vunpack.c.l.b16 %v4126
  %v5214 = vunpack.c.h.b16 %v4126
  %v5215 = vunpack.c.l.b16 %v4127
  %v5216 = vunpack.c.h.b16 %v4127
  %v5217 = vunpack.c.l.b16 %v4128
  %v5218 = vunpack.c.h.b16 %v4128
  %v5219 = vunpack.c.l.b16 %v4129
  %v5220 = vunpack.c.h.b16 %v4129
  %v5221 = vunpack.c.l.b16 %v4130
  %v5222 = vunpack.c.h.b16 %v4130
  %v5223 = vunpack.c.l.b16 %v4131
  %v5224 = vunpack.c.h.b16 %v4131
  %v5225 = vunpack.c.l.b16 %v4132
  %v5226 = vunpack.c.h.b16 %v4132
  %v5227 = vunpack.c.l.b16 %v4133
  %v5228 = vunpack.c.h.b16 %v4133
  %v5229 = vunpack.c.l.b16 %v4134
  %v5230 = vunpack.c.h.b16 %v4134
  %v5231 = vunpack.c.l.b16 %v4135
  %v5232 = vunpack.c.h.b16 %v4135
  %v5233 = vunpack.c.l.b16 %v4136
  %v5234 = vunpack.c.h.b16 %v4136
  %v5235 = vunpack.c.l.b16 %v4137
  %v5236 = vunpack.c.h.b16 %v4137
  %v5237 = vunpack.c.l.b16 %v4138
  %v5238 = vunpack.c.h.b16 %v4138
  %v5239 = vunpack.c.l.b16 %v4139
  %v5240 = vunpack.c.h.b16 %v4139
  %v5241 = vunpack.c.l.b16 %v4140
  %v5242 = vunpack.c.h.b16 %v4140
  %v5243 = vunpack.c.l.b16 %v4141
  %v5244 = vunpack.c.h.b16 %v4141
  %v5245 = vunpack.c.l.b16 %v4142
  %v5246 = vunpack.c.h.b16 %v4142
  %v5247 = vunpack.c.l.b16 %v4143
  %v5248 = vunpack.c.h.b16 %v4143
  %v5249 = vunpack.c.l.b16 %v4144
  %v5250 = vunpack.c.h.b16 %v4144
  %v5251 = vunpack.c.l.b16 %v4145
  %v5252 = vunpack.c.h.b16 %v4145
  %v5253 = vunpack.c.l.b16 %v4146
  %v5254 = vunpack.c.h.b16 %v4146
  %v5255 = vunpack.c.l.b16 %v4147
  %v5256 = vunpack.c.h.b16 %v4147
  %v5257 = vunpack.c.l.b16 %v4148
  %v5258 = vunpack.c.h.b16 %v4148
  %v5259 = vunpack.c.l.b16 %v4149
  %v5260 = vunpack.c.h.b16 %v4149
  %v5261 = vunpack.c.l.b16 %v4150
  %v5262 = vunpack.c.h.b16 %v4150
  %v5263 = vunpack.c.l.b16 %v4151
  %v5264 = vunpack.c.h.b16 %v4151
  %v5265 = vunpack.c.l.b16 %v4152
  %v5266 = vunpack.c.h.b16 %v4152
  %v5267 = vunpack.c.l.b16 %v4153
  %v5268 = vunpack.c.h.b16 %v4153
  %v5269 = vunpack.c.l.b16 %v4154
  %v5270 = vunpack.c.h.b16 %v4154
  %v5271 = vunpack.c.l.b16 %v4155
  %v5272 = vunpack.c.h.b16 %v4155
  %v5273 = vunpack.c.l.b16 %v4156
  %v5274 = vunpack.c.h.b16 %v4156
  %v5275 = vunpack.c.l.b16 %v4157
  %v5276 = vunpack.c.h.b16 %v4157
  %v5277 = vunpack.c.l.b16 %v4158
  %v5278 = vunpack.c.h.b16 %v4158
  %v5279 = vunpack.c.l.b16 %v4159
  %v5280 = vunpack.c.h.b16 %v4159
  %v5281 = vunpack.c.l.b16 %v4160
  %v5282 = vunpack.c.h.b16 %v4160
  %v5283 = vunpack.c.l.b16 %v4161
  %v5284 = vunpack.c.h.b16 %v4161
  %v5285 = vunpack.c.l.b16 %v4162
  %v5286 = vunpack.c.h.b16 %v4162
  %v5287 = vunpack.c.l.b16 %v4163
  %v5288 = vunpack.c.h.b16 %v4163
  %v5289 = vunpack.c.l.b16 %v4164
  %v5290 = vunpack.c.h.b16 %v4164
  %v5291 = vunpack.c.l.b16 %v4165
  %v5292 = vunpack.c.h.b16 %v4165
  %v5293 = vunpack.c.l.b16 %v4166
  %v5294 = vunpack.c.h.b16 %v4166
  %v5295 = vunpack.c.l.b16 %v4167
  %v5296 = vunpack.c.h.b16 %v4167
  %v5297 = vunpack.c.l.b16 %v4168
  %v5298 = vunpack.c.h.b16 %v4168
  %v5299 = vunpack.c.l.b16 %v4169
  %v5300 = vunpack.c.h.b16 %v4169
  %v5301 = vunpack.c.l.b16 %v4170
  %v5302 = vunpack.c.h.b16 %v4170
  %v5303 = vunpack.c.l.b16 %v4171
  %v5304 = vunpack.c.h.b16 %v4171
  %v5305 = vunpack.c.l.b16 %v4172
  %v5306 = vunpack.c.h.b16 %v4172
  %v5307 = vunpack.c.l.b16 %v4173
  %v5308 = vunpack.c.h.b16 %v4173
  %v5309 = vunpack.c.l.b16 %v4174
  %v5310 = vunpack.c.h.b16 %v4174
  %v5311 = vunpack.c.l.b16 %v4175
  %v5312 = vunpack.c.h.b16 %v4175
  %v5313 = vunpack.c.l.b16 %v4176
  %v5314 = vunpack.c.h.b16 %v4176
  %v5315 = vunpack.c.l.b16 %v4177
  %v5316 = vunpack.c.h.b16 %v4177
  %v5317 = vunpack.c.l.b16 %v4178
  %v5318 = vunpack.c.h.b16 %v4178
  %v5319 = vunpack.c.l.b16 %v4179
  %v5320 = vunpack.c.h.b16 %v4179
  %v5321 = vunpack.c.l.b16 %v4180
  %v5322 = vunpack.c.h.b16 %v4180
  %v5323 = vunpack.c.l.b16 %v4181
  %v5324 = vunpack.c.h.b16 %v4181
  %v5325 = vunpack.c.l.b16 %v4182
  %v5326 = vunpack.c.h.b16 %v4182
  %v5327 = vunpack.c.l.b16 %v4183
  %v5328 = vunpack.c.h.b16 %v4183
  %v5329 = vunpack.c.l.b16 %v4184
  %v5330 = vunpack.c.h.b16 %v4184
  %v5331 = vunpack.c.l.b16 %v4185
  %v5332 = vunpack.c.h.b16 %v4185
  %v5333 = vunpack.c.l.b16 %v4186
  %v5334 = vunpack.c.h.b16 %v4186
  %v5335 = vunpack.c.l.b16 %v4187
  %v5336 = vunpack.c.h.b16 %v4187
  %v5337 = vunpack.c.l.b16 %v4188
  %v5338 = vunpack.c.h.b16 %v4188
  %v5339 = vunpack.c.l.b16 %v4189
  %v5340 = vunpack.c.h.b16 %v4189
  %v5341 = vunpack.c.l.b16 %v4190
  %v5342 = vunpack.c.h.b16 %v4190
  %v5343 = vunpack.c.l.b16 %v4191
  %v5344 = vunpack.c.h.b16 %v4191
  %v5345 = vunpack.c.l.b16 %v4192
  %v5346 = vunpack.c.h.b16 %v4192
  %v5347 = vunpack.c.l.b16 %v4193
  %v5348 = vunpack.c.h.b16 %v4193
  %v5349 = vunpack.c.l.b16 %v4194
  %v5350 = vunpack.c.h.b16 %v4194
  %v5351 = vunpack.c.l.b16 %v4195
  %v5352 = vunpack.c.h.b16 %v4195
  %v5353 = vunpack.c.l.b16 %v4196
  %v5354 = vunpack.c.h.b16 %v4196
  %v5355 = vunpack.c.l.b16 %v4197
  %v5356 = vunpack.c.h.b16 %v4197
  %v5357 = vunpack.c.l.b16 %v4198
  %v5358 = vunpack.c.h.b16 %v4198
  %v5359 = vunpack.c.l.b16 %v4199
  %v5360 = vunpack.c.h.b16 %v4199
  %v5361 = vunpack.c.l.b16 %v4200
  %v5362 = vunpack.c.h.b16 %v4200
  %v5363 = vunpack.c.l.b16 %v4201
  %v5364 = vunpack.c.h.b16 %v4201
  %v5365 = vunpack.c.l.b16 %v4202
  %v5366 = vunpack.c.h.b16 %v4202
  %v5367 = vunpack.c.l.b16 %v4203
  %v5368 = vunpack.c.h.b16 %v4203
  %v5369 = vunpack.c.l.b16 %v4204
  %v5370 = vunpack.c.h.b16 %v4204
  %v5371 = vunpack.c.l.b16 %v4205
  %v5372 = vunpack.c.h.b16 %v4205
  %v5373 = vunpack.c.l.b16 %v4206
  %v5374 = vunpack.c.h.b16 %v4206
  %v5375 = vunpack.c.l.b16 %v4207
  %v5376 = vunpack.c.h.b16 %v4207
  %v5377 = vunpack.c.l.b16 %v4208
  %v5378 = vunpack.c.h.b16 %v4208
  %v5379 = vunpack.c.l.b16 %v4209
  %v5380 = vunpack.c.h.b16 %v4209
  %v5381 = vunpack.c.l.b16 %v4210
  %v5382 = vunpack.c.h.b16 %v4210
  %v5383 = vunpack.c.l.b16 %v4211
  %v5384 = vunpack.c.h.b16 %v4211
  %v5385 = vunpack.c.l.b16 %v4212
  %v5386 = vunpack.c.h.b16 %v4212
  %v5387 = vunpack.c.l.b16 %v4213
  %v5388 = vunpack.c.h.b16 %v4213
  %v5389 = vunpack.c.l.b16 %v4214
  %v5390 = vunpack.c.h.b16 %v4214
  %v5391 = vunpack.c.l.b16 %v4215
  %v5392 = vunpack.c.h.b16 %v4215
  %v5393 = vunpack.c.l.b16 %v4216
  %v5394 = vunpack.c.h.b16 %v4216
  %v5395 = vunpack.c.l.b16 %v4217
  %v5396 = vunpack.c.h.b16 %v4217
  %v5397 = vunpack.c.l.b16 %v4218
  %v5398 = vunpack.c.h.b16 %v4218
  %v5399 = vunpack.c.l.b16 %v4219
  %v5400 = vunpack.c.h.b16 %v4219
  %v5401 = vunpack.c.l.b16 %v4220
  %v5402 = vunpack.c.h.b16 %v4220
  %v5403 = vunpack.c.l.b16 %v4221
  %v5404 = vunpack.c.h.b16 %v4221
  %v5405 = vunpack.c.l.b16 %v4222
  %v5406 = vunpack.c.h.b16 %v4222
  %v5407 = vunpack.c.l.b16 %v4223
  %v5408 = vunpack.c.h.b16 %v4223
  %v5409 = vunpack.c.l.b16 %v4224
  %v5410 = vunpack.c.h.b16 %v4224
  %v5411 = vunpack.c.l.b16 %v4225
  %v5412 = vunpack.c.h.b16 %v4225
  %v5413 = vunpack.c.l.b16 %v4226
  %v5414 = vunpack.c.h.b16 %v4226
  %v5415 = vunpack.c.l.b16 %v4227
  %v5416 = vunpack.c.h.b16 %v4227
  %v5417 = vunpack.c.l.b16 %v4228
  %v5418 = vunpack.c.h.b16 %v4228
  %v5419 = vunpack.c.l.b16 %v4229
  %v5420 = vunpack.c.h.b16 %v4229
  %v5421 = vunpack.c.l.b16 %v4230
  %v5422 = vunpack.c.h.b16 %v4230
  %v5423 = vunpack.c.l.b16 %v4231
  %v5424 = vunpack.c.h.b16 %v4231
  %v5425 = vunpack.c.l.b16 %v4232
  %v5426 = vunpack.c.h.b16 %v4232
  %v5427 = vunpack.c.l.b16 %v4233
  %v5428 = vunpack.c.h.b16 %v4233
  %v5429 = vunpack.c.l.b16 %v4234
  %v5430 = vunpack.c.h.b16 %v4234
  %v5431 = vunpack.c.l.b16 %v4235
  %v5432 = vunpack.c.h.b16 %v4235
  %v5433 = vunpack.c.l.b16 %v4236
  %v5434 = vunpack.c.h.b16 %v4236
  %v5435 = vunpack.c.l.b16 %v4237
  %v5436 = vunpack.c.h.b16 %v4237
  %v5437 = vunpack.c.l.b16 %v4238
  %v5438 = vunpack.c.h.b16 %v4238
  %v5439 = vunpack.c.l.b16 %v4239
  %v5440 = vunpack.c.h.b16 %v4239
  %v5441 = vunpack.c.l.b16 %v4240
  %v5442 = vunpack.c.h.b16 %v4240
  %v5443 = vunpack.c.l.b16 %v4241
  %v5444 = vunpack.c.h.b16 %v4241
  %v5445 = vunpack.c.l.b16 %v4242
  %v5446 = vunpack.c.h.b16 %v4242
  %v5447 = vunpack.c.l.b16 %v4243
  %v5448 = vunpack.c.h.b16 %v4243
  %v5449 = vunpack.c.l.b16 %v4244
  %v5450 = vunpack.c.h.b16 %v4244
  %v5451 = vunpack.c.l.b16 %v4245
  %v5452 = vunpack.c.h.b16 %v4245
  %v5453 = vunpack.c.l.b16 %v4246
  %v5454 = vunpack.c.h.b16 %v4246
  %v5455 = vunpack.c.l.b16 %v4247
  %v5456 = vunpack.c.h.b16 %v4247
  %v5457 = vunpack.c.l.b16 %v4248
  %v5458 = vunpack.c.h.b16 %v4248
  %v5459 = vunpack.c.l.b16 %v4249
  %v5460 = vunpack.c.h.b16 %v4249
  %v5461 = vunpack.c.l.b16 %v4250
  %v5462 = vunpack.c.h.b16 %v4250
  %v5463 = vunpack.c.l.b16 %v4251
  %v5464 = vunpack.c.h.b16 %v4251
  %v5465 = vunpack.c.l.b16 %v4252
  %v5466 = vunpack.c.h.b16 %v4252
  %v5467 = vunpack.c.l.b16 %v4253
  %v5468 = vunpack.c.h.b16 %v4253
  %v5469 = vunpack.c.l.b16 %v4254
  %v5470 = vunpack.c.h.b16 %v4254
  %v5471 = vunpack.c.l.b16 %v4255
  %v5472 = vunpack.c.h.b16 %v4255
  %v5473 = vunpack.c.l.b16 %v4256
  %v5474 = vunpack.c.h.b16 %v4256
  %v5475 = vunpack.c.l.b16 %v4257
  %v5476 = vunpack.c.h.b16 %v4257
  %v5477 = vunpack.c.l.b16 %v4258
  %v5478 = vunpack.c.h.b16 %v4258
  %v5479 = vunpack.c.l.b16 %v4259
  %v5480 = vunpack.c.h.b16 %v4259
  %v5481 = vunpack.c.l.b16 %v4260
  %v5482 = vunpack.c.h.b16 %v4260
  %v5483 = vunpack.c.l.b16 %v4261
  %v5484 = vunpack.c.h.b16 %v4261
  %v5485 = vunpack.c.l.b16 %v4262
  %v5486 = vunpack.c.h.b16 %v4262
  %v5487 = vunpack.c.l.b16 %v4263
  %v5488 = vunpack.c.h.b16 %v4263
  %v5489 = vunpack.c.l.b16 %v4264
  %v5490 = vunpack.c.h.b16 %v4264
  %v5491 = vunpack.c.l.b16 %v4265
  %v5492 = vunpack.c.h.b16 %v4265
  %v5493 = vunpack.c.l.b16 %v4266
  %v5494 = vunpack.c.h.b16 %v4266
  %v5495 = vunpack.c.l.b16 %v4267
  %v5496 = vunpack.c.h.b16 %v4267
  %v5497 = vunpack.c.l.b16 %v4268
  %v5498 = vunpack.c.h.b16 %v4268
  %v5499 = vunpack.c.l.b16 %v4269
  %v5500 = vunpack.c.h.b16 %v4269
  %v5501 = vunpack.c.l.b16 %v4270
  %v5502 = vunpack.c.h.b16 %v4270
  %v5503 = vunpack.c.l.b16 %v4271
  %v5504 = vunpack.c.h.b16 %v4271
  %v5505 = vunpack.c.l.b16 %v4272
  %v5506 = vunpack.c.h.b16 %v4272
  %v5507 = vunpack.c.l.b16 %v4273
  %v5508 = vunpack.c.h.b16 %v4273
  %v5509 = vunpack.c.l.b16 %v4274
  %v5510 = vunpack.c.h.b16 %v4274
  %v5511 = vunpack.c.l.b16 %v4275
  %v5512 = vunpack.c.h.b16 %v4275
  %v5513 = vunpack.c.l.b16 %v4276
  %v5514 = vunpack.c.h.b16 %v4276
  %v5515 = vunpack.c.l.b16 %v4277
  %v5516 = vunpack.c.h.b16 %v4277
  %v5517 = vunpack.c.l.b16 %v4278
  %v5518 = vunpack.c.h.b16 %v4278
  %v5519 = vunpack.c.l.b16 %v4279
  %v5520 = vunpack.c.h.b16 %v4279
  %v5521 = vunpack.c.l.b16 %v4280
  %v5522 = vunpack.c.h.b16 %v4280
  %v5523 = vunpack.c.l.b16 %v4281
  %v5524 = vunpack.c.h.b16 %v4281
  %v5525 = vunpack.c.l.b16 %v4282
  %v5526 = vunpack.c.h.b16 %v4282
  %v5527 = vunpack.c.l.b16 %v4283
  %v5528 = vunpack.c.h.b16 %v4283
  %v5529 = vunpack.c.l.b16 %v4284
  %v5530 = vunpack.c.h.b16 %v4284
  %v5531 = vunpack.c.l.b16 %v4285
  %v5532 = vunpack.c.h.b16 %v4285
  %v5533 = vunpack.c.l.b16 %v4286
  %v5534 = vunpack.c.h.b16 %v4286
  %v5535 = vunpack.c.l.b16 %v4287
  %v5536 = vunpack.c.h.b16 %v4287
  %v5537 = vunpack.c.l.b16 %v4288
  %v5538 = vunpack.c.h.b16 %v4288
  %v5539 = vunpack.c.l.b16 %v4289
  %v5540 = vunpack.c.h.b16 %v4289
  %v5541 = vunpack.c.l.b16 %v4290
  %v5542 = vunpack.c.h.b16 %v4290
  %v5543 = vunpack.c.l.b16 %v4291
  %v5544 = vunpack.c.h.b16 %v4291
  %v5545 = vunpack.c.l.b16 %v4292
  %v5546 = vunpack.c.h.b16 %v4292
  %v5547 = vunpack.c.l.b16 %v4293
  %v5548 = vunpack.c.h.b16 %v4293
  %v5549 = vunpack.c.l.b16 %v4294
  %v5550 = vunpack.c.h.b16 %v4294
  %v5551 = vunpack.c.l.b16 %v4295
  %v5552 = vunpack.c.h.b16 %v4295
  %v5553 = vunpack.c.l.b16 %v4296
  %v5554 = vunpack.c.h.b16 %v4296
  %v5555 = vunpack.c.l.b16 %v4297
  %v5556 = vunpack.c.h.b16 %v4297
  %v5557 = vunpack.c.l.b16 %v4298
  %v5558 = vunpack.c.h.b16 %v4298
  %v5559 = vunpack.c.l.b16 %v4299
  %v5560 = vunpack.c.h.b16 %v4299
  %v5561 = vunpack.c.l.b16 %v4300
  %v5562 = vunpack.c.h.b16 %v4300
  %v5563 = vunpack.c.l.b16 %v4301
  %v5564 = vunpack.c.h.b16 %v4301
  %v5565 = vunpack.c.l.b16 %v4302
  %v5566 = vunpack.c.h.b16 %v4302
  %v5567 = vunpack.c.l.b16 %v4303
  %v5568 = vunpack.c.h.b16 %v4303
  %v5569 = vunpack.c.l.b16 %v4304
  %v5570 = vunpack.c.h.b16 %v4304
  %v5571 = vunpack.c.l.b16 %v4305
  %v5572 = vunpack.c.h.b16 %v4305
  %v5573 = vunpack.c.l.b16 %v4306
  %v5574 = vunpack.c.h.b16 %v4306
  %v5575 = vunpack.c.l.b16 %v4307
  %v5576 = vunpack.c.h.b16 %v4307
  %v5577 = vunpack.c.l.b16 %v4308
  %v5578 = vunpack.c.h.b16 %v4308
  %v5579 = vunpack.c.l.b16 %v4309
  %v5580 = vunpack.c.h.b16 %v4309
  %v5581 = vunpack.c.l.b16 %v4310
  %v5582 = vunpack.c.h.b16 %v4310
  %v5583 = vunpack.c.l.b16 %v4311
  %v5584 = vunpack.c.h.b16 %v4311
  %v5585 = vunpack.c.l.b16 %v4312
  %v5586 = vunpack.c.h.b16 %v4312
  %v5587 = vunpack.c.l.b16 %v4313
  %v5588 = vunpack.c.h.b16 %v4313
  %v5589 = vunpack.c.l.b16 %v4314
  %v5590 = vunpack.c.h.b16 %v4314
  %v5591 = vunpack.c.l.b16 %v4315
  %v5592 = vunpack.c.h.b16 %v4315
  %v5593 = vunpack.c.l.b16 %v4316
  %v5594 = vunpack.c.h.b16 %v4316
  %v5595 = vunpack.c.l.b16 %v4317
  %v5596 = vunpack.c.h.b16 %v4317
  %v5597 = vunpack.c.l.b16 %v4318
  %v5598 = vunpack.c.h.b16 %v4318
  %v5599 = vunpack.c.l.b16 %v4319
  %v5600 = vunpack.c.h.b16 %v4319
  %v5601 = vunpack.c.l.b16 %v4320
  %v5602 = vunpack.c.h.b16 %v4320
  %v5603 = vunpack.c.l.b16 %v4321
  %v5604 = vunpack.c.h.b16 %v4321
  %v5605 = vunpack.c.l.b16 %v4322
  %v5606 = vunpack.c.h.b16 %v4322
  %v5607 = vunpack.c.l.b16 %v4323
  %v5608 = vunpack.c.h.b16 %v4323
  %v5609 = vunpack.c.l.b16 %v4324
  %v5610 = vunpack.c.h.b16 %v4324
  %v5611 = vunpack.c.l.b16 %v4325
  %v5612 = vunpack.c.h.b16 %v4325
  %v5613 = vunpack.c.l.b16 %v4326
  %v5614 = vunpack.c.h.b16 %v4326
  %v5615 = vunpack.c.l.b16 %v4327
  %v5616 = vunpack.c.h.b16 %v4327
  %v5617 = vunpack.c.l.b16 %v4328
  %v5618 = vunpack.c.h.b16 %v4328
  %v5619 = vunpack.c.l.b16 %v4329
  %v5620 = vunpack.c.h.b16 %v4329
  %v5621 = vunpack.c.l.b16 %v4330
  %v5622 = vunpack.c.h.b16 %v4330
  %v5623 = vunpack.c.l.b16 %v4331
  %v5624 = vunpack.c.h.b16 %v4331
  %v5625 = vunpack.c.l.b16 %v4332
  %v5626 = vunpack.c.h.b16 %v4332
  %v5627 = vunpack.c.l.b16 %v4333
  %v5628 = vunpack.c.h.b16 %v4333
  %v5629 = vunpack.c.l.b16 %v4334
  %v5630 = vunpack.c.h.b16 %v4334
  %v5631 = vunpack.c.l.b16 %v4335
  %v5632 = vunpack.c.h.b16 %v4335
  %v5633 = vunpack.c.l.b16 %v4336
  %v5634 = vunpack.c.h.b16 %v4336
  %v5635 = vunpack.c.l.b16 %v4337
  %v5636 = vunpack.c.h.b16 %v4337
  %v5637 = vunpack.c.l.b16 %v4338
  %v5638 = vunpack.c.h.b16 %v4338
  %v5639 = vunpack.c.l.b16 %v4339
  %v5640 = vunpack.c.h.b16 %v4339
  %v5641 = vunpack.c.l.b16 %v4340
  %v5642 = vunpack.c.h.b16 %v4340
  %v5643 = vunpack.c.l.b16 %v4341
  %v5644 = vunpack.c.h.b16 %v4341
  %v5645 = vunpack.c.l.b16 %v4342
  %v5646 = vunpack.c.h.b16 %v4342
  %v5647 = vunpack.c.l.b16 %v4343
  %v5648 = vunpack.c.h.b16 %v4343
  %v5649 = vunpack.c.l.b16 %v4344
  %v5650 = vunpack.c.h.b16 %v4344
  %v5651 = vunpack.c.l.b16 %v4345
  %v5652 = vunpack.c.h.b16 %v4345
  %v5653 = vunpack.c.l.b16 %v4346
  %v5654 = vunpack.c.h.b16 %v4346
  %v5655 = vunpack.c.l.b16 %v4347
  %v5656 = vunpack.c.h.b16 %v4347
  %v5657 = vunpack.c.l.b16 %v4348
  %v5658 = vunpack.c.h.b16 %v4348
  %v5659 = vunpack.c.l.b16 %v4349
  %v5660 = vunpack.c.h.b16 %v4349
  %v5661 = vunpack.c.l.b16 %v4350
  %v5662 = vunpack.c.h.b16 %v4350
  %v5663 = vunpack.c.l.b16 %v4351
  %v5664 = vunpack.c.h.b16 %v4351
  %v5665 = vunpack.c.l.b16 %v4352
  %v5666 = vunpack.c.h.b16 %v4352
  %v5667 = vunpack.c.l.b16 %v4353
  %v5668 = vunpack.c.h.b16 %v4353
  %v5669 = vunpack.c.l.b16 %v4354
  %v5670 = vunpack.c.h.b16 %v4354
  %v5671 = vunpack.c.l.b16 %v4355
  %v5672 = vunpack.c.h.b16 %v4355
  %v5673 = vunpack.c.l.b16 %v4356
  %v5674 = vunpack.c.h.b16 %v4356
  %v5675 = vunpack.c.l.b16 %v4357
  %v5676 = vunpack.c.h.b16 %v4357
  %v5677 = vunpack.c.l.b16 %v4358
  %v5678 = vunpack.c.h.b16 %v4358
  %v5679 = vunpack.c.l.b16 %v4359
  %v5680 = vunpack.c.h.b16 %v4359
  %v5681 = vunpack.c.l.b16 %v4360
  %v5682 = vunpack.c.h.b16 %v4360
  %v5683 = vunpack.c.l.b16 %v4361
  %v5684 = vunpack.c.h.b16 %v4361
  %v5685 = vunpack.c.l.b16 %v4362
  %v5686 = vunpack.c.h.b16 %v4362
  %v5687 = vunpack.c.l.b16 %v4363
  %v5688 = vunpack.c.h.b16 %v4363
  %v5689 = vunpack.c.l.b16 %v4364
  %v5690 = vunpack.c.h.b16 %v4364
  %v5691 = vunpack.c.l.b16 %v4365
  %v5692 = vunpack.c.h.b16 %v4365
  %v5693 = vunpack.c.l.b16 %v4366
  %v5694 = vunpack.c.h.b16 %v4366
  %v5695 = vunpack.c.l.b16 %v4367
  %v5696 = vunpack.c.h.b16 %v4367
  %v5697 = vunpack.c.l.b16 %v4368
  %v5698 = vunpack.c.h.b16 %v4368
  %v5699 = vunpack.c.l.b16 %v4369
  %v5700 = vunpack.c.h.b16 %v4369
  %v5701 = vunpack.c.l.b16 %v4370
  %v5702 = vunpack.c.h.b16 %v4370
  %v5703 = vunpack.c.l.b16 %v4371
  %v5704 = vunpack.c.h.b16 %v4371
  %v5705 = vunpack.c.l.b16 %v4372
  %v5706 = vunpack.c.h.b16 %v4372
  %v5707 = vunpack.c.l.b16 %v4373
  %v5708 = vunpack.c.h.b16 %v4373
  %v5709 = vunpack.c.l.b16 %v4374
  %v5710 = vunpack.c.h.b16 %v4374
  %v5711 = vunpack.c.l.b16 %v4375
  %v5712 = vunpack.c.h.b16 %v4375
  %v5713 = vunpack.c.l.b16 %v4376
  %v5714 = vunpack.c.h.b16 %v4376
  %v5715 = vunpack.c.l.b16 %v4377
  %v5716 = vunpack.c.h.b16 %v4377
  %v5717 = vunpack.c.l.b16 %v4378
  %v5718 = vunpack.c.h.b16 %v4378
  %v5719 = vunpack.c.l.b16 %v4379
  %v5720 = vunpack.c.h.b16 %v4379
  %v5721 = vunpack.c.l.b16 %v4380
  %v5722 = vunpack.c.h.b16 %v4380
  %v5723 = vunpack.c.l.b16 %v4381
  %v5724 = vunpack.c.h.b16 %v4381
  %v5725 = vunpack.c.l.b16 %v4382
  %v5726 = vunpack.c.h.b16 %v4382
  %v5727 = vunpack.c.l.b16 %v4383
  %v5728 = vunpack.c.h.b16 %v4383
  %v5729 = vunpack.c.l.b16 %v4384
  %v5730 = vunpack.c.h.b16 %v4384
  %v5731 = vunpack.c.l.b16 %v4385
  %v5732 = vunpack.c.h.b16 %v4385
  %v5733 = vunpack.c.l.b16 %v4386
  %v5734 = vunpack.c.h.b16 %v4386
  %v5735 = vunpack.c.l.b16 %v4387
  %v5736 = vunpack.c.h.b16 %v4387
  %v5737 = vunpack.c.l.b16 %v4388
  %v5738 = vunpack.c.h.b16 %v4388
  %v5739 = vunpack.c.l.b16 %v4389
  %v5740 = vunpack.c.h.b16 %v4389
  %v5741 = vunpack.c.l.b16 %v4390
  %v5742 = vunpack.c.h.b16 %v4390
  %v5743 = vunpack.c.l.b16 %v4391
  %v5744 = vunpack.c.h.b16 %v4391
  %v5745 = vunpack.c.l.b16 %v4392
  %v5746 = vunpack.c.h.b16 %v4392
  %v5747 = vunpack.c.l.b16 %v4393
  %v5748 = vunpack.c.h.b16 %v4393
  %v5749 = vunpack.c.l.b16 %v4394
  %v5750 = vunpack.c.h.b16 %v4394
  %v5751 = vunpack.c.l.b16 %v4395
  %v5752 = vunpack.c.h.b16 %v4395
  %v5753 = vunpack.c.l.b16 %v4396
  %v5754 = vunpack.c.h.b16 %v4396
  %v5755 = vunpack.c.l.b16 %v4397
  %v5756 = vunpack.c.h.b16 %v4397
  %v5757 = vunpack.c.l.b16 %v4398
  %v5758 = vunpack.c.h.b16 %v4398
  %v5759 = vunpack.c.l.b16 %v4399
  %v5760 = vunpack.c.h.b16 %v4399
  %v5761 = vunpack.c.l.b16 %v4400
  %v5762 = vunpack.c.h.b16 %v4400
  %v5763 = vunpack.c.l.b16 %v4401
  %v5764 = vunpack.c.h.b16 %v4401
  %v5765 = vunpack.c.l.b16 %v4402
  %v5766 = vunpack.c.h.b16 %v4402
  %v5767 = vunpack.c.l.b16 %v4403
  %v5768 = vunpack.c.h.b16 %v4403
  %v5769 = vunpack.c.l.b16 %v4404
  %v5770 = vunpack.c.h.b16 %v4404
  %v5771 = vunpack.c.l.b16 %v4405
  %v5772 = vunpack.c.h.b16 %v4405
  %v5773 = vunpack.c.l.b16 %v4406
  %v5774 = vunpack.c.h.b16 %v4406
  %v5775 = vunpack.c.l.b16 %v4407
  %v5776 = vunpack.c.h.b16 %v4407
  %v5777 = vunpack.c.l.b16 %v4408
  %v5778 = vunpack.c.h.b16 %v4408
  %v5779 = vunpack.c.l.b16 %v4409
  %v5780 = vunpack.c.h.b16 %v4409
  %v5781 = vunpack.c.l.b16 %v4410
  %v5782 = vunpack.c.h.b16 %v4410
  %v5783 = vunpack.c.l.b16 %v4411
  %v5784 = vunpack.c.h.b16 %v4411
  %v5785 = vunpack.c.l.b16 %v4412
  %v5786 = vunpack.c.h.b16 %v4412
  %v5787 = vunpack.c.l.b16 %v4413
  %v5788 = vunpack.c.h.b16 %v4413
  %v5789 = vunpack.c.l.b16 %v4414
  %v5790 = vunpack.c.h.b16 %v4414
  %v5791 = vunpack.c.l.b16 %v4415
  %v5792 = vunpack.c.h.b16 %v4415
  %v5793 = vunpack.c.l.b16 %v4416
  %v5794 = vunpack.c.h.b16 %v4416
  %v5795 = vunpack.c.l.b16 %v4417
  %v5796 = vunpack.c.h.b16 %v4417
  %v5797 = vunpack.c.l.b16 %v4418
  %v5798 = vunpack.c.h.b16 %v4418
  %v5799 = vunpack.c.l.b16 %v4419
  %v5800 = vunpack.c.h.b16 %v4419
  %v5801 = vunpack.c.l.b16 %v4420
  %v5802 = vunpack.c.h.b16 %v4420
  %v5803 = vunpack.c.l.b16 %v4421
  %v5804 = vunpack.c.h.b16 %v4421
  %v5805 = vunpack.c.l.b16 %v4422
  %v5806 = vunpack.c.h.b16 %v4422
  %v5807 = vunpack.c.l.b16 %v4423
  %v5808 = vunpack.c.h.b16 %v4423
  %v5809 = vunpack.c.l.b16 %v4424
  %v5810 = vunpack.c.h.b16 %v4424
  %v5811 = vunpack.c.l.b16 %v4425
  %v5812 = vunpack.c.h.b16 %v4425
  %v5813 = vunpack.c.l.b16 %v4426
  %v5814 = vunpack.c.h.b16 %v4426
  %v5815 = vunpack.c.l.b16 %v4427
  %v5816 = vunpack.c.h.b16 %v4427
  %v5817 = vunpack.c.l.b16 %v4428
  %v5818 = vunpack.c.h.b16 %v4428
  %v5819 = vunpack.c.l.b16 %v4429
  %v5820 = vunpack.c.h.b16 %v4429
  %v5821 = vunpack.c.l.b16 %v4430
  %v5822 = vunpack.c.h.b16 %v4430
  %v5823 = vunpack.c.l.b16 %v4431
  %v5824 = vunpack.c.h.b16 %v4431
  %v5825 = vunpack.c.l.b16 %v4432
  %v5826 = vunpack.c.h.b16 %v4432
  %v5827 = vunpack.c.l.b16 %v4433
  %v5828 = vunpack.c.h.b16 %v4433
  %v5829 = vunpack.c.l.b16 %v4434
  %v5830 = vunpack.c.h.b16 %v4434
  %v5831 = vunpack.c.l.b16 %v4435
  %v5832 = vunpack.c.h.b16 %v4435
  %v5833 = vunpack.c.l.b16 %v4436
  %v5834 = vunpack.c.h.b16 %v4436
  %v5835 = vunpack.c.l.b16 %v4437
  %v5836 = vunpack.c.h.b16 %v4437
  %v5837 = vunpack.c.l.b16 %v4438
  %v5838 = vunpack.c.h.b16 %v4438
  %v5839 = vunpack.c.l.b16 %v4439
  %v5840 = vunpack.c.h.b16 %v4439
  %v5841 = vunpack.c.l.b16 %v4440
  %v5842 = vunpack.c.h.b16 %v4440
  %v5843 = vunpack.c.l.b16 %v4441
  %v5844 = vunpack.c.h.b16 %v4441
  %v5845 = vunpack.c.l.b16 %v4442
  %v5846 = vunpack.c.h.b16 %v4442
  %v5847 = vunpack.c.l.b16 %v4443
  %v5848 = vunpack.c.h.b16 %v4443
  %v5849 = vunpack.c.l.b16 %v4444
  %v5850 = vunpack.c.h.b16 %v4444
  %v5851 = vunpack.c.l.b16 %v4445
  %v5852 = vunpack.c.h.b16 %v4445
  %v5853 = vunpack.c.l.b16 %v4446
  %v5854 = vunpack.c.h.b16 %v4446
  %v5855 = vunpack.c.l.b16 %v4447
  %v5856 = vunpack.c.h.b16 %v4447
  %v5857 = vunpack.c.l.b16 %v4448
  %v5858 = vunpack.c.h.b16 %v4448
  %v5859 = vunpack.c.l.b16 %v4449
  %v5860 = vunpack.c.h.b16 %v4449
  %v5861 = vunpack.c.l.b16 %v4450
  %v5862 = vunpack.c.h.b16 %v4450
  %v5863 = vunpack.c.l.b16 %v4451
  %v5864 = vunpack.c.h.b16 %v4451
  %v5865 = vunpack.c.l.b16 %v4452
  %v5866 = vunpack.c.h.b16 %v4452
  %v5867 = vunpack.c.l.b16 %v4453
  %v5868 = vunpack.c.h.b16 %v4453
  %v5869 = vunpack.c.l.b16 %v4454
  %v5870 = vunpack.c.h.b16 %v4454
  %v5871 = vunpack.c.l.b16 %v4455
  %v5872 = vunpack.c.h.b16 %v4455
  %v5873 = vunpack.c.l.b16 %v4456
  %v5874 = vunpack.c.h.b16 %v4456
  %v5875 = vunpack.c.l.b16 %v4457
  %v5876 = vunpack.c.h.b16 %v4457
  %v5877 = vunpack.c.l.b16 %v4458
  %v5878 = vunpack.c.h.b16 %v4458
  %v5879 = vunpack.c.l.b16 %v4459
  %v5880 = vunpack.c.h.b16 %v4459
  %v5881 = vunpack.c.l.b16 %v4460
  %v5882 = vunpack.c.h.b16 %v4460
  %v5883 = vunpack.c.l.b16 %v4461
  %v5884 = vunpack.c.h.b16 %v4461
  %v5885 = vunpack.c.l.b16 %v4462
  %v5886 = vunpack.c.h.b16 %v4462
  %v5887 = vunpack.c.l.b16 %v4463
  %v5888 = vunpack.c.h.b16 %v4463
  %v5889 = vunpack.c.l.b16 %v4464
  %v5890 = vunpack.c.h.b16 %v4464
  %v5891 = vunpack.c.l.b16 %v4465
  %v5892 = vunpack.c.h.b16 %v4465
  %v5893 = vunpack.c.l.b16 %v4466
  %v5894 = vunpack.c.h.b16 %v4466
  %v5895 = vunpack.c.l.b16 %v4467
  %v5896 = vunpack.c.h.b16 %v4467
  %v5897 = vunpack.c.l.b16 %v4468
  %v5898 = vunpack.c.h.b16 %v4468
  %v5899 = vunpack.c.l.b16 %v4469
  %v5900 = vunpack.c.h.b16 %v4469
  %v5901 = vunpack.c.l.b16 %v4470
  %v5902 = vunpack.c.h.b16 %v4470
  %v5903 = vunpack.c.l.b16 %v4471
  %v5904 = vunpack.c.h.b16 %v4471
  %v5905 = vunpack.c.l.b16 %v4472
  %v5906 = vunpack.c.h.b16 %v4472
  %v5907 = vunpack.c.l.b16 %v4473
  %v5908 = vunpack.c.h.b16 %v4473
  %v5909 = vunpack.c.l.b16 %v4474
  %v5910 = vunpack.c.h.b16 %v4474
  %v5911 = vunpack.c.l.b16 %v4475
  %v5912 = vunpack.c.h.b16 %v4475
  %v5913 = vunpack.c.l.b16 %v4476
  %v5914 = vunpack.c.h.b16 %v4476
  %v5915 = vunpack.c.l.b16 %v4477
  %v5916 = vunpack.c.h.b16 %v4477
  %v5917 = vunpack.c.l.b16 %v4478
  %v5918 = vunpack.c.h.b16 %v4478
  %v5919 = vpack.c.b16 %v5073, %v5055
  %v5920 = vpack.c.b16 %v5074, %v5056
  %v5921 = vpack.c.b16 %v5075, %v5057
  %v5922 = vpack.c.b16 %v5076, %v5058
  %v5923 = vpack.c.b16 %v5077, %v5059
  %v5924 = vpack.c.b16 %v5078, %v5060
  %v5925 = vpack.c.b16 %v5079, %v5061
  %v5926 = vpack.c.b16 %v5080, %v5062
  %v5927 = vpack.c.b16 %v5081, %v5063
  %v5928 = vpack.c.b16 %v5082, %v5064
  %v5929 = vpack.c.b16 %v5083, %v5065
  %v5930 = vpack.c.b16 %v5084, %v5066
  %v5931 = vpack.c.b16 %v5085, %v5067
  %v5932 = vpack.c.b16 %v5086, %v5068
  %v5933 = vpack.c.b16 %v5087, %v5069
  %v5934 = vpack.c.b16 %v5088, %v5070
  %v5935 = vpack.c.b16 %v5089, %v5071
  %v5936 = vpack.c.b16 %v5090, %v5072
  %v5937 = vpack.c.b16 %v5109, %v5091
  %v5938 = vpack.c.b16 %v5110, %v5092
  %v5939 = vpack.c.b16 %v5111, %v5093
  %v5940 = vpack.c.b16 %v5112, %v5094
  %v5941 = vpack.c.b16 %v5113, %v5095
  %v5942 = vpack.c.b16 %v5114, %v5096
  %v5943 = vpack.c.b16 %v5115, %v5097
  %v5944 = vpack.c.b16 %v5116, %v5098
  %v5945 = vpack.c.b16 %v5117, %v5099
  %v5946 = vpack.c.b16 %v5118, %v5100
  %v5947 = vpack.c.b16 %v5119, %v5101
  %v5948 = vpack.c.b16 %v5120, %v5102
  %v5949 = vpack.c.b16 %v5121, %v5103
  %v5950 = vpack.c.b16 %v5122, %v5104
  %v5951 = vpack.c.b16 %v5123, %v5105
  %v5952 = vpack.c.b16 %v5124, %v5106
  %v5953 = vpack.c.b16 %v5125, %v5107
  %v5954 = vpack.c.b16 %v5126, %v5108
  %v5955 = vpack.c.b16 %v5145, %v5127
  %v5956 = vpack.c.b16 %v5146, %v5128
  %v5957 = vpack.c.b16 %v5147, %v5129
  %v5958 = vpack.c.b16 %v5148, %v5130
  %v5959 = vpack.c.b16 %v5149, %v5131
  %v5960 = vpack.c.b16 %v5150, %v5132
  %v5961 = vpack.c.b16 %v5151, %v5133
  %v5962 = vpack.c.b16 %v5152, %v5134
  %v5963 = vpack.c.b16 %v5153, %v5135
  %v5964 = vpack.c.b16 %v5154, %v5136
  %v5965 = vpack.c.b16 %v5155, %v5137
  %v5966 = vpack.c.b16 %v5156, %v5138
  %v5967 = vpack.c.b16 %v5157, %v5139
  %v5968 = vpack.c.b16 %v5158, %v5140
  %v5969 = vpack.c.b16 %v5159, %v5141
  %v5970 = vpack.c.b16 %v5160, %v5142
  %v5971 = vpack.c.b16 %v5161, %v5143
  %v5972 = vpack.c.b16 %v5162, %v5144
  %v5973 = vpack.c.b16 %v5181, %v5163
  %v5974 = vpack.c.b16 %v5182, %v5164
  %v5975 = vpack.c.b16 %v5183, %v5165
  %v5976 = vpack.c.b16 %v5184, %v5166
  %v5977 = vpack.c.b16 %v5185, %v5167
  %v5978 = vpack.c.b16 %v5186, %v5168
  %v5979 = vpack.c.b16 %v5187, %v5169
  %v5980 = vpack.c.b16 %v5188, %v5170
  %v5981 = vpack.c.b16 %v5189, %v5171
  %v5982 = vpack.c.b16 %v5190, %v5172
  %v5983 = vpack.c.b16 %v5191, %v5173
  %v5984 = vpack.c.b16 %v5192, %v5174
  %v5985 = vpack.c.b16 %v5193, %v5175
  %v5986 = vpack.c.b16 %v5194, %v5176
  %v5987 = vpack.c.b16 %v5195, %v5177
  %v5988 = vpack.c.b16 %v5196, %v5178
  %v5989 = vpack.c.b16 %v5197, %v5179
  %v5990 = vpack.c.b16 %v5198, %v5180
  %v5991 = vpack.c.b16 %v5217, %v5199
  %v5992 = vpack.c.b16 %v5218, %v5200
  %v5993 = vpack.c.b16 %v5219, %v5201
  %v5994 = vpack.c.b16 %v5220, %v5202
  %v5995 = vpack.c.b16 %v5221, %v5203
  %v5996 = vpack.c.b16 %v5222, %v5204
  %v5997 = vpack.c.b16 %v5223, %v5205
  %v5998 = vpack.c.b16 %v5224, %v5206
  %v5999 = vpack.c.b16 %v5225, %v5207
  %v6000 = vpack.c.b16 %v5226, %v5208
  %v6001 = vpack.c.b16 %v5227, %v5209
  %v6002 = vpack.c.b16 %v5228, %v5210
  %v6003 = vpack.c.b16 %v5229, %v5211
  %v6004 = vpack.c.b16 %v5230, %v5212
  %v6005 = vpack.c.b16 %v5231, %v5213
  %v6006 = vpack.c.b16 %v5232, %v5214
  %v6007 = vpack.c.b16 %v5233, %v5215
  %v6008 = vpack.c.b16 %v5234, %v5216
  %v6009 = vpack.c.b16 %v5253, %v5235
  %v6010 = vpack.c.b16 %v5254, %v5236
  %v6011 = vpack.c.b16 %v5255, %v5237
  %v6012 = vpack.c.b16 %v5256, %v5238
  %v6013 = vpack.c.b16 %v5257, %v5239
  %v6014 = vpack.c.b16 %v5258, %v5240
  %v6015 = vpack.c.b16 %v5259, %v5241
  %v6016 = vpack.c.b16 %v5260, %v5242
  %v6017 = vpack.c.b16 %v5261, %v5243
  %v6018 = vpack.c.b16 %v5262, %v5244
  %v6019 = vpack.c.b16 %v5263, %v5245
  %v6020 = vpack.c.b16 %v5264, %v5246
  %v6021 = vpack.c.b16 %v5265, %v5247
  %v6022 = vpack.c.b16 %v5266, %v5248
  %v6023 = vpack.c.b16 %v5267, %v5249
  %v6024 = vpack.c.b16 %v5268, %v5250
  %v6025 = vpack.c.b16 %v5269, %v5251
  %v6026 = vpack.c.b16 %v5270, %v5252
  %v6027 = vpack.c.b16 %v5289, %v5271
  %v6028 = vpack.c.b16 %v5290, %v5272
  %v6029 = vpack.c.b16 %v5291, %v5273
  %v6030 = vpack.c.b16 %v5292, %v5274
  %v6031 = vpack.c.b16 %v5293, %v5275
  %v6032 = vpack.c.b16 %v5294, %v5276
  %v6033 = vpack.c.b16 %v5295, %v5277
  %v6034 = vpack.c.b16 %v5296, %v5278
  %v6035 = vpack.c.b16 %v5297, %v5279
  %v6036 = vpack.c.b16 %v5298, %v5280
  %v6037 = vpack.c.b16 %v5299, %v5281
  %v6038 = vpack.c.b16 %v5300, %v5282
  %v6039 = vpack.c.b16 %v5301, %v5283
  %v6040 = vpack.c.b16 %v5302, %v5284
  %v6041 = vpack.c.b16 %v5303, %v5285
  %v6042 = vpack.c.b16 %v5304, %v5286
  %v6043 = vpack.c.b16 %v5305, %v5287
  %v6044 = vpack.c.b16 %v5306, %v5288
  %v6045 = vpack.c.b16 %v5325, %v5307
  %v6046 = vpack.c.b16 %v5326, %v5308
  %v6047 = vpack.c.b16 %v5327, %v5309
  %v6048 = vpack.c.b16 %v5328, %v5310
  %v6049 = vpack.c.b16 %v5329, %v5311
  %v6050 = vpack.c.b16 %v5330, %v5312
  %v6051 = vpack.c.b16 %v5331, %v5313
  %v6052 = vpack.c.b16 %v5332, %v5314
  %v6053 = vpack.c.b16 %v5333, %v5315
  %v6054 = vpack.c.b16 %v5334, %v5316
  %v6055 = vpack.c.b16 %v5335, %v5317
  %v6056 = vpack.c.b16 %v5336, %v5318
  %v6057 = vpack.c.b16 %v5337, %v5319
  %v6058 = vpack.c.b16 %v5338, %v5320
  %v6059 = vpack.c.b16 %v5339, %v5321
  %v6060 = vpack.c.b16 %v5340, %v5322
  %v6061 = vpack.c.b16 %v5341, %v5323
  %v6062 = vpack.c.b16 %v5342, %v5324
  %v6063 = vpack.c.b16 %v5361, %v5343
  %v6064 = vpack.c.b16 %v5362, %v5344
  %v6065 = vpack.c.b16 %v5363, %v5345
  %v6066 = vpack.c.b16 %v5364, %v5346
  %v6067 = vpack.c.b16 %v5365, %v5347
  %v6068 = vpack.c.b16 %v5366, %v5348
  %v6069 = vpack.c.b16 %v5367, %v5349
  %v6070 = vpack.c.b16 %v5368, %v5350
  %v6071 = vpack.c.b16 %v5369, %v5351
  %v6072 = vpack.c.b16 %v5370, %v5352
  %v6073 = vpack.c.b16 %v5371, %v5353
  %v6074 = vpack.c.b16 %v5372, %v5354
  %v6075 = vpack.c.b16 %v5373, %v5355
  %v6076 = vpack.c.b16 %v5374, %v5356
  %v6077 = vpack.c.b16 %v5375, %v5357
  %v6078 = vpack.c.b16 %v5376, %v5358
  %v6079 = vpack.c.b16 %v5377, %v5359
  %v6080 = vpack.c.b16 %v5378, %v5360
  %v6081 = vpack.c.b16 %v5397, %v5379
  %v6082 = vpack.c.b16 %v5398, %v5380
  %v6083 = vpack.c.b16 %v5399, %v5381
  %v6084 = vpack.c.b16 %v5400, %v5382
  %v6085 = vpack.c.b16 %v5401, %v5383
  %v6086 = vpack.c.b16 %v5402, %v5384
  %v6087 = vpack.c.b16 %v5403, %v5385
  %v6088 = vpack.c.b16 %v5404, %v5386
  %v6089 = vpack.c.b16 %v5405, %v5387
  %v6090 = vpack.c.b16 %v5406, %v5388
  %v6091 = vpack.c.b16 %v5407, %v5389
  %v6092 = vpack.c.b16 %v5408, %v5390
  %v6093 = vpack.c.b16 %v5409, %v5391
  %v6094 = vpack.c.b16 %v5410, %v5392
  %v6095 = vpack.c.b16 %v5411, %v5393
  %v6096 = vpack.c.b16 %v5412, %v5394
  %v6097 = vpack.c.b16 %v5413, %v5395
  %v6098 = vpack.c.b16 %v5414, %v5396
  %v6099 = vpack.c.b16 %v5433, %v5415
  %v6100 = vpack.c.b16 %v5434, %v5416
  %v6101 = vpack.c.b16 %v5435, %v5417
  %v6102 = vpack.c.b16 %v5436, %v5418
  %v6103 = vpack.c.b16 %v5437, %v5419
  %v6104 = vpack.c.b16 %v5438, %v5420
  %v6105 = vpack.c.b16 %v5439, %v5421
  %v6106 = vpack.c.b16 %v5440, %v5422
  %v6107 = vpack.c.b16 %v5441, %v5423
  %v6108 = vpack.c.b16 %v5442, %v5424
  %v6109 = vpack.c.b16 %v5443, %v5425
  %v6110 = vpack.c.b16 %v5444, %v5426
  %v6111 = vpack.c.b16 %v5445, %v5427
  %v6112 = vpack.c.b16 %v5446, %v5428
  %v6113 = vpack.c.b16 %v5447, %v5429
  %v6114 = vpack.c.b16 %v5448, %v5430
  %v6115 = vpack.c.b16 %v5449, %v5431
  %v6116 = vpack.c.b16 %v5450, %v5432
  %v6117 = vpack.c.b16 %v5469, %v5451
  %v6118 = vpack.c.b16 %v5470, %v5452
  %v6119 = vpack.c.b16 %v5471, %v5453
  %v6120 = vpack.c.b16 %v5472, %v5454
  %v6121 = vpack.c.b16 %v5473, %v5455
  %v6122 = vpack.c.b16 %v5474, %v5456
  %v6123 = vpack.c.b16 %v5475, %v5457
  %v6124 = vpack.c.b16 %v5476, %v5458
  %v6125 = vpack.c.b16 %v5477, %v5459
  %v6126 = vpack.c.b16 %v5478, %v5460
  %v6127 = vpack.c.b16 %v5479, %v5461
  %v6128 = vpack.c.b16 %v5480, %v5462
  %v6129 = vpack.c.b16 %v5481, %v5463
  %v6130 = vpack.c.b16 %v5482, %v5464
  %v6131 = vpack.c.b16 %v5483, %v5465
  %v6132 = vpack.c.b16 %v5484, %v5466
  %v6133 = vpack.c.b16 %v5485, %v5467
  %v6134 = vpack.c.b16 %v5486, %v5468
  %v6135 = vpack.c.b16 %v5505, %v5487
  %v6136 = vpack.c.b16 %v5506, %v5488
  %v6137 = vpack.c.b16 %v5507, %v5489
  %v6138 = vpack.c.b16 %v5508, %v5490
  %v6139 = vpack.c.b16 %v5509, %v5491
  %v6140 = vpack.c.b16 %v5510, %v5492
  %v6141 = vpack.c.b16 %v5511, %v5493
  %v6142 = vpack.c.b16 %v5512, %v5494
  %v6143 = vpack.c.b16 %v5513, %v5495
  %v6144 = vpack.c.b16 %v5514, %v5496
  %v6145 = vpack.c.b16 %v5515, %v5497
  %v6146 = vpack.c.b16 %v5516, %v5498
  %v6147 = vpack.c.b16 %v5517, %v5499
  %v6148 = vpack.c.b16 %v5518, %v5500
  %v6149 = vpack.c.b16 %v5519, %v5501
  %v6150 = vpack.c.b16 %v5520, %v5502
  %v6151 = vpack.c.b16 %v5521, %v5503
  %v6152 = vpack.c.b16 %v5522, %v5504
  %v6153 = vpack.c.b16 %v5541, %v5523
  %v6154 = vpack.c.b16 %v5542, %v5524
  %v6155 = vpack.c.b16 %v5543, %v5525
  %v6156 = vpack.c.b16 %v5544, %v5526
  %v6157 = vpack.c.b16 %v5545, %v5527
  %v6158 = vpack.c.b16 %v5546, %v5528
  %v6159 = vpack.c.b16 %v5547, %v5529
  %v6160 = vpack.c.b16 %v5548, %v5530
  %v6161 = vpack.c.b16 %v5549, %v5531
  %v6162 = vpack.c.b16 %v5550, %v5532
  %v6163 = vpack.c.b16 %v5551, %v5533
  %v6164 = vpack.c.b16 %v5552, %v5534
  %v6165 = vpack.c.b16 %v5553, %v5535
  %v6166 = vpack.c.b16 %v5554, %v5536
  %v6167 = vpack.c.b16 %v5555, %v5537
  %v6168 = vpack.c.b16 %v5556, %v5538
  %v6169 = vpack.c.b16 %v5557, %v5539
  %v6170 = vpack.c.b16 %v5558, %v5540
  %v6171 = vpack.c.b16 %v5577, %v5559
  %v6172 = vpack.c.b16 %v5578, %v5560
  %v6173 = vpack.c.b16 %v5579, %v5561
  %v6174 = vpack.c.b16 %v5580, %v5562
  %v6175 = vpack.c.b16 %v5581, %v5563
  %v6176 = vpack.c.b16 %v5582, %v5564
  %v6177 = vpack.c.b16 %v5583, %v5565
  %v6178 = vpack.c.b16 %v5584, %v5566
  %v6179 = vpack.c.b16 %v5585, %v5567
  %v6180 = vpack.c.b16 %v5586, %v5568
  %v6181 = vpack.c.b16 %v5587, %v5569
  %v6182 = vpack.c.b16 %v5588, %v5570
  %v6183 = vpack.c.b16 %v5589, %v5571
  %v6184 = vpack.c.b16 %v5590, %v5572
  %v6185 = vpack.c.b16 %v5591, %v5573
  %v6186 = vpack.c.b16 %v5592, %v5574
  %v6187 = vpack.c.b16 %v5593, %v5575
  %v6188 = vpack.c.b16 %v5594, %v5576
  %v6189 = vpack.c.b16 %v5613, %v5595
  %v6190 = vpack.c.b16 %v5614, %v5596
  %v6191 = vpack.c.b16 %v5615, %v5597
  %v6192 = vpack.c.b16 %v5616, %v5598
  %v6193 = vpack.c.b16 %v5617, %v5599
  %v6194 = vpack.c.b16 %v5618, %v5600
  %v6195 = vpack.c.b16 %v5619, %v5601
  %v6196 = vpack.c.b16 %v5620, %v5602
  %v6197 = vpack.c.b16 %v5621, %v5603
  %v6198 = vpack.c.b16 %v5622, %v5604
  %v6199 = vpack.c.b16 %v5623, %v5605
  %v6200 = vpack.c.b16 %v5624, %v5606
  %v6201 = vpack.c.b16 %v5625, %v5607
  %v6202 = vpack.c.b16 %v5626, %v5608
  %v6203 = vpack.c.b16 %v5627, %v5609
  %v6204 = vpack.c.b16 %v5628, %v5610
  %v6205 = vpack.c.b16 %v5629, %v5611
  %v6206 = vpack.c.b16 %v5630, %v5612
  %v6207 = vpack.c.b16 %v5649, %v5631
  %v6208 = vpack.c.b16 %v5650, %v5632
  %v6209 = vpack.c.b16 %v5651, %v5633
  %v6210 = vpack.c.b16 %v5652, %v5634
  %v6211 = vpack.c.b16 %v5653, %v5635
  %v6212 = vpack.c.b16 %v5654, %v5636
  %v6213 = vpack.c.b16 %v5655, %v5637
  %v6214 = vpack.c.b16 %v5656, %v5638
  %v6215 = vpack.c.b16 %v5657, %v5639
  %v6216 = vpack.c.b16 %v5658, %v5640
  %v6217 = vpack.c.b16 %v5659, %v5641
  %v6218 = vpack.c.b16 %v5660, %v5642
  %v6219 = vpack.c.b16 %v5661, %v5643
  %v6220 = vpack.c.b16 %v5662, %v5644
  %v6221 = vpack.c.b16 %v5663, %v5645
  %v6222 = vpack.c.b16 %v5664, %v5646
  %v6223 = vpack.c.b16 %v5665, %v5647
  %v6224 = vpack.c.b16 %v5666, %v5648
  %v6225 = vpack.c.b16 %v5685, %v5667
  %v6226 = vpack.c.b16 %v5686, %v5668
  %v6227 = vpack.c.b16 %v5687, %v5669
  %v6228 = vpack.c.b16 %v5688, %v5670
  %v6229 = vpack.c.b16 %v5689, %v5671
  %v6230 = vpack.c.b16 %v5690, %v5672
  %v6231 = vpack.c.b16 %v5691, %v5673
  %v6232 = vpack.c.b16 %v5692, %v5674
  %v6233 = vpack.c.b16 %v5693, %v5675
  %v6234 = vpack.c.b16 %v5694, %v5676
  %v6235 = vpack.c.b16 %v5695, %v5677
  %v6236 = vpack.c.b16 %v5696, %v5678
  %v6237 = vpack.c.b16 %v5697, %v5679
  %v6238 = vpack.c.b16 %v5698, %v5680
  %v6239 = vpack.c.b16 %v5699, %v5681
  %v6240 = vpack.c.b16 %v5700, %v5682
  %v6241 = vpack.c.b16 %v5701, %v5683
  %v6242 = vpack.c.b16 %v5702, %v5684
  %v6243 = vpack.c.b16 %v5721, %v5703
  %v6244 = vpack.c.b16 %v5722, %v5704
  %v6245 = vpack.c.b16 %v5723, %v5705
  %v6246 = vpack.c.b16 %v5724, %v5706
  %v6247 = vpack.c.b16 %v5725, %v5707
  %v6248 = vpack.c.b16 %v5726, %v5708
  %v6249 = vpack.c.b16 %v5727, %v5709
  %v6250 = vpack.c.b16 %v5728, %v5710
  %v6251 = vpack.c.b16 %v5729, %v5711
  %v6252 = vpack.c.b16 %v5730, %v5712
  %v6253 = vpack.c.b16 %v5731, %v5713
  %v6254 = vpack.c.b16 %v5732, %v5714
  %v6255 = vpack.c.b16 %v5733, %v5715
  %v6256 = vpack.c.b16 %v5734, %v5716
  %v6257 = vpack.c.b16 %v5735, %v5717
  %v6258 = vpack.c.b16 %v5736, %v5718
  %v6259 = vpack.c.b16 %v5737, %v5719
  %v6260 = vpack.c.b16 %v5738, %v5720
  %v6261 = vpack.c.b16 %v5757, %v5739
  %v6262 = vpack.c.b16 %v5758, %v5740
  %v6263 = vpack.c.b16 %v5759, %v5741
  %v6264 = vpack.c.b16 %v5760, %v5742
  %v6265 = vpack.c.b16 %v5761, %v5743
  %v6266 = vpack.c.b16 %v5762, %v5744
  %v6267 = vpack.c.b16 %v5763, %v5745
  %v6268 = vpack.c.b16 %v5764, %v5746
  %v6269 = vpack.c.b16 %v5765, %v5747
  %v6270 = vpack.c.b16 %v5766, %v5748
  %v6271 = vpack.c.b16 %v5767, %v5749
  %v6272 = vpack.c.b16 %v5768, %v5750
  %v6273 = vpack.c.b16 %v5769, %v5751
  %v6274 = vpack.c.b16 %v5770, %v5752
  %v6275 = vpack.c.b16 %v5771, %v5753
  %v6276 = vpack.c.b16 %v5772, %v5754
  %v6277 = vpack.c.b16 %v5773, %v5755
  %v6278 = vpack.c.b16 %v5774, %v5756
  %v6279 = vpack.c.b16 %v5793, %v5775
  %v6280 = vpack.c.b16 %v5794, %v5776
  %v6281 = vpack.c.b16 %v5795, %v5777
  %v6282 = vpack.c.b16 %v5796, %v5778
  %v6283 = vpack.c.b16 %v5797, %v5779
  %v6284 = vpack.c.b16 %v5798, %v5780
  %v6285 = vpack.c.b16 %v5799, %v5781
  %v6286 = vpack.c.b16 %v5800, %v5782
  %v6287 = vpack.c.b16 %v5801, %v5783
  %v6288 = vpack.c.b16 %v5802, %v5784
  %v6289 = vpack.c.b16 %v5803, %v5785
  %v6290 = vpack.c.b16 %v5804, %v5786
  %v6291 = vpack.c.b16 %v5805, %v5787
  %v6292 = vpack.c.b16 %v5806, %v5788
  %v6293 = vpack.c.b16 %v5807, %v5789
  %v6294 = vpack.c.b16 %v5808, %v5790
  %v6295 = vpack.c.b16 %v5809, %v5791
  %v6296 = vpack.c.b16 %v5810, %v5792
  %v6297 = vpack.c.b16 %v5829, %v5811
  %v6298 = vpack.c.b16 %v5830, %v5812
  %v6299 = vpack.c.b16 %v5831, %v5813
  %v6300 = vpack.c.b16 %v5832, %v5814
  %v6301 = vpack.c.b16 %v5833, %v5815
  %v6302 = vpack.c.b16 %v5834, %v5816
  %v6303 = vpack.c.b16 %v5835, %v5817
  %v6304 = vpack.c.b16 %v5836, %v5818
  %v6305 = vpack.c.b16 %v5837, %v5819
  %v6306 = vpack.c.b16 %v5838, %v5820
  %v6307 = vpack.c.b16 %v5839, %v5821
  %v6308 = vpack.c.b16 %v5840, %v5822
  %v6309 = vpack.c.b16 %v5841, %v5823
  %v6310 = vpack.c.b16 %v5842, %v5824
  %v6311 = vpack.c.b16 %v5843, %v5825
  %v6312 = vpack.c.b16 %v5844, %v5826
  %v6313 = vpack.c.b16 %v5845, %v5827
  %v6314 = vpack.c.b16 %v5846, %v5828
  %v6315 = vpack.c.b16 %v5865, %v5847
  %v6316 = vpack.c.b16 %v5866, %v5848
  %v6317 = vpack.c.b16 %v5867, %v5849
  %v6318 = vpack.c.b16 %v5868, %v5850
  %v6319 = vpack.c.b16 %v5869, %v5851
  %v6320 = vpack.c.b16 %v5870, %v5852
  %v6321 = vpack.c.b16 %v5871, %v5853
  %v6322 = vpack.c.b16 %v5872, %v5854
  %v6323 = vpack.c.b16 %v5873, %v5855
  %v6324 = vpack.c.b16 %v5874, %v5856
  %v6325 = vpack.c.b16 %v5875, %v5857
  %v6326 = vpack.c.b16 %v5876, %v5858
  %v6327 = vpack.c.b16 %v5877, %v5859
  %v6328 = vpack.c.b16 %v5878, %v5860
  %v6329 = vpack.c.b16 %v5879, %v5861
  %v6330 = vpack.c.b16 %v5880, %v5862
  %v6331 = vpack.c.b16 %v5881, %v5863
  %v6332 = vpack.c.b16 %v5882, %v5864
  %v6333 = vpack.c.b16 %v5901, %v5883
  %v6334 = vpack.c.b16 %v5902, %v5884
  %v6335 = vpack.c.b16 %v5903, %v5885
  %v6336 = vpack.c.b16 %v5904, %v5886
  %v6337 = vpack.c.b16 %v5905, %v5887
  %v6338 = vpack.c.b16 %v5906, %v5888
  %v6339 = vpack.c.b16 %v5907, %v5889
  %v6340 = vpack.c.b16 %v5908, %v5890
  %v6341 = vpack.c.b16 %v5909, %v5891
  %v6342 = vpack.c.b16 %v5910, %v5892
  %v6343 = vpack.c.b16 %v5911, %v5893
  %v6344 = vpack.c.b16 %v5912, %v5894
  %v6345 = vpack.c.b16 %v5913, %v5895
  %v6346 = vpack.c.b16 %v5914, %v5896
  %v6347 = vpack.c.b16 %v5915, %v5897
  %v6348 = vpack.c.b16 %v5916, %v5898
  %v6349 = vpack.c.b16 %v5917, %v5899
  %v6350 = vpack.c.b16 %v5918, %v5900
  %6783 = vmatprep.subr.bf16.mxu0 0
  %6784 = vmatpush1.bf16.msra.mxu0 %v4479
  %6785 = vmatprep.subr.bf16.mxu0 0
  %6786 = vmatpush1.bf16.msra.mxu0 %v4480
  %6787 = vmatprep.subr.bf16.mxu0 0
  %6788 = vmatpush1.bf16.msra.mxu0 %v4481
  %6789 = vmatprep.subr.bf16.mxu0 0
  %6790 = vmatpush1.bf16.msra.mxu0 %v4482
  %6791 = vmatprep.subr.bf16.mxu0 0
  %6792 = vmatpush1.bf16.msra.mxu0 %v4483
  %6793 = vmatprep.subr.bf16.mxu0 0
  %6794 = vmatpush1.bf16.msra.mxu0 %v4484
  %6795 = vmatprep.subr.bf16.mxu0 0
  %6796 = vmatpush1.bf16.msra.mxu0 %v4485
  %6797 = vmatprep.subr.bf16.mxu0 0
  %6798 = vmatpush1.bf16.msra.mxu0 %v4486
  %6799 = vmatprep.subr.bf16.mxu0 0
  %6800 = vmatpush1.bf16.msra.mxu0 %v4487
  %6801 = vmatprep.subr.bf16.mxu0 0
  %6802 = vmatpush1.bf16.msra.mxu0 %v4488
  %6803 = vmatprep.subr.bf16.mxu0 0
  %6804 = vmatpush1.bf16.msra.mxu0 %v4489
  %6805 = vmatprep.subr.bf16.mxu0 0
  %6806 = vmatpush1.bf16.msra.mxu0 %v4490
  %6807 = vmatprep.subr.bf16.mxu0 0
  %6808 = vmatpush1.bf16.msra.mxu0 %v4491
  %6809 = vmatprep.subr.bf16.mxu0 0
  %6810 = vmatpush1.bf16.msra.mxu0 %v4492
  %6811 = vmatprep.subr.bf16.mxu0 0
  %6812 = vmatpush1.bf16.msra.mxu0 %v4493
  %6813 = vmatprep.subr.bf16.mxu0 0
  %6814 = vmatpush1.bf16.msra.mxu0 %v4494
  %6815 = vmatprep.mubr.bf16.mxu0 %v5920
  %6816 = vmatmul.mubr.bf16.gmra.mrb[0].mxu0 %v5919
  %v6817 = vpop.f32.mrb[0].mxu0
  %v6818 = vadd.f32 0.0, %v6817
  %v6819 = vpop.f32.mrb[0].mxu0
  %v6820 = vpop.f32.mrb[0].mxu0
  %v6821 = vadd.f32 0.0, %v6820
  %v6822 = vpop.f32.mrb[0].mxu0
  %6823 = vmatprep.mubr.bf16.mxu0 %v5938
  %6824 = vmatmul.mubr.bf16.gmra.mrb[0].mxu0 %v5937
  %v6825 = vpop.f32.mrb[0].mxu0
  %v6826 = vadd.f32 0.0, %v6825
  %v6827 = vpop.f32.mrb[0].mxu0
  %v6828 = vpop.f32.mrb[0].mxu0
  %v6829 = vadd.f32 0.0, %v6828
  %v6830 = vpop.f32.mrb[0].mxu0
  %6831 = vmatprep.mubr.bf16.mxu0 %v5956
  %6832 = vmatmul.mubr.bf16.gmra.mrb[0].mxu0 %v5955
  %v6833 = vpop.f32.mrb[0].mxu0
  %v6834 = vadd.f32 0.0, %v6833
  %v6835 = vpop.f32.mrb[0].mxu0
  %v6836 = vpop.f32.mrb[0].mxu0
  %v6837 = vadd.f32 0.0, %v6836
  %v6838 = vpop.f32.mrb[0].mxu0
  %6839 = vmatprep.mubr.bf16.mxu0 %v5974
  %6840 = vmatmul.mubr.bf16.gmra.mrb[0].mxu0 %v5973
  %v6841 = vpop.f32.mrb[0].mxu0
  %v6842 = vadd.f32 0.0, %v6841
  %v6843 = vpop.f32.mrb[0].mxu0
  %v6844 = vpop.f32.mrb[0].mxu0
  %v6845 = vadd.f32 0.0, %v6844
  %v6846 = vpop.f32.mrb[0].mxu0
  %6847 = vmatprep.mubr.bf16.mxu0 %v5992
  %6848 = vmatmul.mubr.bf16.gmra.mrb[0].mxu0 %v5991
  %v6849 = vpop.f32.mrb[0].mxu0
  %v6850 = vadd.f32 0.0, %v6849
  %v6851 = vpop.f32.mrb[0].mxu0
  %v6852 = vpop.f32.mrb[0].mxu0
  %v6853 = vadd.f32 0.0, %v6852
  %v6854 = vpop.f32.mrb[0].mxu0
  %6855 = vmatprep.mubr.bf16.mxu0 %v6010
  %6856 = vmatmul.mubr.bf16.gmra.mrb[0].mxu0 %v6009
  %v6857 = vpop.f32.mrb[0].mxu0
  %v6858 = vadd.f32 0.0, %v6857
  %v6859 = vpop.f32.mrb[0].mxu0
  %v6860 = vpop.f32.mrb[0].mxu0
  %v6861 = vadd.f32 0.0, %v6860
  %v6862 = vpop.f32.mrb[0].mxu0
  %6863 = vmatprep.mubr.bf16.mxu0 %v6028
  %6864 = vmatmul.mubr.bf16.gmra.mrb[0].mxu0 %v6027
  %v6865 = vpop.f32.mrb[0].mxu0
  %v6866 = vadd.f32 0.0, %v6865
  %v6867 = vpop.f32.mrb[0].mxu0
  %v6868 = vpop.f32.mrb[0].mxu0
  %v6869 = vadd.f32 0.0, %v6868
  %v6870 = vpop.f32.mrb[0].mxu0
  %6871 = vmatprep.mubr.bf16.mxu0 %v6046
  %6872 = vmatmul.mubr.bf16.gmra.mrb[0].mxu0 %v6045
  %v6873 = vpop.f32.mrb[0].mxu0
  %v6874 = vadd.f32 0.0, %v6873
  %v6875 = vpop.f32.mrb[0].mxu0
  %v6876 = vpop.f32.mrb[0].mxu0
  %v6877 = vadd.f32 0.0, %v6876
  %v6878 = vpop.f32.mrb[0].mxu0
  %6879 = vmatprep.mubr.bf16.mxu0 %v6064
  %6880 = vmatmul.mubr.bf16.gmra.mrb[0].mxu0 %v6063
  %v6881 = vpop.f32.mrb[0].mxu0
  %v6882 = vadd.f32 0.0, %v6881
  %v6883 = vpop.f32.mrb[0].mxu0
  %v6884 = vpop.f32.mrb[0].mxu0
  %v6885 = vadd.f32 0.0, %v6884
  %v6886 = vpop.f32.mrb[0].mxu0
  %6887 = vmatprep.mubr.bf16.mxu0 %v6082
  %6888 = vmatmul.mubr.bf16.gmra.mrb[0].mxu0 %v6081
  %v6889 = vpop.f32.mrb[0].mxu0
  %v6890 = vadd.f32 0.0, %v6889
  %v6891 = vpop.f32.mrb[0].mxu0
  %v6892 = vpop.f32.mrb[0].mxu0
  %v6893 = vadd.f32 0.0, %v6892
  %v6894 = vpop.f32.mrb[0].mxu0
  %6895 = vmatprep.mubr.bf16.mxu0 %v6100
  %6896 = vmatmul.mubr.bf16.gmra.mrb[0].mxu0 %v6099
  %v6897 = vpop.f32.mrb[0].mxu0
  %v6898 = vadd.f32 0.0, %v6897
  %v6899 = vpop.f32.mrb[0].mxu0
  %v6900 = vpop.f32.mrb[0].mxu0
  %v6901 = vadd.f32 0.0, %v6900
  %v6902 = vpop.f32.mrb[0].mxu0
  %6903 = vmatprep.mubr.bf16.mxu0 %v6118
  %6904 = vmatmul.mubr.bf16.gmra.mrb[0].mxu0 %v6117
  %v6905 = vpop.f32.mrb[0].mxu0
  %v6906 = vadd.f32 0.0, %v6905
  %v6907 = vpop.f32.mrb[0].mxu0
  %v6908 = vpop.f32.mrb[0].mxu0
  %v6909 = vadd.f32 0.0, %v6908
  %v6910 = vpop.f32.mrb[0].mxu0
  %6911 = vmatprep.mubr.bf16.mxu0 %v6136
  %6912 = vmatmul.mubr.bf16.gmra.mrb[0].mxu0 %v6135
  %v6913 = vpop.f32.mrb[0].mxu0
  %v6914 = vadd.f32 0.0, %v6913
  %v6915 = vpop.f32.mrb[0].mxu0
  %v6916 = vpop.f32.mrb[0].mxu0
  %v6917 = vadd.f32 0.0, %v6916
  %v6918 = vpop.f32.mrb[0].mxu0
  %6919 = vmatprep.mubr.bf16.mxu0 %v6154
  %6920 = vmatmul.mubr.bf16.gmra.mrb[0].mxu0 %v6153
  %v6921 = vpop.f32.mrb[0].mxu0
  %v6922 = vadd.f32 0.0, %v6921
  %v6923 = vpop.f32.mrb[0].mxu0
  %v6924 = vpop.f32.mrb[0].mxu0
  %v6925 = vadd.f32 0.0, %v6924
  %v6926 = vpop.f32.mrb[0].mxu0
  %6927 = vmatprep.mubr.bf16.mxu0 %v6172
  %6928 = vmatmul.mubr.bf16.gmra.mrb[0].mxu0 %v6171
  %v6929 = vpop.f32.mrb[0].mxu0
  %v6930 = vadd.f32 0.0, %v6929
  %v6931 = vpop.f32.mrb[0].mxu0
  %v6932 = vpop.f32.mrb[0].mxu0
  %v6933 = vadd.f32 0.0, %v6932
  %v6934 = vpop.f32.mrb[0].mxu0
  %6935 = vmatprep.mubr.bf16.mxu0 %v6190
  %6936 = vmatmul.mubr.bf16.gmra.mrb[0].mxu0 %v6189
  %v6937 = vpop.f32.mrb[0].mxu0
  %v6938 = vadd.f32 0.0, %v6937
  %v6939 = vpop.f32.mrb[0].mxu0
  %v6940 = vpop.f32.mrb[0].mxu0
  %v6941 = vadd.f32 0.0, %v6940
  %v6942 = vpop.f32.mrb[0].mxu0
  %6943 = vmatprep.mubr.bf16.mxu0 %v6208
  %6944 = vmatmul.mubr.bf16.gmra.mrb[0].mxu0 %v6207
  %v6945 = vpop.f32.mrb[0].mxu0
  %v6946 = vadd.f32 0.0, %v6945
  %v6947 = vpop.f32.mrb[0].mxu0
  %v6948 = vpop.f32.mrb[0].mxu0
  %v6949 = vadd.f32 0.0, %v6948
  %v6950 = vpop.f32.mrb[0].mxu0
  %6951 = vmatprep.mubr.bf16.mxu0 %v6226
  %6952 = vmatmul.mubr.bf16.gmra.mrb[0].mxu0 %v6225
  %v6953 = vpop.f32.mrb[0].mxu0
  %v6954 = vadd.f32 0.0, %v6953
  %v6955 = vpop.f32.mrb[0].mxu0
  %v6956 = vpop.f32.mrb[0].mxu0
  %v6957 = vadd.f32 0.0, %v6956
  %v6958 = vpop.f32.mrb[0].mxu0
  %6959 = vmatprep.mubr.bf16.mxu0 %v6244
  %6960 = vmatmul.mubr.bf16.gmra.mrb[0].mxu0 %v6243
  %v6961 = vpop.f32.mrb[0].mxu0
  %v6962 = vadd.f32 0.0, %v6961
  %v6963 = vpop.f32.mrb[0].mxu0
  %v6964 = vpop.f32.mrb[0].mxu0
  %v6965 = vadd.f32 0.0, %v6964
  %v6966 = vpop.f32.mrb[0].mxu0
  %6967 = vmatprep.mubr.bf16.mxu0 %v6262
  %6968 = vmatmul.mubr.bf16.gmra.mrb[0].mxu0 %v6261
  %v6969 = vpop.f32.mrb[0].mxu0
  %v6970 = vadd.f32 0.0, %v6969
  %v6971 = vpop.f32.mrb[0].mxu0
  %v6972 = vpop.f32.mrb[0].mxu0
  %v6973 = vadd.f32 0.0, %v6972
  %v6974 = vpop.f32.mrb[0].mxu0
  %6975 = vmatprep.mubr.bf16.mxu0 %v6280
  %6976 = vmatmul.mubr.bf16.gmra.mrb[0].mxu0 %v6279
  %v6977 = vpop.f32.mrb[0].mxu0
  %v6978 = vadd.f32 0.0, %v6977
  %v6979 = vpop.f32.mrb[0].mxu0
  %v6980 = vpop.f32.mrb[0].mxu0
  %v6981 = vadd.f32 0.0, %v6980
  %v6982 = vpop.f32.mrb[0].mxu0
  %6983 = vmatprep.mubr.bf16.mxu0 %v6298
  %6984 = vmatmul.mubr.bf16.gmra.mrb[0].mxu0 %v6297
  %v6985 = vpop.f32.mrb[0].mxu0
  %v6986 = vadd.f32 0.0, %v6985
  %v6987 = vpop.f32.mrb[0].mxu0
  %v6988 = vpop.f32.mrb[0].mxu0
  %v6989 = vadd.f32 0.0, %v6988
  %v6990 = vpop.f32.mrb[0].mxu0
  %6991 = vmatprep.mubr.bf16.mxu0 %v6316
  %6992 = vmatmul.mubr.bf16.gmra.mrb[0].mxu0 %v6315
  %v6993 = vpop.f32.mrb[0].mxu0
  %v6994 = vadd.f32 0.0, %v6993
  %v6995 = vpop.f32.mrb[0].mxu0
  %v6996 = vpop.f32.mrb[0].mxu0
  %v6997 = vadd.f32 0.0, %v6996
  %v6998 = vpop.f32.mrb[0].mxu0
  %6999 = vmatprep.mubr.bf16.mxu0 %v6334
  %7000 = vmatmul.mubr.bf16.gmra.mrb[0].mxu0 %v6333
  %v7001 = vpop.f32.mrb[0].mxu0
  %v7002 = vadd.f32 0.0, %v7001
  %v7003 = vpop.f32.mrb[0].mxu0
  %v7004 = vpop.f32.mrb[0].mxu0
  %v7005 = vadd.f32 0.0, %v7004
  %v7006 = vpop.f32.mrb[0].mxu0
  %7007 = vdwg.mxu0
  %7008 = vmatprep.subr.bf16.mxu0 0
  %7009 = vmatpush1.bf16.msra.mxu0 %v4495
  %7010 = vmatprep.subr.bf16.mxu0 0
  %7011 = vmatpush1.bf16.msra.mxu0 %v4496
  %7012 = vmatprep.subr.bf16.mxu0 0
  %7013 = vmatpush1.bf16.msra.mxu0 %v4497
  %7014 = vmatprep.subr.bf16.mxu0 0
  %7015 = vmatpush1.bf16.msra.mxu0 %v4498
  %7016 = vmatprep.subr.bf16.mxu0 0
  %7017 = vmatpush1.bf16.msra.mxu0 %v4499
  %7018 = vmatprep.subr.bf16.mxu0 0
  %7019 = vmatpush1.bf16.msra.mxu0 %v4500
  %7020 = vmatprep.subr.bf16.mxu0 0
  %7021 = vmatpush1.bf16.msra.mxu0 %v4501
  %7022 = vmatprep.subr.bf16.mxu0 0
  %7023 = vmatpush1.bf16.msra.mxu0 %v4502
  %7024 = vmatprep.subr.bf16.mxu0 0
  %7025 = vmatpush1.bf16.msra.mxu0 %v4503
  %7026 = vmatprep.subr.bf16.mxu0 0
  %7027 = vmatpush1.bf16.msra.mxu0 %v4504
  %7028 = vmatprep.subr.bf16.mxu0 0
  %7029 = vmatpush1.bf16.msra.mxu0 %v4505
  %7030 = vmatprep.subr.bf16.mxu0 0
  %7031 = vmatpush1.bf16.msra.mxu0 %v4506
  %7032 = vmatprep.subr.bf16.mxu0 0
  %7033 = vmatpush1.bf16.msra.mxu0 %v4507
  %7034 = vmatprep.subr.bf16.mxu0 0
  %7035 = vmatpush1.bf16.msra.mxu0 %v4508
  %7036 = vmatprep.subr.bf16.mxu0 0
  %7037 = vmatpush1.bf16.msra.mxu0 %v4509
  %7038 = vmatprep.subr.bf16.mxu0 0
  %7039 = vmatpush1.bf16.msra.mxu0 %v4510
  %7040 = vmatprep.mubr.bf16.mxu0 %v5922
  %7041 = vmatmul.mubr.bf16.gmra.mrb[0].mxu0 %v5921
  %v7042 = vpop.f32.mrb[0].mxu0
  %v7043 = vadd.f32 %v6818, %v7042
  %v7044 = vpop.f32.mrb[0].mxu0
  %v7045 = vpop.f32.mrb[0].mxu0
  %v7046 = vadd.f32 %v6821, %v7045
  %v7047 = vpop.f32.mrb[0].mxu0
  %7048 = vmatprep.mubr.bf16.mxu0 %v5940
  %7049 = vmatmul.mubr.bf16.gmra.mrb[0].mxu0 %v5939
  %v7050 = vpop.f32.mrb[0].mxu0
  %v7051 = vadd.f32 %v6826, %v7050
  %v7052 = vpop.f32.mrb[0].mxu0
  %v7053 = vpop.f32.mrb[0].mxu0
  %v7054 = vadd.f32 %v6829, %v7053
  %v7055 = vpop.f32.mrb[0].mxu0
  %7056 = vmatprep.mubr.bf16.mxu0 %v5958
  %7057 = vmatmul.mubr.bf16.gmra.mrb[0].mxu0 %v5957
  %v7058 = vpop.f32.mrb[0].mxu0
  %v7059 = vadd.f32 %v6834, %v7058
  %v7060 = vpop.f32.mrb[0].mxu0
  %v7061 = vpop.f32.mrb[0].mxu0
  %v7062 = vadd.f32 %v6837, %v7061
  %v7063 = vpop.f32.mrb[0].mxu0
  %7064 = vmatprep.mubr.bf16.mxu0 %v5976
  %7065 = vmatmul.mubr.bf16.gmra.mrb[0].mxu0 %v5975
  %v7066 = vpop.f32.mrb[0].mxu0
  %v7067 = vadd.f32 %v6842, %v7066
  %v7068 = vpop.f32.mrb[0].mxu0
  %v7069 = vpop.f32.mrb[0].mxu0
  %v7070 = vadd.f32 %v6845, %v7069
  %v7071 = vpop.f32.mrb[0].mxu0
  %7072 = vmatprep.mubr.bf16.mxu0 %v5994
  %7073 = vmatmul.mubr.bf16.gmra.mrb[0].mxu0 %v5993
  %v7074 = vpop.f32.mrb[0].mxu0
  %v7075 = vadd.f32 %v6850, %v7074
  %v7076 = vpop.f32.mrb[0].mxu0
  %v7077 = vpop.f32.mrb[0].mxu0
  %v7078 = vadd.f32 %v6853, %v7077
  %v7079 = vpop.f32.mrb[0].mxu0
  %7080 = vmatprep.mubr.bf16.mxu0 %v6012
  %7081 = vmatmul.mubr.bf16.gmra.mrb[0].mxu0 %v6011
  %v7082 = vpop.f32.mrb[0].mxu0
  %v7083 = vadd.f32 %v6858, %v7082
  %v7084 = vpop.f32.mrb[0].mxu0
  %v7085 = vpop.f32.mrb[0].mxu0
  %v7086 = vadd.f32 %v6861, %v7085
  %v7087 = vpop.f32.mrb[0].mxu0
  %7088 = vmatprep.mubr.bf16.mxu0 %v6030
  %7089 = vmatmul.mubr.bf16.gmra.mrb[0].mxu0 %v6029
  %v7090 = vpop.f32.mrb[0].mxu0
  %v7091 = vadd.f32 %v6866, %v7090
  %v7092 = vpop.f32.mrb[0].mxu0
  %v7093 = vpop.f32.mrb[0].mxu0
  %v7094 = vadd.f32 %v6869, %v7093
  %v7095 = vpop.f32.mrb[0].mxu0
  %7096 = vmatprep.mubr.bf16.mxu0 %v6048
  %7097 = vmatmul.mubr.bf16.gmra.mrb[0].mxu0 %v6047
  %v7098 = vpop.f32.mrb[0].mxu0
  %v7099 = vadd.f32 %v6874, %v7098
  %v7100 = vpop.f32.mrb[0].mxu0
  %v7101 = vpop.f32.mrb[0].mxu0
  %v7102 = vadd.f32 %v6877, %v7101
  %v7103 = vpop.f32.mrb[0].mxu0
  %7104 = vmatprep.mubr.bf16.mxu0 %v6066
  %7105 = vmatmul.mubr.bf16.gmra.mrb[0].mxu0 %v6065
  %v7106 = vpop.f32.mrb[0].mxu0
  %v7107 = vadd.f32 %v6882, %v7106
  %v7108 = vpop.f32.mrb[0].mxu0
  %v7109 = vpop.f32.mrb[0].mxu0
  %v7110 = vadd.f32 %v6885, %v7109
  %v7111 = vpop.f32.mrb[0].mxu0
  %7112 = vmatprep.mubr.bf16.mxu0 %v6084
  %7113 = vmatmul.mubr.bf16.gmra.mrb[0].mxu0 %v6083
  %v7114 = vpop.f32.mrb[0].mxu0
  %v7115 = vadd.f32 %v6890, %v7114
  %v7116 = vpop.f32.mrb[0].mxu0
  %v7117 = vpop.f32.mrb[0].mxu0
  %v7118 = vadd.f32 %v6893, %v7117
  %v7119 = vpop.f32.mrb[0].mxu0
  %7120 = vmatprep.mubr.bf16.mxu0 %v6102
  %7121 = vmatmul.mubr.bf16.gmra.mrb[0].mxu0 %v6101
  %v7122 = vpop.f32.mrb[0].mxu0
  %v7123 = vadd.f32 %v6898, %v7122
  %v7124 = vpop.f32.mrb[0].mxu0
  %v7125 = vpop.f32.mrb[0].mxu0
  %v7126 = vadd.f32 %v6901, %v7125
  %v7127 = vpop.f32.mrb[0].mxu0
  %7128 = vmatprep.mubr.bf16.mxu0 %v6120
  %7129 = vmatmul.mubr.bf16.gmra.mrb[0].mxu0 %v6119
  %v7130 = vpop.f32.mrb[0].mxu0
  %v7131 = vadd.f32 %v6906, %v7130
  %v7132 = vpop.f32.mrb[0].mxu0
  %v7133 = vpop.f32.mrb[0].mxu0
  %v7134 = vadd.f32 %v6909, %v7133
  %v7135 = vpop.f32.mrb[0].mxu0
  %7136 = vmatprep.mubr.bf16.mxu0 %v6138
  %7137 = vmatmul.mubr.bf16.gmra.mrb[0].mxu0 %v6137
  %v7138 = vpop.f32.mrb[0].mxu0
  %v7139 = vadd.f32 %v6914, %v7138
  %v7140 = vpop.f32.mrb[0].mxu0
  %v7141 = vpop.f32.mrb[0].mxu0
  %v7142 = vadd.f32 %v6917, %v7141
  %v7143 = vpop.f32.mrb[0].mxu0
  %7144 = vmatprep.mubr.bf16.mxu0 %v6156
  %7145 = vmatmul.mubr.bf16.gmra.mrb[0].mxu0 %v6155
  %v7146 = vpop.f32.mrb[0].mxu0
  %v7147 = vadd.f32 %v6922, %v7146
  %v7148 = vpop.f32.mrb[0].mxu0
  %v7149 = vpop.f32.mrb[0].mxu0
  %v7150 = vadd.f32 %v6925, %v7149
  %v7151 = vpop.f32.mrb[0].mxu0
  %7152 = vmatprep.mubr.bf16.mxu0 %v6174
  %7153 = vmatmul.mubr.bf16.gmra.mrb[0].mxu0 %v6173
  %v7154 = vpop.f32.mrb[0].mxu0
  %v7155 = vadd.f32 %v6930, %v7154
  %v7156 = vpop.f32.mrb[0].mxu0
  %v7157 = vpop.f32.mrb[0].mxu0
  %v7158 = vadd.f32 %v6933, %v7157
  %v7159 = vpop.f32.mrb[0].mxu0
  %7160 = vmatprep.mubr.bf16.mxu0 %v6192
  %7161 = vmatmul.mubr.bf16.gmra.mrb[0].mxu0 %v6191
  %v7162 = vpop.f32.mrb[0].mxu0
  %v7163 = vadd.f32 %v6938, %v7162
  %v7164 = vpop.f32.mrb[0].mxu0
  %v7165 = vpop.f32.mrb[0].mxu0
  %v7166 = vadd.f32 %v6941, %v7165
  %v7167 = vpop.f32.mrb[0].mxu0
  %7168 = vmatprep.mubr.bf16.mxu0 %v6210
  %7169 = vmatmul.mubr.bf16.gmra.mrb[0].mxu0 %v6209
  %v7170 = vpop.f32.mrb[0].mxu0
  %v7171 = vadd.f32 %v6946, %v7170
  %v7172 = vpop.f32.mrb[0].mxu0
  %v7173 = vpop.f32.mrb[0].mxu0
  %v7174 = vadd.f32 %v6949, %v7173
  %v7175 = vpop.f32.mrb[0].mxu0
  %7176 = vmatprep.mubr.bf16.mxu0 %v6228
  %7177 = vmatmul.mubr.bf16.gmra.mrb[0].mxu0 %v6227
  %v7178 = vpop.f32.mrb[0].mxu0
  %v7179 = vadd.f32 %v6954, %v7178
  %v7180 = vpop.f32.mrb[0].mxu0
  %v7181 = vpop.f32.mrb[0].mxu0
  %v7182 = vadd.f32 %v6957, %v7181
  %v7183 = vpop.f32.mrb[0].mxu0
  %7184 = vmatprep.mubr.bf16.mxu0 %v6246
  %7185 = vmatmul.mubr.bf16.gmra.mrb[0].mxu0 %v6245
  %v7186 = vpop.f32.mrb[0].mxu0
  %v7187 = vadd.f32 %v6962, %v7186
  %v7188 = vpop.f32.mrb[0].mxu0
  %v7189 = vpop.f32.mrb[0].mxu0
  %v7190 = vadd.f32 %v6965, %v7189
  %v7191 = vpop.f32.mrb[0].mxu0
  %7192 = vmatprep.mubr.bf16.mxu0 %v6264
  %7193 = vmatmul.mubr.bf16.gmra.mrb[0].mxu0 %v6263
  %v7194 = vpop.f32.mrb[0].mxu0
  %v7195 = vadd.f32 %v6970, %v7194
  %v7196 = vpop.f32.mrb[0].mxu0
  %v7197 = vpop.f32.mrb[0].mxu0
  %v7198 = vadd.f32 %v6973, %v7197
  %v7199 = vpop.f32.mrb[0].mxu0
  %7200 = vmatprep.mubr.bf16.mxu0 %v6282
  %7201 = vmatmul.mubr.bf16.gmra.mrb[0].mxu0 %v6281
  %v7202 = vpop.f32.mrb[0].mxu0
  %v7203 = vadd.f32 %v6978, %v7202
  %v7204 = vpop.f32.mrb[0].mxu0
  %v7205 = vpop.f32.mrb[0].mxu0
  %v7206 = vadd.f32 %v6981, %v7205
  %v7207 = vpop.f32.mrb[0].mxu0
  %7208 = vmatprep.mubr.bf16.mxu0 %v6300
  %7209 = vmatmul.mubr.bf16.gmra.mrb[0].mxu0 %v6299
  %v7210 = vpop.f32.mrb[0].mxu0
  %v7211 = vadd.f32 %v6986, %v7210
  %v7212 = vpop.f32.mrb[0].mxu0
  %v7213 = vpop.f32.mrb[0].mxu0
  %v7214 = vadd.f32 %v6989, %v7213
  %v7215 = vpop.f32.mrb[0].mxu0
  %7216 = vmatprep.mubr.bf16.mxu0 %v6318
  %7217 = vmatmul.mubr.bf16.gmra.mrb[0].mxu0 %v6317
  %v7218 = vpop.f32.mrb[0].mxu0
  %v7219 = vadd.f32 %v6994, %v7218
  %v7220 = vpop.f32.mrb[0].mxu0
  %v7221 = vpop.f32.mrb[0].mxu0
  %v7222 = vadd.f32 %v6997, %v7221
  %v7223 = vpop.f32.mrb[0].mxu0
  %7224 = vmatprep.mubr.bf16.mxu0 %v6336
  %7225 = vmatmul.mubr.bf16.gmra.mrb[0].mxu0 %v6335
  %v7226 = vpop.f32.mrb[0].mxu0
  %v7227 = vadd.f32 %v7002, %v7226
  %v7228 = vpop.f32.mrb[0].mxu0
  %v7229 = vpop.f32.mrb[0].mxu0
  %v7230 = vadd.f32 %v7005, %v7229
  %v7231 = vpop.f32.mrb[0].mxu0
  %7232 = vdwg.mxu0
  %7233 = vmatprep.subr.bf16.mxu0 0
  %7234 = vmatpush1.bf16.msra.mxu0 %v4511
  %7235 = vmatprep.subr.bf16.mxu0 0
  %7236 = vmatpush1.bf16.msra.mxu0 %v4512
  %7237 = vmatprep.subr.bf16.mxu0 0
  %7238 = vmatpush1.bf16.msra.mxu0 %v4513
  %7239 = vmatprep.subr.bf16.mxu0 0
  %7240 = vmatpush1.bf16.msra.mxu0 %v4514
  %7241 = vmatprep.subr.bf16.mxu0 0
  %7242 = vmatpush1.bf16.msra.mxu0 %v4515
  %7243 = vmatprep.subr.bf16.mxu0 0
  %7244 = vmatpush1.bf16.msra.mxu0 %v4516
  %7245 = vmatprep.subr.bf16.mxu0 0
  %7246 = vmatpush1.bf16.msra.mxu0 %v4517
  %7247 = vmatprep.subr.bf16.mxu0 0
  %7248 = vmatpush1.bf16.msra.mxu0 %v4518
  %7249 = vmatprep.subr.bf16.mxu0 0
  %7250 = vmatpush1.bf16.msra.mxu0 %v4519
  %7251 = vmatprep.subr.bf16.mxu0 0
  %7252 = vmatpush1.bf16.msra.mxu0 %v4520
  %7253 = vmatprep.subr.bf16.mxu0 0
  %7254 = vmatpush1.bf16.msra.mxu0 %v4521
  %7255 = vmatprep.subr.bf16.mxu0 0
  %7256 = vmatpush1.bf16.msra.mxu0 %v4522
  %7257 = vmatprep.subr.bf16.mxu0 0
  %7258 = vmatpush1.bf16.msra.mxu0 %v4523
  %7259 = vmatprep.subr.bf16.mxu0 0
  %7260 = vmatpush1.bf16.msra.mxu0 %v4524
  %7261 = vmatprep.subr.bf16.mxu0 0
  %7262 = vmatpush1.bf16.msra.mxu0 %v4525
  %7263 = vmatprep.subr.bf16.mxu0 0
  %7264 = vmatpush1.bf16.msra.mxu0 %v4526
  %7265 = vmatprep.mubr.bf16.mxu0 %v5924
  %7266 = vmatmul.mubr.bf16.gmra.mrb[0].mxu0 %v5923
  %v7267 = vpop.f32.mrb[0].mxu0
  %v7268 = vadd.f32 %v7043, %v7267
  %v7269 = vpop.f32.mrb[0].mxu0
  %v7270 = vpop.f32.mrb[0].mxu0
  %v7271 = vadd.f32 %v7046, %v7270
  %v7272 = vpop.f32.mrb[0].mxu0
  %7273 = vmatprep.mubr.bf16.mxu0 %v5942
  %7274 = vmatmul.mubr.bf16.gmra.mrb[0].mxu0 %v5941
  %v7275 = vpop.f32.mrb[0].mxu0
  %v7276 = vadd.f32 %v7051, %v7275
  %v7277 = vpop.f32.mrb[0].mxu0
  %v7278 = vpop.f32.mrb[0].mxu0
  %v7279 = vadd.f32 %v7054, %v7278
  %v7280 = vpop.f32.mrb[0].mxu0
  %7281 = vmatprep.mubr.bf16.mxu0 %v5960
  %7282 = vmatmul.mubr.bf16.gmra.mrb[0].mxu0 %v5959
  %v7283 = vpop.f32.mrb[0].mxu0
  %v7284 = vadd.f32 %v7059, %v7283
  %v7285 = vpop.f32.mrb[0].mxu0
  %v7286 = vpop.f32.mrb[0].mxu0
  %v7287 = vadd.f32 %v7062, %v7286
  %v7288 = vpop.f32.mrb[0].mxu0
  %7289 = vmatprep.mubr.bf16.mxu0 %v5978
  %7290 = vmatmul.mubr.bf16.gmra.mrb[0].mxu0 %v5977
  %v7291 = vpop.f32.mrb[0].mxu0
  %v7292 = vadd.f32 %v7067, %v7291
  %v7293 = vpop.f32.mrb[0].mxu0
  %v7294 = vpop.f32.mrb[0].mxu0
  %v7295 = vadd.f32 %v7070, %v7294
  %v7296 = vpop.f32.mrb[0].mxu0
  %7297 = vmatprep.mubr.bf16.mxu0 %v5996
  %7298 = vmatmul.mubr.bf16.gmra.mrb[0].mxu0 %v5995
  %v7299 = vpop.f32.mrb[0].mxu0
  %v7300 = vadd.f32 %v7075, %v7299
  %v7301 = vpop.f32.mrb[0].mxu0
  %v7302 = vpop.f32.mrb[0].mxu0
  %v7303 = vadd.f32 %v7078, %v7302
  %v7304 = vpop.f32.mrb[0].mxu0
  %7305 = vmatprep.mubr.bf16.mxu0 %v6014
  %7306 = vmatmul.mubr.bf16.gmra.mrb[0].mxu0 %v6013
  %v7307 = vpop.f32.mrb[0].mxu0
  %v7308 = vadd.f32 %v7083, %v7307
  %v7309 = vpop.f32.mrb[0].mxu0
  %v7310 = vpop.f32.mrb[0].mxu0
  %v7311 = vadd.f32 %v7086, %v7310
  %v7312 = vpop.f32.mrb[0].mxu0
  %7313 = vmatprep.mubr.bf16.mxu0 %v6032
  %7314 = vmatmul.mubr.bf16.gmra.mrb[0].mxu0 %v6031
  %v7315 = vpop.f32.mrb[0].mxu0
  %v7316 = vadd.f32 %v7091, %v7315
  %v7317 = vpop.f32.mrb[0].mxu0
  %v7318 = vpop.f32.mrb[0].mxu0
  %v7319 = vadd.f32 %v7094, %v7318
  %v7320 = vpop.f32.mrb[0].mxu0
  %7321 = vmatprep.mubr.bf16.mxu0 %v6050
  %7322 = vmatmul.mubr.bf16.gmra.mrb[0].mxu0 %v6049
  %v7323 = vpop.f32.mrb[0].mxu0
  %v7324 = vadd.f32 %v7099, %v7323
  %v7325 = vpop.f32.mrb[0].mxu0
  %v7326 = vpop.f32.mrb[0].mxu0
  %v7327 = vadd.f32 %v7102, %v7326
  %v7328 = vpop.f32.mrb[0].mxu0
  %7329 = vmatprep.mubr.bf16.mxu0 %v6068
  %7330 = vmatmul.mubr.bf16.gmra.mrb[0].mxu0 %v6067
  %v7331 = vpop.f32.mrb[0].mxu0
  %v7332 = vadd.f32 %v7107, %v7331
  %v7333 = vpop.f32.mrb[0].mxu0
  %v7334 = vpop.f32.mrb[0].mxu0
  %v7335 = vadd.f32 %v7110, %v7334
  %v7336 = vpop.f32.mrb[0].mxu0
  %7337 = vmatprep.mubr.bf16.mxu0 %v6086
  %7338 = vmatmul.mubr.bf16.gmra.mrb[0].mxu0 %v6085
  %v7339 = vpop.f32.mrb[0].mxu0
  %v7340 = vadd.f32 %v7115, %v7339
  %v7341 = vpop.f32.mrb[0].mxu0
  %v7342 = vpop.f32.mrb[0].mxu0
  %v7343 = vadd.f32 %v7118, %v7342
  %v7344 = vpop.f32.mrb[0].mxu0
  %7345 = vmatprep.mubr.bf16.mxu0 %v6104
  %7346 = vmatmul.mubr.bf16.gmra.mrb[0].mxu0 %v6103
  %v7347 = vpop.f32.mrb[0].mxu0
  %v7348 = vadd.f32 %v7123, %v7347
  %v7349 = vpop.f32.mrb[0].mxu0
  %v7350 = vpop.f32.mrb[0].mxu0
  %v7351 = vadd.f32 %v7126, %v7350
  %v7352 = vpop.f32.mrb[0].mxu0
  %7353 = vmatprep.mubr.bf16.mxu0 %v6122
  %7354 = vmatmul.mubr.bf16.gmra.mrb[0].mxu0 %v6121
  %v7355 = vpop.f32.mrb[0].mxu0
  %v7356 = vadd.f32 %v7131, %v7355
  %v7357 = vpop.f32.mrb[0].mxu0
  %v7358 = vpop.f32.mrb[0].mxu0
  %v7359 = vadd.f32 %v7134, %v7358
  %v7360 = vpop.f32.mrb[0].mxu0
  %7361 = vmatprep.mubr.bf16.mxu0 %v6140
  %7362 = vmatmul.mubr.bf16.gmra.mrb[0].mxu0 %v6139
  %v7363 = vpop.f32.mrb[0].mxu0
  %v7364 = vadd.f32 %v7139, %v7363
  %v7365 = vpop.f32.mrb[0].mxu0
  %v7366 = vpop.f32.mrb[0].mxu0
  %v7367 = vadd.f32 %v7142, %v7366
  %v7368 = vpop.f32.mrb[0].mxu0
  %7369 = vmatprep.mubr.bf16.mxu0 %v6158
  %7370 = vmatmul.mubr.bf16.gmra.mrb[0].mxu0 %v6157
  %v7371 = vpop.f32.mrb[0].mxu0
  %v7372 = vadd.f32 %v7147, %v7371
  %v7373 = vpop.f32.mrb[0].mxu0
  %v7374 = vpop.f32.mrb[0].mxu0
  %v7375 = vadd.f32 %v7150, %v7374
  %v7376 = vpop.f32.mrb[0].mxu0
  %7377 = vmatprep.mubr.bf16.mxu0 %v6176
  %7378 = vmatmul.mubr.bf16.gmra.mrb[0].mxu0 %v6175
  %v7379 = vpop.f32.mrb[0].mxu0
  %v7380 = vadd.f32 %v7155, %v7379
  %v7381 = vpop.f32.mrb[0].mxu0
  %v7382 = vpop.f32.mrb[0].mxu0
  %v7383 = vadd.f32 %v7158, %v7382
  %v7384 = vpop.f32.mrb[0].mxu0
  %7385 = vmatprep.mubr.bf16.mxu0 %v6194
  %7386 = vmatmul.mubr.bf16.gmra.mrb[0].mxu0 %v6193
  %v7387 = vpop.f32.mrb[0].mxu0
  %v7388 = vadd.f32 %v7163, %v7387
  %v7389 = vpop.f32.mrb[0].mxu0
  %v7390 = vpop.f32.mrb[0].mxu0
  %v7391 = vadd.f32 %v7166, %v7390
  %v7392 = vpop.f32.mrb[0].mxu0
  %7393 = vmatprep.mubr.bf16.mxu0 %v6212
  %7394 = vmatmul.mubr.bf16.gmra.mrb[0].mxu0 %v6211
  %v7395 = vpop.f32.mrb[0].mxu0
  %v7396 = vadd.f32 %v7171, %v7395
  %v7397 = vpop.f32.mrb[0].mxu0
  %v7398 = vpop.f32.mrb[0].mxu0
  %v7399 = vadd.f32 %v7174, %v7398
  %v7400 = vpop.f32.mrb[0].mxu0
  %7401 = vmatprep.mubr.bf16.mxu0 %v6230
  %7402 = vmatmul.mubr.bf16.gmra.mrb[0].mxu0 %v6229
  %v7403 = vpop.f32.mrb[0].mxu0
  %v7404 = vadd.f32 %v7179, %v7403
  %v7405 = vpop.f32.mrb[0].mxu0
  %v7406 = vpop.f32.mrb[0].mxu0
  %v7407 = vadd.f32 %v7182, %v7406
  %v7408 = vpop.f32.mrb[0].mxu0
  %7409 = vmatprep.mubr.bf16.mxu0 %v6248
  %7410 = vmatmul.mubr.bf16.gmra.mrb[0].mxu0 %v6247
  %v7411 = vpop.f32.mrb[0].mxu0
  %v7412 = vadd.f32 %v7187, %v7411
  %v7413 = vpop.f32.mrb[0].mxu0
  %v7414 = vpop.f32.mrb[0].mxu0
  %v7415 = vadd.f32 %v7190, %v7414
  %v7416 = vpop.f32.mrb[0].mxu0
  %7417 = vmatprep.mubr.bf16.mxu0 %v6266
  %7418 = vmatmul.mubr.bf16.gmra.mrb[0].mxu0 %v6265
  %v7419 = vpop.f32.mrb[0].mxu0
  %v7420 = vadd.f32 %v7195, %v7419
  %v7421 = vpop.f32.mrb[0].mxu0
  %v7422 = vpop.f32.mrb[0].mxu0
  %v7423 = vadd.f32 %v7198, %v7422
  %v7424 = vpop.f32.mrb[0].mxu0
  %7425 = vmatprep.mubr.bf16.mxu0 %v6284
  %7426 = vmatmul.mubr.bf16.gmra.mrb[0].mxu0 %v6283
  %v7427 = vpop.f32.mrb[0].mxu0
  %v7428 = vadd.f32 %v7203, %v7427
  %v7429 = vpop.f32.mrb[0].mxu0
  %v7430 = vpop.f32.mrb[0].mxu0
  %v7431 = vadd.f32 %v7206, %v7430
  %v7432 = vpop.f32.mrb[0].mxu0
  %7433 = vmatprep.mubr.bf16.mxu0 %v6302
  %7434 = vmatmul.mubr.bf16.gmra.mrb[0].mxu0 %v6301
  %v7435 = vpop.f32.mrb[0].mxu0
  %v7436 = vadd.f32 %v7211, %v7435
  %v7437 = vpop.f32.mrb[0].mxu0
  %v7438 = vpop.f32.mrb[0].mxu0
  %v7439 = vadd.f32 %v7214, %v7438
  %v7440 = vpop.f32.mrb[0].mxu0
  %7441 = vmatprep.mubr.bf16.mxu0 %v6320
  %7442 = vmatmul.mubr.bf16.gmra.mrb[0].mxu0 %v6319
  %v7443 = vpop.f32.mrb[0].mxu0
  %v7444 = vadd.f32 %v7219, %v7443
  %v7445 = vpop.f32.mrb[0].mxu0
  %v7446 = vpop.f32.mrb[0].mxu0
  %v7447 = vadd.f32 %v7222, %v7446
  %v7448 = vpop.f32.mrb[0].mxu0
  %7449 = vmatprep.mubr.bf16.mxu0 %v6338
  %7450 = vmatmul.mubr.bf16.gmra.mrb[0].mxu0 %v6337
  %v7451 = vpop.f32.mrb[0].mxu0
  %v7452 = vadd.f32 %v7227, %v7451
  %v7453 = vpop.f32.mrb[0].mxu0
  %v7454 = vpop.f32.mrb[0].mxu0
  %v7455 = vadd.f32 %v7230, %v7454
  %v7456 = vpop.f32.mrb[0].mxu0
  %7457 = vdwg.mxu0
  %7458 = vmatprep.subr.bf16.mxu0 0
  %7459 = vmatpush1.bf16.msra.mxu0 %v4527
  %7460 = vmatprep.subr.bf16.mxu0 0
  %7461 = vmatpush1.bf16.msra.mxu0 %v4528
  %7462 = vmatprep.subr.bf16.mxu0 0
  %7463 = vmatpush1.bf16.msra.mxu0 %v4529
  %7464 = vmatprep.subr.bf16.mxu0 0
  %7465 = vmatpush1.bf16.msra.mxu0 %v4530
  %7466 = vmatprep.subr.bf16.mxu0 0
  %7467 = vmatpush1.bf16.msra.mxu0 %v4531
  %7468 = vmatprep.subr.bf16.mxu0 0
  %7469 = vmatpush1.bf16.msra.mxu0 %v4532
  %7470 = vmatprep.subr.bf16.mxu0 0
  %7471 = vmatpush1.bf16.msra.mxu0 %v4533
  %7472 = vmatprep.subr.bf16.mxu0 0
  %7473 = vmatpush1.bf16.msra.mxu0 %v4534
  %7474 = vmatprep.subr.bf16.mxu0 0
  %7475 = vmatpush1.bf16.msra.mxu0 %v4535
  %7476 = vmatprep.subr.bf16.mxu0 0
  %7477 = vmatpush1.bf16.msra.mxu0 %v4536
  %7478 = vmatprep.subr.bf16.mxu0 0
  %7479 = vmatpush1.bf16.msra.mxu0 %v4537
  %7480 = vmatprep.subr.bf16.mxu0 0
  %7481 = vmatpush1.bf16.msra.mxu0 %v4538
  %7482 = vmatprep.subr.bf16.mxu0 0
  %7483 = vmatpush1.bf16.msra.mxu0 %v4539
  %7484 = vmatprep.subr.bf16.mxu0 0
  %7485 = vmatpush1.bf16.msra.mxu0 %v4540
  %7486 = vmatprep.subr.bf16.mxu0 0
  %7487 = vmatpush1.bf16.msra.mxu0 %v4541
  %7488 = vmatprep.subr.bf16.mxu0 0
  %7489 = vmatpush1.bf16.msra.mxu0 %v4542
  %7490 = vmatprep.mubr.bf16.mxu0 %v5926
  %7491 = vmatmul.mubr.bf16.gmra.mrb[0].mxu0 %v5925
  %v7492 = vpop.f32.mrb[0].mxu0
  %v7493 = vadd.f32 %v7268, %v7492
  %v7494 = vpop.f32.mrb[0].mxu0
  %v7495 = vpop.f32.mrb[0].mxu0
  %v7496 = vadd.f32 %v7271, %v7495
  %v7497 = vpop.f32.mrb[0].mxu0
  %7498 = vmatprep.mubr.bf16.mxu0 %v5944
  %7499 = vmatmul.mubr.bf16.gmra.mrb[0].mxu0 %v5943
  %v7500 = vpop.f32.mrb[0].mxu0
  %v7501 = vadd.f32 %v7276, %v7500
  %v7502 = vpop.f32.mrb[0].mxu0
  %v7503 = vpop.f32.mrb[0].mxu0
  %v7504 = vadd.f32 %v7279, %v7503
  %v7505 = vpop.f32.mrb[0].mxu0
  %7506 = vmatprep.mubr.bf16.mxu0 %v5962
  %7507 = vmatmul.mubr.bf16.gmra.mrb[0].mxu0 %v5961
  %v7508 = vpop.f32.mrb[0].mxu0
  %v7509 = vadd.f32 %v7284, %v7508
  %v7510 = vpop.f32.mrb[0].mxu0
  %v7511 = vpop.f32.mrb[0].mxu0
  %v7512 = vadd.f32 %v7287, %v7511
  %v7513 = vpop.f32.mrb[0].mxu0
  %7514 = vmatprep.mubr.bf16.mxu0 %v5980
  %7515 = vmatmul.mubr.bf16.gmra.mrb[0].mxu0 %v5979
  %v7516 = vpop.f32.mrb[0].mxu0
  %v7517 = vadd.f32 %v7292, %v7516
  %v7518 = vpop.f32.mrb[0].mxu0
  %v7519 = vpop.f32.mrb[0].mxu0
  %v7520 = vadd.f32 %v7295, %v7519
  %v7521 = vpop.f32.mrb[0].mxu0
  %7522 = vmatprep.mubr.bf16.mxu0 %v5998
  %7523 = vmatmul.mubr.bf16.gmra.mrb[0].mxu0 %v5997
  %v7524 = vpop.f32.mrb[0].mxu0
  %v7525 = vadd.f32 %v7300, %v7524
  %v7526 = vpop.f32.mrb[0].mxu0
  %v7527 = vpop.f32.mrb[0].mxu0
  %v7528 = vadd.f32 %v7303, %v7527
  %v7529 = vpop.f32.mrb[0].mxu0
  %7530 = vmatprep.mubr.bf16.mxu0 %v6016
  %7531 = vmatmul.mubr.bf16.gmra.mrb[0].mxu0 %v6015
  %v7532 = vpop.f32.mrb[0].mxu0
  %v7533 = vadd.f32 %v7308, %v7532
  %v7534 = vpop.f32.mrb[0].mxu0
  %v7535 = vpop.f32.mrb[0].mxu0
  %v7536 = vadd.f32 %v7311, %v7535
  %v7537 = vpop.f32.mrb[0].mxu0
  %7538 = vmatprep.mubr.bf16.mxu0 %v6034
  %7539 = vmatmul.mubr.bf16.gmra.mrb[0].mxu0 %v6033
  %v7540 = vpop.f32.mrb[0].mxu0
  %v7541 = vadd.f32 %v7316, %v7540
  %v7542 = vpop.f32.mrb[0].mxu0
  %v7543 = vpop.f32.mrb[0].mxu0
  %v7544 = vadd.f32 %v7319, %v7543
  %v7545 = vpop.f32.mrb[0].mxu0
  %7546 = vmatprep.mubr.bf16.mxu0 %v6052
  %7547 = vmatmul.mubr.bf16.gmra.mrb[0].mxu0 %v6051
  %v7548 = vpop.f32.mrb[0].mxu0
  %v7549 = vadd.f32 %v7324, %v7548
  %v7550 = vpop.f32.mrb[0].mxu0
  %v7551 = vpop.f32.mrb[0].mxu0
  %v7552 = vadd.f32 %v7327, %v7551
  %v7553 = vpop.f32.mrb[0].mxu0
  %7554 = vmatprep.mubr.bf16.mxu0 %v6070
  %7555 = vmatmul.mubr.bf16.gmra.mrb[0].mxu0 %v6069
  %v7556 = vpop.f32.mrb[0].mxu0
  %v7557 = vadd.f32 %v7332, %v7556
  %v7558 = vpop.f32.mrb[0].mxu0
  %v7559 = vpop.f32.mrb[0].mxu0
  %v7560 = vadd.f32 %v7335, %v7559
  %v7561 = vpop.f32.mrb[0].mxu0
  %7562 = vmatprep.mubr.bf16.mxu0 %v6088
  %7563 = vmatmul.mubr.bf16.gmra.mrb[0].mxu0 %v6087
  %v7564 = vpop.f32.mrb[0].mxu0
  %v7565 = vadd.f32 %v7340, %v7564
  %v7566 = vpop.f32.mrb[0].mxu0
  %v7567 = vpop.f32.mrb[0].mxu0
  %v7568 = vadd.f32 %v7343, %v7567
  %v7569 = vpop.f32.mrb[0].mxu0
  %7570 = vmatprep.mubr.bf16.mxu0 %v6106
  %7571 = vmatmul.mubr.bf16.gmra.mrb[0].mxu0 %v6105
  %v7572 = vpop.f32.mrb[0].mxu0
  %v7573 = vadd.f32 %v7348, %v7572
  %v7574 = vpop.f32.mrb[0].mxu0
  %v7575 = vpop.f32.mrb[0].mxu0
  %v7576 = vadd.f32 %v7351, %v7575
  %v7577 = vpop.f32.mrb[0].mxu0
  %7578 = vmatprep.mubr.bf16.mxu0 %v6124
  %7579 = vmatmul.mubr.bf16.gmra.mrb[0].mxu0 %v6123
  %v7580 = vpop.f32.mrb[0].mxu0
  %v7581 = vadd.f32 %v7356, %v7580
  %v7582 = vpop.f32.mrb[0].mxu0
  %v7583 = vpop.f32.mrb[0].mxu0
  %v7584 = vadd.f32 %v7359, %v7583
  %v7585 = vpop.f32.mrb[0].mxu0
  %7586 = vmatprep.mubr.bf16.mxu0 %v6142
  %7587 = vmatmul.mubr.bf16.gmra.mrb[0].mxu0 %v6141
  %v7588 = vpop.f32.mrb[0].mxu0
  %v7589 = vadd.f32 %v7364, %v7588
  %v7590 = vpop.f32.mrb[0].mxu0
  %v7591 = vpop.f32.mrb[0].mxu0
  %v7592 = vadd.f32 %v7367, %v7591
  %v7593 = vpop.f32.mrb[0].mxu0
  %7594 = vmatprep.mubr.bf16.mxu0 %v6160
  %7595 = vmatmul.mubr.bf16.gmra.mrb[0].mxu0 %v6159
  %v7596 = vpop.f32.mrb[0].mxu0
  %v7597 = vadd.f32 %v7372, %v7596
  %v7598 = vpop.f32.mrb[0].mxu0
  %v7599 = vpop.f32.mrb[0].mxu0
  %v7600 = vadd.f32 %v7375, %v7599
  %v7601 = vpop.f32.mrb[0].mxu0
  %7602 = vmatprep.mubr.bf16.mxu0 %v6178
  %7603 = vmatmul.mubr.bf16.gmra.mrb[0].mxu0 %v6177
  %v7604 = vpop.f32.mrb[0].mxu0
  %v7605 = vadd.f32 %v7380, %v7604
  %v7606 = vpop.f32.mrb[0].mxu0
  %v7607 = vpop.f32.mrb[0].mxu0
  %v7608 = vadd.f32 %v7383, %v7607
  %v7609 = vpop.f32.mrb[0].mxu0
  %7610 = vmatprep.mubr.bf16.mxu0 %v6196
  %7611 = vmatmul.mubr.bf16.gmra.mrb[0].mxu0 %v6195
  %v7612 = vpop.f32.mrb[0].mxu0
  %v7613 = vadd.f32 %v7388, %v7612
  %v7614 = vpop.f32.mrb[0].mxu0
  %v7615 = vpop.f32.mrb[0].mxu0
  %v7616 = vadd.f32 %v7391, %v7615
  %v7617 = vpop.f32.mrb[0].mxu0
  %7618 = vmatprep.mubr.bf16.mxu0 %v6214
  %7619 = vmatmul.mubr.bf16.gmra.mrb[0].mxu0 %v6213
  %v7620 = vpop.f32.mrb[0].mxu0
  %v7621 = vadd.f32 %v7396, %v7620
  %v7622 = vpop.f32.mrb[0].mxu0
  %v7623 = vpop.f32.mrb[0].mxu0
  %v7624 = vadd.f32 %v7399, %v7623
  %v7625 = vpop.f32.mrb[0].mxu0
  %7626 = vmatprep.mubr.bf16.mxu0 %v6232
  %7627 = vmatmul.mubr.bf16.gmra.mrb[0].mxu0 %v6231
  %v7628 = vpop.f32.mrb[0].mxu0
  %v7629 = vadd.f32 %v7404, %v7628
  %v7630 = vpop.f32.mrb[0].mxu0
  %v7631 = vpop.f32.mrb[0].mxu0
  %v7632 = vadd.f32 %v7407, %v7631
  %v7633 = vpop.f32.mrb[0].mxu0
  %7634 = vmatprep.mubr.bf16.mxu0 %v6250
  %7635 = vmatmul.mubr.bf16.gmra.mrb[0].mxu0 %v6249
  %v7636 = vpop.f32.mrb[0].mxu0
  %v7637 = vadd.f32 %v7412, %v7636
  %v7638 = vpop.f32.mrb[0].mxu0
  %v7639 = vpop.f32.mrb[0].mxu0
  %v7640 = vadd.f32 %v7415, %v7639
  %v7641 = vpop.f32.mrb[0].mxu0
  %7642 = vmatprep.mubr.bf16.mxu0 %v6268
  %7643 = vmatmul.mubr.bf16.gmra.mrb[0].mxu0 %v6267
  %v7644 = vpop.f32.mrb[0].mxu0
  %v7645 = vadd.f32 %v7420, %v7644
  %v7646 = vpop.f32.mrb[0].mxu0
  %v7647 = vpop.f32.mrb[0].mxu0
  %v7648 = vadd.f32 %v7423, %v7647
  %v7649 = vpop.f32.mrb[0].mxu0
  %7650 = vmatprep.mubr.bf16.mxu0 %v6286
  %7651 = vmatmul.mubr.bf16.gmra.mrb[0].mxu0 %v6285
  %v7652 = vpop.f32.mrb[0].mxu0
  %v7653 = vadd.f32 %v7428, %v7652
  %v7654 = vpop.f32.mrb[0].mxu0
  %v7655 = vpop.f32.mrb[0].mxu0
  %v7656 = vadd.f32 %v7431, %v7655
  %v7657 = vpop.f32.mrb[0].mxu0
  %7658 = vmatprep.mubr.bf16.mxu0 %v6304
  %7659 = vmatmul.mubr.bf16.gmra.mrb[0].mxu0 %v6303
  %v7660 = vpop.f32.mrb[0].mxu0
  %v7661 = vadd.f32 %v7436, %v7660
  %v7662 = vpop.f32.mrb[0].mxu0
  %v7663 = vpop.f32.mrb[0].mxu0
  %v7664 = vadd.f32 %v7439, %v7663
  %v7665 = vpop.f32.mrb[0].mxu0
  %7666 = vmatprep.mubr.bf16.mxu0 %v6322
  %7667 = vmatmul.mubr.bf16.gmra.mrb[0].mxu0 %v6321
  %v7668 = vpop.f32.mrb[0].mxu0
  %v7669 = vadd.f32 %v7444, %v7668
  %v7670 = vpop.f32.mrb[0].mxu0
  %v7671 = vpop.f32.mrb[0].mxu0
  %v7672 = vadd.f32 %v7447, %v7671
  %v7673 = vpop.f32.mrb[0].mxu0
  %7674 = vmatprep.mubr.bf16.mxu0 %v6340
  %7675 = vmatmul.mubr.bf16.gmra.mrb[0].mxu0 %v6339
  %v7676 = vpop.f32.mrb[0].mxu0
  %v7677 = vadd.f32 %v7452, %v7676
  %v7678 = vpop.f32.mrb[0].mxu0
  %v7679 = vpop.f32.mrb[0].mxu0
  %v7680 = vadd.f32 %v7455, %v7679
  %v7681 = vpop.f32.mrb[0].mxu0
  %7682 = vdwg.mxu0
  %7683 = vmatprep.subr.bf16.mxu0 0
  %7684 = vmatpush1.bf16.msra.mxu0 %v4543
  %7685 = vmatprep.subr.bf16.mxu0 0
  %7686 = vmatpush1.bf16.msra.mxu0 %v4544
  %7687 = vmatprep.subr.bf16.mxu0 0
  %7688 = vmatpush1.bf16.msra.mxu0 %v4545
  %7689 = vmatprep.subr.bf16.mxu0 0
  %7690 = vmatpush1.bf16.msra.mxu0 %v4546
  %7691 = vmatprep.subr.bf16.mxu0 0
  %7692 = vmatpush1.bf16.msra.mxu0 %v4547
  %7693 = vmatprep.subr.bf16.mxu0 0
  %7694 = vmatpush1.bf16.msra.mxu0 %v4548
  %7695 = vmatprep.subr.bf16.mxu0 0
  %7696 = vmatpush1.bf16.msra.mxu0 %v4549
  %7697 = vmatprep.subr.bf16.mxu0 0
  %7698 = vmatpush1.bf16.msra.mxu0 %v4550
  %7699 = vmatprep.subr.bf16.mxu0 0
  %7700 = vmatpush1.bf16.msra.mxu0 %v4551
  %7701 = vmatprep.subr.bf16.mxu0 0
  %7702 = vmatpush1.bf16.msra.mxu0 %v4552
  %7703 = vmatprep.subr.bf16.mxu0 0
  %7704 = vmatpush1.bf16.msra.mxu0 %v4553
  %7705 = vmatprep.subr.bf16.mxu0 0
  %7706 = vmatpush1.bf16.msra.mxu0 %v4554
  %7707 = vmatprep.subr.bf16.mxu0 0
  %7708 = vmatpush1.bf16.msra.mxu0 %v4555
  %7709 = vmatprep.subr.bf16.mxu0 0
  %7710 = vmatpush1.bf16.msra.mxu0 %v4556
  %7711 = vmatprep.subr.bf16.mxu0 0
  %7712 = vmatpush1.bf16.msra.mxu0 %v4557
  %7713 = vmatprep.subr.bf16.mxu0 0
  %7714 = vmatpush1.bf16.msra.mxu0 %v4558
  %7715 = vmatprep.mubr.bf16.mxu0 %v5928
  %7716 = vmatmul.mubr.bf16.gmra.mrb[0].mxu0 %v5927
  %v7717 = vpop.f32.mrb[0].mxu0
  %v7718 = vadd.f32 %v7493, %v7717
  %v7719 = vpop.f32.mrb[0].mxu0
  %v7720 = vpop.f32.mrb[0].mxu0
  %v7721 = vadd.f32 %v7496, %v7720
  %v7722 = vpop.f32.mrb[0].mxu0
  %7723 = vmatprep.mubr.bf16.mxu0 %v5946
  %7724 = vmatmul.mubr.bf16.gmra.mrb[0].mxu0 %v5945
  %v7725 = vpop.f32.mrb[0].mxu0
  %v7726 = vadd.f32 %v7501, %v7725
  %v7727 = vpop.f32.mrb[0].mxu0
  %v7728 = vpop.f32.mrb[0].mxu0
  %v7729 = vadd.f32 %v7504, %v7728
  %v7730 = vpop.f32.mrb[0].mxu0
  %7731 = vmatprep.mubr.bf16.mxu0 %v5964
  %7732 = vmatmul.mubr.bf16.gmra.mrb[0].mxu0 %v5963
  %v7733 = vpop.f32.mrb[0].mxu0
  %v7734 = vadd.f32 %v7509, %v7733
  %v7735 = vpop.f32.mrb[0].mxu0
  %v7736 = vpop.f32.mrb[0].mxu0
  %v7737 = vadd.f32 %v7512, %v7736
  %v7738 = vpop.f32.mrb[0].mxu0
  %7739 = vmatprep.mubr.bf16.mxu0 %v5982
  %7740 = vmatmul.mubr.bf16.gmra.mrb[0].mxu0 %v5981
  %v7741 = vpop.f32.mrb[0].mxu0
  %v7742 = vadd.f32 %v7517, %v7741
  %v7743 = vpop.f32.mrb[0].mxu0
  %v7744 = vpop.f32.mrb[0].mxu0
  %v7745 = vadd.f32 %v7520, %v7744
  %v7746 = vpop.f32.mrb[0].mxu0
  %7747 = vmatprep.mubr.bf16.mxu0 %v6000
  %7748 = vmatmul.mubr.bf16.gmra.mrb[0].mxu0 %v5999
  %v7749 = vpop.f32.mrb[0].mxu0
  %v7750 = vadd.f32 %v7525, %v7749
  %v7751 = vpop.f32.mrb[0].mxu0
  %v7752 = vpop.f32.mrb[0].mxu0
  %v7753 = vadd.f32 %v7528, %v7752
  %v7754 = vpop.f32.mrb[0].mxu0
  %7755 = vmatprep.mubr.bf16.mxu0 %v6018
  %7756 = vmatmul.mubr.bf16.gmra.mrb[0].mxu0 %v6017
  %v7757 = vpop.f32.mrb[0].mxu0
  %v7758 = vadd.f32 %v7533, %v7757
  %v7759 = vpop.f32.mrb[0].mxu0
  %v7760 = vpop.f32.mrb[0].mxu0
  %v7761 = vadd.f32 %v7536, %v7760
  %v7762 = vpop.f32.mrb[0].mxu0
  %7763 = vmatprep.mubr.bf16.mxu0 %v6036
  %7764 = vmatmul.mubr.bf16.gmra.mrb[0].mxu0 %v6035
  %v7765 = vpop.f32.mrb[0].mxu0
  %v7766 = vadd.f32 %v7541, %v7765
  %v7767 = vpop.f32.mrb[0].mxu0
  %v7768 = vpop.f32.mrb[0].mxu0
  %v7769 = vadd.f32 %v7544, %v7768
  %v7770 = vpop.f32.mrb[0].mxu0
  %7771 = vmatprep.mubr.bf16.mxu0 %v6054
  %7772 = vmatmul.mubr.bf16.gmra.mrb[0].mxu0 %v6053
  %v7773 = vpop.f32.mrb[0].mxu0
  %v7774 = vadd.f32 %v7549, %v7773
  %v7775 = vpop.f32.mrb[0].mxu0
  %v7776 = vpop.f32.mrb[0].mxu0
  %v7777 = vadd.f32 %v7552, %v7776
  %v7778 = vpop.f32.mrb[0].mxu0
  %7779 = vmatprep.mubr.bf16.mxu0 %v6072
  %7780 = vmatmul.mubr.bf16.gmra.mrb[0].mxu0 %v6071
  %v7781 = vpop.f32.mrb[0].mxu0
  %v7782 = vadd.f32 %v7557, %v7781
  %v7783 = vpop.f32.mrb[0].mxu0
  %v7784 = vpop.f32.mrb[0].mxu0
  %v7785 = vadd.f32 %v7560, %v7784
  %v7786 = vpop.f32.mrb[0].mxu0
  %7787 = vmatprep.mubr.bf16.mxu0 %v6090
  %7788 = vmatmul.mubr.bf16.gmra.mrb[0].mxu0 %v6089
  %v7789 = vpop.f32.mrb[0].mxu0
  %v7790 = vadd.f32 %v7565, %v7789
  %v7791 = vpop.f32.mrb[0].mxu0
  %v7792 = vpop.f32.mrb[0].mxu0
  %v7793 = vadd.f32 %v7568, %v7792
  %v7794 = vpop.f32.mrb[0].mxu0
  %7795 = vmatprep.mubr.bf16.mxu0 %v6108
  %7796 = vmatmul.mubr.bf16.gmra.mrb[0].mxu0 %v6107
  %v7797 = vpop.f32.mrb[0].mxu0
  %v7798 = vadd.f32 %v7573, %v7797
  %v7799 = vpop.f32.mrb[0].mxu0
  %v7800 = vpop.f32.mrb[0].mxu0
  %v7801 = vadd.f32 %v7576, %v7800
  %v7802 = vpop.f32.mrb[0].mxu0
  %7803 = vmatprep.mubr.bf16.mxu0 %v6126
  %7804 = vmatmul.mubr.bf16.gmra.mrb[0].mxu0 %v6125
  %v7805 = vpop.f32.mrb[0].mxu0
  %v7806 = vadd.f32 %v7581, %v7805
  %v7807 = vpop.f32.mrb[0].mxu0
  %v7808 = vpop.f32.mrb[0].mxu0
  %v7809 = vadd.f32 %v7584, %v7808
  %v7810 = vpop.f32.mrb[0].mxu0
  %7811 = vmatprep.mubr.bf16.mxu0 %v6144
  %7812 = vmatmul.mubr.bf16.gmra.mrb[0].mxu0 %v6143
  %v7813 = vpop.f32.mrb[0].mxu0
  %v7814 = vadd.f32 %v7589, %v7813
  %v7815 = vpop.f32.mrb[0].mxu0
  %v7816 = vpop.f32.mrb[0].mxu0
  %v7817 = vadd.f32 %v7592, %v7816
  %v7818 = vpop.f32.mrb[0].mxu0
  %7819 = vmatprep.mubr.bf16.mxu0 %v6162
  %7820 = vmatmul.mubr.bf16.gmra.mrb[0].mxu0 %v6161
  %v7821 = vpop.f32.mrb[0].mxu0
  %v7822 = vadd.f32 %v7597, %v7821
  %v7823 = vpop.f32.mrb[0].mxu0
  %v7824 = vpop.f32.mrb[0].mxu0
  %v7825 = vadd.f32 %v7600, %v7824
  %v7826 = vpop.f32.mrb[0].mxu0
  %7827 = vmatprep.mubr.bf16.mxu0 %v6180
  %7828 = vmatmul.mubr.bf16.gmra.mrb[0].mxu0 %v6179
  %v7829 = vpop.f32.mrb[0].mxu0
  %v7830 = vadd.f32 %v7605, %v7829
  %v7831 = vpop.f32.mrb[0].mxu0
  %v7832 = vpop.f32.mrb[0].mxu0
  %v7833 = vadd.f32 %v7608, %v7832
  %v7834 = vpop.f32.mrb[0].mxu0
  %7835 = vmatprep.mubr.bf16.mxu0 %v6198
  %7836 = vmatmul.mubr.bf16.gmra.mrb[0].mxu0 %v6197
  %v7837 = vpop.f32.mrb[0].mxu0
  %v7838 = vadd.f32 %v7613, %v7837
  %v7839 = vpop.f32.mrb[0].mxu0
  %v7840 = vpop.f32.mrb[0].mxu0
  %v7841 = vadd.f32 %v7616, %v7840
  %v7842 = vpop.f32.mrb[0].mxu0
  %7843 = vmatprep.mubr.bf16.mxu0 %v6216
  %7844 = vmatmul.mubr.bf16.gmra.mrb[0].mxu0 %v6215
  %v7845 = vpop.f32.mrb[0].mxu0
  %v7846 = vadd.f32 %v7621, %v7845
  %v7847 = vpop.f32.mrb[0].mxu0
  %v7848 = vpop.f32.mrb[0].mxu0
  %v7849 = vadd.f32 %v7624, %v7848
  %v7850 = vpop.f32.mrb[0].mxu0
  %7851 = vmatprep.mubr.bf16.mxu0 %v6234
  %7852 = vmatmul.mubr.bf16.gmra.mrb[0].mxu0 %v6233
  %v7853 = vpop.f32.mrb[0].mxu0
  %v7854 = vadd.f32 %v7629, %v7853
  %v7855 = vpop.f32.mrb[0].mxu0
  %v7856 = vpop.f32.mrb[0].mxu0
  %v7857 = vadd.f32 %v7632, %v7856
  %v7858 = vpop.f32.mrb[0].mxu0
  %7859 = vmatprep.mubr.bf16.mxu0 %v6252
  %7860 = vmatmul.mubr.bf16.gmra.mrb[0].mxu0 %v6251
  %v7861 = vpop.f32.mrb[0].mxu0
  %v7862 = vadd.f32 %v7637, %v7861
  %v7863 = vpop.f32.mrb[0].mxu0
  %v7864 = vpop.f32.mrb[0].mxu0
  %v7865 = vadd.f32 %v7640, %v7864
  %v7866 = vpop.f32.mrb[0].mxu0
  %7867 = vmatprep.mubr.bf16.mxu0 %v6270
  %7868 = vmatmul.mubr.bf16.gmra.mrb[0].mxu0 %v6269
  %v7869 = vpop.f32.mrb[0].mxu0
  %v7870 = vadd.f32 %v7645, %v7869
  %v7871 = vpop.f32.mrb[0].mxu0
  %v7872 = vpop.f32.mrb[0].mxu0
  %v7873 = vadd.f32 %v7648, %v7872
  %v7874 = vpop.f32.mrb[0].mxu0
  %7875 = vmatprep.mubr.bf16.mxu0 %v6288
  %7876 = vmatmul.mubr.bf16.gmra.mrb[0].mxu0 %v6287
  %v7877 = vpop.f32.mrb[0].mxu0
  %v7878 = vadd.f32 %v7653, %v7877
  %v7879 = vpop.f32.mrb[0].mxu0
  %v7880 = vpop.f32.mrb[0].mxu0
  %v7881 = vadd.f32 %v7656, %v7880
  %v7882 = vpop.f32.mrb[0].mxu0
  %7883 = vmatprep.mubr.bf16.mxu0 %v6306
  %7884 = vmatmul.mubr.bf16.gmra.mrb[0].mxu0 %v6305
  %v7885 = vpop.f32.mrb[0].mxu0
  %v7886 = vadd.f32 %v7661, %v7885
  %v7887 = vpop.f32.mrb[0].mxu0
  %v7888 = vpop.f32.mrb[0].mxu0
  %v7889 = vadd.f32 %v7664, %v7888
  %v7890 = vpop.f32.mrb[0].mxu0
  %7891 = vmatprep.mubr.bf16.mxu0 %v6324
  %7892 = vmatmul.mubr.bf16.gmra.mrb[0].mxu0 %v6323
  %v7893 = vpop.f32.mrb[0].mxu0
  %v7894 = vadd.f32 %v7669, %v7893
  %v7895 = vpop.f32.mrb[0].mxu0
  %v7896 = vpop.f32.mrb[0].mxu0
  %v7897 = vadd.f32 %v7672, %v7896
  %v7898 = vpop.f32.mrb[0].mxu0
  %7899 = vmatprep.mubr.bf16.mxu0 %v6342
  %7900 = vmatmul.mubr.bf16.gmra.mrb[0].mxu0 %v6341
  %v7901 = vpop.f32.mrb[0].mxu0
  %v7902 = vadd.f32 %v7677, %v7901
  %v7903 = vpop.f32.mrb[0].mxu0
  %v7904 = vpop.f32.mrb[0].mxu0
  %v7905 = vadd.f32 %v7680, %v7904
  %v7906 = vpop.f32.mrb[0].mxu0
  %7907 = vdwg.mxu0
  %7908 = vmatprep.subr.bf16.mxu0 0
  %7909 = vmatpush1.bf16.msra.mxu0 %v4559
  %7910 = vmatprep.subr.bf16.mxu0 0
  %7911 = vmatpush1.bf16.msra.mxu0 %v4560
  %7912 = vmatprep.subr.bf16.mxu0 0
  %7913 = vmatpush1.bf16.msra.mxu0 %v4561
  %7914 = vmatprep.subr.bf16.mxu0 0
  %7915 = vmatpush1.bf16.msra.mxu0 %v4562
  %7916 = vmatprep.subr.bf16.mxu0 0
  %7917 = vmatpush1.bf16.msra.mxu0 %v4563
  %7918 = vmatprep.subr.bf16.mxu0 0
  %7919 = vmatpush1.bf16.msra.mxu0 %v4564
  %7920 = vmatprep.subr.bf16.mxu0 0
  %7921 = vmatpush1.bf16.msra.mxu0 %v4565
  %7922 = vmatprep.subr.bf16.mxu0 0
  %7923 = vmatpush1.bf16.msra.mxu0 %v4566
  %7924 = vmatprep.subr.bf16.mxu0 0
  %7925 = vmatpush1.bf16.msra.mxu0 %v4567
  %7926 = vmatprep.subr.bf16.mxu0 0
  %7927 = vmatpush1.bf16.msra.mxu0 %v4568
  %7928 = vmatprep.subr.bf16.mxu0 0
  %7929 = vmatpush1.bf16.msra.mxu0 %v4569
  %7930 = vmatprep.subr.bf16.mxu0 0
  %7931 = vmatpush1.bf16.msra.mxu0 %v4570
  %7932 = vmatprep.subr.bf16.mxu0 0
  %7933 = vmatpush1.bf16.msra.mxu0 %v4571
  %7934 = vmatprep.subr.bf16.mxu0 0
  %7935 = vmatpush1.bf16.msra.mxu0 %v4572
  %7936 = vmatprep.subr.bf16.mxu0 0
  %7937 = vmatpush1.bf16.msra.mxu0 %v4573
  %7938 = vmatprep.subr.bf16.mxu0 0
  %7939 = vmatpush1.bf16.msra.mxu0 %v4574
  %7940 = vmatprep.mubr.bf16.mxu0 %v5930
  %7941 = vmatmul.mubr.bf16.gmra.mrb[0].mxu0 %v5929
  %v7942 = vpop.f32.mrb[0].mxu0
  %v7943 = vadd.f32 %v7718, %v7942
  %v7944 = vpop.f32.mrb[0].mxu0
  %v7945 = vpop.f32.mrb[0].mxu0
  %v7946 = vadd.f32 %v7721, %v7945
  %v7947 = vpop.f32.mrb[0].mxu0
  %7948 = vmatprep.mubr.bf16.mxu0 %v5948
  %7949 = vmatmul.mubr.bf16.gmra.mrb[0].mxu0 %v5947
  %v7950 = vpop.f32.mrb[0].mxu0
  %v7951 = vadd.f32 %v7726, %v7950
  %v7952 = vpop.f32.mrb[0].mxu0
  %v7953 = vpop.f32.mrb[0].mxu0
  %v7954 = vadd.f32 %v7729, %v7953
  %v7955 = vpop.f32.mrb[0].mxu0
  %7956 = vmatprep.mubr.bf16.mxu0 %v5966
  %7957 = vmatmul.mubr.bf16.gmra.mrb[0].mxu0 %v5965
  %v7958 = vpop.f32.mrb[0].mxu0
  %v7959 = vadd.f32 %v7734, %v7958
  %v7960 = vpop.f32.mrb[0].mxu0
  %v7961 = vpop.f32.mrb[0].mxu0
  %v7962 = vadd.f32 %v7737, %v7961
  %v7963 = vpop.f32.mrb[0].mxu0
  %7964 = vmatprep.mubr.bf16.mxu0 %v5984
  %7965 = vmatmul.mubr.bf16.gmra.mrb[0].mxu0 %v5983
  %v7966 = vpop.f32.mrb[0].mxu0
  %v7967 = vadd.f32 %v7742, %v7966
  %v7968 = vpop.f32.mrb[0].mxu0
  %v7969 = vpop.f32.mrb[0].mxu0
  %v7970 = vadd.f32 %v7745, %v7969
  %v7971 = vpop.f32.mrb[0].mxu0
  %7972 = vmatprep.mubr.bf16.mxu0 %v6002
  %7973 = vmatmul.mubr.bf16.gmra.mrb[0].mxu0 %v6001
  %v7974 = vpop.f32.mrb[0].mxu0
  %v7975 = vadd.f32 %v7750, %v7974
  %v7976 = vpop.f32.mrb[0].mxu0
  %v7977 = vpop.f32.mrb[0].mxu0
  %v7978 = vadd.f32 %v7753, %v7977
  %v7979 = vpop.f32.mrb[0].mxu0
  %7980 = vmatprep.mubr.bf16.mxu0 %v6020
  %7981 = vmatmul.mubr.bf16.gmra.mrb[0].mxu0 %v6019
  %v7982 = vpop.f32.mrb[0].mxu0
  %v7983 = vadd.f32 %v7758, %v7982
  %v7984 = vpop.f32.mrb[0].mxu0
  %v7985 = vpop.f32.mrb[0].mxu0
  %v7986 = vadd.f32 %v7761, %v7985
  %v7987 = vpop.f32.mrb[0].mxu0
  %7988 = vmatprep.mubr.bf16.mxu0 %v6038
  %7989 = vmatmul.mubr.bf16.gmra.mrb[0].mxu0 %v6037
  %v7990 = vpop.f32.mrb[0].mxu0
  %v7991 = vadd.f32 %v7766, %v7990
  %v7992 = vpop.f32.mrb[0].mxu0
  %v7993 = vpop.f32.mrb[0].mxu0
  %v7994 = vadd.f32 %v7769, %v7993
  %v7995 = vpop.f32.mrb[0].mxu0
  %7996 = vmatprep.mubr.bf16.mxu0 %v6056
  %7997 = vmatmul.mubr.bf16.gmra.mrb[0].mxu0 %v6055
  %v7998 = vpop.f32.mrb[0].mxu0
  %v7999 = vadd.f32 %v7774, %v7998
  %v8000 = vpop.f32.mrb[0].mxu0
  %v8001 = vpop.f32.mrb[0].mxu0
  %v8002 = vadd.f32 %v7777, %v8001
  %v8003 = vpop.f32.mrb[0].mxu0
  %8004 = vmatprep.mubr.bf16.mxu0 %v6074
  %8005 = vmatmul.mubr.bf16.gmra.mrb[0].mxu0 %v6073
  %v8006 = vpop.f32.mrb[0].mxu0
  %v8007 = vadd.f32 %v7782, %v8006
  %v8008 = vpop.f32.mrb[0].mxu0
  %v8009 = vpop.f32.mrb[0].mxu0
  %v8010 = vadd.f32 %v7785, %v8009
  %v8011 = vpop.f32.mrb[0].mxu0
  %8012 = vmatprep.mubr.bf16.mxu0 %v6092
  %8013 = vmatmul.mubr.bf16.gmra.mrb[0].mxu0 %v6091
  %v8014 = vpop.f32.mrb[0].mxu0
  %v8015 = vadd.f32 %v7790, %v8014
  %v8016 = vpop.f32.mrb[0].mxu0
  %v8017 = vpop.f32.mrb[0].mxu0
  %v8018 = vadd.f32 %v7793, %v8017
  %v8019 = vpop.f32.mrb[0].mxu0
  %8020 = vmatprep.mubr.bf16.mxu0 %v6110
  %8021 = vmatmul.mubr.bf16.gmra.mrb[0].mxu0 %v6109
  %v8022 = vpop.f32.mrb[0].mxu0
  %v8023 = vadd.f32 %v7798, %v8022
  %v8024 = vpop.f32.mrb[0].mxu0
  %v8025 = vpop.f32.mrb[0].mxu0
  %v8026 = vadd.f32 %v7801, %v8025
  %v8027 = vpop.f32.mrb[0].mxu0
  %8028 = vmatprep.mubr.bf16.mxu0 %v6128
  %8029 = vmatmul.mubr.bf16.gmra.mrb[0].mxu0 %v6127
  %v8030 = vpop.f32.mrb[0].mxu0
  %v8031 = vadd.f32 %v7806, %v8030
  %v8032 = vpop.f32.mrb[0].mxu0
  %v8033 = vpop.f32.mrb[0].mxu0
  %v8034 = vadd.f32 %v7809, %v8033
  %v8035 = vpop.f32.mrb[0].mxu0
  %8036 = vmatprep.mubr.bf16.mxu0 %v6146
  %8037 = vmatmul.mubr.bf16.gmra.mrb[0].mxu0 %v6145
  %v8038 = vpop.f32.mrb[0].mxu0
  %v8039 = vadd.f32 %v7814, %v8038
  %v8040 = vpop.f32.mrb[0].mxu0
  %v8041 = vpop.f32.mrb[0].mxu0
  %v8042 = vadd.f32 %v7817, %v8041
  %v8043 = vpop.f32.mrb[0].mxu0
  %8044 = vmatprep.mubr.bf16.mxu0 %v6164
  %8045 = vmatmul.mubr.bf16.gmra.mrb[0].mxu0 %v6163
  %v8046 = vpop.f32.mrb[0].mxu0
  %v8047 = vadd.f32 %v7822, %v8046
  %v8048 = vpop.f32.mrb[0].mxu0
  %v8049 = vpop.f32.mrb[0].mxu0
  %v8050 = vadd.f32 %v7825, %v8049
  %v8051 = vpop.f32.mrb[0].mxu0
  %8052 = vmatprep.mubr.bf16.mxu0 %v6182
  %8053 = vmatmul.mubr.bf16.gmra.mrb[0].mxu0 %v6181
  %v8054 = vpop.f32.mrb[0].mxu0
  %v8055 = vadd.f32 %v7830, %v8054
  %v8056 = vpop.f32.mrb[0].mxu0
  %v8057 = vpop.f32.mrb[0].mxu0
  %v8058 = vadd.f32 %v7833, %v8057
  %v8059 = vpop.f32.mrb[0].mxu0
  %8060 = vmatprep.mubr.bf16.mxu0 %v6200
  %8061 = vmatmul.mubr.bf16.gmra.mrb[0].mxu0 %v6199
  %v8062 = vpop.f32.mrb[0].mxu0
  %v8063 = vadd.f32 %v7838, %v8062
  %v8064 = vpop.f32.mrb[0].mxu0
  %v8065 = vpop.f32.mrb[0].mxu0
  %v8066 = vadd.f32 %v7841, %v8065
  %v8067 = vpop.f32.mrb[0].mxu0
  %8068 = vmatprep.mubr.bf16.mxu0 %v6218
  %8069 = vmatmul.mubr.bf16.gmra.mrb[0].mxu0 %v6217
  %v8070 = vpop.f32.mrb[0].mxu0
  %v8071 = vadd.f32 %v7846, %v8070
  %v8072 = vpop.f32.mrb[0].mxu0
  %v8073 = vpop.f32.mrb[0].mxu0
  %v8074 = vadd.f32 %v7849, %v8073
  %v8075 = vpop.f32.mrb[0].mxu0
  %8076 = vmatprep.mubr.bf16.mxu0 %v6236
  %8077 = vmatmul.mubr.bf16.gmra.mrb[0].mxu0 %v6235
  %v8078 = vpop.f32.mrb[0].mxu0
  %v8079 = vadd.f32 %v7854, %v8078
  %v8080 = vpop.f32.mrb[0].mxu0
  %v8081 = vpop.f32.mrb[0].mxu0
  %v8082 = vadd.f32 %v7857, %v8081
  %v8083 = vpop.f32.mrb[0].mxu0
  %8084 = vmatprep.mubr.bf16.mxu0 %v6254
  %8085 = vmatmul.mubr.bf16.gmra.mrb[0].mxu0 %v6253
  %v8086 = vpop.f32.mrb[0].mxu0
  %v8087 = vadd.f32 %v7862, %v8086
  %v8088 = vpop.f32.mrb[0].mxu0
  %v8089 = vpop.f32.mrb[0].mxu0
  %v8090 = vadd.f32 %v7865, %v8089
  %v8091 = vpop.f32.mrb[0].mxu0
  %8092 = vmatprep.mubr.bf16.mxu0 %v6272
  %8093 = vmatmul.mubr.bf16.gmra.mrb[0].mxu0 %v6271
  %v8094 = vpop.f32.mrb[0].mxu0
  %v8095 = vadd.f32 %v7870, %v8094
  %v8096 = vpop.f32.mrb[0].mxu0
  %v8097 = vpop.f32.mrb[0].mxu0
  %v8098 = vadd.f32 %v7873, %v8097
  %v8099 = vpop.f32.mrb[0].mxu0
  %8100 = vmatprep.mubr.bf16.mxu0 %v6290
  %8101 = vmatmul.mubr.bf16.gmra.mrb[0].mxu0 %v6289
  %v8102 = vpop.f32.mrb[0].mxu0
  %v8103 = vadd.f32 %v7878, %v8102
  %v8104 = vpop.f32.mrb[0].mxu0
  %v8105 = vpop.f32.mrb[0].mxu0
  %v8106 = vadd.f32 %v7881, %v8105
  %v8107 = vpop.f32.mrb[0].mxu0
  %8108 = vmatprep.mubr.bf16.mxu0 %v6308
  %8109 = vmatmul.mubr.bf16.gmra.mrb[0].mxu0 %v6307
  %v8110 = vpop.f32.mrb[0].mxu0
  %v8111 = vadd.f32 %v7886, %v8110
  %v8112 = vpop.f32.mrb[0].mxu0
  %v8113 = vpop.f32.mrb[0].mxu0
  %v8114 = vadd.f32 %v7889, %v8113
  %v8115 = vpop.f32.mrb[0].mxu0
  %8116 = vmatprep.mubr.bf16.mxu0 %v6326
  %8117 = vmatmul.mubr.bf16.gmra.mrb[0].mxu0 %v6325
  %v8118 = vpop.f32.mrb[0].mxu0
  %v8119 = vadd.f32 %v7894, %v8118
  %v8120 = vpop.f32.mrb[0].mxu0
  %v8121 = vpop.f32.mrb[0].mxu0
  %v8122 = vadd.f32 %v7897, %v8121
  %v8123 = vpop.f32.mrb[0].mxu0
  %8124 = vmatprep.mubr.bf16.mxu0 %v6344
  %8125 = vmatmul.mubr.bf16.gmra.mrb[0].mxu0 %v6343
  %v8126 = vpop.f32.mrb[0].mxu0
  %v8127 = vadd.f32 %v7902, %v8126
  %v8128 = vpop.f32.mrb[0].mxu0
  %v8129 = vpop.f32.mrb[0].mxu0
  %v8130 = vadd.f32 %v7905, %v8129
  %v8131 = vpop.f32.mrb[0].mxu0
  %8132 = vdwg.mxu0
  %8133 = vmatprep.subr.bf16.mxu0 0
  %8134 = vmatpush1.bf16.msra.mxu0 %v4575
  %8135 = vmatprep.subr.bf16.mxu0 0
  %8136 = vmatpush1.bf16.msra.mxu0 %v4576
  %8137 = vmatprep.subr.bf16.mxu0 0
  %8138 = vmatpush1.bf16.msra.mxu0 %v4577
  %8139 = vmatprep.subr.bf16.mxu0 0
  %8140 = vmatpush1.bf16.msra.mxu0 %v4578
  %8141 = vmatprep.subr.bf16.mxu0 0
  %8142 = vmatpush1.bf16.msra.mxu0 %v4579
  %8143 = vmatprep.subr.bf16.mxu0 0
  %8144 = vmatpush1.bf16.msra.mxu0 %v4580
  %8145 = vmatprep.subr.bf16.mxu0 0
  %8146 = vmatpush1.bf16.msra.mxu0 %v4581
  %8147 = vmatprep.subr.bf16.mxu0 0
  %8148 = vmatpush1.bf16.msra.mxu0 %v4582
  %8149 = vmatprep.subr.bf16.mxu0 0
  %8150 = vmatpush1.bf16.msra.mxu0 %v4583
  %8151 = vmatprep.subr.bf16.mxu0 0
  %8152 = vmatpush1.bf16.msra.mxu0 %v4584
  %8153 = vmatprep.subr.bf16.mxu0 0
  %8154 = vmatpush1.bf16.msra.mxu0 %v4585
  %8155 = vmatprep.subr.bf16.mxu0 0
  %8156 = vmatpush1.bf16.msra.mxu0 %v4586
  %8157 = vmatprep.subr.bf16.mxu0 0
  %8158 = vmatpush1.bf16.msra.mxu0 %v4587
  %8159 = vmatprep.subr.bf16.mxu0 0
  %8160 = vmatpush1.bf16.msra.mxu0 %v4588
  %8161 = vmatprep.subr.bf16.mxu0 0
  %8162 = vmatpush1.bf16.msra.mxu0 %v4589
  %8163 = vmatprep.subr.bf16.mxu0 0
  %8164 = vmatpush1.bf16.msra.mxu0 %v4590
  %8165 = vmatprep.mubr.bf16.mxu0 %v5932
  %8166 = vmatmul.mubr.bf16.gmra.mrb[0].mxu0 %v5931
  %v8167 = vpop.f32.mrb[0].mxu0
  %v8168 = vadd.f32 %v7943, %v8167
  %v8169 = vpop.f32.mrb[0].mxu0
  %v8170 = vpop.f32.mrb[0].mxu0
  %v8171 = vadd.f32 %v7946, %v8170
  %v8172 = vpop.f32.mrb[0].mxu0
  %8173 = vmatprep.mubr.bf16.mxu0 %v5950
  %8174 = vmatmul.mubr.bf16.gmra.mrb[0].mxu0 %v5949
  %v8175 = vpop.f32.mrb[0].mxu0
  %v8176 = vadd.f32 %v7951, %v8175
  %v8177 = vpop.f32.mrb[0].mxu0
  %v8178 = vpop.f32.mrb[0].mxu0
  %v8179 = vadd.f32 %v7954, %v8178
  %v8180 = vpop.f32.mrb[0].mxu0
  %8181 = vmatprep.mubr.bf16.mxu0 %v5968
  %8182 = vmatmul.mubr.bf16.gmra.mrb[0].mxu0 %v5967
  %v8183 = vpop.f32.mrb[0].mxu0
  %v8184 = vadd.f32 %v7959, %v8183
  %v8185 = vpop.f32.mrb[0].mxu0
  %v8186 = vpop.f32.mrb[0].mxu0
  %v8187 = vadd.f32 %v7962, %v8186
  %v8188 = vpop.f32.mrb[0].mxu0
  %8189 = vmatprep.mubr.bf16.mxu0 %v5986
  %8190 = vmatmul.mubr.bf16.gmra.mrb[0].mxu0 %v5985
  %v8191 = vpop.f32.mrb[0].mxu0
  %v8192 = vadd.f32 %v7967, %v8191
  %v8193 = vpop.f32.mrb[0].mxu0
  %v8194 = vpop.f32.mrb[0].mxu0
  %v8195 = vadd.f32 %v7970, %v8194
  %v8196 = vpop.f32.mrb[0].mxu0
  %8197 = vmatprep.mubr.bf16.mxu0 %v6004
  %8198 = vmatmul.mubr.bf16.gmra.mrb[0].mxu0 %v6003
  %v8199 = vpop.f32.mrb[0].mxu0
  %v8200 = vadd.f32 %v7975, %v8199
  %v8201 = vpop.f32.mrb[0].mxu0
  %v8202 = vpop.f32.mrb[0].mxu0
  %v8203 = vadd.f32 %v7978, %v8202
  %v8204 = vpop.f32.mrb[0].mxu0
  %8205 = vmatprep.mubr.bf16.mxu0 %v6022
  %8206 = vmatmul.mubr.bf16.gmra.mrb[0].mxu0 %v6021
  %v8207 = vpop.f32.mrb[0].mxu0
  %v8208 = vadd.f32 %v7983, %v8207
  %v8209 = vpop.f32.mrb[0].mxu0
  %v8210 = vpop.f32.mrb[0].mxu0
  %v8211 = vadd.f32 %v7986, %v8210
  %v8212 = vpop.f32.mrb[0].mxu0
  %8213 = vmatprep.mubr.bf16.mxu0 %v6040
  %8214 = vmatmul.mubr.bf16.gmra.mrb[0].mxu0 %v6039
  %v8215 = vpop.f32.mrb[0].mxu0
  %v8216 = vadd.f32 %v7991, %v8215
  %v8217 = vpop.f32.mrb[0].mxu0
  %v8218 = vpop.f32.mrb[0].mxu0
  %v8219 = vadd.f32 %v7994, %v8218
  %v8220 = vpop.f32.mrb[0].mxu0
  %8221 = vmatprep.mubr.bf16.mxu0 %v6058
  %8222 = vmatmul.mubr.bf16.gmra.mrb[0].mxu0 %v6057
  %v8223 = vpop.f32.mrb[0].mxu0
  %v8224 = vadd.f32 %v7999, %v8223
  %v8225 = vpop.f32.mrb[0].mxu0
  %v8226 = vpop.f32.mrb[0].mxu0
  %v8227 = vadd.f32 %v8002, %v8226
  %v8228 = vpop.f32.mrb[0].mxu0
  %8229 = vmatprep.mubr.bf16.mxu0 %v6076
  %8230 = vmatmul.mubr.bf16.gmra.mrb[0].mxu0 %v6075
  %v8231 = vpop.f32.mrb[0].mxu0
  %v8232 = vadd.f32 %v8007, %v8231
  %v8233 = vpop.f32.mrb[0].mxu0
  %v8234 = vpop.f32.mrb[0].mxu0
  %v8235 = vadd.f32 %v8010, %v8234
  %v8236 = vpop.f32.mrb[0].mxu0
  %8237 = vmatprep.mubr.bf16.mxu0 %v6094
  %8238 = vmatmul.mubr.bf16.gmra.mrb[0].mxu0 %v6093
  %v8239 = vpop.f32.mrb[0].mxu0
  %v8240 = vadd.f32 %v8015, %v8239
  %v8241 = vpop.f32.mrb[0].mxu0
  %v8242 = vpop.f32.mrb[0].mxu0
  %v8243 = vadd.f32 %v8018, %v8242
  %v8244 = vpop.f32.mrb[0].mxu0
  %8245 = vmatprep.mubr.bf16.mxu0 %v6112
  %8246 = vmatmul.mubr.bf16.gmra.mrb[0].mxu0 %v6111
  %v8247 = vpop.f32.mrb[0].mxu0
  %v8248 = vadd.f32 %v8023, %v8247
  %v8249 = vpop.f32.mrb[0].mxu0
  %v8250 = vpop.f32.mrb[0].mxu0
  %v8251 = vadd.f32 %v8026, %v8250
  %v8252 = vpop.f32.mrb[0].mxu0
  %8253 = vmatprep.mubr.bf16.mxu0 %v6130
  %8254 = vmatmul.mubr.bf16.gmra.mrb[0].mxu0 %v6129
  %v8255 = vpop.f32.mrb[0].mxu0
  %v8256 = vadd.f32 %v8031, %v8255
  %v8257 = vpop.f32.mrb[0].mxu0
  %v8258 = vpop.f32.mrb[0].mxu0
  %v8259 = vadd.f32 %v8034, %v8258
  %v8260 = vpop.f32.mrb[0].mxu0
  %8261 = vmatprep.mubr.bf16.mxu0 %v6148
  %8262 = vmatmul.mubr.bf16.gmra.mrb[0].mxu0 %v6147
  %v8263 = vpop.f32.mrb[0].mxu0
  %v8264 = vadd.f32 %v8039, %v8263
  %v8265 = vpop.f32.mrb[0].mxu0
  %v8266 = vpop.f32.mrb[0].mxu0
  %v8267 = vadd.f32 %v8042, %v8266
  %v8268 = vpop.f32.mrb[0].mxu0
  %8269 = vmatprep.mubr.bf16.mxu0 %v6166
  %8270 = vmatmul.mubr.bf16.gmra.mrb[0].mxu0 %v6165
  %v8271 = vpop.f32.mrb[0].mxu0
  %v8272 = vadd.f32 %v8047, %v8271
  %v8273 = vpop.f32.mrb[0].mxu0
  %v8274 = vpop.f32.mrb[0].mxu0
  %v8275 = vadd.f32 %v8050, %v8274
  %v8276 = vpop.f32.mrb[0].mxu0
  %8277 = vmatprep.mubr.bf16.mxu0 %v6184
  %8278 = vmatmul.mubr.bf16.gmra.mrb[0].mxu0 %v6183
  %v8279 = vpop.f32.mrb[0].mxu0
  %v8280 = vadd.f32 %v8055, %v8279
  %v8281 = vpop.f32.mrb[0].mxu0
  %v8282 = vpop.f32.mrb[0].mxu0
  %v8283 = vadd.f32 %v8058, %v8282
  %v8284 = vpop.f32.mrb[0].mxu0
  %8285 = vmatprep.mubr.bf16.mxu0 %v6202
  %8286 = vmatmul.mubr.bf16.gmra.mrb[0].mxu0 %v6201
  %v8287 = vpop.f32.mrb[0].mxu0
  %v8288 = vadd.f32 %v8063, %v8287
  %v8289 = vpop.f32.mrb[0].mxu0
  %v8290 = vpop.f32.mrb[0].mxu0
  %v8291 = vadd.f32 %v8066, %v8290
  %v8292 = vpop.f32.mrb[0].mxu0
  %8293 = vmatprep.mubr.bf16.mxu0 %v6220
  %8294 = vmatmul.mubr.bf16.gmra.mrb[0].mxu0 %v6219
  %v8295 = vpop.f32.mrb[0].mxu0
  %v8296 = vadd.f32 %v8071, %v8295
  %v8297 = vpop.f32.mrb[0].mxu0
  %v8298 = vpop.f32.mrb[0].mxu0
  %v8299 = vadd.f32 %v8074, %v8298
  %v8300 = vpop.f32.mrb[0].mxu0
  %8301 = vmatprep.mubr.bf16.mxu0 %v6238
  %8302 = vmatmul.mubr.bf16.gmra.mrb[0].mxu0 %v6237
  %v8303 = vpop.f32.mrb[0].mxu0
  %v8304 = vadd.f32 %v8079, %v8303
  %v8305 = vpop.f32.mrb[0].mxu0
  %v8306 = vpop.f32.mrb[0].mxu0
  %v8307 = vadd.f32 %v8082, %v8306
  %v8308 = vpop.f32.mrb[0].mxu0
  %8309 = vmatprep.mubr.bf16.mxu0 %v6256
  %8310 = vmatmul.mubr.bf16.gmra.mrb[0].mxu0 %v6255
  %v8311 = vpop.f32.mrb[0].mxu0
  %v8312 = vadd.f32 %v8087, %v8311
  %v8313 = vpop.f32.mrb[0].mxu0
  %v8314 = vpop.f32.mrb[0].mxu0
  %v8315 = vadd.f32 %v8090, %v8314
  %v8316 = vpop.f32.mrb[0].mxu0
  %8317 = vmatprep.mubr.bf16.mxu0 %v6274
  %8318 = vmatmul.mubr.bf16.gmra.mrb[0].mxu0 %v6273
  %v8319 = vpop.f32.mrb[0].mxu0
  %v8320 = vadd.f32 %v8095, %v8319
  %v8321 = vpop.f32.mrb[0].mxu0
  %v8322 = vpop.f32.mrb[0].mxu0
  %v8323 = vadd.f32 %v8098, %v8322
  %v8324 = vpop.f32.mrb[0].mxu0
  %8325 = vmatprep.mubr.bf16.mxu0 %v6292
  %8326 = vmatmul.mubr.bf16.gmra.mrb[0].mxu0 %v6291
  %v8327 = vpop.f32.mrb[0].mxu0
  %v8328 = vadd.f32 %v8103, %v8327
  %v8329 = vpop.f32.mrb[0].mxu0
  %v8330 = vpop.f32.mrb[0].mxu0
  %v8331 = vadd.f32 %v8106, %v8330
  %v8332 = vpop.f32.mrb[0].mxu0
  %8333 = vmatprep.mubr.bf16.mxu0 %v6310
  %8334 = vmatmul.mubr.bf16.gmra.mrb[0].mxu0 %v6309
  %v8335 = vpop.f32.mrb[0].mxu0
  %v8336 = vadd.f32 %v8111, %v8335
  %v8337 = vpop.f32.mrb[0].mxu0
  %v8338 = vpop.f32.mrb[0].mxu0
  %v8339 = vadd.f32 %v8114, %v8338
  %v8340 = vpop.f32.mrb[0].mxu0
  %8341 = vmatprep.mubr.bf16.mxu0 %v6328
  %8342 = vmatmul.mubr.bf16.gmra.mrb[0].mxu0 %v6327
  %v8343 = vpop.f32.mrb[0].mxu0
  %v8344 = vadd.f32 %v8119, %v8343
  %v8345 = vpop.f32.mrb[0].mxu0
  %v8346 = vpop.f32.mrb[0].mxu0
  %v8347 = vadd.f32 %v8122, %v8346
  %v8348 = vpop.f32.mrb[0].mxu0
  %8349 = vmatprep.mubr.bf16.mxu0 %v6346
  %8350 = vmatmul.mubr.bf16.gmra.mrb[0].mxu0 %v6345
  %v8351 = vpop.f32.mrb[0].mxu0
  %v8352 = vadd.f32 %v8127, %v8351
  %v8353 = vpop.f32.mrb[0].mxu0
  %v8354 = vpop.f32.mrb[0].mxu0
  %v8355 = vadd.f32 %v8130, %v8354
  %v8356 = vpop.f32.mrb[0].mxu0
  %8357 = vdwg.mxu0
  %8358 = vmatprep.subr.bf16.mxu0 0
  %8359 = vmatpush1.bf16.msra.mxu0 %v4591
  %8360 = vmatprep.subr.bf16.mxu0 0
  %8361 = vmatpush1.bf16.msra.mxu0 %v4592
  %8362 = vmatprep.subr.bf16.mxu0 0
  %8363 = vmatpush1.bf16.msra.mxu0 %v4593
  %8364 = vmatprep.subr.bf16.mxu0 0
  %8365 = vmatpush1.bf16.msra.mxu0 %v4594
  %8366 = vmatprep.subr.bf16.mxu0 0
  %8367 = vmatpush1.bf16.msra.mxu0 %v4595
  %8368 = vmatprep.subr.bf16.mxu0 0
  %8369 = vmatpush1.bf16.msra.mxu0 %v4596
  %8370 = vmatprep.subr.bf16.mxu0 0
  %8371 = vmatpush1.bf16.msra.mxu0 %v4597
  %8372 = vmatprep.subr.bf16.mxu0 0
  %8373 = vmatpush1.bf16.msra.mxu0 %v4598
  %8374 = vmatprep.subr.bf16.mxu0 0
  %8375 = vmatpush1.bf16.msra.mxu0 %v4599
  %8376 = vmatprep.subr.bf16.mxu0 0
  %8377 = vmatpush1.bf16.msra.mxu0 %v4600
  %8378 = vmatprep.subr.bf16.mxu0 0
  %8379 = vmatpush1.bf16.msra.mxu0 %v4601
  %8380 = vmatprep.subr.bf16.mxu0 0
  %8381 = vmatpush1.bf16.msra.mxu0 %v4602
  %8382 = vmatprep.subr.bf16.mxu0 0
  %8383 = vmatpush1.bf16.msra.mxu0 %v4603
  %8384 = vmatprep.subr.bf16.mxu0 0
  %8385 = vmatpush1.bf16.msra.mxu0 %v4604
  %8386 = vmatprep.subr.bf16.mxu0 0
  %8387 = vmatpush1.bf16.msra.mxu0 %v4605
  %8388 = vmatprep.subr.bf16.mxu0 0
  %8389 = vmatpush1.bf16.msra.mxu0 %v4606
  %8390 = vmatprep.mubr.bf16.mxu0 %v5934
  %8391 = vmatmul.mubr.bf16.gmra.mrb[0].mxu0 %v5933
  %v8392 = vpop.f32.mrb[0].mxu0
  %v8393 = vadd.f32 %v8168, %v8392
  %v8394 = vpop.f32.mrb[0].mxu0
  %v8395 = vpop.f32.mrb[0].mxu0
  %v8396 = vadd.f32 %v8171, %v8395
  %v8397 = vpop.f32.mrb[0].mxu0
  %8398 = vmatprep.mubr.bf16.mxu0 %v5952
  %8399 = vmatmul.mubr.bf16.gmra.mrb[0].mxu0 %v5951
  %v8400 = vpop.f32.mrb[0].mxu0
  %v8401 = vadd.f32 %v8176, %v8400
  %v8402 = vpop.f32.mrb[0].mxu0
  %v8403 = vpop.f32.mrb[0].mxu0
  %v8404 = vadd.f32 %v8179, %v8403
  %v8405 = vpop.f32.mrb[0].mxu0
  %8406 = vmatprep.mubr.bf16.mxu0 %v5970
  %8407 = vmatmul.mubr.bf16.gmra.mrb[0].mxu0 %v5969
  %v8408 = vpop.f32.mrb[0].mxu0
  %v8409 = vadd.f32 %v8184, %v8408
  %v8410 = vpop.f32.mrb[0].mxu0
  %v8411 = vpop.f32.mrb[0].mxu0
  %v8412 = vadd.f32 %v8187, %v8411
  %v8413 = vpop.f32.mrb[0].mxu0
  %8414 = vmatprep.mubr.bf16.mxu0 %v5988
  %8415 = vmatmul.mubr.bf16.gmra.mrb[0].mxu0 %v5987
  %v8416 = vpop.f32.mrb[0].mxu0
  %v8417 = vadd.f32 %v8192, %v8416
  %v8418 = vpop.f32.mrb[0].mxu0
  %v8419 = vpop.f32.mrb[0].mxu0
  %v8420 = vadd.f32 %v8195, %v8419
  %v8421 = vpop.f32.mrb[0].mxu0
  %8422 = vmatprep.mubr.bf16.mxu0 %v6006
  %8423 = vmatmul.mubr.bf16.gmra.mrb[0].mxu0 %v6005
  %v8424 = vpop.f32.mrb[0].mxu0
  %v8425 = vadd.f32 %v8200, %v8424
  %v8426 = vpop.f32.mrb[0].mxu0
  %v8427 = vpop.f32.mrb[0].mxu0
  %v8428 = vadd.f32 %v8203, %v8427
  %v8429 = vpop.f32.mrb[0].mxu0
  %8430 = vmatprep.mubr.bf16.mxu0 %v6024
  %8431 = vmatmul.mubr.bf16.gmra.mrb[0].mxu0 %v6023
  %v8432 = vpop.f32.mrb[0].mxu0
  %v8433 = vadd.f32 %v8208, %v8432
  %v8434 = vpop.f32.mrb[0].mxu0
  %v8435 = vpop.f32.mrb[0].mxu0
  %v8436 = vadd.f32 %v8211, %v8435
  %v8437 = vpop.f32.mrb[0].mxu0
  %8438 = vmatprep.mubr.bf16.mxu0 %v6042
  %8439 = vmatmul.mubr.bf16.gmra.mrb[0].mxu0 %v6041
  %v8440 = vpop.f32.mrb[0].mxu0
  %v8441 = vadd.f32 %v8216, %v8440
  %v8442 = vpop.f32.mrb[0].mxu0
  %v8443 = vpop.f32.mrb[0].mxu0
  %v8444 = vadd.f32 %v8219, %v8443
  %v8445 = vpop.f32.mrb[0].mxu0
  %8446 = vmatprep.mubr.bf16.mxu0 %v6060
  %8447 = vmatmul.mubr.bf16.gmra.mrb[0].mxu0 %v6059
  %v8448 = vpop.f32.mrb[0].mxu0
  %v8449 = vadd.f32 %v8224, %v8448
  %v8450 = vpop.f32.mrb[0].mxu0
  %v8451 = vpop.f32.mrb[0].mxu0
  %v8452 = vadd.f32 %v8227, %v8451
  %v8453 = vpop.f32.mrb[0].mxu0
  %8454 = vmatprep.mubr.bf16.mxu0 %v6078
  %8455 = vmatmul.mubr.bf16.gmra.mrb[0].mxu0 %v6077
  %v8456 = vpop.f32.mrb[0].mxu0
  %v8457 = vadd.f32 %v8232, %v8456
  %v8458 = vpop.f32.mrb[0].mxu0
  %v8459 = vpop.f32.mrb[0].mxu0
  %v8460 = vadd.f32 %v8235, %v8459
  %v8461 = vpop.f32.mrb[0].mxu0
  %8462 = vmatprep.mubr.bf16.mxu0 %v6096
  %8463 = vmatmul.mubr.bf16.gmra.mrb[0].mxu0 %v6095
  %v8464 = vpop.f32.mrb[0].mxu0
  %v8465 = vadd.f32 %v8240, %v8464
  %v8466 = vpop.f32.mrb[0].mxu0
  %v8467 = vpop.f32.mrb[0].mxu0
  %v8468 = vadd.f32 %v8243, %v8467
  %v8469 = vpop.f32.mrb[0].mxu0
  %8470 = vmatprep.mubr.bf16.mxu0 %v6114
  %8471 = vmatmul.mubr.bf16.gmra.mrb[0].mxu0 %v6113
  %v8472 = vpop.f32.mrb[0].mxu0
  %v8473 = vadd.f32 %v8248, %v8472
  %v8474 = vpop.f32.mrb[0].mxu0
  %v8475 = vpop.f32.mrb[0].mxu0
  %v8476 = vadd.f32 %v8251, %v8475
  %v8477 = vpop.f32.mrb[0].mxu0
  %8478 = vmatprep.mubr.bf16.mxu0 %v6132
  %8479 = vmatmul.mubr.bf16.gmra.mrb[0].mxu0 %v6131
  %v8480 = vpop.f32.mrb[0].mxu0
  %v8481 = vadd.f32 %v8256, %v8480
  %v8482 = vpop.f32.mrb[0].mxu0
  %v8483 = vpop.f32.mrb[0].mxu0
  %v8484 = vadd.f32 %v8259, %v8483
  %v8485 = vpop.f32.mrb[0].mxu0
  %8486 = vmatprep.mubr.bf16.mxu0 %v6150
  %8487 = vmatmul.mubr.bf16.gmra.mrb[0].mxu0 %v6149
  %v8488 = vpop.f32.mrb[0].mxu0
  %v8489 = vadd.f32 %v8264, %v8488
  %v8490 = vpop.f32.mrb[0].mxu0
  %v8491 = vpop.f32.mrb[0].mxu0
  %v8492 = vadd.f32 %v8267, %v8491
  %v8493 = vpop.f32.mrb[0].mxu0
  %8494 = vmatprep.mubr.bf16.mxu0 %v6168
  %8495 = vmatmul.mubr.bf16.gmra.mrb[0].mxu0 %v6167
  %v8496 = vpop.f32.mrb[0].mxu0
  %v8497 = vadd.f32 %v8272, %v8496
  %v8498 = vpop.f32.mrb[0].mxu0
  %v8499 = vpop.f32.mrb[0].mxu0
  %v8500 = vadd.f32 %v8275, %v8499
  %v8501 = vpop.f32.mrb[0].mxu0
  %8502 = vmatprep.mubr.bf16.mxu0 %v6186
  %8503 = vmatmul.mubr.bf16.gmra.mrb[0].mxu0 %v6185
  %v8504 = vpop.f32.mrb[0].mxu0
  %v8505 = vadd.f32 %v8280, %v8504
  %v8506 = vpop.f32.mrb[0].mxu0
  %v8507 = vpop.f32.mrb[0].mxu0
  %v8508 = vadd.f32 %v8283, %v8507
  %v8509 = vpop.f32.mrb[0].mxu0
  %8510 = vmatprep.mubr.bf16.mxu0 %v6204
  %8511 = vmatmul.mubr.bf16.gmra.mrb[0].mxu0 %v6203
  %v8512 = vpop.f32.mrb[0].mxu0
  %v8513 = vadd.f32 %v8288, %v8512
  %v8514 = vpop.f32.mrb[0].mxu0
  %v8515 = vpop.f32.mrb[0].mxu0
  %v8516 = vadd.f32 %v8291, %v8515
  %v8517 = vpop.f32.mrb[0].mxu0
  %8518 = vmatprep.mubr.bf16.mxu0 %v6222
  %8519 = vmatmul.mubr.bf16.gmra.mrb[0].mxu0 %v6221
  %v8520 = vpop.f32.mrb[0].mxu0
  %v8521 = vadd.f32 %v8296, %v8520
  %v8522 = vpop.f32.mrb[0].mxu0
  %v8523 = vpop.f32.mrb[0].mxu0
  %v8524 = vadd.f32 %v8299, %v8523
  %v8525 = vpop.f32.mrb[0].mxu0
  %8526 = vmatprep.mubr.bf16.mxu0 %v6240
  %8527 = vmatmul.mubr.bf16.gmra.mrb[0].mxu0 %v6239
  %v8528 = vpop.f32.mrb[0].mxu0
  %v8529 = vadd.f32 %v8304, %v8528
  %v8530 = vpop.f32.mrb[0].mxu0
  %v8531 = vpop.f32.mrb[0].mxu0
  %v8532 = vadd.f32 %v8307, %v8531
  %v8533 = vpop.f32.mrb[0].mxu0
  %8534 = vmatprep.mubr.bf16.mxu0 %v6258
  %8535 = vmatmul.mubr.bf16.gmra.mrb[0].mxu0 %v6257
  %v8536 = vpop.f32.mrb[0].mxu0
  %v8537 = vadd.f32 %v8312, %v8536
  %v8538 = vpop.f32.mrb[0].mxu0
  %v8539 = vpop.f32.mrb[0].mxu0
  %v8540 = vadd.f32 %v8315, %v8539
  %v8541 = vpop.f32.mrb[0].mxu0
  %8542 = vmatprep.mubr.bf16.mxu0 %v6276
  %8543 = vmatmul.mubr.bf16.gmra.mrb[0].mxu0 %v6275
  %v8544 = vpop.f32.mrb[0].mxu0
  %v8545 = vadd.f32 %v8320, %v8544
  %v8546 = vpop.f32.mrb[0].mxu0
  %v8547 = vpop.f32.mrb[0].mxu0
  %v8548 = vadd.f32 %v8323, %v8547
  %v8549 = vpop.f32.mrb[0].mxu0
  %8550 = vmatprep.mubr.bf16.mxu0 %v6294
  %8551 = vmatmul.mubr.bf16.gmra.mrb[0].mxu0 %v6293
  %v8552 = vpop.f32.mrb[0].mxu0
  %v8553 = vadd.f32 %v8328, %v8552
  %v8554 = vpop.f32.mrb[0].mxu0
  %v8555 = vpop.f32.mrb[0].mxu0
  %v8556 = vadd.f32 %v8331, %v8555
  %v8557 = vpop.f32.mrb[0].mxu0
  %8558 = vmatprep.mubr.bf16.mxu0 %v6312
  %8559 = vmatmul.mubr.bf16.gmra.mrb[0].mxu0 %v6311
  %v8560 = vpop.f32.mrb[0].mxu0
  %v8561 = vadd.f32 %v8336, %v8560
  %v8562 = vpop.f32.mrb[0].mxu0
  %v8563 = vpop.f32.mrb[0].mxu0
  %v8564 = vadd.f32 %v8339, %v8563
  %v8565 = vpop.f32.mrb[0].mxu0
  %8566 = vmatprep.mubr.bf16.mxu0 %v6330
  %8567 = vmatmul.mubr.bf16.gmra.mrb[0].mxu0 %v6329
  %v8568 = vpop.f32.mrb[0].mxu0
  %v8569 = vadd.f32 %v8344, %v8568
  %v8570 = vpop.f32.mrb[0].mxu0
  %v8571 = vpop.f32.mrb[0].mxu0
  %v8572 = vadd.f32 %v8347, %v8571
  %v8573 = vpop.f32.mrb[0].mxu0
  %8574 = vmatprep.mubr.bf16.mxu0 %v6348
  %8575 = vmatmul.mubr.bf16.gmra.mrb[0].mxu0 %v6347
  %v8576 = vpop.f32.mrb[0].mxu0
  %v8577 = vadd.f32 %v8352, %v8576
  %v8578 = vpop.f32.mrb[0].mxu0
  %v8579 = vpop.f32.mrb[0].mxu0
  %v8580 = vadd.f32 %v8355, %v8579
  %v8581 = vpop.f32.mrb[0].mxu0
  %8582 = vdwg.mxu0
  %8583 = vmatprep.subr.bf16.mxu0 0
  %8584 = vmatpush1.bf16.msra.mxu0 %v4607
  %8585 = vmatprep.subr.bf16.mxu0 0
  %8586 = vmatpush1.bf16.msra.mxu0 %v4608
  %8587 = vmatprep.subr.bf16.mxu0 0
  %8588 = vmatpush1.bf16.msra.mxu0 %v4609
  %8589 = vmatprep.subr.bf16.mxu0 0
  %8590 = vmatpush1.bf16.msra.mxu0 %v4610
  %8591 = vmatprep.subr.bf16.mxu0 0
  %8592 = vmatpush1.bf16.msra.mxu0 %v4611
  %8593 = vmatprep.subr.bf16.mxu0 0
  %8594 = vmatpush1.bf16.msra.mxu0 %v4612
  %8595 = vmatprep.subr.bf16.mxu0 0
  %8596 = vmatpush1.bf16.msra.mxu0 %v4613
  %8597 = vmatprep.subr.bf16.mxu0 0
  %8598 = vmatpush1.bf16.msra.mxu0 %v4614
  %8599 = vmatprep.subr.bf16.mxu0 0
  %8600 = vmatpush1.bf16.msra.mxu0 %v4615
  %8601 = vmatprep.subr.bf16.mxu0 0
  %8602 = vmatpush1.bf16.msra.mxu0 %v4616
  %8603 = vmatprep.subr.bf16.mxu0 0
  %8604 = vmatpush1.bf16.msra.mxu0 %v4617
  %8605 = vmatprep.subr.bf16.mxu0 0
  %8606 = vmatpush1.bf16.msra.mxu0 %v4618
  %8607 = vmatprep.subr.bf16.mxu0 0
  %8608 = vmatpush1.bf16.msra.mxu0 %v4619
  %8609 = vmatprep.subr.bf16.mxu0 0
  %8610 = vmatpush1.bf16.msra.mxu0 %v4620
  %8611 = vmatprep.subr.bf16.mxu0 0
  %8612 = vmatpush1.bf16.msra.mxu0 %v4621
  %8613 = vmatprep.subr.bf16.mxu0 0
  %8614 = vmatpush1.bf16.msra.mxu0 %v4622
  %8615 = vmatprep.mubr.bf16.mxu0 %v5936
  %8616 = vmatmul.mubr.bf16.gmra.mrb[0].mxu0 %v5935
  %v8617 = vpop.f32.mrb[0].mxu0
  %v8618 = vadd.f32 %v8393, %v8617
  %v8619 = vpop.f32.mrb[0].mxu0
  %v8620 = vpop.f32.mrb[0].mxu0
  %v8621 = vadd.f32 %v8396, %v8620
  %v8622 = vpop.f32.mrb[0].mxu0
  %8623 = vmatprep.mubr.bf16.mxu0 %v5954
  %8624 = vmatmul.mubr.bf16.gmra.mrb[0].mxu0 %v5953
  %v8625 = vpop.f32.mrb[0].mxu0
  %v8626 = vadd.f32 %v8401, %v8625
  %v8627 = vpop.f32.mrb[0].mxu0
  %v8628 = vpop.f32.mrb[0].mxu0
  %v8629 = vadd.f32 %v8404, %v8628
  %v8630 = vpop.f32.mrb[0].mxu0
  %8631 = vmatprep.mubr.bf16.mxu0 %v5972
  %8632 = vmatmul.mubr.bf16.gmra.mrb[0].mxu0 %v5971
  %v8633 = vpop.f32.mrb[0].mxu0
  %v8634 = vadd.f32 %v8409, %v8633
  %v8635 = vpop.f32.mrb[0].mxu0
  %v8636 = vpop.f32.mrb[0].mxu0
  %v8637 = vadd.f32 %v8412, %v8636
  %v8638 = vpop.f32.mrb[0].mxu0
  %8639 = vmatprep.mubr.bf16.mxu0 %v5990
  %8640 = vmatmul.mubr.bf16.gmra.mrb[0].mxu0 %v5989
  %v8641 = vpop.f32.mrb[0].mxu0
  %v8642 = vadd.f32 %v8417, %v8641
  %v8643 = vpop.f32.mrb[0].mxu0
  %v8644 = vpop.f32.mrb[0].mxu0
  %v8645 = vadd.f32 %v8420, %v8644
  %v8646 = vpop.f32.mrb[0].mxu0
  %8647 = vmatprep.mubr.bf16.mxu0 %v6008
  %8648 = vmatmul.mubr.bf16.gmra.mrb[0].mxu0 %v6007
  %v8649 = vpop.f32.mrb[0].mxu0
  %v8650 = vadd.f32 %v8425, %v8649
  %v8651 = vpop.f32.mrb[0].mxu0
  %v8652 = vpop.f32.mrb[0].mxu0
  %v8653 = vadd.f32 %v8428, %v8652
  %v8654 = vpop.f32.mrb[0].mxu0
  %8655 = vmatprep.mubr.bf16.mxu0 %v6026
  %8656 = vmatmul.mubr.bf16.gmra.mrb[0].mxu0 %v6025
  %v8657 = vpop.f32.mrb[0].mxu0
  %v8658 = vadd.f32 %v8433, %v8657
  %v8659 = vpop.f32.mrb[0].mxu0
  %v8660 = vpop.f32.mrb[0].mxu0
  %v8661 = vadd.f32 %v8436, %v8660
  %v8662 = vpop.f32.mrb[0].mxu0
  %8663 = vmatprep.mubr.bf16.mxu0 %v6044
  %8664 = vmatmul.mubr.bf16.gmra.mrb[0].mxu0 %v6043
  %v8665 = vpop.f32.mrb[0].mxu0
  %v8666 = vadd.f32 %v8441, %v8665
  %v8667 = vpop.f32.mrb[0].mxu0
  %v8668 = vpop.f32.mrb[0].mxu0
  %v8669 = vadd.f32 %v8444, %v8668
  %v8670 = vpop.f32.mrb[0].mxu0
  %8671 = vmatprep.mubr.bf16.mxu0 %v6062
  %8672 = vmatmul.mubr.bf16.gmra.mrb[0].mxu0 %v6061
  %v8673 = vpop.f32.mrb[0].mxu0
  %v8674 = vadd.f32 %v8449, %v8673
  %v8675 = vpop.f32.mrb[0].mxu0
  %v8676 = vpop.f32.mrb[0].mxu0
  %v8677 = vadd.f32 %v8452, %v8676
  %v8678 = vpop.f32.mrb[0].mxu0
  %8679 = vmatprep.mubr.bf16.mxu0 %v6080
  %8680 = vmatmul.mubr.bf16.gmra.mrb[0].mxu0 %v6079
  %v8681 = vpop.f32.mrb[0].mxu0
  %v8682 = vadd.f32 %v8457, %v8681
  %v8683 = vpop.f32.mrb[0].mxu0
  %v8684 = vpop.f32.mrb[0].mxu0
  %v8685 = vadd.f32 %v8460, %v8684
  %v8686 = vpop.f32.mrb[0].mxu0
  %8687 = vmatprep.mubr.bf16.mxu0 %v6098
  %8688 = vmatmul.mubr.bf16.gmra.mrb[0].mxu0 %v6097
  %v8689 = vpop.f32.mrb[0].mxu0
  %v8690 = vadd.f32 %v8465, %v8689
  %v8691 = vpop.f32.mrb[0].mxu0
  %v8692 = vpop.f32.mrb[0].mxu0
  %v8693 = vadd.f32 %v8468, %v8692
  %v8694 = vpop.f32.mrb[0].mxu0
  %8695 = vmatprep.mubr.bf16.mxu0 %v6116
  %8696 = vmatmul.mubr.bf16.gmra.mrb[0].mxu0 %v6115
  %v8697 = vpop.f32.mrb[0].mxu0
  %v8698 = vadd.f32 %v8473, %v8697
  %v8699 = vpop.f32.mrb[0].mxu0
  %v8700 = vpop.f32.mrb[0].mxu0
  %v8701 = vadd.f32 %v8476, %v8700
  %v8702 = vpop.f32.mrb[0].mxu0
  %8703 = vmatprep.mubr.bf16.mxu0 %v6134
  %8704 = vmatmul.mubr.bf16.gmra.mrb[0].mxu0 %v6133
  %v8705 = vpop.f32.mrb[0].mxu0
  %v8706 = vadd.f32 %v8481, %v8705
  %v8707 = vpop.f32.mrb[0].mxu0
  %v8708 = vpop.f32.mrb[0].mxu0
  %v8709 = vadd.f32 %v8484, %v8708
  %v8710 = vpop.f32.mrb[0].mxu0
  %8711 = vmatprep.mubr.bf16.mxu0 %v6152
  %8712 = vmatmul.mubr.bf16.gmra.mrb[0].mxu0 %v6151
  %v8713 = vpop.f32.mrb[0].mxu0
  %v8714 = vadd.f32 %v8489, %v8713
  %v8715 = vpop.f32.mrb[0].mxu0
  %v8716 = vpop.f32.mrb[0].mxu0
  %v8717 = vadd.f32 %v8492, %v8716
  %v8718 = vpop.f32.mrb[0].mxu0
  %8719 = vmatprep.mubr.bf16.mxu0 %v6170
  %8720 = vmatmul.mubr.bf16.gmra.mrb[0].mxu0 %v6169
  %v8721 = vpop.f32.mrb[0].mxu0
  %v8722 = vadd.f32 %v8497, %v8721
  %v8723 = vpop.f32.mrb[0].mxu0
  %v8724 = vpop.f32.mrb[0].mxu0
  %v8725 = vadd.f32 %v8500, %v8724
  %v8726 = vpop.f32.mrb[0].mxu0
  %8727 = vmatprep.mubr.bf16.mxu0 %v6188
  %8728 = vmatmul.mubr.bf16.gmra.mrb[0].mxu0 %v6187
  %v8729 = vpop.f32.mrb[0].mxu0
  %v8730 = vadd.f32 %v8505, %v8729
  %v8731 = vpop.f32.mrb[0].mxu0
  %v8732 = vpop.f32.mrb[0].mxu0
  %v8733 = vadd.f32 %v8508, %v8732
  %v8734 = vpop.f32.mrb[0].mxu0
  %8735 = vmatprep.mubr.bf16.mxu0 %v6206
  %8736 = vmatmul.mubr.bf16.gmra.mrb[0].mxu0 %v6205
  %v8737 = vpop.f32.mrb[0].mxu0
  %v8738 = vadd.f32 %v8513, %v8737
  %v8739 = vpop.f32.mrb[0].mxu0
  %v8740 = vpop.f32.mrb[0].mxu0
  %v8741 = vadd.f32 %v8516, %v8740
  %v8742 = vpop.f32.mrb[0].mxu0
  %8743 = vmatprep.mubr.bf16.mxu0 %v6224
  %8744 = vmatmul.mubr.bf16.gmra.mrb[0].mxu0 %v6223
  %v8745 = vpop.f32.mrb[0].mxu0
  %v8746 = vadd.f32 %v8521, %v8745
  %v8747 = vpop.f32.mrb[0].mxu0
  %v8748 = vpop.f32.mrb[0].mxu0
  %v8749 = vadd.f32 %v8524, %v8748
  %v8750 = vpop.f32.mrb[0].mxu0
  %8751 = vmatprep.mubr.bf16.mxu0 %v6242
  %8752 = vmatmul.mubr.bf16.gmra.mrb[0].mxu0 %v6241
  %v8753 = vpop.f32.mrb[0].mxu0
  %v8754 = vadd.f32 %v8529, %v8753
  %v8755 = vpop.f32.mrb[0].mxu0
  %v8756 = vpop.f32.mrb[0].mxu0
  %v8757 = vadd.f32 %v8532, %v8756
  %v8758 = vpop.f32.mrb[0].mxu0
  %8759 = vmatprep.mubr.bf16.mxu0 %v6260
  %8760 = vmatmul.mubr.bf16.gmra.mrb[0].mxu0 %v6259
  %v8761 = vpop.f32.mrb[0].mxu0
  %v8762 = vadd.f32 %v8537, %v8761
  %v8763 = vpop.f32.mrb[0].mxu0
  %v8764 = vpop.f32.mrb[0].mxu0
  %v8765 = vadd.f32 %v8540, %v8764
  %v8766 = vpop.f32.mrb[0].mxu0
  %8767 = vmatprep.mubr.bf16.mxu0 %v6278
  %8768 = vmatmul.mubr.bf16.gmra.mrb[0].mxu0 %v6277
  %v8769 = vpop.f32.mrb[0].mxu0
  %v8770 = vadd.f32 %v8545, %v8769
  %v8771 = vpop.f32.mrb[0].mxu0
  %v8772 = vpop.f32.mrb[0].mxu0
  %v8773 = vadd.f32 %v8548, %v8772
  %v8774 = vpop.f32.mrb[0].mxu0
  %8775 = vmatprep.mubr.bf16.mxu0 %v6296
  %8776 = vmatmul.mubr.bf16.gmra.mrb[0].mxu0 %v6295
  %v8777 = vpop.f32.mrb[0].mxu0
  %v8778 = vadd.f32 %v8553, %v8777
  %v8779 = vpop.f32.mrb[0].mxu0
  %v8780 = vpop.f32.mrb[0].mxu0
  %v8781 = vadd.f32 %v8556, %v8780
  %v8782 = vpop.f32.mrb[0].mxu0
  %8783 = vmatprep.mubr.bf16.mxu0 %v6314
  %8784 = vmatmul.mubr.bf16.gmra.mrb[0].mxu0 %v6313
  %v8785 = vpop.f32.mrb[0].mxu0
  %v8786 = vadd.f32 %v8561, %v8785
  %v8787 = vpop.f32.mrb[0].mxu0
  %v8788 = vpop.f32.mrb[0].mxu0
  %v8789 = vadd.f32 %v8564, %v8788
  %v8790 = vpop.f32.mrb[0].mxu0
  %8791 = vmatprep.mubr.bf16.mxu0 %v6332
  %8792 = vmatmul.mubr.bf16.gmra.mrb[0].mxu0 %v6331
  %v8793 = vpop.f32.mrb[0].mxu0
  %v8794 = vadd.f32 %v8569, %v8793
  %v8795 = vpop.f32.mrb[0].mxu0
  %v8796 = vpop.f32.mrb[0].mxu0
  %v8797 = vadd.f32 %v8572, %v8796
  %v8798 = vpop.f32.mrb[0].mxu0
  %8799 = vmatprep.mubr.bf16.mxu0 %v6350
  %8800 = vmatmul.mubr.bf16.gmra.mrb[0].mxu0 %v6349
  %v8801 = vpop.f32.mrb[0].mxu0
  %v8802 = vadd.f32 %v8577, %v8801
  %v8803 = vpop.f32.mrb[0].mxu0
  %v8804 = vpop.f32.mrb[0].mxu0
  %v8805 = vadd.f32 %v8580, %v8804
  %v8806 = vpop.f32.mrb[0].mxu0
  %8807 = vdwg.mxu0
  %vm8808 = vcmask 400384
  %8809 = vst.msk [vmem:[%s3] sm:$0xff] %vm8808, %v8618
  %8810 = vst.msk [vmem:[%s3 + $0x8] sm:$0xff] %vm8808, %v8621
  %8811 = vst.msk [vmem:[%s3 + $0x10] sm:$0xff] %vm8808, %v8626
  %8812 = vst.msk [vmem:[%s3 + $0x18] sm:$0xff] %vm8808, %v8629
  %8813 = vst.msk [vmem:[%s3 + $0x20] sm:$0xff] %vm8808, %v8634
  %8814 = vst.msk [vmem:[%s3 + $0x28] sm:$0xff] %vm8808, %v8637
  %8815 = vst.msk [vmem:[%s3 + $0x30] sm:$0xff] %vm8808, %v8642
  %8816 = vst.msk [vmem:[%s3 + $0x38] sm:$0xff] %vm8808, %v8645
  %8817 = vst.msk [vmem:[%s3 + $0x40] sm:$0xff] %vm8808, %v8650
  %8818 = vst.msk [vmem:[%s3 + $0x48] sm:$0xff] %vm8808, %v8653
  %8819 = vst.msk [vmem:[%s3 + $0x50] sm:$0xff] %vm8808, %v8658
  %8820 = vst.msk [vmem:[%s3 + $0x58] sm:$0xff] %vm8808, %v8661
  %8821 = vst.msk [vmem:[%s3 + $0x60] sm:$0xff] %vm8808, %v8666
  %8822 = vst.msk [vmem:[%s3 + $0x68] sm:$0xff] %vm8808, %v8669
  %8823 = vst.msk [vmem:[%s3 + $0x70] sm:$0xff] %vm8808, %v8674
  %8824 = vst.msk [vmem:[%s3 + $0x78] sm:$0xff] %vm8808, %v8677
  %8825 = vst.msk [vmem:[%s3 + $0x80] sm:$0xff] %vm8808, %v8682
  %8826 = vst.msk [vmem:[%s3 + $0x88] sm:$0xff] %vm8808, %v8685
  %8827 = vst.msk [vmem:[%s3 + $0x90] sm:$0xff] %vm8808, %v8690
  %8828 = vst.msk [vmem:[%s3 + $0x98] sm:$0xff] %vm8808, %v8693
  %8829 = vst.msk [vmem:[%s3 + $0xa0] sm:$0xff] %vm8808, %v8698
  %8830 = vst.msk [vmem:[%s3 + $0xa8] sm:$0xff] %vm8808, %v8701
  %8831 = vst.msk [vmem:[%s3 + $0xb0] sm:$0xff] %vm8808, %v8706
  %8832 = vst.msk [vmem:[%s3 + $0xb8] sm:$0xff] %vm8808, %v8709
  %8833 = vst.msk [vmem:[%s3 + $0xc0] sm:$0xff] %vm8808, %v8714
  %8834 = vst.msk [vmem:[%s3 + $0xc8] sm:$0xff] %vm8808, %v8717
  %8835 = vst.msk [vmem:[%s3 + $0xd0] sm:$0xff] %vm8808, %v8722
  %8836 = vst.msk [vmem:[%s3 + $0xd8] sm:$0xff] %vm8808, %v8725
  %8837 = vst.msk [vmem:[%s3 + $0xe0] sm:$0xff] %vm8808, %v8730
  %8838 = vst.msk [vmem:[%s3 + $0xe8] sm:$0xff] %vm8808, %v8733
  %8839 = vst.msk [vmem:[%s3 + $0xf0] sm:$0xff] %vm8808, %v8738
  %8840 = vst.msk [vmem:[%s3 + $0xf8] sm:$0xff] %vm8808, %v8741
  %8841 = vst.msk [vmem:[%s3 + $0x100] sm:$0xff] %vm8808, %v8746
  %8842 = vst.msk [vmem:[%s3 + $0x108] sm:$0xff] %vm8808, %v8749
  %8843 = vst.msk [vmem:[%s3 + $0x110] sm:$0xff] %vm8808, %v8754
  %8844 = vst.msk [vmem:[%s3 + $0x118] sm:$0xff] %vm8808, %v8757
  %8845 = vst.msk [vmem:[%s3 + $0x120] sm:$0xff] %vm8808, %v8762
  %8846 = vst.msk [vmem:[%s3 + $0x128] sm:$0xff] %vm8808, %v8765
  %8847 = vst.msk [vmem:[%s3 + $0x130] sm:$0xff] %vm8808, %v8770
  %8848 = vst.msk [vmem:[%s3 + $0x138] sm:$0xff] %vm8808, %v8773
  %8849 = vst.msk [vmem:[%s3 + $0x140] sm:$0xff] %vm8808, %v8778
  %8850 = vst.msk [vmem:[%s3 + $0x148] sm:$0xff] %vm8808, %v8781
  %8851 = vst.msk [vmem:[%s3 + $0x150] sm:$0xff] %vm8808, %v8786
  %8852 = vst.msk [vmem:[%s3 + $0x158] sm:$0xff] %vm8808, %v8789
  %8853 = vst.msk [vmem:[%s3 + $0x160] sm:$0xff] %vm8808, %v8794
  %8854 = vst.msk [vmem:[%s3 + $0x168] sm:$0xff] %vm8808, %v8797
  %8855 = vst.msk [vmem:[%s3 + $0x170] sm:$0xff] %vm8808, %v8802
  %8856 = vst.msk [vmem:[%s3 + $0x178] sm:$0xff] %vm8808, %v8805
  // Predicated region
  $region14: #{tpu_custom_call.1} parent=0 // pred_check
    _
  $region15: #{tpu_custom_call.1} parent=0 // pred_check_branch
    %8858 = sbr.rel (0) target = $region17
  $region16: #{tpu_custom_call.1} parent=0 // pred_region
    _
  $region17: #{tpu_custom_call.1} parent=0 // pred_fallthru
    _
  // Predicated region
  $region18: #{tpu_custom_call.1} parent=0 // pred_check
    _
  $region19: #{tpu_custom_call.1} parent=0 // pred_check_branch
    %8860 = sbr.rel (0) target = $region21
  $region20: #{tpu_custom_call.1} parent=0 // pred_region
    _
  $region21: #{tpu_custom_call.1} parent=0 // pred_fallthru
    _

</llo_original>
